<compile_context>
chip_gen: v5e
topology: v5e:2x2
jax: 0.10.0
libtpu: 0.0.40
codegen_flags: <defaults>
</compile_context>

<pallas_src>
import functools
import math

import jax
import jax.numpy as jnp
from jax.experimental import pallas as pl
from jax.experimental.pallas import tpu as pltpu

_INV_SQRT2 = 1.0 / math.sqrt(2.0)


# ------------------------------- kernel ------------------------------------- #
def _mlp_kernel(x_ref, w1_ref, b1_ref, w2_ref, b2_ref, o_ref, acc_ref, *,
                mxu_dtype, act_dtype):
    """One (tm, D) row tile x one hidden chunk; f32 VMEM accumulator across chunks."""
    c = pl.program_id(1)
    n_c = pl.num_programs(1)

    @pl.when(c == 0)
    def _init():
        acc_ref[...] = jnp.zeros_like(acc_ref)

    # Cast the native-dtype activation tile in-kernel (VPU, hidden under the MXU).
    x = x_ref[...].astype(mxu_dtype)                               # (tm, D)

    # fc1 for this hidden chunk: MXU with f32 accumulation.
    h = jnp.dot(x, w1_ref[...], preferred_element_type=jnp.float32)  # (tm, hc) f32
    h = h + b1_ref[...]                                              # + (1, hc) f32

    # Exact erf-form GELU (PyTorch nn.GELU default). Elementwise chain in act_dtype
    # (bf16 on v6e/v7x halves VALU bundle count; Mosaic widens as needed on v5e).
    h = h.astype(act_dtype)
    h = 0.5 * h * (1.0 + jax.lax.erf(h * _INV_SQRT2))
    # dropout(p=0.0) -> identity

    # fc2 partial product, accumulated into the f32 VMEM scratch.
    acc_ref[...] += jnp.dot(h.astype(mxu_dtype), w2_ref[...],
                            preferred_element_type=jnp.float32)

    @pl.when(c == n_c - 1)
    def _finalize():
        o_ref[...] = (acc_ref[...] + b2_ref[...]).astype(o_ref.dtype)


# ------------------------------ heuristics ----------------------------------- #
def _round_up(a: int, b: int) -> int:
    return (a + b - 1) // b * b


def _vmem_capacity():
    try:
        return int(pltpu.get_tpu_info().vmem_capacity_bytes)
    except Exception:
        return None  # unknown -> assume the most constrained generation (v7x, 64 MiB)


def _pick_row_tile(M: int, vmem_capacity) -> int:
    tm = 256
    # v5e/v6e (128 MiB VMEM): bigger tiles halve per-grid-step overhead once M is large.
    if vmem_capacity is not None and vmem_capacity >= 128 * 1024 * 1024 and M >= 1024:
        tm = 512
    tm = min(tm, _round_up(M, 8))
    # v7x megacore: prefer an even number of row tiles so both TensorCores get work.
    if M > tm and pl.cdiv(M, tm) % 2 == 1 and tm >= 128:
        tm //= 2
    return tm


def _pick_hidden_chunk(H: int, target: int) -> int:
    # Largest multiple-of-256 divisor of H that is <= target (MXU contraction depth on
    # v6e/v7x); fall back to multiple-of-128, then to H itself.
    for align in (256, 128):
        best, c = 0, align
        while c <= min(H, target):
            if H % c == 0:
                best = c
            c += align
        if best:
            return best
    return H


def _vmem_limit(tm, D, hc, O, x_itemsize, out_itemsize, vmem_capacity):
    need = (2 * tm * D * x_itemsize          # double-buffered x tiles (native dtype)
            + 2 * (D * hc) * 2 + 2 * hc * 4  # w1 + b1 chunks (bf16 / f32), double-buffered
            + 2 * (hc * O) * 2 + 2 * O * 4   # w2 chunks + b2
            + 2 * tm * O * out_itemsize      # output tiles
            + tm * O * 4                     # f32 accumulator scratch
            + tm * hc * 6)                   # live fc1 intermediate (f32 + bf16 copy)
    limit = max(int(need * 1.5), 32 * 1024 * 1024)
    cap = vmem_capacity if vmem_capacity is not None else 64 * 1024 * 1024
    return min(limit, int(cap * 0.75))       # leave headroom for compiler scratch


# -------------------------------- wrapper ------------------------------------ #
def mlp_pallas(x, w1, b1, w2, b2, *, row_tile=None, hidden_chunk=512,
               mxu_dtype=jnp.bfloat16, act_dtype=jnp.bfloat16):
    """channelvit Mlp forward.

    x: (..., D); w1: (D, H), b1: (H,), w2: (H, O), b2: (O,)  (weights pre-transposed).
    """
    out_dtype = x.dtype
    D = x.shape[-1]
    H = w1.shape[1]
    O = w2.shape[1]
    lead = x.shape[:-1]

    x2 = x.reshape(-1, D)                    # no dtype cast, no padding of x
    M = x2.shape[0]

    vmem_cap = _vmem_capacity()
    tm = row_tile if row_tile is not None else _pick_row_tile(M, vmem_cap)

    # Weights small enough to sit in VMEM -> keep resident (hc = H gives constant block
    # indices, so they are fetched exactly once for the whole grid).  Otherwise stream
    # lane-aligned hidden chunks so VMEM stays O(D*hc + hc*O) regardless of H (v7x 64 MiB).
    resident_bytes = (2 * (D * H + H * O) * jnp.dtype(mxu_dtype).itemsize
                      + tm * H * 6)
    budget = (vmem_cap if vmem_cap is not None else 64 * 1024 * 1024) // 4
    hc = H if resident_bytes <= budget else _pick_hidden_chunk(H, hidden_chunk)

    n_m = pl.cdiv(M, tm)
    n_c = H // hc if H % hc == 0 else pl.cdiv(H, hc)
    if H % hc != 0:  # should not happen (picker returns divisors), but stay safe
        hc = H
        n_c = 1

    w1c = w1.astype(mxu_dtype)
    w2c = w2.astype(mxu_dtype)
    b1r = b1.astype(jnp.float32).reshape(1, H)
    b2r = b2.astype(jnp.float32).reshape(1, O)

    kernel = functools.partial(_mlp_kernel, mxu_dtype=mxu_dtype, act_dtype=act_dtype)

    cost = pl.CostEstimate(
        flops=2 * M * (D * H + H * O),
        transcendentals=M * H,                       # one erf per hidden activation
        bytes_accessed=(x2.size * x2.dtype.itemsize
                        + n_m * (w1c.size + w2c.size) * jnp.dtype(mxu_dtype).itemsize
                        + b1r.size * 4 + b2r.size * 4
                        + M * O * jnp.dtype(out_dtype).itemsize),
    )

    out2 = pl.pallas_call(
        kernel,
        out_shape=jax.ShapeDtypeStruct((M, O), out_dtype),
        grid_spec=pltpu.PrefetchScalarGridSpec(
            num_scalar_prefetch=0,
            grid=(n_m, n_c),
            in_specs=[
                pl.BlockSpec((tm, D), lambda i, c: (i, 0)),   # x row tile (resident over c)
                pl.BlockSpec((D, hc), lambda i, c: (0, c)),   # w1 hidden chunk (streamed)
                pl.BlockSpec((1, hc), lambda i, c: (0, c)),   # b1 chunk
                pl.BlockSpec((hc, O), lambda i, c: (c, 0)),   # w2 hidden chunk (streamed)
                pl.BlockSpec((1, O), lambda i, c: (0, 0)),    # b2 (resident)
            ],
            out_specs=pl.BlockSpec((tm, O), lambda i, c: (i, 0)),
            scratch_shapes=[pltpu.VMEM((tm, O), jnp.float32)],   # fc2 accumulator
        ),
        compiler_params=pltpu.CompilerParams(
            dimension_semantics=("parallel", "arbitrary"),
            vmem_limit_bytes=_vmem_limit(tm, D, hc, O,
                                         x2.dtype.itemsize,
                                         jnp.dtype(out_dtype).itemsize,
                                         vmem_cap),
        ),
        cost_estimate=cost,
    )(x2, w1c, b1r, w2c, b2r)

    return out2.reshape(*lead, O)


def mlp_reference(x, w1, b1, w2, b2):
    h = x @ w1 + b1
    h = 0.5 * h * (1.0 + jax.lax.erf(h * _INV_SQRT2))
    return h @ w2 + b2


if __name__ == "__main__":
    key = jax.random.PRNGKey(0)
    # Small lane-dense shapes: D/H/O multiples of 128; M = B*N = 512 rows -> two
    # 256-row tiles (even grid -> shards cleanly across v7x's two TensorCores).
    B, N = 4, 128           # batch, tokens
    D, Hd = 128, 512        # in_features, hidden_features = 4x (ViT-style)
    O = D                   # out_features defaults to in_features

    kx, k1, kb1, k2, kb2 = jax.random.split(key, 5)
    x = jax.random.normal(kx, (B, N, D), dtype=jnp.float32)

    # Deterministic "PyTorch-like" init (uniform +-1/sqrt(fan_in)); stored pre-transposed.
    lim1 = 1.0 / math.sqrt(D)
    w1 = jax.random.uniform(k1, (D, Hd), minval=-lim1, maxval=lim1, dtype=jnp.float32)
    b1 = jax.random.uniform(kb1, (Hd,), minval=-lim1, maxval=lim1, dtype=jnp.float32)
    lim2 = 1.0 / math.sqrt(Hd)
    w2 = jax.random.uniform(k2, (Hd, O), minval=-lim2, maxval=lim2, dtype=jnp.float32)
    b2 = jax.random.uniform(kb2, (O,), minval=-lim2, maxval=lim2, dtype=jnp.float32)

    out = mlp_pallas(x, w1, b1, w2, b2)
    out = jax.block_until_ready(out)

    ref = mlp_reference(x, w1, b1, w2, b2)
    assert out.shape == (B, N, O)
    # bf16 MXU operands + bf16 GELU (f32 accumulation) -> small deviation vs. f32 reference.
    err = float(jnp.max(jnp.abs(out - ref)))
    assert jnp.allclose(out, ref, atol=3e-2, rtol=3e-2), f"mismatch vs reference (max abs err {err})"
    print("KERNEL_OK")
</pallas_src>

<mosaic_0001>
module attributes {stable_mosaic.version = 11 : i64} {
  func.func @_mlp_kernel(%arg0: i32, %arg1: i32, %arg2: memref<256x128xf32, #tpu.memory_space<vmem>>, %arg3: memref<128x512xbf16, #tpu.memory_space<vmem>>, %arg4: memref<1x512xf32, #tpu.memory_space<vmem>>, %arg5: memref<512x128xbf16, #tpu.memory_space<vmem>>, %arg6: memref<1x128xf32, #tpu.memory_space<vmem>>, %arg7: memref<256x128xf32, #tpu.memory_space<vmem>>, %arg8: memref<256x128xf32, #tpu.memory_space<vmem>>) attributes {dimension_semantics = [#tpu.dimension_semantics<parallel>, #tpu.dimension_semantics<arbitrary>], iteration_bounds = array<i64: 2, 1>, scalar_prefetch = 0 : i64, scratch_operands = 1 : i64, tpu.core_type = #tpu.core_type<tc>, window_params = [{transform_indices = @transform_0, window_bounds = array<i64: 256, 128>}, {transform_indices = @transform_1, window_bounds = array<i64: 128, 512>}, {transform_indices = @transform_2, window_bounds = array<i64: 1, 512>}, {transform_indices = @transform_3, window_bounds = array<i64: 512, 128>}, {pipeline_mode = #tpu.pipeline_mode<synchronous>, transform_indices = @transform_4, window_bounds = array<i64: 1, 128>}, {transform_indices = @transform_5, window_bounds = array<i64: 256, 128>}]} {
    %c0_i32 = arith.constant 0 : i32
    %0 = arith.cmpi eq, %arg1, %c0_i32 : i32
    %1 = arith.extui %0 : i1 to i32
    %c0_i32_0 = arith.constant 0 : i32
    %2 = arith.cmpi ne, %1, %c0_i32_0 : i32
    scf.if %2 {
      %cst_18 = arith.constant 0.000000e+00 : f32
      %27 = vector.broadcast %cst_18 : f32 to vector<256x128xf32>
      %c0_19 = arith.constant 0 : index
      %c0_20 = arith.constant 0 : index
      %28 = vector.load %arg8[%c0_19, %c0_20] : memref<256x128xf32, #tpu.memory_space<vmem>>, vector<256x128xf32>
      tpu.vector_store %arg8[%c0_19, %c0_20], %27 {strides = array<i32>} : memref<256x128xf32, #tpu.memory_space<vmem>>, vector<256x128xf32>,
    } else {
    }
    %c0 = arith.constant 0 : index
    %c0_1 = arith.constant 0 : index
    %3 = vector.load %arg2[%c0, %c0_1] : memref<256x128xf32, #tpu.memory_space<vmem>>, vector<256x128xf32>
    %4 = arith.truncf %3 : vector<256x128xf32> to vector<256x128xbf16>
    %c0_2 = arith.constant 0 : index
    %c0_3 = arith.constant 0 : index
    %5 = vector.load %arg3[%c0_2, %c0_3] : memref<128x512xbf16, #tpu.memory_space<vmem>>, vector<128x512xbf16>
    %cst = arith.constant dense<0.000000e+00> : vector<256x512xf32>
    %6 = tpu.matmul %4, %5, %cst {dimension_numbers = #tpu.dot_dimension_numbers<[1], [0], [0], [1], [0, 0, 1, 1], [], []>} : vector<256x128xbf16>, vector<128x512xbf16>, vector<256x512xf32> -> vector<256x512xf32>
    %c0_4 = arith.constant 0 : index
    %c0_5 = arith.constant 0 : index
    %7 = vector.load %arg4[%c0_4, %c0_5] : memref<1x512xf32, #tpu.memory_space<vmem>>, vector<1x512xf32>
    %8 = vector.broadcast %7 : vector<1x512xf32> to vector<256x512xf32>
    %9 = arith.addf %6, %8 : vector<256x512xf32>
    %10 = arith.truncf %9 : vector<256x512xf32> to vector<256x512xbf16>
    %cst_6 = arith.constant 5.000000e-01 : bf16
    %11 = vector.broadcast %cst_6 : bf16 to vector<256x512xbf16>
    %12 = arith.mulf %11, %10 : vector<256x512xbf16>
    %cst_7 = arith.constant 7.070310e-01 : bf16
    %13 = vector.broadcast %cst_7 : bf16 to vector<256x512xbf16>
    %14 = arith.mulf %10, %13 : vector<256x512xbf16>
    %15 = math.erf %14 : vector<256x512xbf16>
    %cst_8 = arith.constant 1.000000e+00 : bf16
    %16 = vector.broadcast %cst_8 : bf16 to vector<256x512xbf16>
    %17 = arith.addf %16, %15 : vector<256x512xbf16>
    %18 = arith.mulf %12, %17 : vector<256x512xbf16>
    %c0_9 = arith.constant 0 : index
    %c0_10 = arith.constant 0 : index
    %19 = vector.load %arg8[%c0_9, %c0_10] : memref<256x128xf32, #tpu.memory_space<vmem>>, vector<256x128xf32>
    %c0_11 = arith.constant 0 : index
    %c0_12 = arith.constant 0 : index
    %20 = vector.load %arg5[%c0_11, %c0_12] : memref<512x128xbf16, #tpu.memory_space<vmem>>, vector<512x128xbf16>
    %cst_13 = arith.constant dense<0.000000e+00> : vector<256x128xf32>
    %21 = tpu.matmul %18, %20, %cst_13 {dimension_numbers = #tpu.dot_dimension_numbers<[1], [0], [0], [1], [0, 0, 1, 1], [], []>} : vector<256x512xbf16>, vector<512x128xbf16>, vector<256x128xf32> -> vector<256x128xf32>
    %22 = arith.addf %19, %21 : vector<256x128xf32>
    %c0_14 = arith.constant 0 : index
    %c0_15 = arith.constant 0 : index
    %23 = vector.load %arg8[%c0_14, %c0_15] : memref<256x128xf32, #tpu.memory_space<vmem>>, vector<256x128xf32>
    tpu.vector_store %arg8[%c0_14, %c0_15], %22 {strides = array<i32>} : memref<256x128xf32, #tpu.memory_space<vmem>>, vector<256x128xf32>,
    %c0_i32_16 = arith.constant 0 : i32
    %24 = arith.cmpi eq, %arg1, %c0_i32_16 : i32
    %25 = arith.extui %24 : i1 to i32
    %c0_i32_17 = arith.constant 0 : i32
    %26 = arith.cmpi ne, %25, %c0_i32_17 : i32
    scf.if %26 {
      %c0_18 = arith.constant 0 : index
      %c0_19 = arith.constant 0 : index
      %27 = vector.load %arg8[%c0_18, %c0_19] : memref<256x128xf32, #tpu.memory_space<vmem>>, vector<256x128xf32>
      %c0_20 = arith.constant 0 : index
      %c0_21 = arith.constant 0 : index
      %28 = vector.load %arg6[%c0_20, %c0_21] : memref<1x128xf32, #tpu.memory_space<vmem>>, vector<1x128xf32>
      %29 = vector.broadcast %28 : vector<1x128xf32> to vector<256x128xf32>
      %30 = arith.addf %27, %29 : vector<256x128xf32>
      %c0_22 = arith.constant 0 : index
      %c0_23 = arith.constant 0 : index
      %31 = vector.load %arg7[%c0_22, %c0_23] : memref<256x128xf32, #tpu.memory_space<vmem>>, vector<256x128xf32>
      tpu.vector_store %arg7[%c0_22, %c0_23], %30 {strides = array<i32>} : memref<256x128xf32, #tpu.memory_space<vmem>>, vector<256x128xf32>,
    } else {
    }
    return
  }
  func.func @transform_0(%arg0: i32, %arg1: i32) -> (i32, i32) {
    %c0_i32 = arith.constant 0 : i32
    %c0_i32_0 = arith.constant 0 : i32
    return %arg0, %c0_i32 : i32, i32
  }
  func.func @transform_1(%arg0: i32, %arg1: i32) -> (i32, i32) {
    %c0_i32 = arith.constant 0 : i32
    %c0_i32_0 = arith.constant 0 : i32
    return %c0_i32, %arg1 : i32, i32
  }
  func.func @transform_2(%arg0: i32, %arg1: i32) -> (i32, i32) {
    %c0_i32 = arith.constant 0 : i32
    %c0_i32_0 = arith.constant 0 : i32
    return %c0_i32, %arg1 : i32, i32
  }
  func.func @transform_3(%arg0: i32, %arg1: i32) -> (i32, i32) {
    %c0_i32 = arith.constant 0 : i32
    %c0_i32_0 = arith.constant 0 : i32
    return %arg1, %c0_i32 : i32, i32
  }
  func.func @transform_4(%arg0: i32, %arg1: i32) -> (i32, i32) {
    %c0_i32 = arith.constant 0 : i32
    %c0_i32_0 = arith.constant 0 : i32
    %c0_i32_1 = arith.constant 0 : i32
    return %c0_i32, %c0_i32_0 : i32, i32
  }
  func.func @transform_5(%arg0: i32, %arg1: i32) -> (i32, i32) {
    %c0_i32 = arith.constant 0 : i32
    %c0_i32_0 = arith.constant 0 : i32
    return %arg0, %c0_i32 : i32, i32
  }
}

</mosaic_0001>

<llo_original>
// kernel: tpu_custom_call.1
$region0: #{tpu_custom_call.1}
  #allocation0 [shape = 'u32[]', space=smem, size = 0x4, offset = 0x4, fixed_abs, tag = 'smem constant byte address 0x4 - core index']
  #allocation1 [shape = 'u32[72,128]{1,0:T(1,128)}', space=vmem, size = 0x9000, scoped, tag = 'internal scratch']
  #allocation2 [shape = 'f32[256,128]{1,0:T(8,128)}', space=vmem, size = 0x20000, scoped, tag = 'scratch operand']
  %s0 = inlined_call_operand.hbm [shape: f32[512,128], index: 0, kind: input, shape index: {}]
  %s1 = inlined_call_operand.hbm [shape: bf16[128,512], index: 1, kind: input, shape index: {}]
  %s2 = inlined_call_operand.hbm [shape: f32[1,512], index: 2, kind: input, shape index: {}]
  %s3 = inlined_call_operand.hbm [shape: bf16[512,128], index: 3, kind: input, shape index: {}]
  %s4 = inlined_call_operand.vmem [shape: f32[1,128], index: 4, kind: input, shape index: {}]
  %s5 = inlined_call_operand.hbm [shape: f32[512,128], index: 5, kind: output, shape index: {}]
  %s6 = sld [smem:[#allocation0]]
  $region77: #{tpu_custom_call.1} parent=0
    _
  %s8 = ssub.s32 1, %s6
  %s9 = scalar_select 0, %s8, %s6
  $region1: #{tpu_custom_call.1} parent=0
    #allocation3 [shape = 'u8[262144]{0}', space=vmem, size = 0x40000, scoped, tag = 'input window, operand 0']
    #allocation4 [shape = 's32[2]{0}', space=sflag, size = 0x8, scoped, tag = 'scoped memory for tpu_custom_call.1']
    #allocation5 [shape = 's32[2]{0}', space=sflag, size = 0x8, scoped, tag = 'scoped memory for tpu_custom_call.1']
    #allocation6 [shape = 'u8[131072]{0}', space=vmem, size = 0x20000, scoped, tag = 'input window, operand 1, single buffered']
    #allocation7 [shape = 's32[1]{0}', space=sflag, size = 0x4, scoped, tag = 'scoped memory for tpu_custom_call.1']
    #allocation8 [shape = 'u8[2048]{0}', space=vmem, size = 0x800, scoped, tag = 'input window, operand 2, single buffered']
    #allocation9 [shape = 'u8[131072]{0}', space=vmem, size = 0x20000, scoped, tag = 'input window, operand 3, single buffered']
    #allocation10 [shape = 's32[1]{0}', space=sflag, size = 0x4, scoped, tag = 'scoped memory for tpu_custom_call.1']
    #allocation11 [shape = 'u8[262144]{0}', space=vmem, size = 0x40000, scoped, tag = 'output window, operand 0']
    %10 = vsyncpa [#allocation4], 0
    %s11 = scalar_lea.sflag [#allocation4], 1
    %12 = vsyncpa %s11, 0
    %13 = vsyncpa [#allocation7], 0
    %14 = vsyncpa [#allocation10], 0
    %15 = vsyncpa [#allocation5], 0
    %s16 = scalar_lea.sflag [#allocation5], 1
    %17 = vsyncpa %s16, 0
    loop: start=0, step=1, limit=4
    $region2: #{tpu_custom_call.1} parent=1 // loop_pre_header
      _
    $region3: #{tpu_custom_call.1} parent=1 // loop_header
      %s19 = sphi 0, %s23
      %p20 = scmp.ge.s32.totalorder %s19, 4
      %s26 = sphi 0, %s38
      %s27 = sphi 0, %s34
      %s28 = sphi 0, %s26
      %s29 = sphi 0, %s27
      %s30 = sphi 0, %s28
      %s31 = sphi 0, %s29
      %s41 = sphi 0, %s43
      %s44 = sphi 0, %s41
      %s45 = sphi 0, %s44
      %s61 = sphi 0, %s45
      %s67 = sphi 0, %s69
      %s70 = sphi 0, %s67
      %s71 = sphi 0, %s70
      %s87 = sphi 0, %s71
      %s93 = sphi 0, %s95
      %s96 = sphi 0, %s93
      %s97 = sphi 0, %s96
      %s113 = sphi 0, %s97
      %s119 = sphi 0, %s121
      %s122 = sphi 0, %s119
      %s123 = sphi 0, %s122
      %s139 = sphi 0, %s123
      %s143 = sphi 0, %s143
      %s145 = sphi 0, %s143
      %s146 = sphi 0, %s145
      %s160 = sphi 0, %s146
      %s166 = sphi 0, %s168
      %s169 = sphi 0, %s166
      %s170 = sphi 0, %s169
      %s186 = sphi 0, %s170
    $region4: #{tpu_custom_call.1} parent=1 // loop_header_branch
      %22 = sbr.rel (%p20) target = $region8
    $region5: #{tpu_custom_call.1} parent=1 // loop_body
      %s24 = ssub.s32 %s19, 1
      %s25 = ssub.s32 %s19, 2
      %s32 = sadd.s32 1, %s27
      %p33 = scmp.ge.s32.totalorder %s32, 1
      %s34 = scalar_select %p33, 0, %s32
      %s35 = sadd.s32 1, %s26
      %s36 = scalar_select %p33, %s35, %s26
      %p37 = scmp.ge.s32.totalorder %s36, 2
      %s38 = scalar_select %p37, 0, %s36
      %s39 = ssub.s32 %s26, %s38
      %p40 = scmp.eq.s32.totalorder %s39, 0
      %s42 = sadd.s32 %s41, 1
      %s43 = scalar_select %p40, %s41, %s42
      %p46 = pneg %p40
      %p47 = scmp.eq.s32.totalorder %s19, 1
      %p48 = por %p46, %p47
      %p49 = scmp.ne.s32.totalorder %s41, %s44
      %p50 = scmp.eq.s32.totalorder %s19, 0
      %p51 = por %p49, %p50
      %p52 = scmp.ne.s32.totalorder %s41, %s44
      %p53 = scmp.eq.s32.totalorder %s24, 1
      %p54 = por %p52, %p53
      %p55 = scmp.ne.s32.totalorder %s44, %s45
      %p56 = scmp.eq.s32.totalorder %s24, 0
      %p57 = por %p55, %p56
      %p58 = scmp.ne.s32.totalorder %s44, %s45
      %p59 = scmp.eq.s32.totalorder %s25, 1
      %p60 = por %p58, %p59
      %p62 = scmp.ne.s32.totalorder %s45, %s61
      %p63 = scmp.eq.s32.totalorder %s25, 0
      %p64 = por %p62, %p63
      %s65 = ssub.s32 %s27, %s34
      %p66 = scmp.eq.s32.totalorder %s65, 0
      %s68 = sadd.s32 %s67, 1
      %s69 = scalar_select %p66, %s67, %s68
      %p72 = pneg %p66
      %p73 = scmp.eq.s32.totalorder %s19, 1
      %p74 = por %p72, %p73
      %p75 = scmp.ne.s32.totalorder %s67, %s70
      %p76 = scmp.eq.s32.totalorder %s19, 0
      %p77 = por %p75, %p76
      %p78 = scmp.ne.s32.totalorder %s67, %s70
      %p79 = scmp.eq.s32.totalorder %s24, 1
      %p80 = por %p78, %p79
      %p81 = scmp.ne.s32.totalorder %s70, %s71
      %p82 = scmp.eq.s32.totalorder %s24, 0
      %p83 = por %p81, %p82
      %p84 = scmp.ne.s32.totalorder %s70, %s71
      %p85 = scmp.eq.s32.totalorder %s25, 1
      %p86 = por %p84, %p85
      %p88 = scmp.ne.s32.totalorder %s71, %s87
      %p89 = scmp.eq.s32.totalorder %s25, 0
      %p90 = por %p88, %p89
      %s91 = ssub.s32 %s27, %s34
      %p92 = scmp.eq.s32.totalorder %s91, 0
      %s94 = sadd.s32 %s93, 1
      %s95 = scalar_select %p92, %s93, %s94
      %p98 = pneg %p92
      %p99 = scmp.eq.s32.totalorder %s19, 1
      %p100 = por %p98, %p99
      %p101 = scmp.ne.s32.totalorder %s93, %s96
      %p102 = scmp.eq.s32.totalorder %s19, 0
      %p103 = por %p101, %p102
      %p104 = scmp.ne.s32.totalorder %s93, %s96
      %p105 = scmp.eq.s32.totalorder %s24, 1
      %p106 = por %p104, %p105
      %p107 = scmp.ne.s32.totalorder %s96, %s97
      %p108 = scmp.eq.s32.totalorder %s24, 0
      %p109 = por %p107, %p108
      %p110 = scmp.ne.s32.totalorder %s96, %s97
      %p111 = scmp.eq.s32.totalorder %s25, 1
      %p112 = por %p110, %p111
      %p114 = scmp.ne.s32.totalorder %s97, %s113
      %p115 = scmp.eq.s32.totalorder %s25, 0
      %p116 = por %p114, %p115
      %s117 = ssub.s32 %s27, %s34
      %p118 = scmp.eq.s32.totalorder %s117, 0
      %s120 = sadd.s32 %s119, 1
      %s121 = scalar_select %p118, %s119, %s120
      %p124 = pneg %p118
      %p125 = scmp.eq.s32.totalorder %s19, 1
      %p126 = por %p124, %p125
      %p127 = scmp.ne.s32.totalorder %s119, %s122
      %p128 = scmp.eq.s32.totalorder %s19, 0
      %p129 = por %p127, %p128
      %p130 = scmp.ne.s32.totalorder %s119, %s122
      %p131 = scmp.eq.s32.totalorder %s24, 1
      %p132 = por %p130, %p131
      %p133 = scmp.ne.s32.totalorder %s122, %s123
      %p134 = scmp.eq.s32.totalorder %s24, 0
      %p135 = por %p133, %p134
      %p136 = scmp.ne.s32.totalorder %s122, %s123
      %p137 = scmp.eq.s32.totalorder %s25, 1
      %p138 = por %p136, %p137
      %p140 = scmp.ne.s32.totalorder %s123, %s139
      %p141 = scmp.eq.s32.totalorder %s25, 0
      %p142 = por %p140, %p141
      %s144 = sadd.s32 %s143, 1
      %p147 = scmp.eq.s32.totalorder %s19, 1
      %p148 = scmp.ne.s32.totalorder %s143, %s145
      %p149 = scmp.eq.s32.totalorder %s19, 0
      %p150 = por %p148, %p149
      %p151 = scmp.ne.s32.totalorder %s143, %s145
      %p152 = scmp.eq.s32.totalorder %s24, 1
      %p153 = por %p151, %p152
      %p154 = scmp.ne.s32.totalorder %s145, %s146
      %p155 = scmp.eq.s32.totalorder %s24, 0
      %p156 = por %p154, %p155
      %p157 = scmp.ne.s32.totalorder %s145, %s146
      %p158 = scmp.eq.s32.totalorder %s25, 1
      %p159 = por %p157, %p158
      %p161 = scmp.ne.s32.totalorder %s146, %s160
      %p162 = scmp.eq.s32.totalorder %s25, 0
      %p163 = por %p161, %p162
      %s164 = ssub.s32 %s26, %s38
      %p165 = scmp.eq.s32.totalorder %s164, 0
      %s167 = sadd.s32 %s166, 1
      %s168 = scalar_select %p165, %s166, %s167
      %p171 = pneg %p165
      %p172 = scmp.eq.s32.totalorder %s19, 1
      %p173 = por %p171, %p172
      %p174 = scmp.ne.s32.totalorder %s166, %s169
      %p175 = scmp.eq.s32.totalorder %s19, 0
      %p176 = por %p174, %p175
      %p177 = scmp.ne.s32.totalorder %s166, %s169
      %p178 = scmp.eq.s32.totalorder %s24, 1
      %p179 = por %p177, %p178
      %p180 = scmp.ne.s32.totalorder %s169, %s170
      %p181 = scmp.eq.s32.totalorder %s24, 0
      %p182 = por %p180, %p181
      %p183 = scmp.ne.s32.totalorder %s169, %s170
      %p184 = scmp.eq.s32.totalorder %s25, 1
      %p185 = por %p183, %p184
      %p187 = scmp.ne.s32.totalorder %s170, %s186
      %p188 = scmp.eq.s32.totalorder %s25, 0
      %p189 = por %p187, %p188
      %p190 = scmp.le.s32.totalorder 1, %s19
      %p191 = scmp.lt.s32.totalorder %s19, 3
      %p192 = pnand %p190, %p191
      %p193 = pneg %p192
      // Predicated region
      $region9: #{tpu_custom_call.1} parent=5 // pred_check
        _
      $region10: #{tpu_custom_call.1} parent=5 // pred_check_branch
        %195 = sbr.rel (%p192) target = $region12
      $region11: #{tpu_custom_call.1} parent=5 // pred_region
        %s196 = ssub.s32 %s19, 1
        // Predicated region
        $region13: #{tpu_custom_call.1} parent=11 // pred_check
          %p197 = pneg %p83
        $region14: #{tpu_custom_call.1} parent=11 // pred_check_branch
          %199 = sbr.rel (%p197) target = $region16
        $region15: #{tpu_custom_call.1} parent=11 // pred_region
          %s200 = smul.u32 4, %s29
          %202 = vsyncadd [#allocation7], 0
          %s203 = smul.addr %s200, 4
          %s204 = scalar_lea.hbm %s1, %s203
          %s205 = sshll.u32 %s204, 4
          %s206 = int_to_ptr.hbm [resolvable:$true] %s205
          %s207 = sshll.u32 [#allocation6], 4
          %s208 = int_to_ptr.vmem [resolvable:$true] %s207
          %213 = dma.hbm_to_vmem [thread:$0]  %s206, 4096, %s208, [#allocation7], 256, 256, 16
        $region16: #{tpu_custom_call.1} parent=11 // pred_fallthru
          _
        // Predicated region
        $region17: #{tpu_custom_call.1} parent=11 // pred_check
          %p214 = pneg %p109
        $region18: #{tpu_custom_call.1} parent=11 // pred_check_branch
          %216 = sbr.rel (%p214) target = $region20
        $region19: #{tpu_custom_call.1} parent=11 // pred_region
          %s217 = smul.u32 4, %s29
          %219 = vsyncadd [#allocation7], 0
          %s220 = scalar_lea.hbm %s2, %s217
          %s222 = sshll.u32 %s220, 4
          %s223 = int_to_ptr.hbm [resolvable:$true] %s222
          %s224 = sshll.u32 [#allocation8], 4
          %s225 = int_to_ptr.vmem [resolvable:$true] %s224
          %227 = dma.hbm_to_vmem [thread:$0]  %s223, 64, %s225, [#allocation7]
        $region20: #{tpu_custom_call.1} parent=11 // pred_fallthru
          _
        // Predicated region
        $region21: #{tpu_custom_call.1} parent=11 // pred_check
          %p228 = pneg %p135
        $region22: #{tpu_custom_call.1} parent=11 // pred_check_branch
          %230 = sbr.rel (%p228) target = $region24
        $region23: #{tpu_custom_call.1} parent=11 // pred_region
          %s231 = smul.u32 64, %s29
          %233 = vsyncadd [#allocation10], 0
          %s234 = smul.addr %s231, 4
          %s235 = scalar_lea.hbm %s3, %s234
          %s236 = sshll.u32 %s235, 4
          %s237 = int_to_ptr.hbm [resolvable:$true] %s236
          %s238 = sshll.u32 [#allocation9], 4
          %s239 = int_to_ptr.vmem [resolvable:$true] %s238
          %244 = dma.hbm_to_vmem [thread:$0]  %s237, 4096, %s239, [#allocation10], 64, 64, 4
        $region24: #{tpu_custom_call.1} parent=11 // pred_fallthru
          _
        // Predicated region
        $region25: #{tpu_custom_call.1} parent=11 // pred_check
          %p245 = pneg %p156
        $region26: #{tpu_custom_call.1} parent=11 // pred_check_branch
          %247 = sbr.rel (%p245) target = $region28
        $region27: #{tpu_custom_call.1} parent=11 // pred_region
          _
        $region28: #{tpu_custom_call.1} parent=11 // pred_fallthru
          _
      $region12: #{tpu_custom_call.1} parent=5 // pred_fallthru
        _
      %p248 = scmp.lt.s32.totalorder %s19, 2
      // Predicated region
      $region29: #{tpu_custom_call.1} parent=5 // pred_check
        %p249 = pneg %p248
      $region30: #{tpu_custom_call.1} parent=5 // pred_check_branch
        %251 = sbr.rel (%p249) target = $region32
      $region31: #{tpu_custom_call.1} parent=5 // pred_region
        // Predicated region
        $region33: #{tpu_custom_call.1} parent=31 // pred_check
          %p252 = pneg %p51
        $region34: #{tpu_custom_call.1} parent=31 // pred_check_branch
          %254 = sbr.rel (%p252) target = $region36
        $region35: #{tpu_custom_call.1} parent=31 // pred_region
          %s255 = sand.u32 %s41, 1
          %s256 = scalar_lea.sflag [#allocation4], %s255
          %s257 = sand.u32 %s41, 1
          %s258 = smul.addr %s257, 256
          %s259 = scalar_lea.vmem [#allocation3], %s258
          %s260 = smul.u32 32, %s26
          %262 = vsyncadd %s256, 0
          %s263 = smul.addr %s260, 8
          %s264 = scalar_lea.hbm %s0, %s263
          %s265 = sshll.u32 %s264, 4
          %s266 = int_to_ptr.hbm [resolvable:$true] %s265
          %s267 = sshll.u32 %s259, 4
          %s268 = int_to_ptr.vmem [resolvable:$true] %s267
          %273 = dma.hbm_to_vmem [thread:$0]  %s266, 4096, %s268, %s256, 128, 128, 8
        $region36: #{tpu_custom_call.1} parent=31 // pred_fallthru
          _
      $region32: #{tpu_custom_call.1} parent=5 // pred_fallthru
        _
      %p274 = scmp.le.s32.totalorder 1, %s19
      %p275 = scmp.lt.s32.totalorder %s19, 3
      %p276 = pnand %p274, %p275
      %p277 = pneg %p276
      // Predicated region
      $region37: #{tpu_custom_call.1} parent=5 // pred_check
        _
      $region38: #{tpu_custom_call.1} parent=5 // pred_check_branch
        %279 = sbr.rel (%p276) target = $region40
      $region39: #{tpu_custom_call.1} parent=5 // pred_region
        %s280 = ssub.s32 %s19, 1
        %s281 = sand.u32 %s44, 1
        %s282 = scalar_lea.sflag [#allocation4], %s281
        %s283 = sand.u32 %s44, 1
        %s284 = smul.addr %s283, 256
        %s285 = scalar_lea.vmem [#allocation3], %s284
        // Predicated region
        $region41: #{tpu_custom_call.1} parent=39 // pred_check
          %p286 = pneg %p57
        $region42: #{tpu_custom_call.1} parent=39 // pred_check_branch
          %288 = sbr.rel (%p286) target = $region44
        $region43: #{tpu_custom_call.1} parent=39 // pred_region
          %290 = dma.done %s282, 4096
        $region44: #{tpu_custom_call.1} parent=39 // pred_fallthru
          _
        // Predicated region
        $region45: #{tpu_custom_call.1} parent=39 // pred_check
          %p291 = pneg %p83
        $region46: #{tpu_custom_call.1} parent=39 // pred_check_branch
          %293 = sbr.rel (%p291) target = $region48
        $region47: #{tpu_custom_call.1} parent=39 // pred_region
          %295 = dma.done [#allocation7], 4096
        $region48: #{tpu_custom_call.1} parent=39 // pred_fallthru
          _
        // Predicated region
        $region49: #{tpu_custom_call.1} parent=39 // pred_check
          %p296 = pneg %p109
        $region50: #{tpu_custom_call.1} parent=39 // pred_check_branch
          %298 = sbr.rel (%p296) target = $region52
        $region51: #{tpu_custom_call.1} parent=39 // pred_region
          %300 = dma.done [#allocation7], 64
        $region52: #{tpu_custom_call.1} parent=39 // pred_fallthru
          _
        // Predicated region
        $region53: #{tpu_custom_call.1} parent=39 // pred_check
          %p301 = pneg %p135
        $region54: #{tpu_custom_call.1} parent=39 // pred_check_branch
          %303 = sbr.rel (%p301) target = $region56
        $region55: #{tpu_custom_call.1} parent=39 // pred_region
          %305 = dma.done [#allocation10], 4096
        $region56: #{tpu_custom_call.1} parent=39 // pred_fallthru
          _
        %s306 = sand.u32 %s44, 1
        %s307 = scalar_lea.sflag [#allocation4], %s306
        %s308 = sand.u32 %s44, 1
        %s309 = smul.addr %s308, 256
        %s310 = scalar_lea.vmem [#allocation3], %s309
        %p311 = pneg %p57
        %p312 = pneg %p54
        %p313 = pneg %p83
        %p314 = pneg %p80
        %p315 = pneg %p109
        %p316 = pneg %p106
        %p317 = pneg %p135
        %p318 = pneg %p132
        %p319 = pneg %p156
        %p320 = pneg %p153
        %p321 = pneg %p182
        %p322 = pneg %p179
        %s323 = sand.u32 %s169, 1
        %s324 = scalar_lea.sflag [#allocation5], %s323
        %s325 = sand.u32 %s169, 1
        %s326 = smul.addr %s325, 256
        %s327 = scalar_lea.vmem [#allocation11], %s326
        %s328 = smul.u32 32, %s28
        %s329 = smul.u32 4, %s29
        %s330 = smul.u32 4, %s29
        %s331 = smul.u32 64, %s29
        %s332 = smul.u32 32, %s28
        %p333 = scmp.eq.s32.totalorder %s29, 0
        // Predicated region
        $region57: #{tpu_custom_call.1} parent=39 // pred_check
          %p334 = pneg %p333
        $region58: #{tpu_custom_call.1} parent=39 // pred_check_branch
          %336 = sbr.rel (%p334) target = $region60
        $region59: #{tpu_custom_call.1} parent=39 // pred_region
          %337 = vst [vmem:[#allocation2] sm:$0xff] 0.0
          %338 = vst [vmem:[#allocation2 + $0x8] sm:$0xff] 0.0
          %339 = vst [vmem:[#allocation2 + $0x10] sm:$0xff] 0.0
          %340 = vst [vmem:[#allocation2 + $0x18] sm:$0xff] 0.0
          %341 = vst [vmem:[#allocation2 + $0x20] sm:$0xff] 0.0
          %342 = vst [vmem:[#allocation2 + $0x28] sm:$0xff] 0.0
          %343 = vst [vmem:[#allocation2 + $0x30] sm:$0xff] 0.0
          %344 = vst [vmem:[#allocation2 + $0x38] sm:$0xff] 0.0
          %345 = vst [vmem:[#allocation2 + $0x40] sm:$0xff] 0.0
          %346 = vst [vmem:[#allocation2 + $0x48] sm:$0xff] 0.0
          %347 = vst [vmem:[#allocation2 + $0x50] sm:$0xff] 0.0
          %348 = vst [vmem:[#allocation2 + $0x58] sm:$0xff] 0.0
          %349 = vst [vmem:[#allocation2 + $0x60] sm:$0xff] 0.0
          %350 = vst [vmem:[#allocation2 + $0x68] sm:$0xff] 0.0
          %351 = vst [vmem:[#allocation2 + $0x70] sm:$0xff] 0.0
          %352 = vst [vmem:[#allocation2 + $0x78] sm:$0xff] 0.0
          %353 = vst [vmem:[#allocation2 + $0x80] sm:$0xff] 0.0
          %354 = vst [vmem:[#allocation2 + $0x88] sm:$0xff] 0.0
          %355 = vst [vmem:[#allocation2 + $0x90] sm:$0xff] 0.0
          %356 = vst [vmem:[#allocation2 + $0x98] sm:$0xff] 0.0
          %357 = vst [vmem:[#allocation2 + $0xa0] sm:$0xff] 0.0
          %358 = vst [vmem:[#allocation2 + $0xa8] sm:$0xff] 0.0
          %359 = vst [vmem:[#allocation2 + $0xb0] sm:$0xff] 0.0
          %360 = vst [vmem:[#allocation2 + $0xb8] sm:$0xff] 0.0
          %361 = vst [vmem:[#allocation2 + $0xc0] sm:$0xff] 0.0
          %362 = vst [vmem:[#allocation2 + $0xc8] sm:$0xff] 0.0
          %363 = vst [vmem:[#allocation2 + $0xd0] sm:$0xff] 0.0
          %364 = vst [vmem:[#allocation2 + $0xd8] sm:$0xff] 0.0
          %365 = vst [vmem:[#allocation2 + $0xe0] sm:$0xff] 0.0
          %366 = vst [vmem:[#allocation2 + $0xe8] sm:$0xff] 0.0
          %367 = vst [vmem:[#allocation2 + $0xf0] sm:$0xff] 0.0
          %368 = vst [vmem:[#allocation2 + $0xf8] sm:$0xff] 0.0
        $region60: #{tpu_custom_call.1} parent=39 // pred_fallthru
          _
        %v369 = vld [vmem:[%s285] sm:$0xff]
        %v370 = vld [vmem:[%s285 + $0x8] sm:$0xff]
        %v371 = vld [vmem:[%s285 + $0x10] sm:$0xff]
        %v372 = vld [vmem:[%s285 + $0x18] sm:$0xff]
        %v373 = vld [vmem:[%s285 + $0x20] sm:$0xff]
        %v374 = vld [vmem:[%s285 + $0x28] sm:$0xff]
        %v375 = vld [vmem:[%s285 + $0x30] sm:$0xff]
        %v376 = vld [vmem:[%s285 + $0x38] sm:$0xff]
        %v377 = vld [vmem:[%s285 + $0x40] sm:$0xff]
        %v378 = vld [vmem:[%s285 + $0x48] sm:$0xff]
        %v379 = vld [vmem:[%s285 + $0x50] sm:$0xff]
        %v380 = vld [vmem:[%s285 + $0x58] sm:$0xff]
        %v381 = vld [vmem:[%s285 + $0x60] sm:$0xff]
        %v382 = vld [vmem:[%s285 + $0x68] sm:$0xff]
        %v383 = vld [vmem:[%s285 + $0x70] sm:$0xff]
        %v384 = vld [vmem:[%s285 + $0x78] sm:$0xff]
        %v385 = vld [vmem:[%s285 + $0x80] sm:$0xff]
        %v386 = vld [vmem:[%s285 + $0x88] sm:$0xff]
        %v387 = vld [vmem:[%s285 + $0x90] sm:$0xff]
        %v388 = vld [vmem:[%s285 + $0x98] sm:$0xff]
        %v389 = vld [vmem:[%s285 + $0xa0] sm:$0xff]
        %v390 = vld [vmem:[%s285 + $0xa8] sm:$0xff]
        %v391 = vld [vmem:[%s285 + $0xb0] sm:$0xff]
        %v392 = vld [vmem:[%s285 + $0xb8] sm:$0xff]
        %v393 = vld [vmem:[%s285 + $0xc0] sm:$0xff]
        %v394 = vld [vmem:[%s285 + $0xc8] sm:$0xff]
        %v395 = vld [vmem:[%s285 + $0xd0] sm:$0xff]
        %v396 = vld [vmem:[%s285 + $0xd8] sm:$0xff]
        %v397 = vld [vmem:[%s285 + $0xe0] sm:$0xff]
        %v398 = vld [vmem:[%s285 + $0xe8] sm:$0xff]
        %v399 = vld [vmem:[%s285 + $0xf0] sm:$0xff]
        %v400 = vld [vmem:[%s285 + $0xf8] sm:$0xff]
        %v401 = vpack.c.bf16 %v370, %v369
        %v402 = vpack.c.bf16 %v372, %v371
        %v403 = vpack.c.bf16 %v374, %v373
        %v404 = vpack.c.bf16 %v376, %v375
        %v405 = vpack.c.bf16 %v378, %v377
        %v406 = vpack.c.bf16 %v380, %v379
        %v407 = vpack.c.bf16 %v382, %v381
        %v408 = vpack.c.bf16 %v384, %v383
        %v409 = vpack.c.bf16 %v386, %v385
        %v410 = vpack.c.bf16 %v388, %v387
        %v411 = vpack.c.bf16 %v390, %v389
        %v412 = vpack.c.bf16 %v392, %v391
        %v413 = vpack.c.bf16 %v394, %v393
        %v414 = vpack.c.bf16 %v396, %v395
        %v415 = vpack.c.bf16 %v398, %v397
        %v416 = vpack.c.bf16 %v400, %v399
        %v417 = vld [vmem:[#allocation6] sm:$0xff]
        %v418 = vld [vmem:[#allocation6 + $0x8] sm:$0xff]
        %v419 = vld [vmem:[#allocation6 + $0x10] sm:$0xff]
        %v420 = vld [vmem:[#allocation6 + $0x18] sm:$0xff]
        %v421 = vld [vmem:[#allocation6 + $0x20] sm:$0xff]
        %v422 = vld [vmem:[#allocation6 + $0x28] sm:$0xff]
        %v423 = vld [vmem:[#allocation6 + $0x30] sm:$0xff]
        %v424 = vld [vmem:[#allocation6 + $0x38] sm:$0xff]
        %v425 = vld [vmem:[#allocation6 + $0x40] sm:$0xff]
        %v426 = vld [vmem:[#allocation6 + $0x48] sm:$0xff]
        %v427 = vld [vmem:[#allocation6 + $0x50] sm:$0xff]
        %v428 = vld [vmem:[#allocation6 + $0x58] sm:$0xff]
        %v429 = vld [vmem:[#allocation6 + $0x60] sm:$0xff]
        %v430 = vld [vmem:[#allocation6 + $0x68] sm:$0xff]
        %v431 = vld [vmem:[#allocation6 + $0x70] sm:$0xff]
        %v432 = vld [vmem:[#allocation6 + $0x78] sm:$0xff]
        %v433 = vld [vmem:[#allocation6 + $0x80] sm:$0xff]
        %v434 = vld [vmem:[#allocation6 + $0x88] sm:$0xff]
        %v435 = vld [vmem:[#allocation6 + $0x90] sm:$0xff]
        %v436 = vld [vmem:[#allocation6 + $0x98] sm:$0xff]
        %v437 = vld [vmem:[#allocation6 + $0xa0] sm:$0xff]
        %v438 = vld [vmem:[#allocation6 + $0xa8] sm:$0xff]
        %v439 = vld [vmem:[#allocation6 + $0xb0] sm:$0xff]
        %v440 = vld [vmem:[#allocation6 + $0xb8] sm:$0xff]
        %v441 = vld [vmem:[#allocation6 + $0xc0] sm:$0xff]
        %v442 = vld [vmem:[#allocation6 + $0xc8] sm:$0xff]
        %v443 = vld [vmem:[#allocation6 + $0xd0] sm:$0xff]
        %v444 = vld [vmem:[#allocation6 + $0xd8] sm:$0xff]
        %v445 = vld [vmem:[#allocation6 + $0xe0] sm:$0xff]
        %v446 = vld [vmem:[#allocation6 + $0xe8] sm:$0xff]
        %v447 = vld [vmem:[#allocation6 + $0xf0] sm:$0xff]
        %v448 = vld [vmem:[#allocation6 + $0xf8] sm:$0xff]
        %v449 = vld [vmem:[#allocation8] sm:$0xf]
        %v451 = vperm.slane %v449, 0
        %v452 = vperm.slane %v449, 1
        %v453 = vperm.slane %v449, 2
        %v454 = vperm.slane %v449, 3
        %v491 = vunpack.c.l.b16 %v417
        %v492 = vunpack.c.h.b16 %v417
        %v493 = vunpack.c.l.b16 %v418
        %v494 = vunpack.c.h.b16 %v418
        %v495 = vunpack.c.l.b16 %v419
        %v496 = vunpack.c.h.b16 %v419
        %v497 = vunpack.c.l.b16 %v420
        %v498 = vunpack.c.h.b16 %v420
        %v499 = vunpack.c.l.b16 %v421
        %v500 = vunpack.c.h.b16 %v421
        %v501 = vunpack.c.l.b16 %v422
        %v502 = vunpack.c.h.b16 %v422
        %v503 = vunpack.c.l.b16 %v423
        %v504 = vunpack.c.h.b16 %v423
        %v505 = vunpack.c.l.b16 %v424
        %v506 = vunpack.c.h.b16 %v424
        %v507 = vunpack.c.l.b16 %v425
        %v508 = vunpack.c.h.b16 %v425
        %v509 = vunpack.c.l.b16 %v426
        %v510 = vunpack.c.h.b16 %v426
        %v511 = vunpack.c.l.b16 %v427
        %v512 = vunpack.c.h.b16 %v427
        %v513 = vunpack.c.l.b16 %v428
        %v514 = vunpack.c.h.b16 %v428
        %v515 = vunpack.c.l.b16 %v429
        %v516 = vunpack.c.h.b16 %v429
        %v517 = vunpack.c.l.b16 %v430
        %v518 = vunpack.c.h.b16 %v430
        %v519 = vunpack.c.l.b16 %v431
        %v520 = vunpack.c.h.b16 %v431
        %v521 = vunpack.c.l.b16 %v432
        %v522 = vunpack.c.h.b16 %v432
        %v523 = vunpack.c.l.b16 %v433
        %v524 = vunpack.c.h.b16 %v433
        %v525 = vunpack.c.l.b16 %v434
        %v526 = vunpack.c.h.b16 %v434
        %v527 = vunpack.c.l.b16 %v435
        %v528 = vunpack.c.h.b16 %v435
        %v529 = vunpack.c.l.b16 %v436
        %v530 = vunpack.c.h.b16 %v436
        %v531 = vunpack.c.l.b16 %v437
        %v532 = vunpack.c.h.b16 %v437
        %v533 = vunpack.c.l.b16 %v438
        %v534 = vunpack.c.h.b16 %v438
        %v535 = vunpack.c.l.b16 %v439
        %v536 = vunpack.c.h.b16 %v439
        %v537 = vunpack.c.l.b16 %v440
        %v538 = vunpack.c.h.b16 %v440
        %v539 = vunpack.c.l.b16 %v441
        %v540 = vunpack.c.h.b16 %v441
        %v541 = vunpack.c.l.b16 %v442
        %v542 = vunpack.c.h.b16 %v442
        %v543 = vunpack.c.l.b16 %v443
        %v544 = vunpack.c.h.b16 %v443
        %v545 = vunpack.c.l.b16 %v444
        %v546 = vunpack.c.h.b16 %v444
        %v547 = vunpack.c.l.b16 %v445
        %v548 = vunpack.c.h.b16 %v445
        %v549 = vunpack.c.l.b16 %v446
        %v550 = vunpack.c.h.b16 %v446
        %v551 = vunpack.c.l.b16 %v447
        %v552 = vunpack.c.h.b16 %v447
        %v553 = vunpack.c.l.b16 %v448
        %v554 = vunpack.c.h.b16 %v448
        %v555 = vpack.c.b16 %v495, %v491
        %v556 = vpack.c.b16 %v496, %v492
        %v557 = vpack.c.b16 %v497, %v493
        %v558 = vpack.c.b16 %v498, %v494
        %v559 = vpack.c.b16 %v503, %v499
        %v560 = vpack.c.b16 %v504, %v500
        %v561 = vpack.c.b16 %v505, %v501
        %v562 = vpack.c.b16 %v506, %v502
        %v563 = vpack.c.b16 %v511, %v507
        %v564 = vpack.c.b16 %v512, %v508
        %v565 = vpack.c.b16 %v513, %v509
        %v566 = vpack.c.b16 %v514, %v510
        %v567 = vpack.c.b16 %v519, %v515
        %v568 = vpack.c.b16 %v520, %v516
        %v569 = vpack.c.b16 %v521, %v517
        %v570 = vpack.c.b16 %v522, %v518
        %v571 = vpack.c.b16 %v527, %v523
        %v572 = vpack.c.b16 %v528, %v524
        %v573 = vpack.c.b16 %v529, %v525
        %v574 = vpack.c.b16 %v530, %v526
        %v575 = vpack.c.b16 %v535, %v531
        %v576 = vpack.c.b16 %v536, %v532
        %v577 = vpack.c.b16 %v537, %v533
        %v578 = vpack.c.b16 %v538, %v534
        %v579 = vpack.c.b16 %v543, %v539
        %v580 = vpack.c.b16 %v544, %v540
        %v581 = vpack.c.b16 %v545, %v541
        %v582 = vpack.c.b16 %v546, %v542
        %v583 = vpack.c.b16 %v551, %v547
        %v584 = vpack.c.b16 %v552, %v548
        %v585 = vpack.c.b16 %v553, %v549
        %v586 = vpack.c.b16 %v554, %v550
        %619 = vmatpush.bf16.msra.mxu0 %v583
        %620 = vmatpush.bf16.msra.mxu0 %v579
        %621 = vmatpush.bf16.msra.mxu0 %v575
        %622 = vmatpush.bf16.msra.mxu0 %v571
        %623 = vmatpush.bf16.msra.mxu0 %v567
        %624 = vmatpush.bf16.msra.mxu0 %v563
        %625 = vmatpush.bf16.msra.mxu0 %v559
        %626 = vmatpush.bf16.msra.mxu0 %v555
        %627 = vmatmul.bf16.gmra.mxu0 %v401
        %v628 = vpop.f32.mrf.mxu0
        %v629 = vadd.f32 %v451, %v628
        %v630 = vpop.f32.mrf.mxu0
        %v631 = vadd.f32 %v451, %v630
        %632 = vmatmul.bf16.gmra.mxu0 %v402
        %v633 = vpop.f32.mrf.mxu0
        %v634 = vadd.f32 %v451, %v633
        %v635 = vpop.f32.mrf.mxu0
        %v636 = vadd.f32 %v451, %v635
        %637 = vmatmul.bf16.gmra.mxu0 %v403
        %v638 = vpop.f32.mrf.mxu0
        %v639 = vadd.f32 %v451, %v638
        %v640 = vpop.f32.mrf.mxu0
        %v641 = vadd.f32 %v451, %v640
        %642 = vmatmul.bf16.gmra.mxu0 %v404
        %v643 = vpop.f32.mrf.mxu0
        %v644 = vadd.f32 %v451, %v643
        %v645 = vpop.f32.mrf.mxu0
        %v646 = vadd.f32 %v451, %v645
        %647 = vmatmul.bf16.gmra.mxu0 %v405
        %v648 = vpop.f32.mrf.mxu0
        %v649 = vadd.f32 %v451, %v648
        %v650 = vpop.f32.mrf.mxu0
        %v651 = vadd.f32 %v451, %v650
        %652 = vmatmul.bf16.gmra.mxu0 %v406
        %v653 = vpop.f32.mrf.mxu0
        %v654 = vadd.f32 %v451, %v653
        %v655 = vpop.f32.mrf.mxu0
        %v656 = vadd.f32 %v451, %v655
        %657 = vmatmul.bf16.gmra.mxu0 %v407
        %v658 = vpop.f32.mrf.mxu0
        %v659 = vadd.f32 %v451, %v658
        %v660 = vpop.f32.mrf.mxu0
        %v661 = vadd.f32 %v451, %v660
        %662 = vmatmul.bf16.gmra.mxu0 %v408
        %v663 = vpop.f32.mrf.mxu0
        %v664 = vadd.f32 %v451, %v663
        %v665 = vpop.f32.mrf.mxu0
        %v666 = vadd.f32 %v451, %v665
        %667 = vmatmul.bf16.gmra.mxu0 %v409
        %v668 = vpop.f32.mrf.mxu0
        %v669 = vadd.f32 %v451, %v668
        %v670 = vpop.f32.mrf.mxu0
        %v671 = vadd.f32 %v451, %v670
        %672 = vmatmul.bf16.gmra.mxu0 %v410
        %v673 = vpop.f32.mrf.mxu0
        %v674 = vadd.f32 %v451, %v673
        %v675 = vpop.f32.mrf.mxu0
        %v676 = vadd.f32 %v451, %v675
        %677 = vmatmul.bf16.gmra.mxu0 %v411
        %v678 = vpop.f32.mrf.mxu0
        %v679 = vadd.f32 %v451, %v678
        %v680 = vpop.f32.mrf.mxu0
        %v681 = vadd.f32 %v451, %v680
        %682 = vmatmul.bf16.gmra.mxu0 %v412
        %v683 = vpop.f32.mrf.mxu0
        %v684 = vadd.f32 %v451, %v683
        %v685 = vpop.f32.mrf.mxu0
        %v686 = vadd.f32 %v451, %v685
        %687 = vmatmul.bf16.gmra.mxu0 %v413
        %v688 = vpop.f32.mrf.mxu0
        %v689 = vadd.f32 %v451, %v688
        %v690 = vpop.f32.mrf.mxu0
        %v691 = vadd.f32 %v451, %v690
        %692 = vmatmul.bf16.gmra.mxu0 %v414
        %v693 = vpop.f32.mrf.mxu0
        %v694 = vadd.f32 %v451, %v693
        %v695 = vpop.f32.mrf.mxu0
        %v696 = vadd.f32 %v451, %v695
        %697 = vmatmul.bf16.gmra.mxu0 %v415
        %v698 = vpop.f32.mrf.mxu0
        %v699 = vadd.f32 %v451, %v698
        %v700 = vpop.f32.mrf.mxu0
        %v701 = vadd.f32 %v451, %v700
        %702 = vmatmul.bf16.gmra.mxu0 %v416
        %v703 = vpop.f32.mrf.mxu0
        %v704 = vadd.f32 %v451, %v703
        %v705 = vpop.f32.mrf.mxu0
        %v706 = vadd.f32 %v451, %v705
        %707 = vdwg.mxu0
        %708 = vmatpush.bf16.msra.mxu0 %v584
        %709 = vmatpush.bf16.msra.mxu0 %v580
        %710 = vmatpush.bf16.msra.mxu0 %v576
        %711 = vmatpush.bf16.msra.mxu0 %v572
        %712 = vmatpush.bf16.msra.mxu0 %v568
        %713 = vmatpush.bf16.msra.mxu0 %v564
        %714 = vmatpush.bf16.msra.mxu0 %v560
        %715 = vmatpush.bf16.msra.mxu0 %v556
        %716 = vmatmul.bf16.gmra.mxu0 %v401
        %v717 = vpop.f32.mrf.mxu0
        %v718 = vadd.f32 %v452, %v717
        %v719 = vpop.f32.mrf.mxu0
        %v720 = vadd.f32 %v452, %v719
        %721 = vmatmul.bf16.gmra.mxu0 %v402
        %v722 = vpop.f32.mrf.mxu0
        %v723 = vadd.f32 %v452, %v722
        %v724 = vpop.f32.mrf.mxu0
        %v725 = vadd.f32 %v452, %v724
        %726 = vmatmul.bf16.gmra.mxu0 %v403
        %v727 = vpop.f32.mrf.mxu0
        %v728 = vadd.f32 %v452, %v727
        %v729 = vpop.f32.mrf.mxu0
        %v730 = vadd.f32 %v452, %v729
        %731 = vmatmul.bf16.gmra.mxu0 %v404
        %v732 = vpop.f32.mrf.mxu0
        %v733 = vadd.f32 %v452, %v732
        %v734 = vpop.f32.mrf.mxu0
        %v735 = vadd.f32 %v452, %v734
        %736 = vmatmul.bf16.gmra.mxu0 %v405
        %v737 = vpop.f32.mrf.mxu0
        %v738 = vadd.f32 %v452, %v737
        %v739 = vpop.f32.mrf.mxu0
        %v740 = vadd.f32 %v452, %v739
        %741 = vmatmul.bf16.gmra.mxu0 %v406
        %v742 = vpop.f32.mrf.mxu0
        %v743 = vadd.f32 %v452, %v742
        %v744 = vpop.f32.mrf.mxu0
        %v745 = vadd.f32 %v452, %v744
        %746 = vmatmul.bf16.gmra.mxu0 %v407
        %v747 = vpop.f32.mrf.mxu0
        %v748 = vadd.f32 %v452, %v747
        %v749 = vpop.f32.mrf.mxu0
        %v750 = vadd.f32 %v452, %v749
        %751 = vmatmul.bf16.gmra.mxu0 %v408
        %v752 = vpop.f32.mrf.mxu0
        %v753 = vadd.f32 %v452, %v752
        %v754 = vpop.f32.mrf.mxu0
        %v755 = vadd.f32 %v452, %v754
        %756 = vmatmul.bf16.gmra.mxu0 %v409
        %v757 = vpop.f32.mrf.mxu0
        %v758 = vadd.f32 %v452, %v757
        %v759 = vpop.f32.mrf.mxu0
        %v760 = vadd.f32 %v452, %v759
        %761 = vmatmul.bf16.gmra.mxu0 %v410
        %v762 = vpop.f32.mrf.mxu0
        %v763 = vadd.f32 %v452, %v762
        %v764 = vpop.f32.mrf.mxu0
        %v765 = vadd.f32 %v452, %v764
        %766 = vmatmul.bf16.gmra.mxu0 %v411
        %v767 = vpop.f32.mrf.mxu0
        %v768 = vadd.f32 %v452, %v767
        %v769 = vpop.f32.mrf.mxu0
        %v770 = vadd.f32 %v452, %v769
        %771 = vmatmul.bf16.gmra.mxu0 %v412
        %v772 = vpop.f32.mrf.mxu0
        %v773 = vadd.f32 %v452, %v772
        %v774 = vpop.f32.mrf.mxu0
        %v775 = vadd.f32 %v452, %v774
        %776 = vmatmul.bf16.gmra.mxu0 %v413
        %v777 = vpop.f32.mrf.mxu0
        %v778 = vadd.f32 %v452, %v777
        %v779 = vpop.f32.mrf.mxu0
        %v780 = vadd.f32 %v452, %v779
        %781 = vmatmul.bf16.gmra.mxu0 %v414
        %v782 = vpop.f32.mrf.mxu0
        %v783 = vadd.f32 %v452, %v782
        %v784 = vpop.f32.mrf.mxu0
        %v785 = vadd.f32 %v452, %v784
        %786 = vmatmul.bf16.gmra.mxu0 %v415
        %v787 = vpop.f32.mrf.mxu0
        %v788 = vadd.f32 %v452, %v787
        %v789 = vpop.f32.mrf.mxu0
        %v790 = vadd.f32 %v452, %v789
        %791 = vmatmul.bf16.gmra.mxu0 %v416
        %v792 = vpop.f32.mrf.mxu0
        %v793 = vadd.f32 %v452, %v792
        %v794 = vpop.f32.mrf.mxu0
        %v795 = vadd.f32 %v452, %v794
        %796 = vdwg.mxu0
        %797 = vmatpush.bf16.msra.mxu0 %v585
        %798 = vmatpush.bf16.msra.mxu0 %v581
        %799 = vmatpush.bf16.msra.mxu0 %v577
        %800 = vmatpush.bf16.msra.mxu0 %v573
        %801 = vmatpush.bf16.msra.mxu0 %v569
        %802 = vmatpush.bf16.msra.mxu0 %v565
        %803 = vmatpush.bf16.msra.mxu0 %v561
        %804 = vmatpush.bf16.msra.mxu0 %v557
        %805 = vmatmul.bf16.gmra.mxu0 %v401
        %v806 = vpop.f32.mrf.mxu0
        %v807 = vadd.f32 %v453, %v806
        %v808 = vpop.f32.mrf.mxu0
        %v809 = vadd.f32 %v453, %v808
        %810 = vmatmul.bf16.gmra.mxu0 %v402
        %v811 = vpop.f32.mrf.mxu0
        %v812 = vadd.f32 %v453, %v811
        %v813 = vpop.f32.mrf.mxu0
        %v814 = vadd.f32 %v453, %v813
        %815 = vmatmul.bf16.gmra.mxu0 %v403
        %v816 = vpop.f32.mrf.mxu0
        %v817 = vadd.f32 %v453, %v816
        %v818 = vpop.f32.mrf.mxu0
        %v819 = vadd.f32 %v453, %v818
        %820 = vmatmul.bf16.gmra.mxu0 %v404
        %v821 = vpop.f32.mrf.mxu0
        %v822 = vadd.f32 %v453, %v821
        %v823 = vpop.f32.mrf.mxu0
        %v824 = vadd.f32 %v453, %v823
        %825 = vmatmul.bf16.gmra.mxu0 %v405
        %v826 = vpop.f32.mrf.mxu0
        %v827 = vadd.f32 %v453, %v826
        %v828 = vpop.f32.mrf.mxu0
        %v829 = vadd.f32 %v453, %v828
        %830 = vmatmul.bf16.gmra.mxu0 %v406
        %v831 = vpop.f32.mrf.mxu0
        %v832 = vadd.f32 %v453, %v831
        %v833 = vpop.f32.mrf.mxu0
        %v834 = vadd.f32 %v453, %v833
        %835 = vmatmul.bf16.gmra.mxu0 %v407
        %v836 = vpop.f32.mrf.mxu0
        %v837 = vadd.f32 %v453, %v836
        %v838 = vpop.f32.mrf.mxu0
        %v839 = vadd.f32 %v453, %v838
        %840 = vmatmul.bf16.gmra.mxu0 %v408
        %v841 = vpop.f32.mrf.mxu0
        %v842 = vadd.f32 %v453, %v841
        %v843 = vpop.f32.mrf.mxu0
        %v844 = vadd.f32 %v453, %v843
        %845 = vmatmul.bf16.gmra.mxu0 %v409
        %v846 = vpop.f32.mrf.mxu0
        %v847 = vadd.f32 %v453, %v846
        %v848 = vpop.f32.mrf.mxu0
        %v849 = vadd.f32 %v453, %v848
        %850 = vmatmul.bf16.gmra.mxu0 %v410
        %v851 = vpop.f32.mrf.mxu0
        %v852 = vadd.f32 %v453, %v851
        %v853 = vpop.f32.mrf.mxu0
        %v854 = vadd.f32 %v453, %v853
        %855 = vmatmul.bf16.gmra.mxu0 %v411
        %v856 = vpop.f32.mrf.mxu0
        %v857 = vadd.f32 %v453, %v856
        %v858 = vpop.f32.mrf.mxu0
        %v859 = vadd.f32 %v453, %v858
        %860 = vmatmul.bf16.gmra.mxu0 %v412
        %v861 = vpop.f32.mrf.mxu0
        %v862 = vadd.f32 %v453, %v861
        %v863 = vpop.f32.mrf.mxu0
        %v864 = vadd.f32 %v453, %v863
        %865 = vmatmul.bf16.gmra.mxu0 %v413
        %v866 = vpop.f32.mrf.mxu0
        %v867 = vadd.f32 %v453, %v866
        %v868 = vpop.f32.mrf.mxu0
        %v869 = vadd.f32 %v453, %v868
        %870 = vmatmul.bf16.gmra.mxu0 %v414
        %v871 = vpop.f32.mrf.mxu0
        %v872 = vadd.f32 %v453, %v871
        %v873 = vpop.f32.mrf.mxu0
        %v874 = vadd.f32 %v453, %v873
        %875 = vmatmul.bf16.gmra.mxu0 %v415
        %v876 = vpop.f32.mrf.mxu0
        %v877 = vadd.f32 %v453, %v876
        %v878 = vpop.f32.mrf.mxu0
        %v879 = vadd.f32 %v453, %v878
        %880 = vmatmul.bf16.gmra.mxu0 %v416
        %v881 = vpop.f32.mrf.mxu0
        %v882 = vadd.f32 %v453, %v881
        %v883 = vpop.f32.mrf.mxu0
        %v884 = vadd.f32 %v453, %v883
        %885 = vdwg.mxu0
        %886 = vmatpush.bf16.msra.mxu0 %v586
        %887 = vmatpush.bf16.msra.mxu0 %v582
        %888 = vmatpush.bf16.msra.mxu0 %v578
        %889 = vmatpush.bf16.msra.mxu0 %v574
        %890 = vmatpush.bf16.msra.mxu0 %v570
        %891 = vmatpush.bf16.msra.mxu0 %v566
        %892 = vmatpush.bf16.msra.mxu0 %v562
        %893 = vmatpush.bf16.msra.mxu0 %v558
        %894 = vmatmul.bf16.gmra.mxu0 %v401
        %v895 = vpop.f32.mrf.mxu0
        %v896 = vadd.f32 %v454, %v895
        %v897 = vpop.f32.mrf.mxu0
        %v898 = vadd.f32 %v454, %v897
        %899 = vmatmul.bf16.gmra.mxu0 %v402
        %v900 = vpop.f32.mrf.mxu0
        %v901 = vadd.f32 %v454, %v900
        %v902 = vpop.f32.mrf.mxu0
        %v903 = vadd.f32 %v454, %v902
        %904 = vmatmul.bf16.gmra.mxu0 %v403
        %v905 = vpop.f32.mrf.mxu0
        %v906 = vadd.f32 %v454, %v905
        %v907 = vpop.f32.mrf.mxu0
        %v908 = vadd.f32 %v454, %v907
        %909 = vmatmul.bf16.gmra.mxu0 %v404
        %v910 = vpop.f32.mrf.mxu0
        %v911 = vadd.f32 %v454, %v910
        %v912 = vpop.f32.mrf.mxu0
        %v913 = vadd.f32 %v454, %v912
        %914 = vmatmul.bf16.gmra.mxu0 %v405
        %v915 = vpop.f32.mrf.mxu0
        %v916 = vadd.f32 %v454, %v915
        %v917 = vpop.f32.mrf.mxu0
        %v918 = vadd.f32 %v454, %v917
        %919 = vmatmul.bf16.gmra.mxu0 %v406
        %v920 = vpop.f32.mrf.mxu0
        %v921 = vadd.f32 %v454, %v920
        %v922 = vpop.f32.mrf.mxu0
        %v923 = vadd.f32 %v454, %v922
        %924 = vmatmul.bf16.gmra.mxu0 %v407
        %v925 = vpop.f32.mrf.mxu0
        %v926 = vadd.f32 %v454, %v925
        %v927 = vpop.f32.mrf.mxu0
        %v928 = vadd.f32 %v454, %v927
        %929 = vmatmul.bf16.gmra.mxu0 %v408
        %v930 = vpop.f32.mrf.mxu0
        %v931 = vadd.f32 %v454, %v930
        %v932 = vpop.f32.mrf.mxu0
        %v933 = vadd.f32 %v454, %v932
        %934 = vmatmul.bf16.gmra.mxu0 %v409
        %v935 = vpop.f32.mrf.mxu0
        %v936 = vadd.f32 %v454, %v935
        %v937 = vpop.f32.mrf.mxu0
        %v938 = vadd.f32 %v454, %v937
        %939 = vmatmul.bf16.gmra.mxu0 %v410
        %v940 = vpop.f32.mrf.mxu0
        %v941 = vadd.f32 %v454, %v940
        %v942 = vpop.f32.mrf.mxu0
        %v943 = vadd.f32 %v454, %v942
        %944 = vmatmul.bf16.gmra.mxu0 %v411
        %v945 = vpop.f32.mrf.mxu0
        %v946 = vadd.f32 %v454, %v945
        %v947 = vpop.f32.mrf.mxu0
        %v948 = vadd.f32 %v454, %v947
        %949 = vmatmul.bf16.gmra.mxu0 %v412
        %v950 = vpop.f32.mrf.mxu0
        %v951 = vadd.f32 %v454, %v950
        %v952 = vpop.f32.mrf.mxu0
        %v953 = vadd.f32 %v454, %v952
        %954 = vmatmul.bf16.gmra.mxu0 %v413
        %v955 = vpop.f32.mrf.mxu0
        %v956 = vadd.f32 %v454, %v955
        %v957 = vpop.f32.mrf.mxu0
        %v958 = vadd.f32 %v454, %v957
        %959 = vmatmul.bf16.gmra.mxu0 %v414
        %v960 = vpop.f32.mrf.mxu0
        %v961 = vadd.f32 %v454, %v960
        %v962 = vpop.f32.mrf.mxu0
        %v963 = vadd.f32 %v454, %v962
        %964 = vmatmul.bf16.gmra.mxu0 %v415
        %v965 = vpop.f32.mrf.mxu0
        %v966 = vadd.f32 %v454, %v965
        %v967 = vpop.f32.mrf.mxu0
        %v968 = vadd.f32 %v454, %v967
        %969 = vmatmul.bf16.gmra.mxu0 %v416
        %v970 = vpop.f32.mrf.mxu0
        %v971 = vadd.f32 %v454, %v970
        %v972 = vpop.f32.mrf.mxu0
        %v973 = vadd.f32 %v454, %v972
        %974 = vdwg.mxu0
        %v975 = vpack.c.bf16 %v718, %v629
        %v976 = vpack.c.bf16 %v896, %v807
        %v977 = vpack.c.bf16 %v720, %v631
        %v978 = vpack.c.bf16 %v898, %v809
        %v979 = vpack.c.bf16 %v723, %v634
        %v980 = vpack.c.bf16 %v901, %v812
        %v981 = vpack.c.bf16 %v725, %v636
        %v982 = vpack.c.bf16 %v903, %v814
        %v983 = vpack.c.bf16 %v728, %v639
        %v984 = vpack.c.bf16 %v906, %v817
        %v985 = vpack.c.bf16 %v730, %v641
        %v986 = vpack.c.bf16 %v908, %v819
        %v987 = vpack.c.bf16 %v733, %v644
        %v988 = vpack.c.bf16 %v911, %v822
        %v989 = vpack.c.bf16 %v735, %v646
        %v990 = vpack.c.bf16 %v913, %v824
        %v991 = vpack.c.bf16 %v738, %v649
        %v992 = vpack.c.bf16 %v916, %v827
        %v993 = vpack.c.bf16 %v740, %v651
        %v994 = vpack.c.bf16 %v918, %v829
        %v995 = vpack.c.bf16 %v743, %v654
        %v996 = vpack.c.bf16 %v921, %v832
        %v997 = vpack.c.bf16 %v745, %v656
        %v998 = vpack.c.bf16 %v923, %v834
        %v999 = vpack.c.bf16 %v748, %v659
        %v1000 = vpack.c.bf16 %v926, %v837
        %v1001 = vpack.c.bf16 %v750, %v661
        %v1002 = vpack.c.bf16 %v928, %v839
        %v1003 = vpack.c.bf16 %v753, %v664
        %v1004 = vpack.c.bf16 %v931, %v842
        %v1005 = vpack.c.bf16 %v755, %v666
        %v1006 = vpack.c.bf16 %v933, %v844
        %v1007 = vpack.c.bf16 %v758, %v669
        %v1008 = vpack.c.bf16 %v936, %v847
        %v1009 = vpack.c.bf16 %v760, %v671
        %v1010 = vpack.c.bf16 %v938, %v849
        %v1011 = vpack.c.bf16 %v763, %v674
        %v1012 = vpack.c.bf16 %v941, %v852
        %v1013 = vpack.c.bf16 %v765, %v676
        %v1014 = vpack.c.bf16 %v943, %v854
        %v1015 = vpack.c.bf16 %v768, %v679
        %v1016 = vpack.c.bf16 %v946, %v857
        %v1017 = vpack.c.bf16 %v770, %v681
        %v1018 = vpack.c.bf16 %v948, %v859
        %v1019 = vpack.c.bf16 %v773, %v684
        %v1020 = vpack.c.bf16 %v951, %v862
        %v1021 = vpack.c.bf16 %v775, %v686
        %v1022 = vpack.c.bf16 %v953, %v864
        %v1023 = vpack.c.bf16 %v778, %v689
        %v1024 = vpack.c.bf16 %v956, %v867
        %v1025 = vpack.c.bf16 %v780, %v691
        %v1026 = vpack.c.bf16 %v958, %v869
        %v1027 = vpack.c.bf16 %v783, %v694
        %v1028 = vpack.c.bf16 %v961, %v872
        %v1029 = vpack.c.bf16 %v785, %v696
        %v1030 = vpack.c.bf16 %v963, %v874
        %v1031 = vpack.c.bf16 %v788, %v699
        %v1032 = vpack.c.bf16 %v966, %v877
        %v1033 = vpack.c.bf16 %v790, %v701
        %v1034 = vpack.c.bf16 %v968, %v879
        %v1035 = vpack.c.bf16 %v793, %v704
        %v1036 = vpack.c.bf16 %v971, %v882
        %v1037 = vpack.c.bf16 %v795, %v706
        %v1038 = vpack.c.bf16 %v973, %v884
        %v1039 = vunpack.c.l.bf16 %v975
        %v1040 = vunpack.c.h.bf16 %v975
        %v1041 = vunpack.c.l.bf16 %v976
        %v1042 = vunpack.c.h.bf16 %v976
        %v1043 = vunpack.c.l.bf16 %v977
        %v1044 = vunpack.c.h.bf16 %v977
        %v1045 = vunpack.c.l.bf16 %v978
        %v1046 = vunpack.c.h.bf16 %v978
        %v1047 = vunpack.c.l.bf16 %v979
        %v1048 = vunpack.c.h.bf16 %v979
        %v1049 = vunpack.c.l.bf16 %v980
        %v1050 = vunpack.c.h.bf16 %v980
        %v1051 = vunpack.c.l.bf16 %v981
        %v1052 = vunpack.c.h.bf16 %v981
        %v1053 = vunpack.c.l.bf16 %v982
        %v1054 = vunpack.c.h.bf16 %v982
        %v1055 = vunpack.c.l.bf16 %v983
        %v1056 = vunpack.c.h.bf16 %v983
        %v1057 = vunpack.c.l.bf16 %v984
        %v1058 = vunpack.c.h.bf16 %v984
        %v1059 = vunpack.c.l.bf16 %v985
        %v1060 = vunpack.c.h.bf16 %v985
        %v1061 = vunpack.c.l.bf16 %v986
        %v1062 = vunpack.c.h.bf16 %v986
        %v1063 = vunpack.c.l.bf16 %v987
        %v1064 = vunpack.c.h.bf16 %v987
        %v1065 = vunpack.c.l.bf16 %v988
        %v1066 = vunpack.c.h.bf16 %v988
        %v1067 = vunpack.c.l.bf16 %v989
        %v1068 = vunpack.c.h.bf16 %v989
        %v1069 = vunpack.c.l.bf16 %v990
        %v1070 = vunpack.c.h.bf16 %v990
        %v1071 = vunpack.c.l.bf16 %v991
        %v1072 = vunpack.c.h.bf16 %v991
        %v1073 = vunpack.c.l.bf16 %v992
        %v1074 = vunpack.c.h.bf16 %v992
        %v1075 = vunpack.c.l.bf16 %v993
        %v1076 = vunpack.c.h.bf16 %v993
        %v1077 = vunpack.c.l.bf16 %v994
        %v1078 = vunpack.c.h.bf16 %v994
        %v1079 = vunpack.c.l.bf16 %v995
        %v1080 = vunpack.c.h.bf16 %v995
        %v1081 = vunpack.c.l.bf16 %v996
        %v1082 = vunpack.c.h.bf16 %v996
        %v1083 = vunpack.c.l.bf16 %v997
        %v1084 = vunpack.c.h.bf16 %v997
        %v1085 = vunpack.c.l.bf16 %v998
        %v1086 = vunpack.c.h.bf16 %v998
        %v1087 = vunpack.c.l.bf16 %v999
        %v1088 = vunpack.c.h.bf16 %v999
        %v1089 = vunpack.c.l.bf16 %v1000
        %v1090 = vunpack.c.h.bf16 %v1000
        %v1091 = vunpack.c.l.bf16 %v1001
        %v1092 = vunpack.c.h.bf16 %v1001
        %v1093 = vunpack.c.l.bf16 %v1002
        %v1094 = vunpack.c.h.bf16 %v1002
        %v1095 = vunpack.c.l.bf16 %v1003
        %v1096 = vunpack.c.h.bf16 %v1003
        %v1097 = vunpack.c.l.bf16 %v1004
        %v1098 = vunpack.c.h.bf16 %v1004
        %v1099 = vunpack.c.l.bf16 %v1005
        %v1100 = vunpack.c.h.bf16 %v1005
        %v1101 = vunpack.c.l.bf16 %v1006
        %v1102 = vunpack.c.h.bf16 %v1006
        %v1103 = vunpack.c.l.bf16 %v1007
        %v1104 = vunpack.c.h.bf16 %v1007
        %v1105 = vunpack.c.l.bf16 %v1008
        %v1106 = vunpack.c.h.bf16 %v1008
        %v1107 = vunpack.c.l.bf16 %v1009
        %v1108 = vunpack.c.h.bf16 %v1009
        %v1109 = vunpack.c.l.bf16 %v1010
        %v1110 = vunpack.c.h.bf16 %v1010
        %v1111 = vunpack.c.l.bf16 %v1011
        %v1112 = vunpack.c.h.bf16 %v1011
        %v1113 = vunpack.c.l.bf16 %v1012
        %v1114 = vunpack.c.h.bf16 %v1012
        %v1115 = vunpack.c.l.bf16 %v1013
        %v1116 = vunpack.c.h.bf16 %v1013
        %v1117 = vunpack.c.l.bf16 %v1014
        %v1118 = vunpack.c.h.bf16 %v1014
        %v1119 = vunpack.c.l.bf16 %v1015
        %v1120 = vunpack.c.h.bf16 %v1015
        %v1121 = vunpack.c.l.bf16 %v1016
        %v1122 = vunpack.c.h.bf16 %v1016
        %v1123 = vunpack.c.l.bf16 %v1017
        %v1124 = vunpack.c.h.bf16 %v1017
        %v1125 = vunpack.c.l.bf16 %v1018
        %v1126 = vunpack.c.h.bf16 %v1018
        %v1127 = vunpack.c.l.bf16 %v1019
        %v1128 = vunpack.c.h.bf16 %v1019
        %v1129 = vunpack.c.l.bf16 %v1020
        %v1130 = vunpack.c.h.bf16 %v1020
        %v1131 = vunpack.c.l.bf16 %v1021
        %v1132 = vunpack.c.h.bf16 %v1021
        %v1133 = vunpack.c.l.bf16 %v1022
        %v1134 = vunpack.c.h.bf16 %v1022
        %v1135 = vunpack.c.l.bf16 %v1023
        %v1136 = vunpack.c.h.bf16 %v1023
        %v1137 = vunpack.c.l.bf16 %v1024
        %v1138 = vunpack.c.h.bf16 %v1024
        %v1139 = vunpack.c.l.bf16 %v1025
        %v1140 = vunpack.c.h.bf16 %v1025
        %v1141 = vunpack.c.l.bf16 %v1026
        %v1142 = vunpack.c.h.bf16 %v1026
        %v1143 = vunpack.c.l.bf16 %v1027
        %v1144 = vunpack.c.h.bf16 %v1027
        %v1145 = vunpack.c.l.bf16 %v1028
        %v1146 = vunpack.c.h.bf16 %v1028
        %v1147 = vunpack.c.l.bf16 %v1029
        %v1148 = vunpack.c.h.bf16 %v1029
        %v1149 = vunpack.c.l.bf16 %v1030
        %v1150 = vunpack.c.h.bf16 %v1030
        %v1151 = vunpack.c.l.bf16 %v1031
        %v1152 = vunpack.c.h.bf16 %v1031
        %v1153 = vunpack.c.l.bf16 %v1032
        %v1154 = vunpack.c.h.bf16 %v1032
        %v1155 = vunpack.c.l.bf16 %v1033
        %v1156 = vunpack.c.h.bf16 %v1033
        %v1157 = vunpack.c.l.bf16 %v1034
        %v1158 = vunpack.c.h.bf16 %v1034
        %v1159 = vunpack.c.l.bf16 %v1035
        %v1160 = vunpack.c.h.bf16 %v1035
        %v1161 = vunpack.c.l.bf16 %v1036
        %v1162 = vunpack.c.h.bf16 %v1036
        %v1163 = vunpack.c.l.bf16 %v1037
        %v1164 = vunpack.c.h.bf16 %v1037
        %v1165 = vunpack.c.l.bf16 %v1038
        %v1166 = vunpack.c.h.bf16 %v1038
        %v1167 = vmul.f32 %v1039, 0.5
        %v1168 = vmul.f32 %v1040, 0.5
        %v1169 = vmul.f32 %v1041, 0.5
        %v1170 = vmul.f32 %v1042, 0.5
        %v1171 = vmul.f32 %v1043, 0.5
        %v1172 = vmul.f32 %v1044, 0.5
        %v1173 = vmul.f32 %v1045, 0.5
        %v1174 = vmul.f32 %v1046, 0.5
        %v1175 = vmul.f32 %v1047, 0.5
        %v1176 = vmul.f32 %v1048, 0.5
        %v1177 = vmul.f32 %v1049, 0.5
        %v1178 = vmul.f32 %v1050, 0.5
        %v1179 = vmul.f32 %v1051, 0.5
        %v1180 = vmul.f32 %v1052, 0.5
        %v1181 = vmul.f32 %v1053, 0.5
        %v1182 = vmul.f32 %v1054, 0.5
        %v1183 = vmul.f32 %v1055, 0.5
        %v1184 = vmul.f32 %v1056, 0.5
        %v1185 = vmul.f32 %v1057, 0.5
        %v1186 = vmul.f32 %v1058, 0.5
        %v1187 = vmul.f32 %v1059, 0.5
        %v1188 = vmul.f32 %v1060, 0.5
        %v1189 = vmul.f32 %v1061, 0.5
        %v1190 = vmul.f32 %v1062, 0.5
        %v1191 = vmul.f32 %v1063, 0.5
        %v1192 = vmul.f32 %v1064, 0.5
        %v1193 = vmul.f32 %v1065, 0.5
        %v1194 = vmul.f32 %v1066, 0.5
        %v1195 = vmul.f32 %v1067, 0.5
        %v1196 = vmul.f32 %v1068, 0.5
        %v1197 = vmul.f32 %v1069, 0.5
        %v1198 = vmul.f32 %v1070, 0.5
        %v1199 = vmul.f32 %v1071, 0.5
        %v1200 = vmul.f32 %v1072, 0.5
        %v1201 = vmul.f32 %v1073, 0.5
        %v1202 = vmul.f32 %v1074, 0.5
        %v1203 = vmul.f32 %v1075, 0.5
        %v1204 = vmul.f32 %v1076, 0.5
        %v1205 = vmul.f32 %v1077, 0.5
        %v1206 = vmul.f32 %v1078, 0.5
        %v1207 = vmul.f32 %v1079, 0.5
        %v1208 = vmul.f32 %v1080, 0.5
        %v1209 = vmul.f32 %v1081, 0.5
        %v1210 = vmul.f32 %v1082, 0.5
        %v1211 = vmul.f32 %v1083, 0.5
        %v1212 = vmul.f32 %v1084, 0.5
        %v1213 = vmul.f32 %v1085, 0.5
        %v1214 = vmul.f32 %v1086, 0.5
        %v1215 = vmul.f32 %v1087, 0.5
        %v1216 = vmul.f32 %v1088, 0.5
        %v1217 = vmul.f32 %v1089, 0.5
        %v1218 = vmul.f32 %v1090, 0.5
        %v1219 = vmul.f32 %v1091, 0.5
        %v1220 = vmul.f32 %v1092, 0.5
        %v1221 = vmul.f32 %v1093, 0.5
        %v1222 = vmul.f32 %v1094, 0.5
        %v1223 = vmul.f32 %v1095, 0.5
        %v1224 = vmul.f32 %v1096, 0.5
        %v1225 = vmul.f32 %v1097, 0.5
        %v1226 = vmul.f32 %v1098, 0.5
        %v1227 = vmul.f32 %v1099, 0.5
        %v1228 = vmul.f32 %v1100, 0.5
        %v1229 = vmul.f32 %v1101, 0.5
        %v1230 = vmul.f32 %v1102, 0.5
        %v1231 = vmul.f32 %v1103, 0.5
        %v1232 = vmul.f32 %v1104, 0.5
        %v1233 = vmul.f32 %v1105, 0.5
        %v1234 = vmul.f32 %v1106, 0.5
        %v1235 = vmul.f32 %v1107, 0.5
        %v1236 = vmul.f32 %v1108, 0.5
        %v1237 = vmul.f32 %v1109, 0.5
        %v1238 = vmul.f32 %v1110, 0.5
        %v1239 = vmul.f32 %v1111, 0.5
        %v1240 = vmul.f32 %v1112, 0.5
        %v1241 = vmul.f32 %v1113, 0.5
        %v1242 = vmul.f32 %v1114, 0.5
        %v1243 = vmul.f32 %v1115, 0.5
        %v1244 = vmul.f32 %v1116, 0.5
        %v1245 = vmul.f32 %v1117, 0.5
        %v1246 = vmul.f32 %v1118, 0.5
        %v1247 = vmul.f32 %v1119, 0.5
        %v1248 = vmul.f32 %v1120, 0.5
        %v1249 = vmul.f32 %v1121, 0.5
        %v1250 = vmul.f32 %v1122, 0.5
        %v1251 = vmul.f32 %v1123, 0.5
        %v1252 = vmul.f32 %v1124, 0.5
        %v1253 = vmul.f32 %v1125, 0.5
        %v1254 = vmul.f32 %v1126, 0.5
        %v1255 = vmul.f32 %v1127, 0.5
        %v1256 = vmul.f32 %v1128, 0.5
        %v1257 = vmul.f32 %v1129, 0.5
        %v1258 = vmul.f32 %v1130, 0.5
        %v1259 = vmul.f32 %v1131, 0.5
        %v1260 = vmul.f32 %v1132, 0.5
        %v1261 = vmul.f32 %v1133, 0.5
        %v1262 = vmul.f32 %v1134, 0.5
        %v1263 = vmul.f32 %v1135, 0.5
        %v1264 = vmul.f32 %v1136, 0.5
        %v1265 = vmul.f32 %v1137, 0.5
        %v1266 = vmul.f32 %v1138, 0.5
        %v1267 = vmul.f32 %v1139, 0.5
        %v1268 = vmul.f32 %v1140, 0.5
        %v1269 = vmul.f32 %v1141, 0.5
        %v1270 = vmul.f32 %v1142, 0.5
        %v1271 = vmul.f32 %v1143, 0.5
        %v1272 = vmul.f32 %v1144, 0.5
        %v1273 = vmul.f32 %v1145, 0.5
        %v1274 = vmul.f32 %v1146, 0.5
        %v1275 = vmul.f32 %v1147, 0.5
        %v1276 = vmul.f32 %v1148, 0.5
        %v1277 = vmul.f32 %v1149, 0.5
        %v1278 = vmul.f32 %v1150, 0.5
        %v1279 = vmul.f32 %v1151, 0.5
        %v1280 = vmul.f32 %v1152, 0.5
        %v1281 = vmul.f32 %v1153, 0.5
        %v1282 = vmul.f32 %v1154, 0.5
        %v1283 = vmul.f32 %v1155, 0.5
        %v1284 = vmul.f32 %v1156, 0.5
        %v1285 = vmul.f32 %v1157, 0.5
        %v1286 = vmul.f32 %v1158, 0.5
        %v1287 = vmul.f32 %v1159, 0.5
        %v1288 = vmul.f32 %v1160, 0.5
        %v1289 = vmul.f32 %v1161, 0.5
        %v1290 = vmul.f32 %v1162, 0.5
        %v1291 = vmul.f32 %v1163, 0.5
        %v1292 = vmul.f32 %v1164, 0.5
        %v1293 = vmul.f32 %v1165, 0.5
        %v1294 = vmul.f32 %v1166, 0.5
        %v1295 = vpack.c.bf16 %v1168, %v1167
        %v1296 = vpack.c.bf16 %v1170, %v1169
        %v1297 = vpack.c.bf16 %v1172, %v1171
        %v1298 = vpack.c.bf16 %v1174, %v1173
        %v1299 = vpack.c.bf16 %v1176, %v1175
        %v1300 = vpack.c.bf16 %v1178, %v1177
        %v1301 = vpack.c.bf16 %v1180, %v1179
        %v1302 = vpack.c.bf16 %v1182, %v1181
        %v1303 = vpack.c.bf16 %v1184, %v1183
        %v1304 = vpack.c.bf16 %v1186, %v1185
        %v1305 = vpack.c.bf16 %v1188, %v1187
        %v1306 = vpack.c.bf16 %v1190, %v1189
        %v1307 = vpack.c.bf16 %v1192, %v1191
        %v1308 = vpack.c.bf16 %v1194, %v1193
        %v1309 = vpack.c.bf16 %v1196, %v1195
        %v1310 = vpack.c.bf16 %v1198, %v1197
        %v1311 = vpack.c.bf16 %v1200, %v1199
        %v1312 = vpack.c.bf16 %v1202, %v1201
        %v1313 = vpack.c.bf16 %v1204, %v1203
        %v1314 = vpack.c.bf16 %v1206, %v1205
        %v1315 = vpack.c.bf16 %v1208, %v1207
        %v1316 = vpack.c.bf16 %v1210, %v1209
        %v1317 = vpack.c.bf16 %v1212, %v1211
        %v1318 = vpack.c.bf16 %v1214, %v1213
        %v1319 = vpack.c.bf16 %v1216, %v1215
        %v1320 = vpack.c.bf16 %v1218, %v1217
        %v1321 = vpack.c.bf16 %v1220, %v1219
        %v1322 = vpack.c.bf16 %v1222, %v1221
        %v1323 = vpack.c.bf16 %v1224, %v1223
        %v1324 = vpack.c.bf16 %v1226, %v1225
        %v1325 = vpack.c.bf16 %v1228, %v1227
        %v1326 = vpack.c.bf16 %v1230, %v1229
        %v1327 = vpack.c.bf16 %v1232, %v1231
        %v1328 = vpack.c.bf16 %v1234, %v1233
        %v1329 = vpack.c.bf16 %v1236, %v1235
        %v1330 = vpack.c.bf16 %v1238, %v1237
        %v1331 = vpack.c.bf16 %v1240, %v1239
        %v1332 = vpack.c.bf16 %v1242, %v1241
        %v1333 = vpack.c.bf16 %v1244, %v1243
        %v1334 = vpack.c.bf16 %v1246, %v1245
        %v1335 = vpack.c.bf16 %v1248, %v1247
        %v1336 = vpack.c.bf16 %v1250, %v1249
        %v1337 = vpack.c.bf16 %v1252, %v1251
        %v1338 = vpack.c.bf16 %v1254, %v1253
        %v1339 = vpack.c.bf16 %v1256, %v1255
        %v1340 = vpack.c.bf16 %v1258, %v1257
        %v1341 = vpack.c.bf16 %v1260, %v1259
        %v1342 = vpack.c.bf16 %v1262, %v1261
        %v1343 = vpack.c.bf16 %v1264, %v1263
        %v1344 = vpack.c.bf16 %v1266, %v1265
        %v1345 = vpack.c.bf16 %v1268, %v1267
        %v1346 = vpack.c.bf16 %v1270, %v1269
        %v1347 = vpack.c.bf16 %v1272, %v1271
        %v1348 = vpack.c.bf16 %v1274, %v1273
        %v1349 = vpack.c.bf16 %v1276, %v1275
        %v1350 = vpack.c.bf16 %v1278, %v1277
        %v1351 = vpack.c.bf16 %v1280, %v1279
        %v1352 = vpack.c.bf16 %v1282, %v1281
        %v1353 = vpack.c.bf16 %v1284, %v1283
        %v1354 = vpack.c.bf16 %v1286, %v1285
        %v1355 = vpack.c.bf16 %v1288, %v1287
        %v1356 = vpack.c.bf16 %v1290, %v1289
        %v1357 = vpack.c.bf16 %v1292, %v1291
        %v1358 = vpack.c.bf16 %v1294, %v1293
        %v1359 = vmul.f32 %v1039, 0.70703125
        %v1360 = vmul.f32 %v1040, 0.70703125
        %v1361 = vmul.f32 %v1041, 0.70703125
        %v1362 = vmul.f32 %v1042, 0.70703125
        %v1363 = vmul.f32 %v1043, 0.70703125
        %v1364 = vmul.f32 %v1044, 0.70703125
        %v1365 = vmul.f32 %v1045, 0.70703125
        %v1366 = vmul.f32 %v1046, 0.70703125
        %v1367 = vmul.f32 %v1047, 0.70703125
        %v1368 = vmul.f32 %v1048, 0.70703125
        %v1369 = vmul.f32 %v1049, 0.70703125
        %v1370 = vmul.f32 %v1050, 0.70703125
        %v1371 = vmul.f32 %v1051, 0.70703125
        %v1372 = vmul.f32 %v1052, 0.70703125
        %v1373 = vmul.f32 %v1053, 0.70703125
        %v1374 = vmul.f32 %v1054, 0.70703125
        %v1375 = vmul.f32 %v1055, 0.70703125
        %v1376 = vmul.f32 %v1056, 0.70703125
        %v1377 = vmul.f32 %v1057, 0.70703125
        %v1378 = vmul.f32 %v1058, 0.70703125
        %v1379 = vmul.f32 %v1059, 0.70703125
        %v1380 = vmul.f32 %v1060, 0.70703125
        %v1381 = vmul.f32 %v1061, 0.70703125
        %v1382 = vmul.f32 %v1062, 0.70703125
        %v1383 = vmul.f32 %v1063, 0.70703125
        %v1384 = vmul.f32 %v1064, 0.70703125
        %v1385 = vmul.f32 %v1065, 0.70703125
        %v1386 = vmul.f32 %v1066, 0.70703125
        %v1387 = vmul.f32 %v1067, 0.70703125
        %v1388 = vmul.f32 %v1068, 0.70703125
        %v1389 = vmul.f32 %v1069, 0.70703125
        %v1390 = vmul.f32 %v1070, 0.70703125
        %v1391 = vmul.f32 %v1071, 0.70703125
        %v1392 = vmul.f32 %v1072, 0.70703125
        %v1393 = vmul.f32 %v1073, 0.70703125
        %v1394 = vmul.f32 %v1074, 0.70703125
        %v1395 = vmul.f32 %v1075, 0.70703125
        %v1396 = vmul.f32 %v1076, 0.70703125
        %v1397 = vmul.f32 %v1077, 0.70703125
        %v1398 = vmul.f32 %v1078, 0.70703125
        %v1399 = vmul.f32 %v1079, 0.70703125
        %v1400 = vmul.f32 %v1080, 0.70703125
        %v1401 = vmul.f32 %v1081, 0.70703125
        %v1402 = vmul.f32 %v1082, 0.70703125
        %v1403 = vmul.f32 %v1083, 0.70703125
        %v1404 = vmul.f32 %v1084, 0.70703125
        %v1405 = vmul.f32 %v1085, 0.70703125
        %v1406 = vmul.f32 %v1086, 0.70703125
        %v1407 = vmul.f32 %v1087, 0.70703125
        %v1408 = vmul.f32 %v1088, 0.70703125
        %v1409 = vmul.f32 %v1089, 0.70703125
        %v1410 = vmul.f32 %v1090, 0.70703125
        %v1411 = vmul.f32 %v1091, 0.70703125
        %v1412 = vmul.f32 %v1092, 0.70703125
        %v1413 = vmul.f32 %v1093, 0.70703125
        %v1414 = vmul.f32 %v1094, 0.70703125
        %v1415 = vmul.f32 %v1095, 0.70703125
        %v1416 = vmul.f32 %v1096, 0.70703125
        %v1417 = vmul.f32 %v1097, 0.70703125
        %v1418 = vmul.f32 %v1098, 0.70703125
        %v1419 = vmul.f32 %v1099, 0.70703125
        %v1420 = vmul.f32 %v1100, 0.70703125
        %v1421 = vmul.f32 %v1101, 0.70703125
        %v1422 = vmul.f32 %v1102, 0.70703125
        %v1423 = vmul.f32 %v1103, 0.70703125
        %v1424 = vmul.f32 %v1104, 0.70703125
        %v1425 = vmul.f32 %v1105, 0.70703125
        %v1426 = vmul.f32 %v1106, 0.70703125
        %v1427 = vmul.f32 %v1107, 0.70703125
        %v1428 = vmul.f32 %v1108, 0.70703125
        %v1429 = vmul.f32 %v1109, 0.70703125
        %v1430 = vmul.f32 %v1110, 0.70703125
        %v1431 = vmul.f32 %v1111, 0.70703125
        %v1432 = vmul.f32 %v1112, 0.70703125
        %v1433 = vmul.f32 %v1113, 0.70703125
        %v1434 = vmul.f32 %v1114, 0.70703125
        %v1435 = vmul.f32 %v1115, 0.70703125
        %v1436 = vmul.f32 %v1116, 0.70703125
        %v1437 = vmul.f32 %v1117, 0.70703125
        %v1438 = vmul.f32 %v1118, 0.70703125
        %v1439 = vmul.f32 %v1119, 0.70703125
        %v1440 = vmul.f32 %v1120, 0.70703125
        %v1441 = vmul.f32 %v1121, 0.70703125
        %v1442 = vmul.f32 %v1122, 0.70703125
        %v1443 = vmul.f32 %v1123, 0.70703125
        %v1444 = vmul.f32 %v1124, 0.70703125
        %v1445 = vmul.f32 %v1125, 0.70703125
        %v1446 = vmul.f32 %v1126, 0.70703125
        %v1447 = vmul.f32 %v1127, 0.70703125
        %v1448 = vmul.f32 %v1128, 0.70703125
        %v1449 = vmul.f32 %v1129, 0.70703125
        %v1450 = vmul.f32 %v1130, 0.70703125
        %v1451 = vmul.f32 %v1131, 0.70703125
        %v1452 = vmul.f32 %v1132, 0.70703125
        %v1453 = vmul.f32 %v1133, 0.70703125
        %v1454 = vmul.f32 %v1134, 0.70703125
        %v1455 = vmul.f32 %v1135, 0.70703125
        %v1456 = vmul.f32 %v1136, 0.70703125
        %v1457 = vmul.f32 %v1137, 0.70703125
        %v1458 = vmul.f32 %v1138, 0.70703125
        %v1459 = vmul.f32 %v1139, 0.70703125
        %v1460 = vmul.f32 %v1140, 0.70703125
        %v1461 = vmul.f32 %v1141, 0.70703125
        %v1462 = vmul.f32 %v1142, 0.70703125
        %v1463 = vmul.f32 %v1143, 0.70703125
        %v1464 = vmul.f32 %v1144, 0.70703125
        %v1465 = vmul.f32 %v1145, 0.70703125
        %v1466 = vmul.f32 %v1146, 0.70703125
        %v1467 = vmul.f32 %v1147, 0.70703125
        %v1468 = vmul.f32 %v1148, 0.70703125
        %v1469 = vmul.f32 %v1149, 0.70703125
        %v1470 = vmul.f32 %v1150, 0.70703125
        %v1471 = vmul.f32 %v1151, 0.70703125
        %v1472 = vmul.f32 %v1152, 0.70703125
        %v1473 = vmul.f32 %v1153, 0.70703125
        %v1474 = vmul.f32 %v1154, 0.70703125
        %v1475 = vmul.f32 %v1155, 0.70703125
        %v1476 = vmul.f32 %v1156, 0.70703125
        %v1477 = vmul.f32 %v1157, 0.70703125
        %v1478 = vmul.f32 %v1158, 0.70703125
        %v1479 = vmul.f32 %v1159, 0.70703125
        %v1480 = vmul.f32 %v1160, 0.70703125
        %v1481 = vmul.f32 %v1161, 0.70703125
        %v1482 = vmul.f32 %v1162, 0.70703125
        %v1483 = vmul.f32 %v1163, 0.70703125
        %v1484 = vmul.f32 %v1164, 0.70703125
        %v1485 = vmul.f32 %v1165, 0.70703125
        %v1486 = vmul.f32 %v1166, 0.70703125
        %v1487 = vpack.c.bf16 %v1360, %v1359
        %v1488 = vpack.c.bf16 %v1362, %v1361
        %v1489 = vpack.c.bf16 %v1364, %v1363
        %v1490 = vpack.c.bf16 %v1366, %v1365
        %v1491 = vpack.c.bf16 %v1368, %v1367
        %v1492 = vpack.c.bf16 %v1370, %v1369
        %v1493 = vpack.c.bf16 %v1372, %v1371
        %v1494 = vpack.c.bf16 %v1374, %v1373
        %v1495 = vpack.c.bf16 %v1376, %v1375
        %v1496 = vpack.c.bf16 %v1378, %v1377
        %v1497 = vpack.c.bf16 %v1380, %v1379
        %v1498 = vpack.c.bf16 %v1382, %v1381
        %v1499 = vpack.c.bf16 %v1384, %v1383
        %v1500 = vpack.c.bf16 %v1386, %v1385
        %v1501 = vpack.c.bf16 %v1388, %v1387
        %v1502 = vpack.c.bf16 %v1390, %v1389
        %v1503 = vpack.c.bf16 %v1392, %v1391
        %v1504 = vpack.c.bf16 %v1394, %v1393
        %v1505 = vpack.c.bf16 %v1396, %v1395
        %v1506 = vpack.c.bf16 %v1398, %v1397
        %v1507 = vpack.c.bf16 %v1400, %v1399
        %v1508 = vpack.c.bf16 %v1402, %v1401
        %v1509 = vpack.c.bf16 %v1404, %v1403
        %v1510 = vpack.c.bf16 %v1406, %v1405
        %v1511 = vpack.c.bf16 %v1408, %v1407
        %v1512 = vpack.c.bf16 %v1410, %v1409
        %v1513 = vpack.c.bf16 %v1412, %v1411
        %v1514 = vpack.c.bf16 %v1414, %v1413
        %v1515 = vpack.c.bf16 %v1416, %v1415
        %v1516 = vpack.c.bf16 %v1418, %v1417
        %v1517 = vpack.c.bf16 %v1420, %v1419
        %v1518 = vpack.c.bf16 %v1422, %v1421
        %v1519 = vpack.c.bf16 %v1424, %v1423
        %v1520 = vpack.c.bf16 %v1426, %v1425
        %v1521 = vpack.c.bf16 %v1428, %v1427
        %v1522 = vpack.c.bf16 %v1430, %v1429
        %v1523 = vpack.c.bf16 %v1432, %v1431
        %v1524 = vpack.c.bf16 %v1434, %v1433
        %v1525 = vpack.c.bf16 %v1436, %v1435
        %v1526 = vpack.c.bf16 %v1438, %v1437
        %v1527 = vpack.c.bf16 %v1440, %v1439
        %v1528 = vpack.c.bf16 %v1442, %v1441
        %v1529 = vpack.c.bf16 %v1444, %v1443
        %v1530 = vpack.c.bf16 %v1446, %v1445
        %v1531 = vpack.c.bf16 %v1448, %v1447
        %v1532 = vpack.c.bf16 %v1450, %v1449
        %v1533 = vpack.c.bf16 %v1452, %v1451
        %v1534 = vpack.c.bf16 %v1454, %v1453
        %v1535 = vpack.c.bf16 %v1456, %v1455
        %v1536 = vpack.c.bf16 %v1458, %v1457
        %v1537 = vpack.c.bf16 %v1460, %v1459
        %v1538 = vpack.c.bf16 %v1462, %v1461
        %v1539 = vpack.c.bf16 %v1464, %v1463
        %v1540 = vpack.c.bf16 %v1466, %v1465
        %v1541 = vpack.c.bf16 %v1468, %v1467
        %v1542 = vpack.c.bf16 %v1470, %v1469
        %v1543 = vpack.c.bf16 %v1472, %v1471
        %v1544 = vpack.c.bf16 %v1474, %v1473
        %v1545 = vpack.c.bf16 %v1476, %v1475
        %v1546 = vpack.c.bf16 %v1478, %v1477
        %v1547 = vpack.c.bf16 %v1480, %v1479
        %v1548 = vpack.c.bf16 %v1482, %v1481
        %v1549 = vpack.c.bf16 %v1484, %v1483
        %v1550 = vpack.c.bf16 %v1486, %v1485
        %v1551 = vunpack.c.l.bf16 %v1487
        %v1552 = vunpack.c.h.bf16 %v1487
        %v1553 = vunpack.c.l.bf16 %v1488
        %v1554 = vunpack.c.h.bf16 %v1488
        %v1555 = vunpack.c.l.bf16 %v1489
        %v1556 = vunpack.c.h.bf16 %v1489
        %v1557 = vunpack.c.l.bf16 %v1490
        %v1558 = vunpack.c.h.bf16 %v1490
        %v1559 = vunpack.c.l.bf16 %v1491
        %v1560 = vunpack.c.h.bf16 %v1491
        %v1561 = vunpack.c.l.bf16 %v1492
        %v1562 = vunpack.c.h.bf16 %v1492
        %v1563 = vunpack.c.l.bf16 %v1493
        %v1564 = vunpack.c.h.bf16 %v1493
        %v1565 = vunpack.c.l.bf16 %v1494
        %v1566 = vunpack.c.h.bf16 %v1494
        %v1567 = vunpack.c.l.bf16 %v1495
        %v1568 = vunpack.c.h.bf16 %v1495
        %v1569 = vunpack.c.l.bf16 %v1496
        %v1570 = vunpack.c.h.bf16 %v1496
        %v1571 = vunpack.c.l.bf16 %v1497
        %v1572 = vunpack.c.h.bf16 %v1497
        %v1573 = vunpack.c.l.bf16 %v1498
        %v1574 = vunpack.c.h.bf16 %v1498
        %v1575 = vunpack.c.l.bf16 %v1499
        %v1576 = vunpack.c.h.bf16 %v1499
        %v1577 = vunpack.c.l.bf16 %v1500
        %v1578 = vunpack.c.h.bf16 %v1500
        %v1579 = vunpack.c.l.bf16 %v1501
        %v1580 = vunpack.c.h.bf16 %v1501
        %v1581 = vunpack.c.l.bf16 %v1502
        %v1582 = vunpack.c.h.bf16 %v1502
        %v1583 = vunpack.c.l.bf16 %v1503
        %v1584 = vunpack.c.h.bf16 %v1503
        %v1585 = vunpack.c.l.bf16 %v1504
        %v1586 = vunpack.c.h.bf16 %v1504
        %v1587 = vunpack.c.l.bf16 %v1505
        %v1588 = vunpack.c.h.bf16 %v1505
        %v1589 = vunpack.c.l.bf16 %v1506
        %v1590 = vunpack.c.h.bf16 %v1506
        %v1591 = vunpack.c.l.bf16 %v1507
        %v1592 = vunpack.c.h.bf16 %v1507
        %v1593 = vunpack.c.l.bf16 %v1508
        %v1594 = vunpack.c.h.bf16 %v1508
        %v1595 = vunpack.c.l.bf16 %v1509
        %v1596 = vunpack.c.h.bf16 %v1509
        %v1597 = vunpack.c.l.bf16 %v1510
        %v1598 = vunpack.c.h.bf16 %v1510
        %v1599 = vunpack.c.l.bf16 %v1511
        %v1600 = vunpack.c.h.bf16 %v1511
        %v1601 = vunpack.c.l.bf16 %v1512
        %v1602 = vunpack.c.h.bf16 %v1512
        %v1603 = vunpack.c.l.bf16 %v1513
        %v1604 = vunpack.c.h.bf16 %v1513
        %v1605 = vunpack.c.l.bf16 %v1514
        %v1606 = vunpack.c.h.bf16 %v1514
        %v1607 = vunpack.c.l.bf16 %v1515
        %v1608 = vunpack.c.h.bf16 %v1515
        %v1609 = vunpack.c.l.bf16 %v1516
        %v1610 = vunpack.c.h.bf16 %v1516
        %v1611 = vunpack.c.l.bf16 %v1517
        %v1612 = vunpack.c.h.bf16 %v1517
        %v1613 = vunpack.c.l.bf16 %v1518
        %v1614 = vunpack.c.h.bf16 %v1518
        %v1615 = vunpack.c.l.bf16 %v1519
        %v1616 = vunpack.c.h.bf16 %v1519
        %v1617 = vunpack.c.l.bf16 %v1520
        %v1618 = vunpack.c.h.bf16 %v1520
        %v1619 = vunpack.c.l.bf16 %v1521
        %v1620 = vunpack.c.h.bf16 %v1521
        %v1621 = vunpack.c.l.bf16 %v1522
        %v1622 = vunpack.c.h.bf16 %v1522
        %v1623 = vunpack.c.l.bf16 %v1523
        %v1624 = vunpack.c.h.bf16 %v1523
        %v1625 = vunpack.c.l.bf16 %v1524
        %v1626 = vunpack.c.h.bf16 %v1524
        %v1627 = vunpack.c.l.bf16 %v1525
        %v1628 = vunpack.c.h.bf16 %v1525
        %v1629 = vunpack.c.l.bf16 %v1526
        %v1630 = vunpack.c.h.bf16 %v1526
        %v1631 = vunpack.c.l.bf16 %v1527
        %v1632 = vunpack.c.h.bf16 %v1527
        %v1633 = vunpack.c.l.bf16 %v1528
        %v1634 = vunpack.c.h.bf16 %v1528
        %v1635 = vunpack.c.l.bf16 %v1529
        %v1636 = vunpack.c.h.bf16 %v1529
        %v1637 = vunpack.c.l.bf16 %v1530
        %v1638 = vunpack.c.h.bf16 %v1530
        %v1639 = vunpack.c.l.bf16 %v1531
        %v1640 = vunpack.c.h.bf16 %v1531
        %v1641 = vunpack.c.l.bf16 %v1532
        %v1642 = vunpack.c.h.bf16 %v1532
        %v1643 = vunpack.c.l.bf16 %v1533
        %v1644 = vunpack.c.h.bf16 %v1533
        %v1645 = vunpack.c.l.bf16 %v1534
        %v1646 = vunpack.c.h.bf16 %v1534
        %v1647 = vunpack.c.l.bf16 %v1535
        %v1648 = vunpack.c.h.bf16 %v1535
        %v1649 = vunpack.c.l.bf16 %v1536
        %v1650 = vunpack.c.h.bf16 %v1536
        %v1651 = vunpack.c.l.bf16 %v1537
        %v1652 = vunpack.c.h.bf16 %v1537
        %v1653 = vunpack.c.l.bf16 %v1538
        %v1654 = vunpack.c.h.bf16 %v1538
        %v1655 = vunpack.c.l.bf16 %v1539
        %v1656 = vunpack.c.h.bf16 %v1539
        %v1657 = vunpack.c.l.bf16 %v1540
        %v1658 = vunpack.c.h.bf16 %v1540
        %v1659 = vunpack.c.l.bf16 %v1541
        %v1660 = vunpack.c.h.bf16 %v1541
        %v1661 = vunpack.c.l.bf16 %v1542
        %v1662 = vunpack.c.h.bf16 %v1542
        %v1663 = vunpack.c.l.bf16 %v1543
        %v1664 = vunpack.c.h.bf16 %v1543
        %v1665 = vunpack.c.l.bf16 %v1544
        %v1666 = vunpack.c.h.bf16 %v1544
        %v1667 = vunpack.c.l.bf16 %v1545
        %v1668 = vunpack.c.h.bf16 %v1545
        %v1669 = vunpack.c.l.bf16 %v1546
        %v1670 = vunpack.c.h.bf16 %v1546
        %v1671 = vunpack.c.l.bf16 %v1547
        %v1672 = vunpack.c.h.bf16 %v1547
        %v1673 = vunpack.c.l.bf16 %v1548
        %v1674 = vunpack.c.h.bf16 %v1548
        %v1675 = vunpack.c.l.bf16 %v1549
        %v1676 = vunpack.c.h.bf16 %v1549
        %v1677 = vunpack.c.l.bf16 %v1550
        %v1678 = vunpack.c.h.bf16 %v1550
        %v1679 = vmul.f32 %v1551, %v1551
        %v1680 = vmin.f32 16.0, %v1679
        %v1681 = vmul.f32 %v1680, 2.1237322e-06
        %v1682 = vadd.f32 %v1681, 0.00028619796
        %v1683 = vmul.f32 %v1680, %v1682
        %v1684 = vadd.f32 %v1683, 0.0036580483
        %v1685 = vmul.f32 %v1680, %v1684
        %v1686 = vadd.f32 %v1685, 0.05243302
        %v1687 = vmul.f32 %v1680, %v1686
        %v1688 = vadd.f32 %v1687, 0.18741608
        %v1689 = vmul.f32 %v1680, %v1688
        %v1690 = vadd.f32 %v1689, 1.1283791
        %v1691 = vmul.f32 %v1551, %v1690
        %v1692 = vmul.f32 %v1680, 3.8918573e-05
        %v1693 = vadd.f32 %v1692, 0.001143296
        %v1694 = vmul.f32 %v1680, %v1693
        %v1695 = vadd.f32 %v1694, 0.014752088
        %v1696 = vmul.f32 %v1680, %v1695
        %v1697 = vadd.f32 %v1696, 0.112945676
        %v1698 = vmul.f32 %v1680, %v1697
        %v1699 = vadd.f32 %v1698, 0.4994258
        %v1700 = vmul.f32 %v1680, %v1699
        %v1701 = vadd.f32 %v1700, 1.0
        %v1702 = vrcp.pop %v1701
        %v1703 = vmul.f32 %v1701, %v1702
        %v1704 = vsub.f32 1.0, %v1703
        %v1705 = vmul.f32 %v1702, %v1704
        %v1706 = vadd.f32 %v1702, %v1705
        %vm1707 = vweird.f32 %v1701
        %vm1708 = vweird.f32 %v1702
        %vm1709 = vmor %vm1707, %vm1708
        %v1710 = vsel %vm1709, %v1702, %v1706
        %v1711 = vand.u32 2147483647, %v1701
        %vm1712 = vcmp.eq.f32.partialorder %v1711, 8.507059e+37
        %v1713 = vand.u32 %v1701, 2147483648
        %v1714 = vor.u32 1.1754944e-38, %v1713
        %v1715 = vsel %vm1712, %v1714, %v1710
        %v1716 = vmul.f32 %v1691, %v1715
        %v1717 = vmin.f32 %v1716, 1.0
        %v1718 = vmax.f32 %v1717, -1.0
        %v1719 = vmul.f32 %v1552, %v1552
        %v1720 = vmin.f32 16.0, %v1719
        %v1721 = vmul.f32 %v1720, 2.1237322e-06
        %v1722 = vadd.f32 %v1721, 0.00028619796
        %v1723 = vmul.f32 %v1720, %v1722
        %v1724 = vadd.f32 %v1723, 0.0036580483
        %v1725 = vmul.f32 %v1720, %v1724
        %v1726 = vadd.f32 %v1725, 0.05243302
        %v1727 = vmul.f32 %v1720, %v1726
        %v1728 = vadd.f32 %v1727, 0.18741608
        %v1729 = vmul.f32 %v1720, %v1728
        %v1730 = vadd.f32 %v1729, 1.1283791
        %v1731 = vmul.f32 %v1552, %v1730
        %v1732 = vmul.f32 %v1720, 3.8918573e-05
        %v1733 = vadd.f32 %v1732, 0.001143296
        %v1734 = vmul.f32 %v1720, %v1733
        %v1735 = vadd.f32 %v1734, 0.014752088
        %v1736 = vmul.f32 %v1720, %v1735
        %v1737 = vadd.f32 %v1736, 0.112945676
        %v1738 = vmul.f32 %v1720, %v1737
        %v1739 = vadd.f32 %v1738, 0.4994258
        %v1740 = vmul.f32 %v1720, %v1739
        %v1741 = vadd.f32 %v1740, 1.0
        %v1742 = vrcp.pop %v1741
        %v1743 = vmul.f32 %v1741, %v1742
        %v1744 = vsub.f32 1.0, %v1743
        %v1745 = vmul.f32 %v1742, %v1744
        %v1746 = vadd.f32 %v1742, %v1745
        %vm1747 = vweird.f32 %v1741
        %vm1748 = vweird.f32 %v1742
        %vm1749 = vmor %vm1747, %vm1748
        %v1750 = vsel %vm1749, %v1742, %v1746
        %v1751 = vand.u32 2147483647, %v1741
        %vm1752 = vcmp.eq.f32.partialorder %v1751, 8.507059e+37
        %v1753 = vand.u32 %v1741, 2147483648
        %v1754 = vor.u32 1.1754944e-38, %v1753
        %v1755 = vsel %vm1752, %v1754, %v1750
        %v1756 = vmul.f32 %v1731, %v1755
        %v1757 = vmin.f32 %v1756, 1.0
        %v1758 = vmax.f32 %v1757, -1.0
        %v1759 = vmul.f32 %v1553, %v1553
        %v1760 = vmin.f32 16.0, %v1759
        %v1761 = vmul.f32 %v1760, 2.1237322e-06
        %v1762 = vadd.f32 %v1761, 0.00028619796
        %v1763 = vmul.f32 %v1760, %v1762
        %v1764 = vadd.f32 %v1763, 0.0036580483
        %v1765 = vmul.f32 %v1760, %v1764
        %v1766 = vadd.f32 %v1765, 0.05243302
        %v1767 = vmul.f32 %v1760, %v1766
        %v1768 = vadd.f32 %v1767, 0.18741608
        %v1769 = vmul.f32 %v1760, %v1768
        %v1770 = vadd.f32 %v1769, 1.1283791
        %v1771 = vmul.f32 %v1553, %v1770
        %v1772 = vmul.f32 %v1760, 3.8918573e-05
        %v1773 = vadd.f32 %v1772, 0.001143296
        %v1774 = vmul.f32 %v1760, %v1773
        %v1775 = vadd.f32 %v1774, 0.014752088
        %v1776 = vmul.f32 %v1760, %v1775
        %v1777 = vadd.f32 %v1776, 0.112945676
        %v1778 = vmul.f32 %v1760, %v1777
        %v1779 = vadd.f32 %v1778, 0.4994258
        %v1780 = vmul.f32 %v1760, %v1779
        %v1781 = vadd.f32 %v1780, 1.0
        %v1782 = vrcp.pop %v1781
        %v1783 = vmul.f32 %v1781, %v1782
        %v1784 = vsub.f32 1.0, %v1783
        %v1785 = vmul.f32 %v1782, %v1784
        %v1786 = vadd.f32 %v1782, %v1785
        %vm1787 = vweird.f32 %v1781
        %vm1788 = vweird.f32 %v1782
        %vm1789 = vmor %vm1787, %vm1788
        %v1790 = vsel %vm1789, %v1782, %v1786
        %v1791 = vand.u32 2147483647, %v1781
        %vm1792 = vcmp.eq.f32.partialorder %v1791, 8.507059e+37
        %v1793 = vand.u32 %v1781, 2147483648
        %v1794 = vor.u32 1.1754944e-38, %v1793
        %v1795 = vsel %vm1792, %v1794, %v1790
        %v1796 = vmul.f32 %v1771, %v1795
        %v1797 = vmin.f32 %v1796, 1.0
        %v1798 = vmax.f32 %v1797, -1.0
        %v1799 = vmul.f32 %v1554, %v1554
        %v1800 = vmin.f32 16.0, %v1799
        %v1801 = vmul.f32 %v1800, 2.1237322e-06
        %v1802 = vadd.f32 %v1801, 0.00028619796
        %v1803 = vmul.f32 %v1800, %v1802
        %v1804 = vadd.f32 %v1803, 0.0036580483
        %v1805 = vmul.f32 %v1800, %v1804
        %v1806 = vadd.f32 %v1805, 0.05243302
        %v1807 = vmul.f32 %v1800, %v1806
        %v1808 = vadd.f32 %v1807, 0.18741608
        %v1809 = vmul.f32 %v1800, %v1808
        %v1810 = vadd.f32 %v1809, 1.1283791
        %v1811 = vmul.f32 %v1554, %v1810
        %v1812 = vmul.f32 %v1800, 3.8918573e-05
        %v1813 = vadd.f32 %v1812, 0.001143296
        %v1814 = vmul.f32 %v1800, %v1813
        %v1815 = vadd.f32 %v1814, 0.014752088
        %v1816 = vmul.f32 %v1800, %v1815
        %v1817 = vadd.f32 %v1816, 0.112945676
        %v1818 = vmul.f32 %v1800, %v1817
        %v1819 = vadd.f32 %v1818, 0.4994258
        %v1820 = vmul.f32 %v1800, %v1819
        %v1821 = vadd.f32 %v1820, 1.0
        %v1822 = vrcp.pop %v1821
        %v1823 = vmul.f32 %v1821, %v1822
        %v1824 = vsub.f32 1.0, %v1823
        %v1825 = vmul.f32 %v1822, %v1824
        %v1826 = vadd.f32 %v1822, %v1825
        %vm1827 = vweird.f32 %v1821
        %vm1828 = vweird.f32 %v1822
        %vm1829 = vmor %vm1827, %vm1828
        %v1830 = vsel %vm1829, %v1822, %v1826
        %v1831 = vand.u32 2147483647, %v1821
        %vm1832 = vcmp.eq.f32.partialorder %v1831, 8.507059e+37
        %v1833 = vand.u32 %v1821, 2147483648
        %v1834 = vor.u32 1.1754944e-38, %v1833
        %v1835 = vsel %vm1832, %v1834, %v1830
        %v1836 = vmul.f32 %v1811, %v1835
        %v1837 = vmin.f32 %v1836, 1.0
        %v1838 = vmax.f32 %v1837, -1.0
        %v1839 = vmul.f32 %v1555, %v1555
        %v1840 = vmin.f32 16.0, %v1839
        %v1841 = vmul.f32 %v1840, 2.1237322e-06
        %v1842 = vadd.f32 %v1841, 0.00028619796
        %v1843 = vmul.f32 %v1840, %v1842
        %v1844 = vadd.f32 %v1843, 0.0036580483
        %v1845 = vmul.f32 %v1840, %v1844
        %v1846 = vadd.f32 %v1845, 0.05243302
        %v1847 = vmul.f32 %v1840, %v1846
        %v1848 = vadd.f32 %v1847, 0.18741608
        %v1849 = vmul.f32 %v1840, %v1848
        %v1850 = vadd.f32 %v1849, 1.1283791
        %v1851 = vmul.f32 %v1555, %v1850
        %v1852 = vmul.f32 %v1840, 3.8918573e-05
        %v1853 = vadd.f32 %v1852, 0.001143296
        %v1854 = vmul.f32 %v1840, %v1853
        %v1855 = vadd.f32 %v1854, 0.014752088
        %v1856 = vmul.f32 %v1840, %v1855
        %v1857 = vadd.f32 %v1856, 0.112945676
        %v1858 = vmul.f32 %v1840, %v1857
        %v1859 = vadd.f32 %v1858, 0.4994258
        %v1860 = vmul.f32 %v1840, %v1859
        %v1861 = vadd.f32 %v1860, 1.0
        %v1862 = vrcp.pop %v1861
        %v1863 = vmul.f32 %v1861, %v1862
        %v1864 = vsub.f32 1.0, %v1863
        %v1865 = vmul.f32 %v1862, %v1864
        %v1866 = vadd.f32 %v1862, %v1865
        %vm1867 = vweird.f32 %v1861
        %vm1868 = vweird.f32 %v1862
        %vm1869 = vmor %vm1867, %vm1868
        %v1870 = vsel %vm1869, %v1862, %v1866
        %v1871 = vand.u32 2147483647, %v1861
        %vm1872 = vcmp.eq.f32.partialorder %v1871, 8.507059e+37
        %v1873 = vand.u32 %v1861, 2147483648
        %v1874 = vor.u32 1.1754944e-38, %v1873
        %v1875 = vsel %vm1872, %v1874, %v1870
        %v1876 = vmul.f32 %v1851, %v1875
        %v1877 = vmin.f32 %v1876, 1.0
        %v1878 = vmax.f32 %v1877, -1.0
        %v1879 = vmul.f32 %v1556, %v1556
        %v1880 = vmin.f32 16.0, %v1879
        %v1881 = vmul.f32 %v1880, 2.1237322e-06
        %v1882 = vadd.f32 %v1881, 0.00028619796
        %v1883 = vmul.f32 %v1880, %v1882
        %v1884 = vadd.f32 %v1883, 0.0036580483
        %v1885 = vmul.f32 %v1880, %v1884
        %v1886 = vadd.f32 %v1885, 0.05243302
        %v1887 = vmul.f32 %v1880, %v1886
        %v1888 = vadd.f32 %v1887, 0.18741608
        %v1889 = vmul.f32 %v1880, %v1888
        %v1890 = vadd.f32 %v1889, 1.1283791
        %v1891 = vmul.f32 %v1556, %v1890
        %v1892 = vmul.f32 %v1880, 3.8918573e-05
        %v1893 = vadd.f32 %v1892, 0.001143296
        %v1894 = vmul.f32 %v1880, %v1893
        %v1895 = vadd.f32 %v1894, 0.014752088
        %v1896 = vmul.f32 %v1880, %v1895
        %v1897 = vadd.f32 %v1896, 0.112945676
        %v1898 = vmul.f32 %v1880, %v1897
        %v1899 = vadd.f32 %v1898, 0.4994258
        %v1900 = vmul.f32 %v1880, %v1899
        %v1901 = vadd.f32 %v1900, 1.0
        %v1902 = vrcp.pop %v1901
        %v1903 = vmul.f32 %v1901, %v1902
        %v1904 = vsub.f32 1.0, %v1903
        %v1905 = vmul.f32 %v1902, %v1904
        %v1906 = vadd.f32 %v1902, %v1905
        %vm1907 = vweird.f32 %v1901
        %vm1908 = vweird.f32 %v1902
        %vm1909 = vmor %vm1907, %vm1908
        %v1910 = vsel %vm1909, %v1902, %v1906
        %v1911 = vand.u32 2147483647, %v1901
        %vm1912 = vcmp.eq.f32.partialorder %v1911, 8.507059e+37
        %v1913 = vand.u32 %v1901, 2147483648
        %v1914 = vor.u32 1.1754944e-38, %v1913
        %v1915 = vsel %vm1912, %v1914, %v1910
        %v1916 = vmul.f32 %v1891, %v1915
        %v1917 = vmin.f32 %v1916, 1.0
        %v1918 = vmax.f32 %v1917, -1.0
        %v1919 = vmul.f32 %v1557, %v1557
        %v1920 = vmin.f32 16.0, %v1919
        %v1921 = vmul.f32 %v1920, 2.1237322e-06
        %v1922 = vadd.f32 %v1921, 0.00028619796
        %v1923 = vmul.f32 %v1920, %v1922
        %v1924 = vadd.f32 %v1923, 0.0036580483
        %v1925 = vmul.f32 %v1920, %v1924
        %v1926 = vadd.f32 %v1925, 0.05243302
        %v1927 = vmul.f32 %v1920, %v1926
        %v1928 = vadd.f32 %v1927, 0.18741608
        %v1929 = vmul.f32 %v1920, %v1928
        %v1930 = vadd.f32 %v1929, 1.1283791
        %v1931 = vmul.f32 %v1557, %v1930
        %v1932 = vmul.f32 %v1920, 3.8918573e-05
        %v1933 = vadd.f32 %v1932, 0.001143296
        %v1934 = vmul.f32 %v1920, %v1933
        %v1935 = vadd.f32 %v1934, 0.014752088
        %v1936 = vmul.f32 %v1920, %v1935
        %v1937 = vadd.f32 %v1936, 0.112945676
        %v1938 = vmul.f32 %v1920, %v1937
        %v1939 = vadd.f32 %v1938, 0.4994258
        %v1940 = vmul.f32 %v1920, %v1939
        %v1941 = vadd.f32 %v1940, 1.0
        %v1942 = vrcp.pop %v1941
        %v1943 = vmul.f32 %v1941, %v1942
        %v1944 = vsub.f32 1.0, %v1943
        %v1945 = vmul.f32 %v1942, %v1944
        %v1946 = vadd.f32 %v1942, %v1945
        %vm1947 = vweird.f32 %v1941
        %vm1948 = vweird.f32 %v1942
        %vm1949 = vmor %vm1947, %vm1948
        %v1950 = vsel %vm1949, %v1942, %v1946
        %v1951 = vand.u32 2147483647, %v1941
        %vm1952 = vcmp.eq.f32.partialorder %v1951, 8.507059e+37
        %v1953 = vand.u32 %v1941, 2147483648
        %v1954 = vor.u32 1.1754944e-38, %v1953
        %v1955 = vsel %vm1952, %v1954, %v1950
        %v1956 = vmul.f32 %v1931, %v1955
        %v1957 = vmin.f32 %v1956, 1.0
        %v1958 = vmax.f32 %v1957, -1.0
        %v1959 = vmul.f32 %v1558, %v1558
        %v1960 = vmin.f32 16.0, %v1959
        %v1961 = vmul.f32 %v1960, 2.1237322e-06
        %v1962 = vadd.f32 %v1961, 0.00028619796
        %v1963 = vmul.f32 %v1960, %v1962
        %v1964 = vadd.f32 %v1963, 0.0036580483
        %v1965 = vmul.f32 %v1960, %v1964
        %v1966 = vadd.f32 %v1965, 0.05243302
        %v1967 = vmul.f32 %v1960, %v1966
        %v1968 = vadd.f32 %v1967, 0.18741608
        %v1969 = vmul.f32 %v1960, %v1968
        %v1970 = vadd.f32 %v1969, 1.1283791
        %v1971 = vmul.f32 %v1558, %v1970
        %v1972 = vmul.f32 %v1960, 3.8918573e-05
        %v1973 = vadd.f32 %v1972, 0.001143296
        %v1974 = vmul.f32 %v1960, %v1973
        %v1975 = vadd.f32 %v1974, 0.014752088
        %v1976 = vmul.f32 %v1960, %v1975
        %v1977 = vadd.f32 %v1976, 0.112945676
        %v1978 = vmul.f32 %v1960, %v1977
        %v1979 = vadd.f32 %v1978, 0.4994258
        %v1980 = vmul.f32 %v1960, %v1979
        %v1981 = vadd.f32 %v1980, 1.0
        %v1982 = vrcp.pop %v1981
        %v1983 = vmul.f32 %v1981, %v1982
        %v1984 = vsub.f32 1.0, %v1983
        %v1985 = vmul.f32 %v1982, %v1984
        %v1986 = vadd.f32 %v1982, %v1985
        %vm1987 = vweird.f32 %v1981
        %vm1988 = vweird.f32 %v1982
        %vm1989 = vmor %vm1987, %vm1988
        %v1990 = vsel %vm1989, %v1982, %v1986
        %v1991 = vand.u32 2147483647, %v1981
        %vm1992 = vcmp.eq.f32.partialorder %v1991, 8.507059e+37
        %v1993 = vand.u32 %v1981, 2147483648
        %v1994 = vor.u32 1.1754944e-38, %v1993
        %v1995 = vsel %vm1992, %v1994, %v1990
        %v1996 = vmul.f32 %v1971, %v1995
        %v1997 = vmin.f32 %v1996, 1.0
        %v1998 = vmax.f32 %v1997, -1.0
        %v1999 = vmul.f32 %v1559, %v1559
        %v2000 = vmin.f32 16.0, %v1999
        %v2001 = vmul.f32 %v2000, 2.1237322e-06
        %v2002 = vadd.f32 %v2001, 0.00028619796
        %v2003 = vmul.f32 %v2000, %v2002
        %v2004 = vadd.f32 %v2003, 0.0036580483
        %v2005 = vmul.f32 %v2000, %v2004
        %v2006 = vadd.f32 %v2005, 0.05243302
        %v2007 = vmul.f32 %v2000, %v2006
        %v2008 = vadd.f32 %v2007, 0.18741608
        %v2009 = vmul.f32 %v2000, %v2008
        %v2010 = vadd.f32 %v2009, 1.1283791
        %v2011 = vmul.f32 %v1559, %v2010
        %v2012 = vmul.f32 %v2000, 3.8918573e-05
        %v2013 = vadd.f32 %v2012, 0.001143296
        %v2014 = vmul.f32 %v2000, %v2013
        %v2015 = vadd.f32 %v2014, 0.014752088
        %v2016 = vmul.f32 %v2000, %v2015
        %v2017 = vadd.f32 %v2016, 0.112945676
        %v2018 = vmul.f32 %v2000, %v2017
        %v2019 = vadd.f32 %v2018, 0.4994258
        %v2020 = vmul.f32 %v2000, %v2019
        %v2021 = vadd.f32 %v2020, 1.0
        %v2022 = vrcp.pop %v2021
        %v2023 = vmul.f32 %v2021, %v2022
        %v2024 = vsub.f32 1.0, %v2023
        %v2025 = vmul.f32 %v2022, %v2024
        %v2026 = vadd.f32 %v2022, %v2025
        %vm2027 = vweird.f32 %v2021
        %vm2028 = vweird.f32 %v2022
        %vm2029 = vmor %vm2027, %vm2028
        %v2030 = vsel %vm2029, %v2022, %v2026
        %v2031 = vand.u32 2147483647, %v2021
        %vm2032 = vcmp.eq.f32.partialorder %v2031, 8.507059e+37
        %v2033 = vand.u32 %v2021, 2147483648
        %v2034 = vor.u32 1.1754944e-38, %v2033
        %v2035 = vsel %vm2032, %v2034, %v2030
        %v2036 = vmul.f32 %v2011, %v2035
        %v2037 = vmin.f32 %v2036, 1.0
        %v2038 = vmax.f32 %v2037, -1.0
        %v2039 = vmul.f32 %v1560, %v1560
        %v2040 = vmin.f32 16.0, %v2039
        %v2041 = vmul.f32 %v2040, 2.1237322e-06
        %v2042 = vadd.f32 %v2041, 0.00028619796
        %v2043 = vmul.f32 %v2040, %v2042
        %v2044 = vadd.f32 %v2043, 0.0036580483
        %v2045 = vmul.f32 %v2040, %v2044
        %v2046 = vadd.f32 %v2045, 0.05243302
        %v2047 = vmul.f32 %v2040, %v2046
        %v2048 = vadd.f32 %v2047, 0.18741608
        %v2049 = vmul.f32 %v2040, %v2048
        %v2050 = vadd.f32 %v2049, 1.1283791
        %v2051 = vmul.f32 %v1560, %v2050
        %v2052 = vmul.f32 %v2040, 3.8918573e-05
        %v2053 = vadd.f32 %v2052, 0.001143296
        %v2054 = vmul.f32 %v2040, %v2053
        %v2055 = vadd.f32 %v2054, 0.014752088
        %v2056 = vmul.f32 %v2040, %v2055
        %v2057 = vadd.f32 %v2056, 0.112945676
        %v2058 = vmul.f32 %v2040, %v2057
        %v2059 = vadd.f32 %v2058, 0.4994258
        %v2060 = vmul.f32 %v2040, %v2059
        %v2061 = vadd.f32 %v2060, 1.0
        %v2062 = vrcp.pop %v2061
        %v2063 = vmul.f32 %v2061, %v2062
        %v2064 = vsub.f32 1.0, %v2063
        %v2065 = vmul.f32 %v2062, %v2064
        %v2066 = vadd.f32 %v2062, %v2065
        %vm2067 = vweird.f32 %v2061
        %vm2068 = vweird.f32 %v2062
        %vm2069 = vmor %vm2067, %vm2068
        %v2070 = vsel %vm2069, %v2062, %v2066
        %v2071 = vand.u32 2147483647, %v2061
        %vm2072 = vcmp.eq.f32.partialorder %v2071, 8.507059e+37
        %v2073 = vand.u32 %v2061, 2147483648
        %v2074 = vor.u32 1.1754944e-38, %v2073
        %v2075 = vsel %vm2072, %v2074, %v2070
        %v2076 = vmul.f32 %v2051, %v2075
        %v2077 = vmin.f32 %v2076, 1.0
        %v2078 = vmax.f32 %v2077, -1.0
        %v2079 = vmul.f32 %v1561, %v1561
        %v2080 = vmin.f32 16.0, %v2079
        %v2081 = vmul.f32 %v2080, 2.1237322e-06
        %v2082 = vadd.f32 %v2081, 0.00028619796
        %v2083 = vmul.f32 %v2080, %v2082
        %v2084 = vadd.f32 %v2083, 0.0036580483
        %v2085 = vmul.f32 %v2080, %v2084
        %v2086 = vadd.f32 %v2085, 0.05243302
        %v2087 = vmul.f32 %v2080, %v2086
        %v2088 = vadd.f32 %v2087, 0.18741608
        %v2089 = vmul.f32 %v2080, %v2088
        %v2090 = vadd.f32 %v2089, 1.1283791
        %v2091 = vmul.f32 %v1561, %v2090
        %v2092 = vmul.f32 %v2080, 3.8918573e-05
        %v2093 = vadd.f32 %v2092, 0.001143296
        %v2094 = vmul.f32 %v2080, %v2093
        %v2095 = vadd.f32 %v2094, 0.014752088
        %v2096 = vmul.f32 %v2080, %v2095
        %v2097 = vadd.f32 %v2096, 0.112945676
        %v2098 = vmul.f32 %v2080, %v2097
        %v2099 = vadd.f32 %v2098, 0.4994258
        %v2100 = vmul.f32 %v2080, %v2099
        %v2101 = vadd.f32 %v2100, 1.0
        %v2102 = vrcp.pop %v2101
        %v2103 = vmul.f32 %v2101, %v2102
        %v2104 = vsub.f32 1.0, %v2103
        %v2105 = vmul.f32 %v2102, %v2104
        %v2106 = vadd.f32 %v2102, %v2105
        %vm2107 = vweird.f32 %v2101
        %vm2108 = vweird.f32 %v2102
        %vm2109 = vmor %vm2107, %vm2108
        %v2110 = vsel %vm2109, %v2102, %v2106
        %v2111 = vand.u32 2147483647, %v2101
        %vm2112 = vcmp.eq.f32.partialorder %v2111, 8.507059e+37
        %v2113 = vand.u32 %v2101, 2147483648
        %v2114 = vor.u32 1.1754944e-38, %v2113
        %v2115 = vsel %vm2112, %v2114, %v2110
        %v2116 = vmul.f32 %v2091, %v2115
        %v2117 = vmin.f32 %v2116, 1.0
        %v2118 = vmax.f32 %v2117, -1.0
        %v2119 = vmul.f32 %v1562, %v1562
        %v2120 = vmin.f32 16.0, %v2119
        %v2121 = vmul.f32 %v2120, 2.1237322e-06
        %v2122 = vadd.f32 %v2121, 0.00028619796
        %v2123 = vmul.f32 %v2120, %v2122
        %v2124 = vadd.f32 %v2123, 0.0036580483
        %v2125 = vmul.f32 %v2120, %v2124
        %v2126 = vadd.f32 %v2125, 0.05243302
        %v2127 = vmul.f32 %v2120, %v2126
        %v2128 = vadd.f32 %v2127, 0.18741608
        %v2129 = vmul.f32 %v2120, %v2128
        %v2130 = vadd.f32 %v2129, 1.1283791
        %v2131 = vmul.f32 %v1562, %v2130
        %v2132 = vmul.f32 %v2120, 3.8918573e-05
        %v2133 = vadd.f32 %v2132, 0.001143296
        %v2134 = vmul.f32 %v2120, %v2133
        %v2135 = vadd.f32 %v2134, 0.014752088
        %v2136 = vmul.f32 %v2120, %v2135
        %v2137 = vadd.f32 %v2136, 0.112945676
        %v2138 = vmul.f32 %v2120, %v2137
        %v2139 = vadd.f32 %v2138, 0.4994258
        %v2140 = vmul.f32 %v2120, %v2139
        %v2141 = vadd.f32 %v2140, 1.0
        %v2142 = vrcp.pop %v2141
        %v2143 = vmul.f32 %v2141, %v2142
        %v2144 = vsub.f32 1.0, %v2143
        %v2145 = vmul.f32 %v2142, %v2144
        %v2146 = vadd.f32 %v2142, %v2145
        %vm2147 = vweird.f32 %v2141
        %vm2148 = vweird.f32 %v2142
        %vm2149 = vmor %vm2147, %vm2148
        %v2150 = vsel %vm2149, %v2142, %v2146
        %v2151 = vand.u32 2147483647, %v2141
        %vm2152 = vcmp.eq.f32.partialorder %v2151, 8.507059e+37
        %v2153 = vand.u32 %v2141, 2147483648
        %v2154 = vor.u32 1.1754944e-38, %v2153
        %v2155 = vsel %vm2152, %v2154, %v2150
        %v2156 = vmul.f32 %v2131, %v2155
        %v2157 = vmin.f32 %v2156, 1.0
        %v2158 = vmax.f32 %v2157, -1.0
        %v2159 = vmul.f32 %v1563, %v1563
        %v2160 = vmin.f32 16.0, %v2159
        %v2161 = vmul.f32 %v2160, 2.1237322e-06
        %v2162 = vadd.f32 %v2161, 0.00028619796
        %v2163 = vmul.f32 %v2160, %v2162
        %v2164 = vadd.f32 %v2163, 0.0036580483
        %v2165 = vmul.f32 %v2160, %v2164
        %v2166 = vadd.f32 %v2165, 0.05243302
        %v2167 = vmul.f32 %v2160, %v2166
        %v2168 = vadd.f32 %v2167, 0.18741608
        %v2169 = vmul.f32 %v2160, %v2168
        %v2170 = vadd.f32 %v2169, 1.1283791
        %v2171 = vmul.f32 %v1563, %v2170
        %v2172 = vmul.f32 %v2160, 3.8918573e-05
        %v2173 = vadd.f32 %v2172, 0.001143296
        %v2174 = vmul.f32 %v2160, %v2173
        %v2175 = vadd.f32 %v2174, 0.014752088
        %v2176 = vmul.f32 %v2160, %v2175
        %v2177 = vadd.f32 %v2176, 0.112945676
        %v2178 = vmul.f32 %v2160, %v2177
        %v2179 = vadd.f32 %v2178, 0.4994258
        %v2180 = vmul.f32 %v2160, %v2179
        %v2181 = vadd.f32 %v2180, 1.0
        %v2182 = vrcp.pop %v2181
        %v2183 = vmul.f32 %v2181, %v2182
        %v2184 = vsub.f32 1.0, %v2183
        %v2185 = vmul.f32 %v2182, %v2184
        %v2186 = vadd.f32 %v2182, %v2185
        %vm2187 = vweird.f32 %v2181
        %vm2188 = vweird.f32 %v2182
        %vm2189 = vmor %vm2187, %vm2188
        %v2190 = vsel %vm2189, %v2182, %v2186
        %v2191 = vand.u32 2147483647, %v2181
        %vm2192 = vcmp.eq.f32.partialorder %v2191, 8.507059e+37
        %v2193 = vand.u32 %v2181, 2147483648
        %v2194 = vor.u32 1.1754944e-38, %v2193
        %v2195 = vsel %vm2192, %v2194, %v2190
        %v2196 = vmul.f32 %v2171, %v2195
        %v2197 = vmin.f32 %v2196, 1.0
        %v2198 = vmax.f32 %v2197, -1.0
        %v2199 = vmul.f32 %v1564, %v1564
        %v2200 = vmin.f32 16.0, %v2199
        %v2201 = vmul.f32 %v2200, 2.1237322e-06
        %v2202 = vadd.f32 %v2201, 0.00028619796
        %v2203 = vmul.f32 %v2200, %v2202
        %v2204 = vadd.f32 %v2203, 0.0036580483
        %v2205 = vmul.f32 %v2200, %v2204
        %v2206 = vadd.f32 %v2205, 0.05243302
        %v2207 = vmul.f32 %v2200, %v2206
        %v2208 = vadd.f32 %v2207, 0.18741608
        %v2209 = vmul.f32 %v2200, %v2208
        %v2210 = vadd.f32 %v2209, 1.1283791
        %v2211 = vmul.f32 %v1564, %v2210
        %v2212 = vmul.f32 %v2200, 3.8918573e-05
        %v2213 = vadd.f32 %v2212, 0.001143296
        %v2214 = vmul.f32 %v2200, %v2213
        %v2215 = vadd.f32 %v2214, 0.014752088
        %v2216 = vmul.f32 %v2200, %v2215
        %v2217 = vadd.f32 %v2216, 0.112945676
        %v2218 = vmul.f32 %v2200, %v2217
        %v2219 = vadd.f32 %v2218, 0.4994258
        %v2220 = vmul.f32 %v2200, %v2219
        %v2221 = vadd.f32 %v2220, 1.0
        %v2222 = vrcp.pop %v2221
        %v2223 = vmul.f32 %v2221, %v2222
        %v2224 = vsub.f32 1.0, %v2223
        %v2225 = vmul.f32 %v2222, %v2224
        %v2226 = vadd.f32 %v2222, %v2225
        %vm2227 = vweird.f32 %v2221
        %vm2228 = vweird.f32 %v2222
        %vm2229 = vmor %vm2227, %vm2228
        %v2230 = vsel %vm2229, %v2222, %v2226
        %v2231 = vand.u32 2147483647, %v2221
        %vm2232 = vcmp.eq.f32.partialorder %v2231, 8.507059e+37
        %v2233 = vand.u32 %v2221, 2147483648
        %v2234 = vor.u32 1.1754944e-38, %v2233
        %v2235 = vsel %vm2232, %v2234, %v2230
        %v2236 = vmul.f32 %v2211, %v2235
        %v2237 = vmin.f32 %v2236, 1.0
        %v2238 = vmax.f32 %v2237, -1.0
        %v2239 = vmul.f32 %v1565, %v1565
        %v2240 = vmin.f32 16.0, %v2239
        %v2241 = vmul.f32 %v2240, 2.1237322e-06
        %v2242 = vadd.f32 %v2241, 0.00028619796
        %v2243 = vmul.f32 %v2240, %v2242
        %v2244 = vadd.f32 %v2243, 0.0036580483
        %v2245 = vmul.f32 %v2240, %v2244
        %v2246 = vadd.f32 %v2245, 0.05243302
        %v2247 = vmul.f32 %v2240, %v2246
        %v2248 = vadd.f32 %v2247, 0.18741608
        %v2249 = vmul.f32 %v2240, %v2248
        %v2250 = vadd.f32 %v2249, 1.1283791
        %v2251 = vmul.f32 %v1565, %v2250
        %v2252 = vmul.f32 %v2240, 3.8918573e-05
        %v2253 = vadd.f32 %v2252, 0.001143296
        %v2254 = vmul.f32 %v2240, %v2253
        %v2255 = vadd.f32 %v2254, 0.014752088
        %v2256 = vmul.f32 %v2240, %v2255
        %v2257 = vadd.f32 %v2256, 0.112945676
        %v2258 = vmul.f32 %v2240, %v2257
        %v2259 = vadd.f32 %v2258, 0.4994258
        %v2260 = vmul.f32 %v2240, %v2259
        %v2261 = vadd.f32 %v2260, 1.0
        %v2262 = vrcp.pop %v2261
        %v2263 = vmul.f32 %v2261, %v2262
        %v2264 = vsub.f32 1.0, %v2263
        %v2265 = vmul.f32 %v2262, %v2264
        %v2266 = vadd.f32 %v2262, %v2265
        %vm2267 = vweird.f32 %v2261
        %vm2268 = vweird.f32 %v2262
        %vm2269 = vmor %vm2267, %vm2268
        %v2270 = vsel %vm2269, %v2262, %v2266
        %v2271 = vand.u32 2147483647, %v2261
        %vm2272 = vcmp.eq.f32.partialorder %v2271, 8.507059e+37
        %v2273 = vand.u32 %v2261, 2147483648
        %v2274 = vor.u32 1.1754944e-38, %v2273
        %v2275 = vsel %vm2272, %v2274, %v2270
        %v2276 = vmul.f32 %v2251, %v2275
        %v2277 = vmin.f32 %v2276, 1.0
        %v2278 = vmax.f32 %v2277, -1.0
        %v2279 = vmul.f32 %v1566, %v1566
        %v2280 = vmin.f32 16.0, %v2279
        %v2281 = vmul.f32 %v2280, 2.1237322e-06
        %v2282 = vadd.f32 %v2281, 0.00028619796
        %v2283 = vmul.f32 %v2280, %v2282
        %v2284 = vadd.f32 %v2283, 0.0036580483
        %v2285 = vmul.f32 %v2280, %v2284
        %v2286 = vadd.f32 %v2285, 0.05243302
        %v2287 = vmul.f32 %v2280, %v2286
        %v2288 = vadd.f32 %v2287, 0.18741608
        %v2289 = vmul.f32 %v2280, %v2288
        %v2290 = vadd.f32 %v2289, 1.1283791
        %v2291 = vmul.f32 %v1566, %v2290
        %v2292 = vmul.f32 %v2280, 3.8918573e-05
        %v2293 = vadd.f32 %v2292, 0.001143296
        %v2294 = vmul.f32 %v2280, %v2293
        %v2295 = vadd.f32 %v2294, 0.014752088
        %v2296 = vmul.f32 %v2280, %v2295
        %v2297 = vadd.f32 %v2296, 0.112945676
        %v2298 = vmul.f32 %v2280, %v2297
        %v2299 = vadd.f32 %v2298, 0.4994258
        %v2300 = vmul.f32 %v2280, %v2299
        %v2301 = vadd.f32 %v2300, 1.0
        %v2302 = vrcp.pop %v2301
        %v2303 = vmul.f32 %v2301, %v2302
        %v2304 = vsub.f32 1.0, %v2303
        %v2305 = vmul.f32 %v2302, %v2304
        %v2306 = vadd.f32 %v2302, %v2305
        %vm2307 = vweird.f32 %v2301
        %vm2308 = vweird.f32 %v2302
        %vm2309 = vmor %vm2307, %vm2308
        %v2310 = vsel %vm2309, %v2302, %v2306
        %v2311 = vand.u32 2147483647, %v2301
        %vm2312 = vcmp.eq.f32.partialorder %v2311, 8.507059e+37
        %v2313 = vand.u32 %v2301, 2147483648
        %v2314 = vor.u32 1.1754944e-38, %v2313
        %v2315 = vsel %vm2312, %v2314, %v2310
        %v2316 = vmul.f32 %v2291, %v2315
        %v2317 = vmin.f32 %v2316, 1.0
        %v2318 = vmax.f32 %v2317, -1.0
        %v2319 = vmul.f32 %v1567, %v1567
        %v2320 = vmin.f32 16.0, %v2319
        %v2321 = vmul.f32 %v2320, 2.1237322e-06
        %v2322 = vadd.f32 %v2321, 0.00028619796
        %v2323 = vmul.f32 %v2320, %v2322
        %v2324 = vadd.f32 %v2323, 0.0036580483
        %v2325 = vmul.f32 %v2320, %v2324
        %v2326 = vadd.f32 %v2325, 0.05243302
        %v2327 = vmul.f32 %v2320, %v2326
        %v2328 = vadd.f32 %v2327, 0.18741608
        %v2329 = vmul.f32 %v2320, %v2328
        %v2330 = vadd.f32 %v2329, 1.1283791
        %v2331 = vmul.f32 %v1567, %v2330
        %v2332 = vmul.f32 %v2320, 3.8918573e-05
        %v2333 = vadd.f32 %v2332, 0.001143296
        %v2334 = vmul.f32 %v2320, %v2333
        %v2335 = vadd.f32 %v2334, 0.014752088
        %v2336 = vmul.f32 %v2320, %v2335
        %v2337 = vadd.f32 %v2336, 0.112945676
        %v2338 = vmul.f32 %v2320, %v2337
        %v2339 = vadd.f32 %v2338, 0.4994258
        %v2340 = vmul.f32 %v2320, %v2339
        %v2341 = vadd.f32 %v2340, 1.0
        %v2342 = vrcp.pop %v2341
        %v2343 = vmul.f32 %v2341, %v2342
        %v2344 = vsub.f32 1.0, %v2343
        %v2345 = vmul.f32 %v2342, %v2344
        %v2346 = vadd.f32 %v2342, %v2345
        %vm2347 = vweird.f32 %v2341
        %vm2348 = vweird.f32 %v2342
        %vm2349 = vmor %vm2347, %vm2348
        %v2350 = vsel %vm2349, %v2342, %v2346
        %v2351 = vand.u32 2147483647, %v2341
        %vm2352 = vcmp.eq.f32.partialorder %v2351, 8.507059e+37
        %v2353 = vand.u32 %v2341, 2147483648
        %v2354 = vor.u32 1.1754944e-38, %v2353
        %v2355 = vsel %vm2352, %v2354, %v2350
        %v2356 = vmul.f32 %v2331, %v2355
        %v2357 = vmin.f32 %v2356, 1.0
        %v2358 = vmax.f32 %v2357, -1.0
        %v2359 = vmul.f32 %v1568, %v1568
        %v2360 = vmin.f32 16.0, %v2359
        %v2361 = vmul.f32 %v2360, 2.1237322e-06
        %v2362 = vadd.f32 %v2361, 0.00028619796
        %v2363 = vmul.f32 %v2360, %v2362
        %v2364 = vadd.f32 %v2363, 0.0036580483
        %v2365 = vmul.f32 %v2360, %v2364
        %v2366 = vadd.f32 %v2365, 0.05243302
        %v2367 = vmul.f32 %v2360, %v2366
        %v2368 = vadd.f32 %v2367, 0.18741608
        %v2369 = vmul.f32 %v2360, %v2368
        %v2370 = vadd.f32 %v2369, 1.1283791
        %v2371 = vmul.f32 %v1568, %v2370
        %v2372 = vmul.f32 %v2360, 3.8918573e-05
        %v2373 = vadd.f32 %v2372, 0.001143296
        %v2374 = vmul.f32 %v2360, %v2373
        %v2375 = vadd.f32 %v2374, 0.014752088
        %v2376 = vmul.f32 %v2360, %v2375
        %v2377 = vadd.f32 %v2376, 0.112945676
        %v2378 = vmul.f32 %v2360, %v2377
        %v2379 = vadd.f32 %v2378, 0.4994258
        %v2380 = vmul.f32 %v2360, %v2379
        %v2381 = vadd.f32 %v2380, 1.0
        %v2382 = vrcp.pop %v2381
        %v2383 = vmul.f32 %v2381, %v2382
        %v2384 = vsub.f32 1.0, %v2383
        %v2385 = vmul.f32 %v2382, %v2384
        %v2386 = vadd.f32 %v2382, %v2385
        %vm2387 = vweird.f32 %v2381
        %vm2388 = vweird.f32 %v2382
        %vm2389 = vmor %vm2387, %vm2388
        %v2390 = vsel %vm2389, %v2382, %v2386
        %v2391 = vand.u32 2147483647, %v2381
        %vm2392 = vcmp.eq.f32.partialorder %v2391, 8.507059e+37
        %v2393 = vand.u32 %v2381, 2147483648
        %v2394 = vor.u32 1.1754944e-38, %v2393
        %v2395 = vsel %vm2392, %v2394, %v2390
        %v2396 = vmul.f32 %v2371, %v2395
        %v2397 = vmin.f32 %v2396, 1.0
        %v2398 = vmax.f32 %v2397, -1.0
        %v2399 = vmul.f32 %v1569, %v1569
        %v2400 = vmin.f32 16.0, %v2399
        %v2401 = vmul.f32 %v2400, 2.1237322e-06
        %v2402 = vadd.f32 %v2401, 0.00028619796
        %v2403 = vmul.f32 %v2400, %v2402
        %v2404 = vadd.f32 %v2403, 0.0036580483
        %v2405 = vmul.f32 %v2400, %v2404
        %v2406 = vadd.f32 %v2405, 0.05243302
        %v2407 = vmul.f32 %v2400, %v2406
        %v2408 = vadd.f32 %v2407, 0.18741608
        %v2409 = vmul.f32 %v2400, %v2408
        %v2410 = vadd.f32 %v2409, 1.1283791
        %v2411 = vmul.f32 %v1569, %v2410
        %v2412 = vmul.f32 %v2400, 3.8918573e-05
        %v2413 = vadd.f32 %v2412, 0.001143296
        %v2414 = vmul.f32 %v2400, %v2413
        %v2415 = vadd.f32 %v2414, 0.014752088
        %v2416 = vmul.f32 %v2400, %v2415
        %v2417 = vadd.f32 %v2416, 0.112945676
        %v2418 = vmul.f32 %v2400, %v2417
        %v2419 = vadd.f32 %v2418, 0.4994258
        %v2420 = vmul.f32 %v2400, %v2419
        %v2421 = vadd.f32 %v2420, 1.0
        %v2422 = vrcp.pop %v2421
        %v2423 = vmul.f32 %v2421, %v2422
        %v2424 = vsub.f32 1.0, %v2423
        %v2425 = vmul.f32 %v2422, %v2424
        %v2426 = vadd.f32 %v2422, %v2425
        %vm2427 = vweird.f32 %v2421
        %vm2428 = vweird.f32 %v2422
        %vm2429 = vmor %vm2427, %vm2428
        %v2430 = vsel %vm2429, %v2422, %v2426
        %v2431 = vand.u32 2147483647, %v2421
        %vm2432 = vcmp.eq.f32.partialorder %v2431, 8.507059e+37
        %v2433 = vand.u32 %v2421, 2147483648
        %v2434 = vor.u32 1.1754944e-38, %v2433
        %v2435 = vsel %vm2432, %v2434, %v2430
        %v2436 = vmul.f32 %v2411, %v2435
        %v2437 = vmin.f32 %v2436, 1.0
        %v2438 = vmax.f32 %v2437, -1.0
        %v2439 = vmul.f32 %v1570, %v1570
        %v2440 = vmin.f32 16.0, %v2439
        %v2441 = vmul.f32 %v2440, 2.1237322e-06
        %v2442 = vadd.f32 %v2441, 0.00028619796
        %v2443 = vmul.f32 %v2440, %v2442
        %v2444 = vadd.f32 %v2443, 0.0036580483
        %v2445 = vmul.f32 %v2440, %v2444
        %v2446 = vadd.f32 %v2445, 0.05243302
        %v2447 = vmul.f32 %v2440, %v2446
        %v2448 = vadd.f32 %v2447, 0.18741608
        %v2449 = vmul.f32 %v2440, %v2448
        %v2450 = vadd.f32 %v2449, 1.1283791
        %v2451 = vmul.f32 %v1570, %v2450
        %v2452 = vmul.f32 %v2440, 3.8918573e-05
        %v2453 = vadd.f32 %v2452, 0.001143296
        %v2454 = vmul.f32 %v2440, %v2453
        %v2455 = vadd.f32 %v2454, 0.014752088
        %v2456 = vmul.f32 %v2440, %v2455
        %v2457 = vadd.f32 %v2456, 0.112945676
        %v2458 = vmul.f32 %v2440, %v2457
        %v2459 = vadd.f32 %v2458, 0.4994258
        %v2460 = vmul.f32 %v2440, %v2459
        %v2461 = vadd.f32 %v2460, 1.0
        %v2462 = vrcp.pop %v2461
        %v2463 = vmul.f32 %v2461, %v2462
        %v2464 = vsub.f32 1.0, %v2463
        %v2465 = vmul.f32 %v2462, %v2464
        %v2466 = vadd.f32 %v2462, %v2465
        %vm2467 = vweird.f32 %v2461
        %vm2468 = vweird.f32 %v2462
        %vm2469 = vmor %vm2467, %vm2468
        %v2470 = vsel %vm2469, %v2462, %v2466
        %v2471 = vand.u32 2147483647, %v2461
        %vm2472 = vcmp.eq.f32.partialorder %v2471, 8.507059e+37
        %v2473 = vand.u32 %v2461, 2147483648
        %v2474 = vor.u32 1.1754944e-38, %v2473
        %v2475 = vsel %vm2472, %v2474, %v2470
        %v2476 = vmul.f32 %v2451, %v2475
        %v2477 = vmin.f32 %v2476, 1.0
        %v2478 = vmax.f32 %v2477, -1.0
        %v2479 = vmul.f32 %v1571, %v1571
        %v2480 = vmin.f32 16.0, %v2479
        %v2481 = vmul.f32 %v2480, 2.1237322e-06
        %v2482 = vadd.f32 %v2481, 0.00028619796
        %v2483 = vmul.f32 %v2480, %v2482
        %v2484 = vadd.f32 %v2483, 0.0036580483
        %v2485 = vmul.f32 %v2480, %v2484
        %v2486 = vadd.f32 %v2485, 0.05243302
        %v2487 = vmul.f32 %v2480, %v2486
        %v2488 = vadd.f32 %v2487, 0.18741608
        %v2489 = vmul.f32 %v2480, %v2488
        %v2490 = vadd.f32 %v2489, 1.1283791
        %v2491 = vmul.f32 %v1571, %v2490
        %v2492 = vmul.f32 %v2480, 3.8918573e-05
        %v2493 = vadd.f32 %v2492, 0.001143296
        %v2494 = vmul.f32 %v2480, %v2493
        %v2495 = vadd.f32 %v2494, 0.014752088
        %v2496 = vmul.f32 %v2480, %v2495
        %v2497 = vadd.f32 %v2496, 0.112945676
        %v2498 = vmul.f32 %v2480, %v2497
        %v2499 = vadd.f32 %v2498, 0.4994258
        %v2500 = vmul.f32 %v2480, %v2499
        %v2501 = vadd.f32 %v2500, 1.0
        %v2502 = vrcp.pop %v2501
        %v2503 = vmul.f32 %v2501, %v2502
        %v2504 = vsub.f32 1.0, %v2503
        %v2505 = vmul.f32 %v2502, %v2504
        %v2506 = vadd.f32 %v2502, %v2505
        %vm2507 = vweird.f32 %v2501
        %vm2508 = vweird.f32 %v2502
        %vm2509 = vmor %vm2507, %vm2508
        %v2510 = vsel %vm2509, %v2502, %v2506
        %v2511 = vand.u32 2147483647, %v2501
        %vm2512 = vcmp.eq.f32.partialorder %v2511, 8.507059e+37
        %v2513 = vand.u32 %v2501, 2147483648
        %v2514 = vor.u32 1.1754944e-38, %v2513
        %v2515 = vsel %vm2512, %v2514, %v2510
        %v2516 = vmul.f32 %v2491, %v2515
        %v2517 = vmin.f32 %v2516, 1.0
        %v2518 = vmax.f32 %v2517, -1.0
        %v2519 = vmul.f32 %v1572, %v1572
        %v2520 = vmin.f32 16.0, %v2519
        %v2521 = vmul.f32 %v2520, 2.1237322e-06
        %v2522 = vadd.f32 %v2521, 0.00028619796
        %v2523 = vmul.f32 %v2520, %v2522
        %v2524 = vadd.f32 %v2523, 0.0036580483
        %v2525 = vmul.f32 %v2520, %v2524
        %v2526 = vadd.f32 %v2525, 0.05243302
        %v2527 = vmul.f32 %v2520, %v2526
        %v2528 = vadd.f32 %v2527, 0.18741608
        %v2529 = vmul.f32 %v2520, %v2528
        %v2530 = vadd.f32 %v2529, 1.1283791
        %v2531 = vmul.f32 %v1572, %v2530
        %v2532 = vmul.f32 %v2520, 3.8918573e-05
        %v2533 = vadd.f32 %v2532, 0.001143296
        %v2534 = vmul.f32 %v2520, %v2533
        %v2535 = vadd.f32 %v2534, 0.014752088
        %v2536 = vmul.f32 %v2520, %v2535
        %v2537 = vadd.f32 %v2536, 0.112945676
        %v2538 = vmul.f32 %v2520, %v2537
        %v2539 = vadd.f32 %v2538, 0.4994258
        %v2540 = vmul.f32 %v2520, %v2539
        %v2541 = vadd.f32 %v2540, 1.0
        %v2542 = vrcp.pop %v2541
        %v2543 = vmul.f32 %v2541, %v2542
        %v2544 = vsub.f32 1.0, %v2543
        %v2545 = vmul.f32 %v2542, %v2544
        %v2546 = vadd.f32 %v2542, %v2545
        %vm2547 = vweird.f32 %v2541
        %vm2548 = vweird.f32 %v2542
        %vm2549 = vmor %vm2547, %vm2548
        %v2550 = vsel %vm2549, %v2542, %v2546
        %v2551 = vand.u32 2147483647, %v2541
        %vm2552 = vcmp.eq.f32.partialorder %v2551, 8.507059e+37
        %v2553 = vand.u32 %v2541, 2147483648
        %v2554 = vor.u32 1.1754944e-38, %v2553
        %v2555 = vsel %vm2552, %v2554, %v2550
        %v2556 = vmul.f32 %v2531, %v2555
        %v2557 = vmin.f32 %v2556, 1.0
        %v2558 = vmax.f32 %v2557, -1.0
        %v2559 = vmul.f32 %v1573, %v1573
        %v2560 = vmin.f32 16.0, %v2559
        %v2561 = vmul.f32 %v2560, 2.1237322e-06
        %v2562 = vadd.f32 %v2561, 0.00028619796
        %v2563 = vmul.f32 %v2560, %v2562
        %v2564 = vadd.f32 %v2563, 0.0036580483
        %v2565 = vmul.f32 %v2560, %v2564
        %v2566 = vadd.f32 %v2565, 0.05243302
        %v2567 = vmul.f32 %v2560, %v2566
        %v2568 = vadd.f32 %v2567, 0.18741608
        %v2569 = vmul.f32 %v2560, %v2568
        %v2570 = vadd.f32 %v2569, 1.1283791
        %v2571 = vmul.f32 %v1573, %v2570
        %v2572 = vmul.f32 %v2560, 3.8918573e-05
        %v2573 = vadd.f32 %v2572, 0.001143296
        %v2574 = vmul.f32 %v2560, %v2573
        %v2575 = vadd.f32 %v2574, 0.014752088
        %v2576 = vmul.f32 %v2560, %v2575
        %v2577 = vadd.f32 %v2576, 0.112945676
        %v2578 = vmul.f32 %v2560, %v2577
        %v2579 = vadd.f32 %v2578, 0.4994258
        %v2580 = vmul.f32 %v2560, %v2579
        %v2581 = vadd.f32 %v2580, 1.0
        %v2582 = vrcp.pop %v2581
        %v2583 = vmul.f32 %v2581, %v2582
        %v2584 = vsub.f32 1.0, %v2583
        %v2585 = vmul.f32 %v2582, %v2584
        %v2586 = vadd.f32 %v2582, %v2585
        %vm2587 = vweird.f32 %v2581
        %vm2588 = vweird.f32 %v2582
        %vm2589 = vmor %vm2587, %vm2588
        %v2590 = vsel %vm2589, %v2582, %v2586
        %v2591 = vand.u32 2147483647, %v2581
        %vm2592 = vcmp.eq.f32.partialorder %v2591, 8.507059e+37
        %v2593 = vand.u32 %v2581, 2147483648
        %v2594 = vor.u32 1.1754944e-38, %v2593
        %v2595 = vsel %vm2592, %v2594, %v2590
        %v2596 = vmul.f32 %v2571, %v2595
        %v2597 = vmin.f32 %v2596, 1.0
        %v2598 = vmax.f32 %v2597, -1.0
        %v2599 = vmul.f32 %v1574, %v1574
        %v2600 = vmin.f32 16.0, %v2599
        %v2601 = vmul.f32 %v2600, 2.1237322e-06
        %v2602 = vadd.f32 %v2601, 0.00028619796
        %v2603 = vmul.f32 %v2600, %v2602
        %v2604 = vadd.f32 %v2603, 0.0036580483
        %v2605 = vmul.f32 %v2600, %v2604
        %v2606 = vadd.f32 %v2605, 0.05243302
        %v2607 = vmul.f32 %v2600, %v2606
        %v2608 = vadd.f32 %v2607, 0.18741608
        %v2609 = vmul.f32 %v2600, %v2608
        %v2610 = vadd.f32 %v2609, 1.1283791
        %v2611 = vmul.f32 %v1574, %v2610
        %v2612 = vmul.f32 %v2600, 3.8918573e-05
        %v2613 = vadd.f32 %v2612, 0.001143296
        %v2614 = vmul.f32 %v2600, %v2613
        %v2615 = vadd.f32 %v2614, 0.014752088
        %v2616 = vmul.f32 %v2600, %v2615
        %v2617 = vadd.f32 %v2616, 0.112945676
        %v2618 = vmul.f32 %v2600, %v2617
        %v2619 = vadd.f32 %v2618, 0.4994258
        %v2620 = vmul.f32 %v2600, %v2619
        %v2621 = vadd.f32 %v2620, 1.0
        %v2622 = vrcp.pop %v2621
        %v2623 = vmul.f32 %v2621, %v2622
        %v2624 = vsub.f32 1.0, %v2623
        %v2625 = vmul.f32 %v2622, %v2624
        %v2626 = vadd.f32 %v2622, %v2625
        %vm2627 = vweird.f32 %v2621
        %vm2628 = vweird.f32 %v2622
        %vm2629 = vmor %vm2627, %vm2628
        %v2630 = vsel %vm2629, %v2622, %v2626
        %v2631 = vand.u32 2147483647, %v2621
        %vm2632 = vcmp.eq.f32.partialorder %v2631, 8.507059e+37
        %v2633 = vand.u32 %v2621, 2147483648
        %v2634 = vor.u32 1.1754944e-38, %v2633
        %v2635 = vsel %vm2632, %v2634, %v2630
        %v2636 = vmul.f32 %v2611, %v2635
        %v2637 = vmin.f32 %v2636, 1.0
        %v2638 = vmax.f32 %v2637, -1.0
        %v2639 = vmul.f32 %v1575, %v1575
        %v2640 = vmin.f32 16.0, %v2639
        %v2641 = vmul.f32 %v2640, 2.1237322e-06
        %v2642 = vadd.f32 %v2641, 0.00028619796
        %v2643 = vmul.f32 %v2640, %v2642
        %v2644 = vadd.f32 %v2643, 0.0036580483
        %v2645 = vmul.f32 %v2640, %v2644
        %v2646 = vadd.f32 %v2645, 0.05243302
        %v2647 = vmul.f32 %v2640, %v2646
        %v2648 = vadd.f32 %v2647, 0.18741608
        %v2649 = vmul.f32 %v2640, %v2648
        %v2650 = vadd.f32 %v2649, 1.1283791
        %v2651 = vmul.f32 %v1575, %v2650
        %v2652 = vmul.f32 %v2640, 3.8918573e-05
        %v2653 = vadd.f32 %v2652, 0.001143296
        %v2654 = vmul.f32 %v2640, %v2653
        %v2655 = vadd.f32 %v2654, 0.014752088
        %v2656 = vmul.f32 %v2640, %v2655
        %v2657 = vadd.f32 %v2656, 0.112945676
        %v2658 = vmul.f32 %v2640, %v2657
        %v2659 = vadd.f32 %v2658, 0.4994258
        %v2660 = vmul.f32 %v2640, %v2659
        %v2661 = vadd.f32 %v2660, 1.0
        %v2662 = vrcp.pop %v2661
        %v2663 = vmul.f32 %v2661, %v2662
        %v2664 = vsub.f32 1.0, %v2663
        %v2665 = vmul.f32 %v2662, %v2664
        %v2666 = vadd.f32 %v2662, %v2665
        %vm2667 = vweird.f32 %v2661
        %vm2668 = vweird.f32 %v2662
        %vm2669 = vmor %vm2667, %vm2668
        %v2670 = vsel %vm2669, %v2662, %v2666
        %v2671 = vand.u32 2147483647, %v2661
        %vm2672 = vcmp.eq.f32.partialorder %v2671, 8.507059e+37
        %v2673 = vand.u32 %v2661, 2147483648
        %v2674 = vor.u32 1.1754944e-38, %v2673
        %v2675 = vsel %vm2672, %v2674, %v2670
        %v2676 = vmul.f32 %v2651, %v2675
        %v2677 = vmin.f32 %v2676, 1.0
        %v2678 = vmax.f32 %v2677, -1.0
        %v2679 = vmul.f32 %v1576, %v1576
        %v2680 = vmin.f32 16.0, %v2679
        %v2681 = vmul.f32 %v2680, 2.1237322e-06
        %v2682 = vadd.f32 %v2681, 0.00028619796
        %v2683 = vmul.f32 %v2680, %v2682
        %v2684 = vadd.f32 %v2683, 0.0036580483
        %v2685 = vmul.f32 %v2680, %v2684
        %v2686 = vadd.f32 %v2685, 0.05243302
        %v2687 = vmul.f32 %v2680, %v2686
        %v2688 = vadd.f32 %v2687, 0.18741608
        %v2689 = vmul.f32 %v2680, %v2688
        %v2690 = vadd.f32 %v2689, 1.1283791
        %v2691 = vmul.f32 %v1576, %v2690
        %v2692 = vmul.f32 %v2680, 3.8918573e-05
        %v2693 = vadd.f32 %v2692, 0.001143296
        %v2694 = vmul.f32 %v2680, %v2693
        %v2695 = vadd.f32 %v2694, 0.014752088
        %v2696 = vmul.f32 %v2680, %v2695
        %v2697 = vadd.f32 %v2696, 0.112945676
        %v2698 = vmul.f32 %v2680, %v2697
        %v2699 = vadd.f32 %v2698, 0.4994258
        %v2700 = vmul.f32 %v2680, %v2699
        %v2701 = vadd.f32 %v2700, 1.0
        %v2702 = vrcp.pop %v2701
        %v2703 = vmul.f32 %v2701, %v2702
        %v2704 = vsub.f32 1.0, %v2703
        %v2705 = vmul.f32 %v2702, %v2704
        %v2706 = vadd.f32 %v2702, %v2705
        %vm2707 = vweird.f32 %v2701
        %vm2708 = vweird.f32 %v2702
        %vm2709 = vmor %vm2707, %vm2708
        %v2710 = vsel %vm2709, %v2702, %v2706
        %v2711 = vand.u32 2147483647, %v2701
        %vm2712 = vcmp.eq.f32.partialorder %v2711, 8.507059e+37
        %v2713 = vand.u32 %v2701, 2147483648
        %v2714 = vor.u32 1.1754944e-38, %v2713
        %v2715 = vsel %vm2712, %v2714, %v2710
        %v2716 = vmul.f32 %v2691, %v2715
        %v2717 = vmin.f32 %v2716, 1.0
        %v2718 = vmax.f32 %v2717, -1.0
        %v2719 = vmul.f32 %v1577, %v1577
        %v2720 = vmin.f32 16.0, %v2719
        %v2721 = vmul.f32 %v2720, 2.1237322e-06
        %v2722 = vadd.f32 %v2721, 0.00028619796
        %v2723 = vmul.f32 %v2720, %v2722
        %v2724 = vadd.f32 %v2723, 0.0036580483
        %v2725 = vmul.f32 %v2720, %v2724
        %v2726 = vadd.f32 %v2725, 0.05243302
        %v2727 = vmul.f32 %v2720, %v2726
        %v2728 = vadd.f32 %v2727, 0.18741608
        %v2729 = vmul.f32 %v2720, %v2728
        %v2730 = vadd.f32 %v2729, 1.1283791
        %v2731 = vmul.f32 %v1577, %v2730
        %v2732 = vmul.f32 %v2720, 3.8918573e-05
        %v2733 = vadd.f32 %v2732, 0.001143296
        %v2734 = vmul.f32 %v2720, %v2733
        %v2735 = vadd.f32 %v2734, 0.014752088
        %v2736 = vmul.f32 %v2720, %v2735
        %v2737 = vadd.f32 %v2736, 0.112945676
        %v2738 = vmul.f32 %v2720, %v2737
        %v2739 = vadd.f32 %v2738, 0.4994258
        %v2740 = vmul.f32 %v2720, %v2739
        %v2741 = vadd.f32 %v2740, 1.0
        %v2742 = vrcp.pop %v2741
        %v2743 = vmul.f32 %v2741, %v2742
        %v2744 = vsub.f32 1.0, %v2743
        %v2745 = vmul.f32 %v2742, %v2744
        %v2746 = vadd.f32 %v2742, %v2745
        %vm2747 = vweird.f32 %v2741
        %vm2748 = vweird.f32 %v2742
        %vm2749 = vmor %vm2747, %vm2748
        %v2750 = vsel %vm2749, %v2742, %v2746
        %v2751 = vand.u32 2147483647, %v2741
        %vm2752 = vcmp.eq.f32.partialorder %v2751, 8.507059e+37
        %v2753 = vand.u32 %v2741, 2147483648
        %v2754 = vor.u32 1.1754944e-38, %v2753
        %v2755 = vsel %vm2752, %v2754, %v2750
        %v2756 = vmul.f32 %v2731, %v2755
        %v2757 = vmin.f32 %v2756, 1.0
        %v2758 = vmax.f32 %v2757, -1.0
        %v2759 = vmul.f32 %v1578, %v1578
        %v2760 = vmin.f32 16.0, %v2759
        %v2761 = vmul.f32 %v2760, 2.1237322e-06
        %v2762 = vadd.f32 %v2761, 0.00028619796
        %v2763 = vmul.f32 %v2760, %v2762
        %v2764 = vadd.f32 %v2763, 0.0036580483
        %v2765 = vmul.f32 %v2760, %v2764
        %v2766 = vadd.f32 %v2765, 0.05243302
        %v2767 = vmul.f32 %v2760, %v2766
        %v2768 = vadd.f32 %v2767, 0.18741608
        %v2769 = vmul.f32 %v2760, %v2768
        %v2770 = vadd.f32 %v2769, 1.1283791
        %v2771 = vmul.f32 %v1578, %v2770
        %v2772 = vmul.f32 %v2760, 3.8918573e-05
        %v2773 = vadd.f32 %v2772, 0.001143296
        %v2774 = vmul.f32 %v2760, %v2773
        %v2775 = vadd.f32 %v2774, 0.014752088
        %v2776 = vmul.f32 %v2760, %v2775
        %v2777 = vadd.f32 %v2776, 0.112945676
        %v2778 = vmul.f32 %v2760, %v2777
        %v2779 = vadd.f32 %v2778, 0.4994258
        %v2780 = vmul.f32 %v2760, %v2779
        %v2781 = vadd.f32 %v2780, 1.0
        %v2782 = vrcp.pop %v2781
        %v2783 = vmul.f32 %v2781, %v2782
        %v2784 = vsub.f32 1.0, %v2783
        %v2785 = vmul.f32 %v2782, %v2784
        %v2786 = vadd.f32 %v2782, %v2785
        %vm2787 = vweird.f32 %v2781
        %vm2788 = vweird.f32 %v2782
        %vm2789 = vmor %vm2787, %vm2788
        %v2790 = vsel %vm2789, %v2782, %v2786
        %v2791 = vand.u32 2147483647, %v2781
        %vm2792 = vcmp.eq.f32.partialorder %v2791, 8.507059e+37
        %v2793 = vand.u32 %v2781, 2147483648
        %v2794 = vor.u32 1.1754944e-38, %v2793
        %v2795 = vsel %vm2792, %v2794, %v2790
        %v2796 = vmul.f32 %v2771, %v2795
        %v2797 = vmin.f32 %v2796, 1.0
        %v2798 = vmax.f32 %v2797, -1.0
        %v2799 = vmul.f32 %v1579, %v1579
        %v2800 = vmin.f32 16.0, %v2799
        %v2801 = vmul.f32 %v2800, 2.1237322e-06
        %v2802 = vadd.f32 %v2801, 0.00028619796
        %v2803 = vmul.f32 %v2800, %v2802
        %v2804 = vadd.f32 %v2803, 0.0036580483
        %v2805 = vmul.f32 %v2800, %v2804
        %v2806 = vadd.f32 %v2805, 0.05243302
        %v2807 = vmul.f32 %v2800, %v2806
        %v2808 = vadd.f32 %v2807, 0.18741608
        %v2809 = vmul.f32 %v2800, %v2808
        %v2810 = vadd.f32 %v2809, 1.1283791
        %v2811 = vmul.f32 %v1579, %v2810
        %v2812 = vmul.f32 %v2800, 3.8918573e-05
        %v2813 = vadd.f32 %v2812, 0.001143296
        %v2814 = vmul.f32 %v2800, %v2813
        %v2815 = vadd.f32 %v2814, 0.014752088
        %v2816 = vmul.f32 %v2800, %v2815
        %v2817 = vadd.f32 %v2816, 0.112945676
        %v2818 = vmul.f32 %v2800, %v2817
        %v2819 = vadd.f32 %v2818, 0.4994258
        %v2820 = vmul.f32 %v2800, %v2819
        %v2821 = vadd.f32 %v2820, 1.0
        %v2822 = vrcp.pop %v2821
        %v2823 = vmul.f32 %v2821, %v2822
        %v2824 = vsub.f32 1.0, %v2823
        %v2825 = vmul.f32 %v2822, %v2824
        %v2826 = vadd.f32 %v2822, %v2825
        %vm2827 = vweird.f32 %v2821
        %vm2828 = vweird.f32 %v2822
        %vm2829 = vmor %vm2827, %vm2828
        %v2830 = vsel %vm2829, %v2822, %v2826
        %v2831 = vand.u32 2147483647, %v2821
        %vm2832 = vcmp.eq.f32.partialorder %v2831, 8.507059e+37
        %v2833 = vand.u32 %v2821, 2147483648
        %v2834 = vor.u32 1.1754944e-38, %v2833
        %v2835 = vsel %vm2832, %v2834, %v2830
        %v2836 = vmul.f32 %v2811, %v2835
        %v2837 = vmin.f32 %v2836, 1.0
        %v2838 = vmax.f32 %v2837, -1.0
        %v2839 = vmul.f32 %v1580, %v1580
        %v2840 = vmin.f32 16.0, %v2839
        %v2841 = vmul.f32 %v2840, 2.1237322e-06
        %v2842 = vadd.f32 %v2841, 0.00028619796
        %v2843 = vmul.f32 %v2840, %v2842
        %v2844 = vadd.f32 %v2843, 0.0036580483
        %v2845 = vmul.f32 %v2840, %v2844
        %v2846 = vadd.f32 %v2845, 0.05243302
        %v2847 = vmul.f32 %v2840, %v2846
        %v2848 = vadd.f32 %v2847, 0.18741608
        %v2849 = vmul.f32 %v2840, %v2848
        %v2850 = vadd.f32 %v2849, 1.1283791
        %v2851 = vmul.f32 %v1580, %v2850
        %v2852 = vmul.f32 %v2840, 3.8918573e-05
        %v2853 = vadd.f32 %v2852, 0.001143296
        %v2854 = vmul.f32 %v2840, %v2853
        %v2855 = vadd.f32 %v2854, 0.014752088
        %v2856 = vmul.f32 %v2840, %v2855
        %v2857 = vadd.f32 %v2856, 0.112945676
        %v2858 = vmul.f32 %v2840, %v2857
        %v2859 = vadd.f32 %v2858, 0.4994258
        %v2860 = vmul.f32 %v2840, %v2859
        %v2861 = vadd.f32 %v2860, 1.0
        %v2862 = vrcp.pop %v2861
        %v2863 = vmul.f32 %v2861, %v2862
        %v2864 = vsub.f32 1.0, %v2863
        %v2865 = vmul.f32 %v2862, %v2864
        %v2866 = vadd.f32 %v2862, %v2865
        %vm2867 = vweird.f32 %v2861
        %vm2868 = vweird.f32 %v2862
        %vm2869 = vmor %vm2867, %vm2868
        %v2870 = vsel %vm2869, %v2862, %v2866
        %v2871 = vand.u32 2147483647, %v2861
        %vm2872 = vcmp.eq.f32.partialorder %v2871, 8.507059e+37
        %v2873 = vand.u32 %v2861, 2147483648
        %v2874 = vor.u32 1.1754944e-38, %v2873
        %v2875 = vsel %vm2872, %v2874, %v2870
        %v2876 = vmul.f32 %v2851, %v2875
        %v2877 = vmin.f32 %v2876, 1.0
        %v2878 = vmax.f32 %v2877, -1.0
        %v2879 = vmul.f32 %v1581, %v1581
        %v2880 = vmin.f32 16.0, %v2879
        %v2881 = vmul.f32 %v2880, 2.1237322e-06
        %v2882 = vadd.f32 %v2881, 0.00028619796
        %v2883 = vmul.f32 %v2880, %v2882
        %v2884 = vadd.f32 %v2883, 0.0036580483
        %v2885 = vmul.f32 %v2880, %v2884
        %v2886 = vadd.f32 %v2885, 0.05243302
        %v2887 = vmul.f32 %v2880, %v2886
        %v2888 = vadd.f32 %v2887, 0.18741608
        %v2889 = vmul.f32 %v2880, %v2888
        %v2890 = vadd.f32 %v2889, 1.1283791
        %v2891 = vmul.f32 %v1581, %v2890
        %v2892 = vmul.f32 %v2880, 3.8918573e-05
        %v2893 = vadd.f32 %v2892, 0.001143296
        %v2894 = vmul.f32 %v2880, %v2893
        %v2895 = vadd.f32 %v2894, 0.014752088
        %v2896 = vmul.f32 %v2880, %v2895
        %v2897 = vadd.f32 %v2896, 0.112945676
        %v2898 = vmul.f32 %v2880, %v2897
        %v2899 = vadd.f32 %v2898, 0.4994258
        %v2900 = vmul.f32 %v2880, %v2899
        %v2901 = vadd.f32 %v2900, 1.0
        %v2902 = vrcp.pop %v2901
        %v2903 = vmul.f32 %v2901, %v2902
        %v2904 = vsub.f32 1.0, %v2903
        %v2905 = vmul.f32 %v2902, %v2904
        %v2906 = vadd.f32 %v2902, %v2905
        %vm2907 = vweird.f32 %v2901
        %vm2908 = vweird.f32 %v2902
        %vm2909 = vmor %vm2907, %vm2908
        %v2910 = vsel %vm2909, %v2902, %v2906
        %v2911 = vand.u32 2147483647, %v2901
        %vm2912 = vcmp.eq.f32.partialorder %v2911, 8.507059e+37
        %v2913 = vand.u32 %v2901, 2147483648
        %v2914 = vor.u32 1.1754944e-38, %v2913
        %v2915 = vsel %vm2912, %v2914, %v2910
        %v2916 = vmul.f32 %v2891, %v2915
        %v2917 = vmin.f32 %v2916, 1.0
        %v2918 = vmax.f32 %v2917, -1.0
        %v2919 = vmul.f32 %v1582, %v1582
        %v2920 = vmin.f32 16.0, %v2919
        %v2921 = vmul.f32 %v2920, 2.1237322e-06
        %v2922 = vadd.f32 %v2921, 0.00028619796
        %v2923 = vmul.f32 %v2920, %v2922
        %v2924 = vadd.f32 %v2923, 0.0036580483
        %v2925 = vmul.f32 %v2920, %v2924
        %v2926 = vadd.f32 %v2925, 0.05243302
        %v2927 = vmul.f32 %v2920, %v2926
        %v2928 = vadd.f32 %v2927, 0.18741608
        %v2929 = vmul.f32 %v2920, %v2928
        %v2930 = vadd.f32 %v2929, 1.1283791
        %v2931 = vmul.f32 %v1582, %v2930
        %v2932 = vmul.f32 %v2920, 3.8918573e-05
        %v2933 = vadd.f32 %v2932, 0.001143296
        %v2934 = vmul.f32 %v2920, %v2933
        %v2935 = vadd.f32 %v2934, 0.014752088
        %v2936 = vmul.f32 %v2920, %v2935
        %v2937 = vadd.f32 %v2936, 0.112945676
        %v2938 = vmul.f32 %v2920, %v2937
        %v2939 = vadd.f32 %v2938, 0.4994258
        %v2940 = vmul.f32 %v2920, %v2939
        %v2941 = vadd.f32 %v2940, 1.0
        %v2942 = vrcp.pop %v2941
        %v2943 = vmul.f32 %v2941, %v2942
        %v2944 = vsub.f32 1.0, %v2943
        %v2945 = vmul.f32 %v2942, %v2944
        %v2946 = vadd.f32 %v2942, %v2945
        %vm2947 = vweird.f32 %v2941
        %vm2948 = vweird.f32 %v2942
        %vm2949 = vmor %vm2947, %vm2948
        %v2950 = vsel %vm2949, %v2942, %v2946
        %v2951 = vand.u32 2147483647, %v2941
        %vm2952 = vcmp.eq.f32.partialorder %v2951, 8.507059e+37
        %v2953 = vand.u32 %v2941, 2147483648
        %v2954 = vor.u32 1.1754944e-38, %v2953
        %v2955 = vsel %vm2952, %v2954, %v2950
        %v2956 = vmul.f32 %v2931, %v2955
        %v2957 = vmin.f32 %v2956, 1.0
        %v2958 = vmax.f32 %v2957, -1.0
        %v2959 = vmul.f32 %v1583, %v1583
        %v2960 = vmin.f32 16.0, %v2959
        %v2961 = vmul.f32 %v2960, 2.1237322e-06
        %v2962 = vadd.f32 %v2961, 0.00028619796
        %v2963 = vmul.f32 %v2960, %v2962
        %v2964 = vadd.f32 %v2963, 0.0036580483
        %v2965 = vmul.f32 %v2960, %v2964
        %v2966 = vadd.f32 %v2965, 0.05243302
        %v2967 = vmul.f32 %v2960, %v2966
        %v2968 = vadd.f32 %v2967, 0.18741608
        %v2969 = vmul.f32 %v2960, %v2968
        %v2970 = vadd.f32 %v2969, 1.1283791
        %v2971 = vmul.f32 %v1583, %v2970
        %v2972 = vmul.f32 %v2960, 3.8918573e-05
        %v2973 = vadd.f32 %v2972, 0.001143296
        %v2974 = vmul.f32 %v2960, %v2973
        %v2975 = vadd.f32 %v2974, 0.014752088
        %v2976 = vmul.f32 %v2960, %v2975
        %v2977 = vadd.f32 %v2976, 0.112945676
        %v2978 = vmul.f32 %v2960, %v2977
        %v2979 = vadd.f32 %v2978, 0.4994258
        %v2980 = vmul.f32 %v2960, %v2979
        %v2981 = vadd.f32 %v2980, 1.0
        %v2982 = vrcp.pop %v2981
        %v2983 = vmul.f32 %v2981, %v2982
        %v2984 = vsub.f32 1.0, %v2983
        %v2985 = vmul.f32 %v2982, %v2984
        %v2986 = vadd.f32 %v2982, %v2985
        %vm2987 = vweird.f32 %v2981
        %vm2988 = vweird.f32 %v2982
        %vm2989 = vmor %vm2987, %vm2988
        %v2990 = vsel %vm2989, %v2982, %v2986
        %v2991 = vand.u32 2147483647, %v2981
        %vm2992 = vcmp.eq.f32.partialorder %v2991, 8.507059e+37
        %v2993 = vand.u32 %v2981, 2147483648
        %v2994 = vor.u32 1.1754944e-38, %v2993
        %v2995 = vsel %vm2992, %v2994, %v2990
        %v2996 = vmul.f32 %v2971, %v2995
        %v2997 = vmin.f32 %v2996, 1.0
        %v2998 = vmax.f32 %v2997, -1.0
        %v2999 = vmul.f32 %v1584, %v1584
        %v3000 = vmin.f32 16.0, %v2999
        %v3001 = vmul.f32 %v3000, 2.1237322e-06
        %v3002 = vadd.f32 %v3001, 0.00028619796
        %v3003 = vmul.f32 %v3000, %v3002
        %v3004 = vadd.f32 %v3003, 0.0036580483
        %v3005 = vmul.f32 %v3000, %v3004
        %v3006 = vadd.f32 %v3005, 0.05243302
        %v3007 = vmul.f32 %v3000, %v3006
        %v3008 = vadd.f32 %v3007, 0.18741608
        %v3009 = vmul.f32 %v3000, %v3008
        %v3010 = vadd.f32 %v3009, 1.1283791
        %v3011 = vmul.f32 %v1584, %v3010
        %v3012 = vmul.f32 %v3000, 3.8918573e-05
        %v3013 = vadd.f32 %v3012, 0.001143296
        %v3014 = vmul.f32 %v3000, %v3013
        %v3015 = vadd.f32 %v3014, 0.014752088
        %v3016 = vmul.f32 %v3000, %v3015
        %v3017 = vadd.f32 %v3016, 0.112945676
        %v3018 = vmul.f32 %v3000, %v3017
        %v3019 = vadd.f32 %v3018, 0.4994258
        %v3020 = vmul.f32 %v3000, %v3019
        %v3021 = vadd.f32 %v3020, 1.0
        %v3022 = vrcp.pop %v3021
        %v3023 = vmul.f32 %v3021, %v3022
        %v3024 = vsub.f32 1.0, %v3023
        %v3025 = vmul.f32 %v3022, %v3024
        %v3026 = vadd.f32 %v3022, %v3025
        %vm3027 = vweird.f32 %v3021
        %vm3028 = vweird.f32 %v3022
        %vm3029 = vmor %vm3027, %vm3028
        %v3030 = vsel %vm3029, %v3022, %v3026
        %v3031 = vand.u32 2147483647, %v3021
        %vm3032 = vcmp.eq.f32.partialorder %v3031, 8.507059e+37
        %v3033 = vand.u32 %v3021, 2147483648
        %v3034 = vor.u32 1.1754944e-38, %v3033
        %v3035 = vsel %vm3032, %v3034, %v3030
        %v3036 = vmul.f32 %v3011, %v3035
        %v3037 = vmin.f32 %v3036, 1.0
        %v3038 = vmax.f32 %v3037, -1.0
        %v3039 = vmul.f32 %v1585, %v1585
        %v3040 = vmin.f32 16.0, %v3039
        %v3041 = vmul.f32 %v3040, 2.1237322e-06
        %v3042 = vadd.f32 %v3041, 0.00028619796
        %v3043 = vmul.f32 %v3040, %v3042
        %v3044 = vadd.f32 %v3043, 0.0036580483
        %v3045 = vmul.f32 %v3040, %v3044
        %v3046 = vadd.f32 %v3045, 0.05243302
        %v3047 = vmul.f32 %v3040, %v3046
        %v3048 = vadd.f32 %v3047, 0.18741608
        %v3049 = vmul.f32 %v3040, %v3048
        %v3050 = vadd.f32 %v3049, 1.1283791
        %v3051 = vmul.f32 %v1585, %v3050
        %v3052 = vmul.f32 %v3040, 3.8918573e-05
        %v3053 = vadd.f32 %v3052, 0.001143296
        %v3054 = vmul.f32 %v3040, %v3053
        %v3055 = vadd.f32 %v3054, 0.014752088
        %v3056 = vmul.f32 %v3040, %v3055
        %v3057 = vadd.f32 %v3056, 0.112945676
        %v3058 = vmul.f32 %v3040, %v3057
        %v3059 = vadd.f32 %v3058, 0.4994258
        %v3060 = vmul.f32 %v3040, %v3059
        %v3061 = vadd.f32 %v3060, 1.0
        %v3062 = vrcp.pop %v3061
        %v3063 = vmul.f32 %v3061, %v3062
        %v3064 = vsub.f32 1.0, %v3063
        %v3065 = vmul.f32 %v3062, %v3064
        %v3066 = vadd.f32 %v3062, %v3065
        %vm3067 = vweird.f32 %v3061
        %vm3068 = vweird.f32 %v3062
        %vm3069 = vmor %vm3067, %vm3068
        %v3070 = vsel %vm3069, %v3062, %v3066
        %v3071 = vand.u32 2147483647, %v3061
        %vm3072 = vcmp.eq.f32.partialorder %v3071, 8.507059e+37
        %v3073 = vand.u32 %v3061, 2147483648
        %v3074 = vor.u32 1.1754944e-38, %v3073
        %v3075 = vsel %vm3072, %v3074, %v3070
        %v3076 = vmul.f32 %v3051, %v3075
        %v3077 = vmin.f32 %v3076, 1.0
        %v3078 = vmax.f32 %v3077, -1.0
        %v3079 = vmul.f32 %v1586, %v1586
        %v3080 = vmin.f32 16.0, %v3079
        %v3081 = vmul.f32 %v3080, 2.1237322e-06
        %v3082 = vadd.f32 %v3081, 0.00028619796
        %v3083 = vmul.f32 %v3080, %v3082
        %v3084 = vadd.f32 %v3083, 0.0036580483
        %v3085 = vmul.f32 %v3080, %v3084
        %v3086 = vadd.f32 %v3085, 0.05243302
        %v3087 = vmul.f32 %v3080, %v3086
        %v3088 = vadd.f32 %v3087, 0.18741608
        %v3089 = vmul.f32 %v3080, %v3088
        %v3090 = vadd.f32 %v3089, 1.1283791
        %v3091 = vmul.f32 %v1586, %v3090
        %v3092 = vmul.f32 %v3080, 3.8918573e-05
        %v3093 = vadd.f32 %v3092, 0.001143296
        %v3094 = vmul.f32 %v3080, %v3093
        %v3095 = vadd.f32 %v3094, 0.014752088
        %v3096 = vmul.f32 %v3080, %v3095
        %v3097 = vadd.f32 %v3096, 0.112945676
        %v3098 = vmul.f32 %v3080, %v3097
        %v3099 = vadd.f32 %v3098, 0.4994258
        %v3100 = vmul.f32 %v3080, %v3099
        %v3101 = vadd.f32 %v3100, 1.0
        %v3102 = vrcp.pop %v3101
        %v3103 = vmul.f32 %v3101, %v3102
        %v3104 = vsub.f32 1.0, %v3103
        %v3105 = vmul.f32 %v3102, %v3104
        %v3106 = vadd.f32 %v3102, %v3105
        %vm3107 = vweird.f32 %v3101
        %vm3108 = vweird.f32 %v3102
        %vm3109 = vmor %vm3107, %vm3108
        %v3110 = vsel %vm3109, %v3102, %v3106
        %v3111 = vand.u32 2147483647, %v3101
        %vm3112 = vcmp.eq.f32.partialorder %v3111, 8.507059e+37
        %v3113 = vand.u32 %v3101, 2147483648
        %v3114 = vor.u32 1.1754944e-38, %v3113
        %v3115 = vsel %vm3112, %v3114, %v3110
        %v3116 = vmul.f32 %v3091, %v3115
        %v3117 = vmin.f32 %v3116, 1.0
        %v3118 = vmax.f32 %v3117, -1.0
        %v3119 = vmul.f32 %v1587, %v1587
        %v3120 = vmin.f32 16.0, %v3119
        %v3121 = vmul.f32 %v3120, 2.1237322e-06
        %v3122 = vadd.f32 %v3121, 0.00028619796
        %v3123 = vmul.f32 %v3120, %v3122
        %v3124 = vadd.f32 %v3123, 0.0036580483
        %v3125 = vmul.f32 %v3120, %v3124
        %v3126 = vadd.f32 %v3125, 0.05243302
        %v3127 = vmul.f32 %v3120, %v3126
        %v3128 = vadd.f32 %v3127, 0.18741608
        %v3129 = vmul.f32 %v3120, %v3128
        %v3130 = vadd.f32 %v3129, 1.1283791
        %v3131 = vmul.f32 %v1587, %v3130
        %v3132 = vmul.f32 %v3120, 3.8918573e-05
        %v3133 = vadd.f32 %v3132, 0.001143296
        %v3134 = vmul.f32 %v3120, %v3133
        %v3135 = vadd.f32 %v3134, 0.014752088
        %v3136 = vmul.f32 %v3120, %v3135
        %v3137 = vadd.f32 %v3136, 0.112945676
        %v3138 = vmul.f32 %v3120, %v3137
        %v3139 = vadd.f32 %v3138, 0.4994258
        %v3140 = vmul.f32 %v3120, %v3139
        %v3141 = vadd.f32 %v3140, 1.0
        %v3142 = vrcp.pop %v3141
        %v3143 = vmul.f32 %v3141, %v3142
        %v3144 = vsub.f32 1.0, %v3143
        %v3145 = vmul.f32 %v3142, %v3144
        %v3146 = vadd.f32 %v3142, %v3145
        %vm3147 = vweird.f32 %v3141
        %vm3148 = vweird.f32 %v3142
        %vm3149 = vmor %vm3147, %vm3148
        %v3150 = vsel %vm3149, %v3142, %v3146
        %v3151 = vand.u32 2147483647, %v3141
        %vm3152 = vcmp.eq.f32.partialorder %v3151, 8.507059e+37
        %v3153 = vand.u32 %v3141, 2147483648
        %v3154 = vor.u32 1.1754944e-38, %v3153
        %v3155 = vsel %vm3152, %v3154, %v3150
        %v3156 = vmul.f32 %v3131, %v3155
        %v3157 = vmin.f32 %v3156, 1.0
        %v3158 = vmax.f32 %v3157, -1.0
        %v3159 = vmul.f32 %v1588, %v1588
        %v3160 = vmin.f32 16.0, %v3159
        %v3161 = vmul.f32 %v3160, 2.1237322e-06
        %v3162 = vadd.f32 %v3161, 0.00028619796
        %v3163 = vmul.f32 %v3160, %v3162
        %v3164 = vadd.f32 %v3163, 0.0036580483
        %v3165 = vmul.f32 %v3160, %v3164
        %v3166 = vadd.f32 %v3165, 0.05243302
        %v3167 = vmul.f32 %v3160, %v3166
        %v3168 = vadd.f32 %v3167, 0.18741608
        %v3169 = vmul.f32 %v3160, %v3168
        %v3170 = vadd.f32 %v3169, 1.1283791
        %v3171 = vmul.f32 %v1588, %v3170
        %v3172 = vmul.f32 %v3160, 3.8918573e-05
        %v3173 = vadd.f32 %v3172, 0.001143296
        %v3174 = vmul.f32 %v3160, %v3173
        %v3175 = vadd.f32 %v3174, 0.014752088
        %v3176 = vmul.f32 %v3160, %v3175
        %v3177 = vadd.f32 %v3176, 0.112945676
        %v3178 = vmul.f32 %v3160, %v3177
        %v3179 = vadd.f32 %v3178, 0.4994258
        %v3180 = vmul.f32 %v3160, %v3179
        %v3181 = vadd.f32 %v3180, 1.0
        %v3182 = vrcp.pop %v3181
        %v3183 = vmul.f32 %v3181, %v3182
        %v3184 = vsub.f32 1.0, %v3183
        %v3185 = vmul.f32 %v3182, %v3184
        %v3186 = vadd.f32 %v3182, %v3185
        %vm3187 = vweird.f32 %v3181
        %vm3188 = vweird.f32 %v3182
        %vm3189 = vmor %vm3187, %vm3188
        %v3190 = vsel %vm3189, %v3182, %v3186
        %v3191 = vand.u32 2147483647, %v3181
        %vm3192 = vcmp.eq.f32.partialorder %v3191, 8.507059e+37
        %v3193 = vand.u32 %v3181, 2147483648
        %v3194 = vor.u32 1.1754944e-38, %v3193
        %v3195 = vsel %vm3192, %v3194, %v3190
        %v3196 = vmul.f32 %v3171, %v3195
        %v3197 = vmin.f32 %v3196, 1.0
        %v3198 = vmax.f32 %v3197, -1.0
        %v3199 = vmul.f32 %v1589, %v1589
        %v3200 = vmin.f32 16.0, %v3199
        %v3201 = vmul.f32 %v3200, 2.1237322e-06
        %v3202 = vadd.f32 %v3201, 0.00028619796
        %v3203 = vmul.f32 %v3200, %v3202
        %v3204 = vadd.f32 %v3203, 0.0036580483
        %v3205 = vmul.f32 %v3200, %v3204
        %v3206 = vadd.f32 %v3205, 0.05243302
        %v3207 = vmul.f32 %v3200, %v3206
        %v3208 = vadd.f32 %v3207, 0.18741608
        %v3209 = vmul.f32 %v3200, %v3208
        %v3210 = vadd.f32 %v3209, 1.1283791
        %v3211 = vmul.f32 %v1589, %v3210
        %v3212 = vmul.f32 %v3200, 3.8918573e-05
        %v3213 = vadd.f32 %v3212, 0.001143296
        %v3214 = vmul.f32 %v3200, %v3213
        %v3215 = vadd.f32 %v3214, 0.014752088
        %v3216 = vmul.f32 %v3200, %v3215
        %v3217 = vadd.f32 %v3216, 0.112945676
        %v3218 = vmul.f32 %v3200, %v3217
        %v3219 = vadd.f32 %v3218, 0.4994258
        %v3220 = vmul.f32 %v3200, %v3219
        %v3221 = vadd.f32 %v3220, 1.0
        %v3222 = vrcp.pop %v3221
        %v3223 = vmul.f32 %v3221, %v3222
        %v3224 = vsub.f32 1.0, %v3223
        %v3225 = vmul.f32 %v3222, %v3224
        %v3226 = vadd.f32 %v3222, %v3225
        %vm3227 = vweird.f32 %v3221
        %vm3228 = vweird.f32 %v3222
        %vm3229 = vmor %vm3227, %vm3228
        %v3230 = vsel %vm3229, %v3222, %v3226
        %v3231 = vand.u32 2147483647, %v3221
        %vm3232 = vcmp.eq.f32.partialorder %v3231, 8.507059e+37
        %v3233 = vand.u32 %v3221, 2147483648
        %v3234 = vor.u32 1.1754944e-38, %v3233
        %v3235 = vsel %vm3232, %v3234, %v3230
        %v3236 = vmul.f32 %v3211, %v3235
        %v3237 = vmin.f32 %v3236, 1.0
        %v3238 = vmax.f32 %v3237, -1.0
        %v3239 = vmul.f32 %v1590, %v1590
        %v3240 = vmin.f32 16.0, %v3239
        %v3241 = vmul.f32 %v3240, 2.1237322e-06
        %v3242 = vadd.f32 %v3241, 0.00028619796
        %v3243 = vmul.f32 %v3240, %v3242
        %v3244 = vadd.f32 %v3243, 0.0036580483
        %v3245 = vmul.f32 %v3240, %v3244
        %v3246 = vadd.f32 %v3245, 0.05243302
        %v3247 = vmul.f32 %v3240, %v3246
        %v3248 = vadd.f32 %v3247, 0.18741608
        %v3249 = vmul.f32 %v3240, %v3248
        %v3250 = vadd.f32 %v3249, 1.1283791
        %v3251 = vmul.f32 %v1590, %v3250
        %v3252 = vmul.f32 %v3240, 3.8918573e-05
        %v3253 = vadd.f32 %v3252, 0.001143296
        %v3254 = vmul.f32 %v3240, %v3253
        %v3255 = vadd.f32 %v3254, 0.014752088
        %v3256 = vmul.f32 %v3240, %v3255
        %v3257 = vadd.f32 %v3256, 0.112945676
        %v3258 = vmul.f32 %v3240, %v3257
        %v3259 = vadd.f32 %v3258, 0.4994258
        %v3260 = vmul.f32 %v3240, %v3259
        %v3261 = vadd.f32 %v3260, 1.0
        %v3262 = vrcp.pop %v3261
        %v3263 = vmul.f32 %v3261, %v3262
        %v3264 = vsub.f32 1.0, %v3263
        %v3265 = vmul.f32 %v3262, %v3264
        %v3266 = vadd.f32 %v3262, %v3265
        %vm3267 = vweird.f32 %v3261
        %vm3268 = vweird.f32 %v3262
        %vm3269 = vmor %vm3267, %vm3268
        %v3270 = vsel %vm3269, %v3262, %v3266
        %v3271 = vand.u32 2147483647, %v3261
        %vm3272 = vcmp.eq.f32.partialorder %v3271, 8.507059e+37
        %v3273 = vand.u32 %v3261, 2147483648
        %v3274 = vor.u32 1.1754944e-38, %v3273
        %v3275 = vsel %vm3272, %v3274, %v3270
        %v3276 = vmul.f32 %v3251, %v3275
        %v3277 = vmin.f32 %v3276, 1.0
        %v3278 = vmax.f32 %v3277, -1.0
        %v3279 = vmul.f32 %v1591, %v1591
        %v3280 = vmin.f32 16.0, %v3279
        %v3281 = vmul.f32 %v3280, 2.1237322e-06
        %v3282 = vadd.f32 %v3281, 0.00028619796
        %v3283 = vmul.f32 %v3280, %v3282
        %v3284 = vadd.f32 %v3283, 0.0036580483
        %v3285 = vmul.f32 %v3280, %v3284
        %v3286 = vadd.f32 %v3285, 0.05243302
        %v3287 = vmul.f32 %v3280, %v3286
        %v3288 = vadd.f32 %v3287, 0.18741608
        %v3289 = vmul.f32 %v3280, %v3288
        %v3290 = vadd.f32 %v3289, 1.1283791
        %v3291 = vmul.f32 %v1591, %v3290
        %v3292 = vmul.f32 %v3280, 3.8918573e-05
        %v3293 = vadd.f32 %v3292, 0.001143296
        %v3294 = vmul.f32 %v3280, %v3293
        %v3295 = vadd.f32 %v3294, 0.014752088
        %v3296 = vmul.f32 %v3280, %v3295
        %v3297 = vadd.f32 %v3296, 0.112945676
        %v3298 = vmul.f32 %v3280, %v3297
        %v3299 = vadd.f32 %v3298, 0.4994258
        %v3300 = vmul.f32 %v3280, %v3299
        %v3301 = vadd.f32 %v3300, 1.0
        %v3302 = vrcp.pop %v3301
        %v3303 = vmul.f32 %v3301, %v3302
        %v3304 = vsub.f32 1.0, %v3303
        %v3305 = vmul.f32 %v3302, %v3304
        %v3306 = vadd.f32 %v3302, %v3305
        %vm3307 = vweird.f32 %v3301
        %vm3308 = vweird.f32 %v3302
        %vm3309 = vmor %vm3307, %vm3308
        %v3310 = vsel %vm3309, %v3302, %v3306
        %v3311 = vand.u32 2147483647, %v3301
        %vm3312 = vcmp.eq.f32.partialorder %v3311, 8.507059e+37
        %v3313 = vand.u32 %v3301, 2147483648
        %v3314 = vor.u32 1.1754944e-38, %v3313
        %v3315 = vsel %vm3312, %v3314, %v3310
        %v3316 = vmul.f32 %v3291, %v3315
        %v3317 = vmin.f32 %v3316, 1.0
        %v3318 = vmax.f32 %v3317, -1.0
        %v3319 = vmul.f32 %v1592, %v1592
        %v3320 = vmin.f32 16.0, %v3319
        %v3321 = vmul.f32 %v3320, 2.1237322e-06
        %v3322 = vadd.f32 %v3321, 0.00028619796
        %v3323 = vmul.f32 %v3320, %v3322
        %v3324 = vadd.f32 %v3323, 0.0036580483
        %v3325 = vmul.f32 %v3320, %v3324
        %v3326 = vadd.f32 %v3325, 0.05243302
        %v3327 = vmul.f32 %v3320, %v3326
        %v3328 = vadd.f32 %v3327, 0.18741608
        %v3329 = vmul.f32 %v3320, %v3328
        %v3330 = vadd.f32 %v3329, 1.1283791
        %v3331 = vmul.f32 %v1592, %v3330
        %v3332 = vmul.f32 %v3320, 3.8918573e-05
        %v3333 = vadd.f32 %v3332, 0.001143296
        %v3334 = vmul.f32 %v3320, %v3333
        %v3335 = vadd.f32 %v3334, 0.014752088
        %v3336 = vmul.f32 %v3320, %v3335
        %v3337 = vadd.f32 %v3336, 0.112945676
        %v3338 = vmul.f32 %v3320, %v3337
        %v3339 = vadd.f32 %v3338, 0.4994258
        %v3340 = vmul.f32 %v3320, %v3339
        %v3341 = vadd.f32 %v3340, 1.0
        %v3342 = vrcp.pop %v3341
        %v3343 = vmul.f32 %v3341, %v3342
        %v3344 = vsub.f32 1.0, %v3343
        %v3345 = vmul.f32 %v3342, %v3344
        %v3346 = vadd.f32 %v3342, %v3345
        %vm3347 = vweird.f32 %v3341
        %vm3348 = vweird.f32 %v3342
        %vm3349 = vmor %vm3347, %vm3348
        %v3350 = vsel %vm3349, %v3342, %v3346
        %v3351 = vand.u32 2147483647, %v3341
        %vm3352 = vcmp.eq.f32.partialorder %v3351, 8.507059e+37
        %v3353 = vand.u32 %v3341, 2147483648
        %v3354 = vor.u32 1.1754944e-38, %v3353
        %v3355 = vsel %vm3352, %v3354, %v3350
        %v3356 = vmul.f32 %v3331, %v3355
        %v3357 = vmin.f32 %v3356, 1.0
        %v3358 = vmax.f32 %v3357, -1.0
        %v3359 = vmul.f32 %v1593, %v1593
        %v3360 = vmin.f32 16.0, %v3359
        %v3361 = vmul.f32 %v3360, 2.1237322e-06
        %v3362 = vadd.f32 %v3361, 0.00028619796
        %v3363 = vmul.f32 %v3360, %v3362
        %v3364 = vadd.f32 %v3363, 0.0036580483
        %v3365 = vmul.f32 %v3360, %v3364
        %v3366 = vadd.f32 %v3365, 0.05243302
        %v3367 = vmul.f32 %v3360, %v3366
        %v3368 = vadd.f32 %v3367, 0.18741608
        %v3369 = vmul.f32 %v3360, %v3368
        %v3370 = vadd.f32 %v3369, 1.1283791
        %v3371 = vmul.f32 %v1593, %v3370
        %v3372 = vmul.f32 %v3360, 3.8918573e-05
        %v3373 = vadd.f32 %v3372, 0.001143296
        %v3374 = vmul.f32 %v3360, %v3373
        %v3375 = vadd.f32 %v3374, 0.014752088
        %v3376 = vmul.f32 %v3360, %v3375
        %v3377 = vadd.f32 %v3376, 0.112945676
        %v3378 = vmul.f32 %v3360, %v3377
        %v3379 = vadd.f32 %v3378, 0.4994258
        %v3380 = vmul.f32 %v3360, %v3379
        %v3381 = vadd.f32 %v3380, 1.0
        %v3382 = vrcp.pop %v3381
        %v3383 = vmul.f32 %v3381, %v3382
        %v3384 = vsub.f32 1.0, %v3383
        %v3385 = vmul.f32 %v3382, %v3384
        %v3386 = vadd.f32 %v3382, %v3385
        %vm3387 = vweird.f32 %v3381
        %vm3388 = vweird.f32 %v3382
        %vm3389 = vmor %vm3387, %vm3388
        %v3390 = vsel %vm3389, %v3382, %v3386
        %v3391 = vand.u32 2147483647, %v3381
        %vm3392 = vcmp.eq.f32.partialorder %v3391, 8.507059e+37
        %v3393 = vand.u32 %v3381, 2147483648
        %v3394 = vor.u32 1.1754944e-38, %v3393
        %v3395 = vsel %vm3392, %v3394, %v3390
        %v3396 = vmul.f32 %v3371, %v3395
        %v3397 = vmin.f32 %v3396, 1.0
        %v3398 = vmax.f32 %v3397, -1.0
        %v3399 = vmul.f32 %v1594, %v1594
        %v3400 = vmin.f32 16.0, %v3399
        %v3401 = vmul.f32 %v3400, 2.1237322e-06
        %v3402 = vadd.f32 %v3401, 0.00028619796
        %v3403 = vmul.f32 %v3400, %v3402
        %v3404 = vadd.f32 %v3403, 0.0036580483
        %v3405 = vmul.f32 %v3400, %v3404
        %v3406 = vadd.f32 %v3405, 0.05243302
        %v3407 = vmul.f32 %v3400, %v3406
        %v3408 = vadd.f32 %v3407, 0.18741608
        %v3409 = vmul.f32 %v3400, %v3408
        %v3410 = vadd.f32 %v3409, 1.1283791
        %v3411 = vmul.f32 %v1594, %v3410
        %v3412 = vmul.f32 %v3400, 3.8918573e-05
        %v3413 = vadd.f32 %v3412, 0.001143296
        %v3414 = vmul.f32 %v3400, %v3413
        %v3415 = vadd.f32 %v3414, 0.014752088
        %v3416 = vmul.f32 %v3400, %v3415
        %v3417 = vadd.f32 %v3416, 0.112945676
        %v3418 = vmul.f32 %v3400, %v3417
        %v3419 = vadd.f32 %v3418, 0.4994258
        %v3420 = vmul.f32 %v3400, %v3419
        %v3421 = vadd.f32 %v3420, 1.0
        %v3422 = vrcp.pop %v3421
        %v3423 = vmul.f32 %v3421, %v3422
        %v3424 = vsub.f32 1.0, %v3423
        %v3425 = vmul.f32 %v3422, %v3424
        %v3426 = vadd.f32 %v3422, %v3425
        %vm3427 = vweird.f32 %v3421
        %vm3428 = vweird.f32 %v3422
        %vm3429 = vmor %vm3427, %vm3428
        %v3430 = vsel %vm3429, %v3422, %v3426
        %v3431 = vand.u32 2147483647, %v3421
        %vm3432 = vcmp.eq.f32.partialorder %v3431, 8.507059e+37
        %v3433 = vand.u32 %v3421, 2147483648
        %v3434 = vor.u32 1.1754944e-38, %v3433
        %v3435 = vsel %vm3432, %v3434, %v3430
        %v3436 = vmul.f32 %v3411, %v3435
        %v3437 = vmin.f32 %v3436, 1.0
        %v3438 = vmax.f32 %v3437, -1.0
        %v3439 = vmul.f32 %v1595, %v1595
        %v3440 = vmin.f32 16.0, %v3439
        %v3441 = vmul.f32 %v3440, 2.1237322e-06
        %v3442 = vadd.f32 %v3441, 0.00028619796
        %v3443 = vmul.f32 %v3440, %v3442
        %v3444 = vadd.f32 %v3443, 0.0036580483
        %v3445 = vmul.f32 %v3440, %v3444
        %v3446 = vadd.f32 %v3445, 0.05243302
        %v3447 = vmul.f32 %v3440, %v3446
        %v3448 = vadd.f32 %v3447, 0.18741608
        %v3449 = vmul.f32 %v3440, %v3448
        %v3450 = vadd.f32 %v3449, 1.1283791
        %v3451 = vmul.f32 %v1595, %v3450
        %v3452 = vmul.f32 %v3440, 3.8918573e-05
        %v3453 = vadd.f32 %v3452, 0.001143296
        %v3454 = vmul.f32 %v3440, %v3453
        %v3455 = vadd.f32 %v3454, 0.014752088
        %v3456 = vmul.f32 %v3440, %v3455
        %v3457 = vadd.f32 %v3456, 0.112945676
        %v3458 = vmul.f32 %v3440, %v3457
        %v3459 = vadd.f32 %v3458, 0.4994258
        %v3460 = vmul.f32 %v3440, %v3459
        %v3461 = vadd.f32 %v3460, 1.0
        %v3462 = vrcp.pop %v3461
        %v3463 = vmul.f32 %v3461, %v3462
        %v3464 = vsub.f32 1.0, %v3463
        %v3465 = vmul.f32 %v3462, %v3464
        %v3466 = vadd.f32 %v3462, %v3465
        %vm3467 = vweird.f32 %v3461
        %vm3468 = vweird.f32 %v3462
        %vm3469 = vmor %vm3467, %vm3468
        %v3470 = vsel %vm3469, %v3462, %v3466
        %v3471 = vand.u32 2147483647, %v3461
        %vm3472 = vcmp.eq.f32.partialorder %v3471, 8.507059e+37
        %v3473 = vand.u32 %v3461, 2147483648
        %v3474 = vor.u32 1.1754944e-38, %v3473
        %v3475 = vsel %vm3472, %v3474, %v3470
        %v3476 = vmul.f32 %v3451, %v3475
        %v3477 = vmin.f32 %v3476, 1.0
        %v3478 = vmax.f32 %v3477, -1.0
        %v3479 = vmul.f32 %v1596, %v1596
        %v3480 = vmin.f32 16.0, %v3479
        %v3481 = vmul.f32 %v3480, 2.1237322e-06
        %v3482 = vadd.f32 %v3481, 0.00028619796
        %v3483 = vmul.f32 %v3480, %v3482
        %v3484 = vadd.f32 %v3483, 0.0036580483
        %v3485 = vmul.f32 %v3480, %v3484
        %v3486 = vadd.f32 %v3485, 0.05243302
        %v3487 = vmul.f32 %v3480, %v3486
        %v3488 = vadd.f32 %v3487, 0.18741608
        %v3489 = vmul.f32 %v3480, %v3488
        %v3490 = vadd.f32 %v3489, 1.1283791
        %v3491 = vmul.f32 %v1596, %v3490
        %v3492 = vmul.f32 %v3480, 3.8918573e-05
        %v3493 = vadd.f32 %v3492, 0.001143296
        %v3494 = vmul.f32 %v3480, %v3493
        %v3495 = vadd.f32 %v3494, 0.014752088
        %v3496 = vmul.f32 %v3480, %v3495
        %v3497 = vadd.f32 %v3496, 0.112945676
        %v3498 = vmul.f32 %v3480, %v3497
        %v3499 = vadd.f32 %v3498, 0.4994258
        %v3500 = vmul.f32 %v3480, %v3499
        %v3501 = vadd.f32 %v3500, 1.0
        %v3502 = vrcp.pop %v3501
        %v3503 = vmul.f32 %v3501, %v3502
        %v3504 = vsub.f32 1.0, %v3503
        %v3505 = vmul.f32 %v3502, %v3504
        %v3506 = vadd.f32 %v3502, %v3505
        %vm3507 = vweird.f32 %v3501
        %vm3508 = vweird.f32 %v3502
        %vm3509 = vmor %vm3507, %vm3508
        %v3510 = vsel %vm3509, %v3502, %v3506
        %v3511 = vand.u32 2147483647, %v3501
        %vm3512 = vcmp.eq.f32.partialorder %v3511, 8.507059e+37
        %v3513 = vand.u32 %v3501, 2147483648
        %v3514 = vor.u32 1.1754944e-38, %v3513
        %v3515 = vsel %vm3512, %v3514, %v3510
        %v3516 = vmul.f32 %v3491, %v3515
        %v3517 = vmin.f32 %v3516, 1.0
        %v3518 = vmax.f32 %v3517, -1.0
        %v3519 = vmul.f32 %v1597, %v1597
        %v3520 = vmin.f32 16.0, %v3519
        %v3521 = vmul.f32 %v3520, 2.1237322e-06
        %v3522 = vadd.f32 %v3521, 0.00028619796
        %v3523 = vmul.f32 %v3520, %v3522
        %v3524 = vadd.f32 %v3523, 0.0036580483
        %v3525 = vmul.f32 %v3520, %v3524
        %v3526 = vadd.f32 %v3525, 0.05243302
        %v3527 = vmul.f32 %v3520, %v3526
        %v3528 = vadd.f32 %v3527, 0.18741608
        %v3529 = vmul.f32 %v3520, %v3528
        %v3530 = vadd.f32 %v3529, 1.1283791
        %v3531 = vmul.f32 %v1597, %v3530
        %v3532 = vmul.f32 %v3520, 3.8918573e-05
        %v3533 = vadd.f32 %v3532, 0.001143296
        %v3534 = vmul.f32 %v3520, %v3533
        %v3535 = vadd.f32 %v3534, 0.014752088
        %v3536 = vmul.f32 %v3520, %v3535
        %v3537 = vadd.f32 %v3536, 0.112945676
        %v3538 = vmul.f32 %v3520, %v3537
        %v3539 = vadd.f32 %v3538, 0.4994258
        %v3540 = vmul.f32 %v3520, %v3539
        %v3541 = vadd.f32 %v3540, 1.0
        %v3542 = vrcp.pop %v3541
        %v3543 = vmul.f32 %v3541, %v3542
        %v3544 = vsub.f32 1.0, %v3543
        %v3545 = vmul.f32 %v3542, %v3544
        %v3546 = vadd.f32 %v3542, %v3545
        %vm3547 = vweird.f32 %v3541
        %vm3548 = vweird.f32 %v3542
        %vm3549 = vmor %vm3547, %vm3548
        %v3550 = vsel %vm3549, %v3542, %v3546
        %v3551 = vand.u32 2147483647, %v3541
        %vm3552 = vcmp.eq.f32.partialorder %v3551, 8.507059e+37
        %v3553 = vand.u32 %v3541, 2147483648
        %v3554 = vor.u32 1.1754944e-38, %v3553
        %v3555 = vsel %vm3552, %v3554, %v3550
        %v3556 = vmul.f32 %v3531, %v3555
        %v3557 = vmin.f32 %v3556, 1.0
        %v3558 = vmax.f32 %v3557, -1.0
        %v3559 = vmul.f32 %v1598, %v1598
        %v3560 = vmin.f32 16.0, %v3559
        %v3561 = vmul.f32 %v3560, 2.1237322e-06
        %v3562 = vadd.f32 %v3561, 0.00028619796
        %v3563 = vmul.f32 %v3560, %v3562
        %v3564 = vadd.f32 %v3563, 0.0036580483
        %v3565 = vmul.f32 %v3560, %v3564
        %v3566 = vadd.f32 %v3565, 0.05243302
        %v3567 = vmul.f32 %v3560, %v3566
        %v3568 = vadd.f32 %v3567, 0.18741608
        %v3569 = vmul.f32 %v3560, %v3568
        %v3570 = vadd.f32 %v3569, 1.1283791
        %v3571 = vmul.f32 %v1598, %v3570
        %v3572 = vmul.f32 %v3560, 3.8918573e-05
        %v3573 = vadd.f32 %v3572, 0.001143296
        %v3574 = vmul.f32 %v3560, %v3573
        %v3575 = vadd.f32 %v3574, 0.014752088
        %v3576 = vmul.f32 %v3560, %v3575
        %v3577 = vadd.f32 %v3576, 0.112945676
        %v3578 = vmul.f32 %v3560, %v3577
        %v3579 = vadd.f32 %v3578, 0.4994258
        %v3580 = vmul.f32 %v3560, %v3579
        %v3581 = vadd.f32 %v3580, 1.0
        %v3582 = vrcp.pop %v3581
        %v3583 = vmul.f32 %v3581, %v3582
        %v3584 = vsub.f32 1.0, %v3583
        %v3585 = vmul.f32 %v3582, %v3584
        %v3586 = vadd.f32 %v3582, %v3585
        %vm3587 = vweird.f32 %v3581
        %vm3588 = vweird.f32 %v3582
        %vm3589 = vmor %vm3587, %vm3588
        %v3590 = vsel %vm3589, %v3582, %v3586
        %v3591 = vand.u32 2147483647, %v3581
        %vm3592 = vcmp.eq.f32.partialorder %v3591, 8.507059e+37
        %v3593 = vand.u32 %v3581, 2147483648
        %v3594 = vor.u32 1.1754944e-38, %v3593
        %v3595 = vsel %vm3592, %v3594, %v3590
        %v3596 = vmul.f32 %v3571, %v3595
        %v3597 = vmin.f32 %v3596, 1.0
        %v3598 = vmax.f32 %v3597, -1.0
        %v3599 = vmul.f32 %v1599, %v1599
        %v3600 = vmin.f32 16.0, %v3599
        %v3601 = vmul.f32 %v3600, 2.1237322e-06
        %v3602 = vadd.f32 %v3601, 0.00028619796
        %v3603 = vmul.f32 %v3600, %v3602
        %v3604 = vadd.f32 %v3603, 0.0036580483
        %v3605 = vmul.f32 %v3600, %v3604
        %v3606 = vadd.f32 %v3605, 0.05243302
        %v3607 = vmul.f32 %v3600, %v3606
        %v3608 = vadd.f32 %v3607, 0.18741608
        %v3609 = vmul.f32 %v3600, %v3608
        %v3610 = vadd.f32 %v3609, 1.1283791
        %v3611 = vmul.f32 %v1599, %v3610
        %v3612 = vmul.f32 %v3600, 3.8918573e-05
        %v3613 = vadd.f32 %v3612, 0.001143296
        %v3614 = vmul.f32 %v3600, %v3613
        %v3615 = vadd.f32 %v3614, 0.014752088
        %v3616 = vmul.f32 %v3600, %v3615
        %v3617 = vadd.f32 %v3616, 0.112945676
        %v3618 = vmul.f32 %v3600, %v3617
        %v3619 = vadd.f32 %v3618, 0.4994258
        %v3620 = vmul.f32 %v3600, %v3619
        %v3621 = vadd.f32 %v3620, 1.0
        %v3622 = vrcp.pop %v3621
        %v3623 = vmul.f32 %v3621, %v3622
        %v3624 = vsub.f32 1.0, %v3623
        %v3625 = vmul.f32 %v3622, %v3624
        %v3626 = vadd.f32 %v3622, %v3625
        %vm3627 = vweird.f32 %v3621
        %vm3628 = vweird.f32 %v3622
        %vm3629 = vmor %vm3627, %vm3628
        %v3630 = vsel %vm3629, %v3622, %v3626
        %v3631 = vand.u32 2147483647, %v3621
        %vm3632 = vcmp.eq.f32.partialorder %v3631, 8.507059e+37
        %v3633 = vand.u32 %v3621, 2147483648
        %v3634 = vor.u32 1.1754944e-38, %v3633
        %v3635 = vsel %vm3632, %v3634, %v3630
        %v3636 = vmul.f32 %v3611, %v3635
        %v3637 = vmin.f32 %v3636, 1.0
        %v3638 = vmax.f32 %v3637, -1.0
        %v3639 = vmul.f32 %v1600, %v1600
        %v3640 = vmin.f32 16.0, %v3639
        %v3641 = vmul.f32 %v3640, 2.1237322e-06
        %v3642 = vadd.f32 %v3641, 0.00028619796
        %v3643 = vmul.f32 %v3640, %v3642
        %v3644 = vadd.f32 %v3643, 0.0036580483
        %v3645 = vmul.f32 %v3640, %v3644
        %v3646 = vadd.f32 %v3645, 0.05243302
        %v3647 = vmul.f32 %v3640, %v3646
        %v3648 = vadd.f32 %v3647, 0.18741608
        %v3649 = vmul.f32 %v3640, %v3648
        %v3650 = vadd.f32 %v3649, 1.1283791
        %v3651 = vmul.f32 %v1600, %v3650
        %v3652 = vmul.f32 %v3640, 3.8918573e-05
        %v3653 = vadd.f32 %v3652, 0.001143296
        %v3654 = vmul.f32 %v3640, %v3653
        %v3655 = vadd.f32 %v3654, 0.014752088
        %v3656 = vmul.f32 %v3640, %v3655
        %v3657 = vadd.f32 %v3656, 0.112945676
        %v3658 = vmul.f32 %v3640, %v3657
        %v3659 = vadd.f32 %v3658, 0.4994258
        %v3660 = vmul.f32 %v3640, %v3659
        %v3661 = vadd.f32 %v3660, 1.0
        %v3662 = vrcp.pop %v3661
        %v3663 = vmul.f32 %v3661, %v3662
        %v3664 = vsub.f32 1.0, %v3663
        %v3665 = vmul.f32 %v3662, %v3664
        %v3666 = vadd.f32 %v3662, %v3665
        %vm3667 = vweird.f32 %v3661
        %vm3668 = vweird.f32 %v3662
        %vm3669 = vmor %vm3667, %vm3668
        %v3670 = vsel %vm3669, %v3662, %v3666
        %v3671 = vand.u32 2147483647, %v3661
        %vm3672 = vcmp.eq.f32.partialorder %v3671, 8.507059e+37
        %v3673 = vand.u32 %v3661, 2147483648
        %v3674 = vor.u32 1.1754944e-38, %v3673
        %v3675 = vsel %vm3672, %v3674, %v3670
        %v3676 = vmul.f32 %v3651, %v3675
        %v3677 = vmin.f32 %v3676, 1.0
        %v3678 = vmax.f32 %v3677, -1.0
        %v3679 = vmul.f32 %v1601, %v1601
        %v3680 = vmin.f32 16.0, %v3679
        %v3681 = vmul.f32 %v3680, 2.1237322e-06
        %v3682 = vadd.f32 %v3681, 0.00028619796
        %v3683 = vmul.f32 %v3680, %v3682
        %v3684 = vadd.f32 %v3683, 0.0036580483
        %v3685 = vmul.f32 %v3680, %v3684
        %v3686 = vadd.f32 %v3685, 0.05243302
        %v3687 = vmul.f32 %v3680, %v3686
        %v3688 = vadd.f32 %v3687, 0.18741608
        %v3689 = vmul.f32 %v3680, %v3688
        %v3690 = vadd.f32 %v3689, 1.1283791
        %v3691 = vmul.f32 %v1601, %v3690
        %v3692 = vmul.f32 %v3680, 3.8918573e-05
        %v3693 = vadd.f32 %v3692, 0.001143296
        %v3694 = vmul.f32 %v3680, %v3693
        %v3695 = vadd.f32 %v3694, 0.014752088
        %v3696 = vmul.f32 %v3680, %v3695
        %v3697 = vadd.f32 %v3696, 0.112945676
        %v3698 = vmul.f32 %v3680, %v3697
        %v3699 = vadd.f32 %v3698, 0.4994258
        %v3700 = vmul.f32 %v3680, %v3699
        %v3701 = vadd.f32 %v3700, 1.0
        %v3702 = vrcp.pop %v3701
        %v3703 = vmul.f32 %v3701, %v3702
        %v3704 = vsub.f32 1.0, %v3703
        %v3705 = vmul.f32 %v3702, %v3704
        %v3706 = vadd.f32 %v3702, %v3705
        %vm3707 = vweird.f32 %v3701
        %vm3708 = vweird.f32 %v3702
        %vm3709 = vmor %vm3707, %vm3708
        %v3710 = vsel %vm3709, %v3702, %v3706
        %v3711 = vand.u32 2147483647, %v3701
        %vm3712 = vcmp.eq.f32.partialorder %v3711, 8.507059e+37
        %v3713 = vand.u32 %v3701, 2147483648
        %v3714 = vor.u32 1.1754944e-38, %v3713
        %v3715 = vsel %vm3712, %v3714, %v3710
        %v3716 = vmul.f32 %v3691, %v3715
        %v3717 = vmin.f32 %v3716, 1.0
        %v3718 = vmax.f32 %v3717, -1.0
        %v3719 = vmul.f32 %v1602, %v1602
        %v3720 = vmin.f32 16.0, %v3719
        %v3721 = vmul.f32 %v3720, 2.1237322e-06
        %v3722 = vadd.f32 %v3721, 0.00028619796
        %v3723 = vmul.f32 %v3720, %v3722
        %v3724 = vadd.f32 %v3723, 0.0036580483
        %v3725 = vmul.f32 %v3720, %v3724
        %v3726 = vadd.f32 %v3725, 0.05243302
        %v3727 = vmul.f32 %v3720, %v3726
        %v3728 = vadd.f32 %v3727, 0.18741608
        %v3729 = vmul.f32 %v3720, %v3728
        %v3730 = vadd.f32 %v3729, 1.1283791
        %v3731 = vmul.f32 %v1602, %v3730
        %v3732 = vmul.f32 %v3720, 3.8918573e-05
        %v3733 = vadd.f32 %v3732, 0.001143296
        %v3734 = vmul.f32 %v3720, %v3733
        %v3735 = vadd.f32 %v3734, 0.014752088
        %v3736 = vmul.f32 %v3720, %v3735
        %v3737 = vadd.f32 %v3736, 0.112945676
        %v3738 = vmul.f32 %v3720, %v3737
        %v3739 = vadd.f32 %v3738, 0.4994258
        %v3740 = vmul.f32 %v3720, %v3739
        %v3741 = vadd.f32 %v3740, 1.0
        %v3742 = vrcp.pop %v3741
        %v3743 = vmul.f32 %v3741, %v3742
        %v3744 = vsub.f32 1.0, %v3743
        %v3745 = vmul.f32 %v3742, %v3744
        %v3746 = vadd.f32 %v3742, %v3745
        %vm3747 = vweird.f32 %v3741
        %vm3748 = vweird.f32 %v3742
        %vm3749 = vmor %vm3747, %vm3748
        %v3750 = vsel %vm3749, %v3742, %v3746
        %v3751 = vand.u32 2147483647, %v3741
        %vm3752 = vcmp.eq.f32.partialorder %v3751, 8.507059e+37
        %v3753 = vand.u32 %v3741, 2147483648
        %v3754 = vor.u32 1.1754944e-38, %v3753
        %v3755 = vsel %vm3752, %v3754, %v3750
        %v3756 = vmul.f32 %v3731, %v3755
        %v3757 = vmin.f32 %v3756, 1.0
        %v3758 = vmax.f32 %v3757, -1.0
        %v3759 = vmul.f32 %v1603, %v1603
        %v3760 = vmin.f32 16.0, %v3759
        %v3761 = vmul.f32 %v3760, 2.1237322e-06
        %v3762 = vadd.f32 %v3761, 0.00028619796
        %v3763 = vmul.f32 %v3760, %v3762
        %v3764 = vadd.f32 %v3763, 0.0036580483
        %v3765 = vmul.f32 %v3760, %v3764
        %v3766 = vadd.f32 %v3765, 0.05243302
        %v3767 = vmul.f32 %v3760, %v3766
        %v3768 = vadd.f32 %v3767, 0.18741608
        %v3769 = vmul.f32 %v3760, %v3768
        %v3770 = vadd.f32 %v3769, 1.1283791
        %v3771 = vmul.f32 %v1603, %v3770
        %v3772 = vmul.f32 %v3760, 3.8918573e-05
        %v3773 = vadd.f32 %v3772, 0.001143296
        %v3774 = vmul.f32 %v3760, %v3773
        %v3775 = vadd.f32 %v3774, 0.014752088
        %v3776 = vmul.f32 %v3760, %v3775
        %v3777 = vadd.f32 %v3776, 0.112945676
        %v3778 = vmul.f32 %v3760, %v3777
        %v3779 = vadd.f32 %v3778, 0.4994258
        %v3780 = vmul.f32 %v3760, %v3779
        %v3781 = vadd.f32 %v3780, 1.0
        %v3782 = vrcp.pop %v3781
        %v3783 = vmul.f32 %v3781, %v3782
        %v3784 = vsub.f32 1.0, %v3783
        %v3785 = vmul.f32 %v3782, %v3784
        %v3786 = vadd.f32 %v3782, %v3785
        %vm3787 = vweird.f32 %v3781
        %vm3788 = vweird.f32 %v3782
        %vm3789 = vmor %vm3787, %vm3788
        %v3790 = vsel %vm3789, %v3782, %v3786
        %v3791 = vand.u32 2147483647, %v3781
        %vm3792 = vcmp.eq.f32.partialorder %v3791, 8.507059e+37
        %v3793 = vand.u32 %v3781, 2147483648
        %v3794 = vor.u32 1.1754944e-38, %v3793
        %v3795 = vsel %vm3792, %v3794, %v3790
        %v3796 = vmul.f32 %v3771, %v3795
        %v3797 = vmin.f32 %v3796, 1.0
        %v3798 = vmax.f32 %v3797, -1.0
        %v3799 = vmul.f32 %v1604, %v1604
        %v3800 = vmin.f32 16.0, %v3799
        %v3801 = vmul.f32 %v3800, 2.1237322e-06
        %v3802 = vadd.f32 %v3801, 0.00028619796
        %v3803 = vmul.f32 %v3800, %v3802
        %v3804 = vadd.f32 %v3803, 0.0036580483
        %v3805 = vmul.f32 %v3800, %v3804
        %v3806 = vadd.f32 %v3805, 0.05243302
        %v3807 = vmul.f32 %v3800, %v3806
        %v3808 = vadd.f32 %v3807, 0.18741608
        %v3809 = vmul.f32 %v3800, %v3808
        %v3810 = vadd.f32 %v3809, 1.1283791
        %v3811 = vmul.f32 %v1604, %v3810
        %v3812 = vmul.f32 %v3800, 3.8918573e-05
        %v3813 = vadd.f32 %v3812, 0.001143296
        %v3814 = vmul.f32 %v3800, %v3813
        %v3815 = vadd.f32 %v3814, 0.014752088
        %v3816 = vmul.f32 %v3800, %v3815
        %v3817 = vadd.f32 %v3816, 0.112945676
        %v3818 = vmul.f32 %v3800, %v3817
        %v3819 = vadd.f32 %v3818, 0.4994258
        %v3820 = vmul.f32 %v3800, %v3819
        %v3821 = vadd.f32 %v3820, 1.0
        %v3822 = vrcp.pop %v3821
        %v3823 = vmul.f32 %v3821, %v3822
        %v3824 = vsub.f32 1.0, %v3823
        %v3825 = vmul.f32 %v3822, %v3824
        %v3826 = vadd.f32 %v3822, %v3825
        %vm3827 = vweird.f32 %v3821
        %vm3828 = vweird.f32 %v3822
        %vm3829 = vmor %vm3827, %vm3828
        %v3830 = vsel %vm3829, %v3822, %v3826
        %v3831 = vand.u32 2147483647, %v3821
        %vm3832 = vcmp.eq.f32.partialorder %v3831, 8.507059e+37
        %v3833 = vand.u32 %v3821, 2147483648
        %v3834 = vor.u32 1.1754944e-38, %v3833
        %v3835 = vsel %vm3832, %v3834, %v3830
        %v3836 = vmul.f32 %v3811, %v3835
        %v3837 = vmin.f32 %v3836, 1.0
        %v3838 = vmax.f32 %v3837, -1.0
        %v3839 = vmul.f32 %v1605, %v1605
        %v3840 = vmin.f32 16.0, %v3839
        %v3841 = vmul.f32 %v3840, 2.1237322e-06
        %v3842 = vadd.f32 %v3841, 0.00028619796
        %v3843 = vmul.f32 %v3840, %v3842
        %v3844 = vadd.f32 %v3843, 0.0036580483
        %v3845 = vmul.f32 %v3840, %v3844
        %v3846 = vadd.f32 %v3845, 0.05243302
        %v3847 = vmul.f32 %v3840, %v3846
        %v3848 = vadd.f32 %v3847, 0.18741608
        %v3849 = vmul.f32 %v3840, %v3848
        %v3850 = vadd.f32 %v3849, 1.1283791
        %v3851 = vmul.f32 %v1605, %v3850
        %v3852 = vmul.f32 %v3840, 3.8918573e-05
        %v3853 = vadd.f32 %v3852, 0.001143296
        %v3854 = vmul.f32 %v3840, %v3853
        %v3855 = vadd.f32 %v3854, 0.014752088
        %v3856 = vmul.f32 %v3840, %v3855
        %v3857 = vadd.f32 %v3856, 0.112945676
        %v3858 = vmul.f32 %v3840, %v3857
        %v3859 = vadd.f32 %v3858, 0.4994258
        %v3860 = vmul.f32 %v3840, %v3859
        %v3861 = vadd.f32 %v3860, 1.0
        %v3862 = vrcp.pop %v3861
        %v3863 = vmul.f32 %v3861, %v3862
        %v3864 = vsub.f32 1.0, %v3863
        %v3865 = vmul.f32 %v3862, %v3864
        %v3866 = vadd.f32 %v3862, %v3865
        %vm3867 = vweird.f32 %v3861
        %vm3868 = vweird.f32 %v3862
        %vm3869 = vmor %vm3867, %vm3868
        %v3870 = vsel %vm3869, %v3862, %v3866
        %v3871 = vand.u32 2147483647, %v3861
        %vm3872 = vcmp.eq.f32.partialorder %v3871, 8.507059e+37
        %v3873 = vand.u32 %v3861, 2147483648
        %v3874 = vor.u32 1.1754944e-38, %v3873
        %v3875 = vsel %vm3872, %v3874, %v3870
        %v3876 = vmul.f32 %v3851, %v3875
        %v3877 = vmin.f32 %v3876, 1.0
        %v3878 = vmax.f32 %v3877, -1.0
        %v3879 = vmul.f32 %v1606, %v1606
        %v3880 = vmin.f32 16.0, %v3879
        %v3881 = vmul.f32 %v3880, 2.1237322e-06
        %v3882 = vadd.f32 %v3881, 0.00028619796
        %v3883 = vmul.f32 %v3880, %v3882
        %v3884 = vadd.f32 %v3883, 0.0036580483
        %v3885 = vmul.f32 %v3880, %v3884
        %v3886 = vadd.f32 %v3885, 0.05243302
        %v3887 = vmul.f32 %v3880, %v3886
        %v3888 = vadd.f32 %v3887, 0.18741608
        %v3889 = vmul.f32 %v3880, %v3888
        %v3890 = vadd.f32 %v3889, 1.1283791
        %v3891 = vmul.f32 %v1606, %v3890
        %v3892 = vmul.f32 %v3880, 3.8918573e-05
        %v3893 = vadd.f32 %v3892, 0.001143296
        %v3894 = vmul.f32 %v3880, %v3893
        %v3895 = vadd.f32 %v3894, 0.014752088
        %v3896 = vmul.f32 %v3880, %v3895
        %v3897 = vadd.f32 %v3896, 0.112945676
        %v3898 = vmul.f32 %v3880, %v3897
        %v3899 = vadd.f32 %v3898, 0.4994258
        %v3900 = vmul.f32 %v3880, %v3899
        %v3901 = vadd.f32 %v3900, 1.0
        %v3902 = vrcp.pop %v3901
        %v3903 = vmul.f32 %v3901, %v3902
        %v3904 = vsub.f32 1.0, %v3903
        %v3905 = vmul.f32 %v3902, %v3904
        %v3906 = vadd.f32 %v3902, %v3905
        %vm3907 = vweird.f32 %v3901
        %vm3908 = vweird.f32 %v3902
        %vm3909 = vmor %vm3907, %vm3908
        %v3910 = vsel %vm3909, %v3902, %v3906
        %v3911 = vand.u32 2147483647, %v3901
        %vm3912 = vcmp.eq.f32.partialorder %v3911, 8.507059e+37
        %v3913 = vand.u32 %v3901, 2147483648
        %v3914 = vor.u32 1.1754944e-38, %v3913
        %v3915 = vsel %vm3912, %v3914, %v3910
        %v3916 = vmul.f32 %v3891, %v3915
        %v3917 = vmin.f32 %v3916, 1.0
        %v3918 = vmax.f32 %v3917, -1.0
        %v3919 = vmul.f32 %v1607, %v1607
        %v3920 = vmin.f32 16.0, %v3919
        %v3921 = vmul.f32 %v3920, 2.1237322e-06
        %v3922 = vadd.f32 %v3921, 0.00028619796
        %v3923 = vmul.f32 %v3920, %v3922
        %v3924 = vadd.f32 %v3923, 0.0036580483
        %v3925 = vmul.f32 %v3920, %v3924
        %v3926 = vadd.f32 %v3925, 0.05243302
        %v3927 = vmul.f32 %v3920, %v3926
        %v3928 = vadd.f32 %v3927, 0.18741608
        %v3929 = vmul.f32 %v3920, %v3928
        %v3930 = vadd.f32 %v3929, 1.1283791
        %v3931 = vmul.f32 %v1607, %v3930
        %v3932 = vmul.f32 %v3920, 3.8918573e-05
        %v3933 = vadd.f32 %v3932, 0.001143296
        %v3934 = vmul.f32 %v3920, %v3933
        %v3935 = vadd.f32 %v3934, 0.014752088
        %v3936 = vmul.f32 %v3920, %v3935
        %v3937 = vadd.f32 %v3936, 0.112945676
        %v3938 = vmul.f32 %v3920, %v3937
        %v3939 = vadd.f32 %v3938, 0.4994258
        %v3940 = vmul.f32 %v3920, %v3939
        %v3941 = vadd.f32 %v3940, 1.0
        %v3942 = vrcp.pop %v3941
        %v3943 = vmul.f32 %v3941, %v3942
        %v3944 = vsub.f32 1.0, %v3943
        %v3945 = vmul.f32 %v3942, %v3944
        %v3946 = vadd.f32 %v3942, %v3945
        %vm3947 = vweird.f32 %v3941
        %vm3948 = vweird.f32 %v3942
        %vm3949 = vmor %vm3947, %vm3948
        %v3950 = vsel %vm3949, %v3942, %v3946
        %v3951 = vand.u32 2147483647, %v3941
        %vm3952 = vcmp.eq.f32.partialorder %v3951, 8.507059e+37
        %v3953 = vand.u32 %v3941, 2147483648
        %v3954 = vor.u32 1.1754944e-38, %v3953
        %v3955 = vsel %vm3952, %v3954, %v3950
        %v3956 = vmul.f32 %v3931, %v3955
        %v3957 = vmin.f32 %v3956, 1.0
        %v3958 = vmax.f32 %v3957, -1.0
        %v3959 = vmul.f32 %v1608, %v1608
        %v3960 = vmin.f32 16.0, %v3959
        %v3961 = vmul.f32 %v3960, 2.1237322e-06
        %v3962 = vadd.f32 %v3961, 0.00028619796
        %v3963 = vmul.f32 %v3960, %v3962
        %v3964 = vadd.f32 %v3963, 0.0036580483
        %v3965 = vmul.f32 %v3960, %v3964
        %v3966 = vadd.f32 %v3965, 0.05243302
        %v3967 = vmul.f32 %v3960, %v3966
        %v3968 = vadd.f32 %v3967, 0.18741608
        %v3969 = vmul.f32 %v3960, %v3968
        %v3970 = vadd.f32 %v3969, 1.1283791
        %v3971 = vmul.f32 %v1608, %v3970
        %v3972 = vmul.f32 %v3960, 3.8918573e-05
        %v3973 = vadd.f32 %v3972, 0.001143296
        %v3974 = vmul.f32 %v3960, %v3973
        %v3975 = vadd.f32 %v3974, 0.014752088
        %v3976 = vmul.f32 %v3960, %v3975
        %v3977 = vadd.f32 %v3976, 0.112945676
        %v3978 = vmul.f32 %v3960, %v3977
        %v3979 = vadd.f32 %v3978, 0.4994258
        %v3980 = vmul.f32 %v3960, %v3979
        %v3981 = vadd.f32 %v3980, 1.0
        %v3982 = vrcp.pop %v3981
        %v3983 = vmul.f32 %v3981, %v3982
        %v3984 = vsub.f32 1.0, %v3983
        %v3985 = vmul.f32 %v3982, %v3984
        %v3986 = vadd.f32 %v3982, %v3985
        %vm3987 = vweird.f32 %v3981
        %vm3988 = vweird.f32 %v3982
        %vm3989 = vmor %vm3987, %vm3988
        %v3990 = vsel %vm3989, %v3982, %v3986
        %v3991 = vand.u32 2147483647, %v3981
        %vm3992 = vcmp.eq.f32.partialorder %v3991, 8.507059e+37
        %v3993 = vand.u32 %v3981, 2147483648
        %v3994 = vor.u32 1.1754944e-38, %v3993
        %v3995 = vsel %vm3992, %v3994, %v3990
        %v3996 = vmul.f32 %v3971, %v3995
        %v3997 = vmin.f32 %v3996, 1.0
        %v3998 = vmax.f32 %v3997, -1.0
        %v3999 = vmul.f32 %v1609, %v1609
        %v4000 = vmin.f32 16.0, %v3999
        %v4001 = vmul.f32 %v4000, 2.1237322e-06
        %v4002 = vadd.f32 %v4001, 0.00028619796
        %v4003 = vmul.f32 %v4000, %v4002
        %v4004 = vadd.f32 %v4003, 0.0036580483
        %v4005 = vmul.f32 %v4000, %v4004
        %v4006 = vadd.f32 %v4005, 0.05243302
        %v4007 = vmul.f32 %v4000, %v4006
        %v4008 = vadd.f32 %v4007, 0.18741608
        %v4009 = vmul.f32 %v4000, %v4008
        %v4010 = vadd.f32 %v4009, 1.1283791
        %v4011 = vmul.f32 %v1609, %v4010
        %v4012 = vmul.f32 %v4000, 3.8918573e-05
        %v4013 = vadd.f32 %v4012, 0.001143296
        %v4014 = vmul.f32 %v4000, %v4013
        %v4015 = vadd.f32 %v4014, 0.014752088
        %v4016 = vmul.f32 %v4000, %v4015
        %v4017 = vadd.f32 %v4016, 0.112945676
        %v4018 = vmul.f32 %v4000, %v4017
        %v4019 = vadd.f32 %v4018, 0.4994258
        %v4020 = vmul.f32 %v4000, %v4019
        %v4021 = vadd.f32 %v4020, 1.0
        %v4022 = vrcp.pop %v4021
        %v4023 = vmul.f32 %v4021, %v4022
        %v4024 = vsub.f32 1.0, %v4023
        %v4025 = vmul.f32 %v4022, %v4024
        %v4026 = vadd.f32 %v4022, %v4025
        %vm4027 = vweird.f32 %v4021
        %vm4028 = vweird.f32 %v4022
        %vm4029 = vmor %vm4027, %vm4028
        %v4030 = vsel %vm4029, %v4022, %v4026
        %v4031 = vand.u32 2147483647, %v4021
        %vm4032 = vcmp.eq.f32.partialorder %v4031, 8.507059e+37
        %v4033 = vand.u32 %v4021, 2147483648
        %v4034 = vor.u32 1.1754944e-38, %v4033
        %v4035 = vsel %vm4032, %v4034, %v4030
        %v4036 = vmul.f32 %v4011, %v4035
        %v4037 = vmin.f32 %v4036, 1.0
        %v4038 = vmax.f32 %v4037, -1.0
        %v4039 = vmul.f32 %v1610, %v1610
        %v4040 = vmin.f32 16.0, %v4039
        %v4041 = vmul.f32 %v4040, 2.1237322e-06
        %v4042 = vadd.f32 %v4041, 0.00028619796
        %v4043 = vmul.f32 %v4040, %v4042
        %v4044 = vadd.f32 %v4043, 0.0036580483
        %v4045 = vmul.f32 %v4040, %v4044
        %v4046 = vadd.f32 %v4045, 0.05243302
        %v4047 = vmul.f32 %v4040, %v4046
        %v4048 = vadd.f32 %v4047, 0.18741608
        %v4049 = vmul.f32 %v4040, %v4048
        %v4050 = vadd.f32 %v4049, 1.1283791
        %v4051 = vmul.f32 %v1610, %v4050
        %v4052 = vmul.f32 %v4040, 3.8918573e-05
        %v4053 = vadd.f32 %v4052, 0.001143296
        %v4054 = vmul.f32 %v4040, %v4053
        %v4055 = vadd.f32 %v4054, 0.014752088
        %v4056 = vmul.f32 %v4040, %v4055
        %v4057 = vadd.f32 %v4056, 0.112945676
        %v4058 = vmul.f32 %v4040, %v4057
        %v4059 = vadd.f32 %v4058, 0.4994258
        %v4060 = vmul.f32 %v4040, %v4059
        %v4061 = vadd.f32 %v4060, 1.0
        %v4062 = vrcp.pop %v4061
        %v4063 = vmul.f32 %v4061, %v4062
        %v4064 = vsub.f32 1.0, %v4063
        %v4065 = vmul.f32 %v4062, %v4064
        %v4066 = vadd.f32 %v4062, %v4065
        %vm4067 = vweird.f32 %v4061
        %vm4068 = vweird.f32 %v4062
        %vm4069 = vmor %vm4067, %vm4068
        %v4070 = vsel %vm4069, %v4062, %v4066
        %v4071 = vand.u32 2147483647, %v4061
        %vm4072 = vcmp.eq.f32.partialorder %v4071, 8.507059e+37
        %v4073 = vand.u32 %v4061, 2147483648
        %v4074 = vor.u32 1.1754944e-38, %v4073
        %v4075 = vsel %vm4072, %v4074, %v4070
        %v4076 = vmul.f32 %v4051, %v4075
        %v4077 = vmin.f32 %v4076, 1.0
        %v4078 = vmax.f32 %v4077, -1.0
        %v4079 = vmul.f32 %v1611, %v1611
        %v4080 = vmin.f32 16.0, %v4079
        %v4081 = vmul.f32 %v4080, 2.1237322e-06
        %v4082 = vadd.f32 %v4081, 0.00028619796
        %v4083 = vmul.f32 %v4080, %v4082
        %v4084 = vadd.f32 %v4083, 0.0036580483
        %v4085 = vmul.f32 %v4080, %v4084
        %v4086 = vadd.f32 %v4085, 0.05243302
        %v4087 = vmul.f32 %v4080, %v4086
        %v4088 = vadd.f32 %v4087, 0.18741608
        %v4089 = vmul.f32 %v4080, %v4088
        %v4090 = vadd.f32 %v4089, 1.1283791
        %v4091 = vmul.f32 %v1611, %v4090
        %v4092 = vmul.f32 %v4080, 3.8918573e-05
        %v4093 = vadd.f32 %v4092, 0.001143296
        %v4094 = vmul.f32 %v4080, %v4093
        %v4095 = vadd.f32 %v4094, 0.014752088
        %v4096 = vmul.f32 %v4080, %v4095
        %v4097 = vadd.f32 %v4096, 0.112945676
        %v4098 = vmul.f32 %v4080, %v4097
        %v4099 = vadd.f32 %v4098, 0.4994258
        %v4100 = vmul.f32 %v4080, %v4099
        %v4101 = vadd.f32 %v4100, 1.0
        %v4102 = vrcp.pop %v4101
        %v4103 = vmul.f32 %v4101, %v4102
        %v4104 = vsub.f32 1.0, %v4103
        %v4105 = vmul.f32 %v4102, %v4104
        %v4106 = vadd.f32 %v4102, %v4105
        %vm4107 = vweird.f32 %v4101
        %vm4108 = vweird.f32 %v4102
        %vm4109 = vmor %vm4107, %vm4108
        %v4110 = vsel %vm4109, %v4102, %v4106
        %v4111 = vand.u32 2147483647, %v4101
        %vm4112 = vcmp.eq.f32.partialorder %v4111, 8.507059e+37
        %v4113 = vand.u32 %v4101, 2147483648
        %v4114 = vor.u32 1.1754944e-38, %v4113
        %v4115 = vsel %vm4112, %v4114, %v4110
        %v4116 = vmul.f32 %v4091, %v4115
        %v4117 = vmin.f32 %v4116, 1.0
        %v4118 = vmax.f32 %v4117, -1.0
        %v4119 = vmul.f32 %v1612, %v1612
        %v4120 = vmin.f32 16.0, %v4119
        %v4121 = vmul.f32 %v4120, 2.1237322e-06
        %v4122 = vadd.f32 %v4121, 0.00028619796
        %v4123 = vmul.f32 %v4120, %v4122
        %v4124 = vadd.f32 %v4123, 0.0036580483
        %v4125 = vmul.f32 %v4120, %v4124
        %v4126 = vadd.f32 %v4125, 0.05243302
        %v4127 = vmul.f32 %v4120, %v4126
        %v4128 = vadd.f32 %v4127, 0.18741608
        %v4129 = vmul.f32 %v4120, %v4128
        %v4130 = vadd.f32 %v4129, 1.1283791
        %v4131 = vmul.f32 %v1612, %v4130
        %v4132 = vmul.f32 %v4120, 3.8918573e-05
        %v4133 = vadd.f32 %v4132, 0.001143296
        %v4134 = vmul.f32 %v4120, %v4133
        %v4135 = vadd.f32 %v4134, 0.014752088
        %v4136 = vmul.f32 %v4120, %v4135
        %v4137 = vadd.f32 %v4136, 0.112945676
        %v4138 = vmul.f32 %v4120, %v4137
        %v4139 = vadd.f32 %v4138, 0.4994258
        %v4140 = vmul.f32 %v4120, %v4139
        %v4141 = vadd.f32 %v4140, 1.0
        %v4142 = vrcp.pop %v4141
        %v4143 = vmul.f32 %v4141, %v4142
        %v4144 = vsub.f32 1.0, %v4143
        %v4145 = vmul.f32 %v4142, %v4144
        %v4146 = vadd.f32 %v4142, %v4145
        %vm4147 = vweird.f32 %v4141
        %vm4148 = vweird.f32 %v4142
        %vm4149 = vmor %vm4147, %vm4148
        %v4150 = vsel %vm4149, %v4142, %v4146
        %v4151 = vand.u32 2147483647, %v4141
        %vm4152 = vcmp.eq.f32.partialorder %v4151, 8.507059e+37
        %v4153 = vand.u32 %v4141, 2147483648
        %v4154 = vor.u32 1.1754944e-38, %v4153
        %v4155 = vsel %vm4152, %v4154, %v4150
        %v4156 = vmul.f32 %v4131, %v4155
        %v4157 = vmin.f32 %v4156, 1.0
        %v4158 = vmax.f32 %v4157, -1.0
        %v4159 = vmul.f32 %v1613, %v1613
        %v4160 = vmin.f32 16.0, %v4159
        %v4161 = vmul.f32 %v4160, 2.1237322e-06
        %v4162 = vadd.f32 %v4161, 0.00028619796
        %v4163 = vmul.f32 %v4160, %v4162
        %v4164 = vadd.f32 %v4163, 0.0036580483
        %v4165 = vmul.f32 %v4160, %v4164
        %v4166 = vadd.f32 %v4165, 0.05243302
        %v4167 = vmul.f32 %v4160, %v4166
        %v4168 = vadd.f32 %v4167, 0.18741608
        %v4169 = vmul.f32 %v4160, %v4168
        %v4170 = vadd.f32 %v4169, 1.1283791
        %v4171 = vmul.f32 %v1613, %v4170
        %v4172 = vmul.f32 %v4160, 3.8918573e-05
        %v4173 = vadd.f32 %v4172, 0.001143296
        %v4174 = vmul.f32 %v4160, %v4173
        %v4175 = vadd.f32 %v4174, 0.014752088
        %v4176 = vmul.f32 %v4160, %v4175
        %v4177 = vadd.f32 %v4176, 0.112945676
        %v4178 = vmul.f32 %v4160, %v4177
        %v4179 = vadd.f32 %v4178, 0.4994258
        %v4180 = vmul.f32 %v4160, %v4179
        %v4181 = vadd.f32 %v4180, 1.0
        %v4182 = vrcp.pop %v4181
        %v4183 = vmul.f32 %v4181, %v4182
        %v4184 = vsub.f32 1.0, %v4183
        %v4185 = vmul.f32 %v4182, %v4184
        %v4186 = vadd.f32 %v4182, %v4185
        %vm4187 = vweird.f32 %v4181
        %vm4188 = vweird.f32 %v4182
        %vm4189 = vmor %vm4187, %vm4188
        %v4190 = vsel %vm4189, %v4182, %v4186
        %v4191 = vand.u32 2147483647, %v4181
        %vm4192 = vcmp.eq.f32.partialorder %v4191, 8.507059e+37
        %v4193 = vand.u32 %v4181, 2147483648
        %v4194 = vor.u32 1.1754944e-38, %v4193
        %v4195 = vsel %vm4192, %v4194, %v4190
        %v4196 = vmul.f32 %v4171, %v4195
        %v4197 = vmin.f32 %v4196, 1.0
        %v4198 = vmax.f32 %v4197, -1.0
        %v4199 = vmul.f32 %v1614, %v1614
        %v4200 = vmin.f32 16.0, %v4199
        %v4201 = vmul.f32 %v4200, 2.1237322e-06
        %v4202 = vadd.f32 %v4201, 0.00028619796
        %v4203 = vmul.f32 %v4200, %v4202
        %v4204 = vadd.f32 %v4203, 0.0036580483
        %v4205 = vmul.f32 %v4200, %v4204
        %v4206 = vadd.f32 %v4205, 0.05243302
        %v4207 = vmul.f32 %v4200, %v4206
        %v4208 = vadd.f32 %v4207, 0.18741608
        %v4209 = vmul.f32 %v4200, %v4208
        %v4210 = vadd.f32 %v4209, 1.1283791
        %v4211 = vmul.f32 %v1614, %v4210
        %v4212 = vmul.f32 %v4200, 3.8918573e-05
        %v4213 = vadd.f32 %v4212, 0.001143296
        %v4214 = vmul.f32 %v4200, %v4213
        %v4215 = vadd.f32 %v4214, 0.014752088
        %v4216 = vmul.f32 %v4200, %v4215
        %v4217 = vadd.f32 %v4216, 0.112945676
        %v4218 = vmul.f32 %v4200, %v4217
        %v4219 = vadd.f32 %v4218, 0.4994258
        %v4220 = vmul.f32 %v4200, %v4219
        %v4221 = vadd.f32 %v4220, 1.0
        %v4222 = vrcp.pop %v4221
        %v4223 = vmul.f32 %v4221, %v4222
        %v4224 = vsub.f32 1.0, %v4223
        %v4225 = vmul.f32 %v4222, %v4224
        %v4226 = vadd.f32 %v4222, %v4225
        %vm4227 = vweird.f32 %v4221
        %vm4228 = vweird.f32 %v4222
        %vm4229 = vmor %vm4227, %vm4228
        %v4230 = vsel %vm4229, %v4222, %v4226
        %v4231 = vand.u32 2147483647, %v4221
        %vm4232 = vcmp.eq.f32.partialorder %v4231, 8.507059e+37
        %v4233 = vand.u32 %v4221, 2147483648
        %v4234 = vor.u32 1.1754944e-38, %v4233
        %v4235 = vsel %vm4232, %v4234, %v4230
        %v4236 = vmul.f32 %v4211, %v4235
        %v4237 = vmin.f32 %v4236, 1.0
        %v4238 = vmax.f32 %v4237, -1.0
        %v4239 = vmul.f32 %v1615, %v1615
        %v4240 = vmin.f32 16.0, %v4239
        %v4241 = vmul.f32 %v4240, 2.1237322e-06
        %v4242 = vadd.f32 %v4241, 0.00028619796
        %v4243 = vmul.f32 %v4240, %v4242
        %v4244 = vadd.f32 %v4243, 0.0036580483
        %v4245 = vmul.f32 %v4240, %v4244
        %v4246 = vadd.f32 %v4245, 0.05243302
        %v4247 = vmul.f32 %v4240, %v4246
        %v4248 = vadd.f32 %v4247, 0.18741608
        %v4249 = vmul.f32 %v4240, %v4248
        %v4250 = vadd.f32 %v4249, 1.1283791
        %v4251 = vmul.f32 %v1615, %v4250
        %v4252 = vmul.f32 %v4240, 3.8918573e-05
        %v4253 = vadd.f32 %v4252, 0.001143296
        %v4254 = vmul.f32 %v4240, %v4253
        %v4255 = vadd.f32 %v4254, 0.014752088
        %v4256 = vmul.f32 %v4240, %v4255
        %v4257 = vadd.f32 %v4256, 0.112945676
        %v4258 = vmul.f32 %v4240, %v4257
        %v4259 = vadd.f32 %v4258, 0.4994258
        %v4260 = vmul.f32 %v4240, %v4259
        %v4261 = vadd.f32 %v4260, 1.0
        %v4262 = vrcp.pop %v4261
        %v4263 = vmul.f32 %v4261, %v4262
        %v4264 = vsub.f32 1.0, %v4263
        %v4265 = vmul.f32 %v4262, %v4264
        %v4266 = vadd.f32 %v4262, %v4265
        %vm4267 = vweird.f32 %v4261
        %vm4268 = vweird.f32 %v4262
        %vm4269 = vmor %vm4267, %vm4268
        %v4270 = vsel %vm4269, %v4262, %v4266
        %v4271 = vand.u32 2147483647, %v4261
        %vm4272 = vcmp.eq.f32.partialorder %v4271, 8.507059e+37
        %v4273 = vand.u32 %v4261, 2147483648
        %v4274 = vor.u32 1.1754944e-38, %v4273
        %v4275 = vsel %vm4272, %v4274, %v4270
        %v4276 = vmul.f32 %v4251, %v4275
        %v4277 = vmin.f32 %v4276, 1.0
        %v4278 = vmax.f32 %v4277, -1.0
        %v4279 = vmul.f32 %v1616, %v1616
        %v4280 = vmin.f32 16.0, %v4279
        %v4281 = vmul.f32 %v4280, 2.1237322e-06
        %v4282 = vadd.f32 %v4281, 0.00028619796
        %v4283 = vmul.f32 %v4280, %v4282
        %v4284 = vadd.f32 %v4283, 0.0036580483
        %v4285 = vmul.f32 %v4280, %v4284
        %v4286 = vadd.f32 %v4285, 0.05243302
        %v4287 = vmul.f32 %v4280, %v4286
        %v4288 = vadd.f32 %v4287, 0.18741608
        %v4289 = vmul.f32 %v4280, %v4288
        %v4290 = vadd.f32 %v4289, 1.1283791
        %v4291 = vmul.f32 %v1616, %v4290
        %v4292 = vmul.f32 %v4280, 3.8918573e-05
        %v4293 = vadd.f32 %v4292, 0.001143296
        %v4294 = vmul.f32 %v4280, %v4293
        %v4295 = vadd.f32 %v4294, 0.014752088
        %v4296 = vmul.f32 %v4280, %v4295
        %v4297 = vadd.f32 %v4296, 0.112945676
        %v4298 = vmul.f32 %v4280, %v4297
        %v4299 = vadd.f32 %v4298, 0.4994258
        %v4300 = vmul.f32 %v4280, %v4299
        %v4301 = vadd.f32 %v4300, 1.0
        %v4302 = vrcp.pop %v4301
        %v4303 = vmul.f32 %v4301, %v4302
        %v4304 = vsub.f32 1.0, %v4303
        %v4305 = vmul.f32 %v4302, %v4304
        %v4306 = vadd.f32 %v4302, %v4305
        %vm4307 = vweird.f32 %v4301
        %vm4308 = vweird.f32 %v4302
        %vm4309 = vmor %vm4307, %vm4308
        %v4310 = vsel %vm4309, %v4302, %v4306
        %v4311 = vand.u32 2147483647, %v4301
        %vm4312 = vcmp.eq.f32.partialorder %v4311, 8.507059e+37
        %v4313 = vand.u32 %v4301, 2147483648
        %v4314 = vor.u32 1.1754944e-38, %v4313
        %v4315 = vsel %vm4312, %v4314, %v4310
        %v4316 = vmul.f32 %v4291, %v4315
        %v4317 = vmin.f32 %v4316, 1.0
        %v4318 = vmax.f32 %v4317, -1.0
        %v4319 = vmul.f32 %v1617, %v1617
        %v4320 = vmin.f32 16.0, %v4319
        %v4321 = vmul.f32 %v4320, 2.1237322e-06
        %v4322 = vadd.f32 %v4321, 0.00028619796
        %v4323 = vmul.f32 %v4320, %v4322
        %v4324 = vadd.f32 %v4323, 0.0036580483
        %v4325 = vmul.f32 %v4320, %v4324
        %v4326 = vadd.f32 %v4325, 0.05243302
        %v4327 = vmul.f32 %v4320, %v4326
        %v4328 = vadd.f32 %v4327, 0.18741608
        %v4329 = vmul.f32 %v4320, %v4328
        %v4330 = vadd.f32 %v4329, 1.1283791
        %v4331 = vmul.f32 %v1617, %v4330
        %v4332 = vmul.f32 %v4320, 3.8918573e-05
        %v4333 = vadd.f32 %v4332, 0.001143296
        %v4334 = vmul.f32 %v4320, %v4333
        %v4335 = vadd.f32 %v4334, 0.014752088
        %v4336 = vmul.f32 %v4320, %v4335
        %v4337 = vadd.f32 %v4336, 0.112945676
        %v4338 = vmul.f32 %v4320, %v4337
        %v4339 = vadd.f32 %v4338, 0.4994258
        %v4340 = vmul.f32 %v4320, %v4339
        %v4341 = vadd.f32 %v4340, 1.0
        %v4342 = vrcp.pop %v4341
        %v4343 = vmul.f32 %v4341, %v4342
        %v4344 = vsub.f32 1.0, %v4343
        %v4345 = vmul.f32 %v4342, %v4344
        %v4346 = vadd.f32 %v4342, %v4345
        %vm4347 = vweird.f32 %v4341
        %vm4348 = vweird.f32 %v4342
        %vm4349 = vmor %vm4347, %vm4348
        %v4350 = vsel %vm4349, %v4342, %v4346
        %v4351 = vand.u32 2147483647, %v4341
        %vm4352 = vcmp.eq.f32.partialorder %v4351, 8.507059e+37
        %v4353 = vand.u32 %v4341, 2147483648
        %v4354 = vor.u32 1.1754944e-38, %v4353
        %v4355 = vsel %vm4352, %v4354, %v4350
        %v4356 = vmul.f32 %v4331, %v4355
        %v4357 = vmin.f32 %v4356, 1.0
        %v4358 = vmax.f32 %v4357, -1.0
        %v4359 = vmul.f32 %v1618, %v1618
        %v4360 = vmin.f32 16.0, %v4359
        %v4361 = vmul.f32 %v4360, 2.1237322e-06
        %v4362 = vadd.f32 %v4361, 0.00028619796
        %v4363 = vmul.f32 %v4360, %v4362
        %v4364 = vadd.f32 %v4363, 0.0036580483
        %v4365 = vmul.f32 %v4360, %v4364
        %v4366 = vadd.f32 %v4365, 0.05243302
        %v4367 = vmul.f32 %v4360, %v4366
        %v4368 = vadd.f32 %v4367, 0.18741608
        %v4369 = vmul.f32 %v4360, %v4368
        %v4370 = vadd.f32 %v4369, 1.1283791
        %v4371 = vmul.f32 %v1618, %v4370
        %v4372 = vmul.f32 %v4360, 3.8918573e-05
        %v4373 = vadd.f32 %v4372, 0.001143296
        %v4374 = vmul.f32 %v4360, %v4373
        %v4375 = vadd.f32 %v4374, 0.014752088
        %v4376 = vmul.f32 %v4360, %v4375
        %v4377 = vadd.f32 %v4376, 0.112945676
        %v4378 = vmul.f32 %v4360, %v4377
        %v4379 = vadd.f32 %v4378, 0.4994258
        %v4380 = vmul.f32 %v4360, %v4379
        %v4381 = vadd.f32 %v4380, 1.0
        %v4382 = vrcp.pop %v4381
        %v4383 = vmul.f32 %v4381, %v4382
        %v4384 = vsub.f32 1.0, %v4383
        %v4385 = vmul.f32 %v4382, %v4384
        %v4386 = vadd.f32 %v4382, %v4385
        %vm4387 = vweird.f32 %v4381
        %vm4388 = vweird.f32 %v4382
        %vm4389 = vmor %vm4387, %vm4388
        %v4390 = vsel %vm4389, %v4382, %v4386
        %v4391 = vand.u32 2147483647, %v4381
        %vm4392 = vcmp.eq.f32.partialorder %v4391, 8.507059e+37
        %v4393 = vand.u32 %v4381, 2147483648
        %v4394 = vor.u32 1.1754944e-38, %v4393
        %v4395 = vsel %vm4392, %v4394, %v4390
        %v4396 = vmul.f32 %v4371, %v4395
        %v4397 = vmin.f32 %v4396, 1.0
        %v4398 = vmax.f32 %v4397, -1.0
        %v4399 = vmul.f32 %v1619, %v1619
        %v4400 = vmin.f32 16.0, %v4399
        %v4401 = vmul.f32 %v4400, 2.1237322e-06
        %v4402 = vadd.f32 %v4401, 0.00028619796
        %v4403 = vmul.f32 %v4400, %v4402
        %v4404 = vadd.f32 %v4403, 0.0036580483
        %v4405 = vmul.f32 %v4400, %v4404
        %v4406 = vadd.f32 %v4405, 0.05243302
        %v4407 = vmul.f32 %v4400, %v4406
        %v4408 = vadd.f32 %v4407, 0.18741608
        %v4409 = vmul.f32 %v4400, %v4408
        %v4410 = vadd.f32 %v4409, 1.1283791
        %v4411 = vmul.f32 %v1619, %v4410
        %v4412 = vmul.f32 %v4400, 3.8918573e-05
        %v4413 = vadd.f32 %v4412, 0.001143296
        %v4414 = vmul.f32 %v4400, %v4413
        %v4415 = vadd.f32 %v4414, 0.014752088
        %v4416 = vmul.f32 %v4400, %v4415
        %v4417 = vadd.f32 %v4416, 0.112945676
        %v4418 = vmul.f32 %v4400, %v4417
        %v4419 = vadd.f32 %v4418, 0.4994258
        %v4420 = vmul.f32 %v4400, %v4419
        %v4421 = vadd.f32 %v4420, 1.0
        %v4422 = vrcp.pop %v4421
        %v4423 = vmul.f32 %v4421, %v4422
        %v4424 = vsub.f32 1.0, %v4423
        %v4425 = vmul.f32 %v4422, %v4424
        %v4426 = vadd.f32 %v4422, %v4425
        %vm4427 = vweird.f32 %v4421
        %vm4428 = vweird.f32 %v4422
        %vm4429 = vmor %vm4427, %vm4428
        %v4430 = vsel %vm4429, %v4422, %v4426
        %v4431 = vand.u32 2147483647, %v4421
        %vm4432 = vcmp.eq.f32.partialorder %v4431, 8.507059e+37
        %v4433 = vand.u32 %v4421, 2147483648
        %v4434 = vor.u32 1.1754944e-38, %v4433
        %v4435 = vsel %vm4432, %v4434, %v4430
        %v4436 = vmul.f32 %v4411, %v4435
        %v4437 = vmin.f32 %v4436, 1.0
        %v4438 = vmax.f32 %v4437, -1.0
        %v4439 = vmul.f32 %v1620, %v1620
        %v4440 = vmin.f32 16.0, %v4439
        %v4441 = vmul.f32 %v4440, 2.1237322e-06
        %v4442 = vadd.f32 %v4441, 0.00028619796
        %v4443 = vmul.f32 %v4440, %v4442
        %v4444 = vadd.f32 %v4443, 0.0036580483
        %v4445 = vmul.f32 %v4440, %v4444
        %v4446 = vadd.f32 %v4445, 0.05243302
        %v4447 = vmul.f32 %v4440, %v4446
        %v4448 = vadd.f32 %v4447, 0.18741608
        %v4449 = vmul.f32 %v4440, %v4448
        %v4450 = vadd.f32 %v4449, 1.1283791
        %v4451 = vmul.f32 %v1620, %v4450
        %v4452 = vmul.f32 %v4440, 3.8918573e-05
        %v4453 = vadd.f32 %v4452, 0.001143296
        %v4454 = vmul.f32 %v4440, %v4453
        %v4455 = vadd.f32 %v4454, 0.014752088
        %v4456 = vmul.f32 %v4440, %v4455
        %v4457 = vadd.f32 %v4456, 0.112945676
        %v4458 = vmul.f32 %v4440, %v4457
        %v4459 = vadd.f32 %v4458, 0.4994258
        %v4460 = vmul.f32 %v4440, %v4459
        %v4461 = vadd.f32 %v4460, 1.0
        %v4462 = vrcp.pop %v4461
        %v4463 = vmul.f32 %v4461, %v4462
        %v4464 = vsub.f32 1.0, %v4463
        %v4465 = vmul.f32 %v4462, %v4464
        %v4466 = vadd.f32 %v4462, %v4465
        %vm4467 = vweird.f32 %v4461
        %vm4468 = vweird.f32 %v4462
        %vm4469 = vmor %vm4467, %vm4468
        %v4470 = vsel %vm4469, %v4462, %v4466
        %v4471 = vand.u32 2147483647, %v4461
        %vm4472 = vcmp.eq.f32.partialorder %v4471, 8.507059e+37
        %v4473 = vand.u32 %v4461, 2147483648
        %v4474 = vor.u32 1.1754944e-38, %v4473
        %v4475 = vsel %vm4472, %v4474, %v4470
        %v4476 = vmul.f32 %v4451, %v4475
        %v4477 = vmin.f32 %v4476, 1.0
        %v4478 = vmax.f32 %v4477, -1.0
        %v4479 = vmul.f32 %v1621, %v1621
        %v4480 = vmin.f32 16.0, %v4479
        %v4481 = vmul.f32 %v4480, 2.1237322e-06
        %v4482 = vadd.f32 %v4481, 0.00028619796
        %v4483 = vmul.f32 %v4480, %v4482
        %v4484 = vadd.f32 %v4483, 0.0036580483
        %v4485 = vmul.f32 %v4480, %v4484
        %v4486 = vadd.f32 %v4485, 0.05243302
        %v4487 = vmul.f32 %v4480, %v4486
        %v4488 = vadd.f32 %v4487, 0.18741608
        %v4489 = vmul.f32 %v4480, %v4488
        %v4490 = vadd.f32 %v4489, 1.1283791
        %v4491 = vmul.f32 %v1621, %v4490
        %v4492 = vmul.f32 %v4480, 3.8918573e-05
        %v4493 = vadd.f32 %v4492, 0.001143296
        %v4494 = vmul.f32 %v4480, %v4493
        %v4495 = vadd.f32 %v4494, 0.014752088
        %v4496 = vmul.f32 %v4480, %v4495
        %v4497 = vadd.f32 %v4496, 0.112945676
        %v4498 = vmul.f32 %v4480, %v4497
        %v4499 = vadd.f32 %v4498, 0.4994258
        %v4500 = vmul.f32 %v4480, %v4499
        %v4501 = vadd.f32 %v4500, 1.0
        %v4502 = vrcp.pop %v4501
        %v4503 = vmul.f32 %v4501, %v4502
        %v4504 = vsub.f32 1.0, %v4503
        %v4505 = vmul.f32 %v4502, %v4504
        %v4506 = vadd.f32 %v4502, %v4505
        %vm4507 = vweird.f32 %v4501
        %vm4508 = vweird.f32 %v4502
        %vm4509 = vmor %vm4507, %vm4508
        %v4510 = vsel %vm4509, %v4502, %v4506
        %v4511 = vand.u32 2147483647, %v4501
        %vm4512 = vcmp.eq.f32.partialorder %v4511, 8.507059e+37
        %v4513 = vand.u32 %v4501, 2147483648
        %v4514 = vor.u32 1.1754944e-38, %v4513
        %v4515 = vsel %vm4512, %v4514, %v4510
        %v4516 = vmul.f32 %v4491, %v4515
        %v4517 = vmin.f32 %v4516, 1.0
        %v4518 = vmax.f32 %v4517, -1.0
        %v4519 = vmul.f32 %v1622, %v1622
        %v4520 = vmin.f32 16.0, %v4519
        %v4521 = vmul.f32 %v4520, 2.1237322e-06
        %v4522 = vadd.f32 %v4521, 0.00028619796
        %v4523 = vmul.f32 %v4520, %v4522
        %v4524 = vadd.f32 %v4523, 0.0036580483
        %v4525 = vmul.f32 %v4520, %v4524
        %v4526 = vadd.f32 %v4525, 0.05243302
        %v4527 = vmul.f32 %v4520, %v4526
        %v4528 = vadd.f32 %v4527, 0.18741608
        %v4529 = vmul.f32 %v4520, %v4528
        %v4530 = vadd.f32 %v4529, 1.1283791
        %v4531 = vmul.f32 %v1622, %v4530
        %v4532 = vmul.f32 %v4520, 3.8918573e-05
        %v4533 = vadd.f32 %v4532, 0.001143296
        %v4534 = vmul.f32 %v4520, %v4533
        %v4535 = vadd.f32 %v4534, 0.014752088
        %v4536 = vmul.f32 %v4520, %v4535
        %v4537 = vadd.f32 %v4536, 0.112945676
        %v4538 = vmul.f32 %v4520, %v4537
        %v4539 = vadd.f32 %v4538, 0.4994258
        %v4540 = vmul.f32 %v4520, %v4539
        %v4541 = vadd.f32 %v4540, 1.0
        %v4542 = vrcp.pop %v4541
        %v4543 = vmul.f32 %v4541, %v4542
        %v4544 = vsub.f32 1.0, %v4543
        %v4545 = vmul.f32 %v4542, %v4544
        %v4546 = vadd.f32 %v4542, %v4545
        %vm4547 = vweird.f32 %v4541
        %vm4548 = vweird.f32 %v4542
        %vm4549 = vmor %vm4547, %vm4548
        %v4550 = vsel %vm4549, %v4542, %v4546
        %v4551 = vand.u32 2147483647, %v4541
        %vm4552 = vcmp.eq.f32.partialorder %v4551, 8.507059e+37
        %v4553 = vand.u32 %v4541, 2147483648
        %v4554 = vor.u32 1.1754944e-38, %v4553
        %v4555 = vsel %vm4552, %v4554, %v4550
        %v4556 = vmul.f32 %v4531, %v4555
        %v4557 = vmin.f32 %v4556, 1.0
        %v4558 = vmax.f32 %v4557, -1.0
        %v4559 = vmul.f32 %v1623, %v1623
        %v4560 = vmin.f32 16.0, %v4559
        %v4561 = vmul.f32 %v4560, 2.1237322e-06
        %v4562 = vadd.f32 %v4561, 0.00028619796
        %v4563 = vmul.f32 %v4560, %v4562
        %v4564 = vadd.f32 %v4563, 0.0036580483
        %v4565 = vmul.f32 %v4560, %v4564
        %v4566 = vadd.f32 %v4565, 0.05243302
        %v4567 = vmul.f32 %v4560, %v4566
        %v4568 = vadd.f32 %v4567, 0.18741608
        %v4569 = vmul.f32 %v4560, %v4568
        %v4570 = vadd.f32 %v4569, 1.1283791
        %v4571 = vmul.f32 %v1623, %v4570
        %v4572 = vmul.f32 %v4560, 3.8918573e-05
        %v4573 = vadd.f32 %v4572, 0.001143296
        %v4574 = vmul.f32 %v4560, %v4573
        %v4575 = vadd.f32 %v4574, 0.014752088
        %v4576 = vmul.f32 %v4560, %v4575
        %v4577 = vadd.f32 %v4576, 0.112945676
        %v4578 = vmul.f32 %v4560, %v4577
        %v4579 = vadd.f32 %v4578, 0.4994258
        %v4580 = vmul.f32 %v4560, %v4579
        %v4581 = vadd.f32 %v4580, 1.0
        %v4582 = vrcp.pop %v4581
        %v4583 = vmul.f32 %v4581, %v4582
        %v4584 = vsub.f32 1.0, %v4583
        %v4585 = vmul.f32 %v4582, %v4584
        %v4586 = vadd.f32 %v4582, %v4585
        %vm4587 = vweird.f32 %v4581
        %vm4588 = vweird.f32 %v4582
        %vm4589 = vmor %vm4587, %vm4588
        %v4590 = vsel %vm4589, %v4582, %v4586
        %v4591 = vand.u32 2147483647, %v4581
        %vm4592 = vcmp.eq.f32.partialorder %v4591, 8.507059e+37
        %v4593 = vand.u32 %v4581, 2147483648
        %v4594 = vor.u32 1.1754944e-38, %v4593
        %v4595 = vsel %vm4592, %v4594, %v4590
        %v4596 = vmul.f32 %v4571, %v4595
        %v4597 = vmin.f32 %v4596, 1.0
        %v4598 = vmax.f32 %v4597, -1.0
        %v4599 = vmul.f32 %v1624, %v1624
        %v4600 = vmin.f32 16.0, %v4599
        %v4601 = vmul.f32 %v4600, 2.1237322e-06
        %v4602 = vadd.f32 %v4601, 0.00028619796
        %v4603 = vmul.f32 %v4600, %v4602
        %v4604 = vadd.f32 %v4603, 0.0036580483
        %v4605 = vmul.f32 %v4600, %v4604
        %v4606 = vadd.f32 %v4605, 0.05243302
        %v4607 = vmul.f32 %v4600, %v4606
        %v4608 = vadd.f32 %v4607, 0.18741608
        %v4609 = vmul.f32 %v4600, %v4608
        %v4610 = vadd.f32 %v4609, 1.1283791
        %v4611 = vmul.f32 %v1624, %v4610
        %v4612 = vmul.f32 %v4600, 3.8918573e-05
        %v4613 = vadd.f32 %v4612, 0.001143296
        %v4614 = vmul.f32 %v4600, %v4613
        %v4615 = vadd.f32 %v4614, 0.014752088
        %v4616 = vmul.f32 %v4600, %v4615
        %v4617 = vadd.f32 %v4616, 0.112945676
        %v4618 = vmul.f32 %v4600, %v4617
        %v4619 = vadd.f32 %v4618, 0.4994258
        %v4620 = vmul.f32 %v4600, %v4619
        %v4621 = vadd.f32 %v4620, 1.0
        %v4622 = vrcp.pop %v4621
        %v4623 = vmul.f32 %v4621, %v4622
        %v4624 = vsub.f32 1.0, %v4623
        %v4625 = vmul.f32 %v4622, %v4624
        %v4626 = vadd.f32 %v4622, %v4625
        %vm4627 = vweird.f32 %v4621
        %vm4628 = vweird.f32 %v4622
        %vm4629 = vmor %vm4627, %vm4628
        %v4630 = vsel %vm4629, %v4622, %v4626
        %v4631 = vand.u32 2147483647, %v4621
        %vm4632 = vcmp.eq.f32.partialorder %v4631, 8.507059e+37
        %v4633 = vand.u32 %v4621, 2147483648
        %v4634 = vor.u32 1.1754944e-38, %v4633
        %v4635 = vsel %vm4632, %v4634, %v4630
        %v4636 = vmul.f32 %v4611, %v4635
        %v4637 = vmin.f32 %v4636, 1.0
        %v4638 = vmax.f32 %v4637, -1.0
        %v4639 = vmul.f32 %v1625, %v1625
        %v4640 = vmin.f32 16.0, %v4639
        %v4641 = vmul.f32 %v4640, 2.1237322e-06
        %v4642 = vadd.f32 %v4641, 0.00028619796
        %v4643 = vmul.f32 %v4640, %v4642
        %v4644 = vadd.f32 %v4643, 0.0036580483
        %v4645 = vmul.f32 %v4640, %v4644
        %v4646 = vadd.f32 %v4645, 0.05243302
        %v4647 = vmul.f32 %v4640, %v4646
        %v4648 = vadd.f32 %v4647, 0.18741608
        %v4649 = vmul.f32 %v4640, %v4648
        %v4650 = vadd.f32 %v4649, 1.1283791
        %v4651 = vmul.f32 %v1625, %v4650
        %v4652 = vmul.f32 %v4640, 3.8918573e-05
        %v4653 = vadd.f32 %v4652, 0.001143296
        %v4654 = vmul.f32 %v4640, %v4653
        %v4655 = vadd.f32 %v4654, 0.014752088
        %v4656 = vmul.f32 %v4640, %v4655
        %v4657 = vadd.f32 %v4656, 0.112945676
        %v4658 = vmul.f32 %v4640, %v4657
        %v4659 = vadd.f32 %v4658, 0.4994258
        %v4660 = vmul.f32 %v4640, %v4659
        %v4661 = vadd.f32 %v4660, 1.0
        %v4662 = vrcp.pop %v4661
        %v4663 = vmul.f32 %v4661, %v4662
        %v4664 = vsub.f32 1.0, %v4663
        %v4665 = vmul.f32 %v4662, %v4664
        %v4666 = vadd.f32 %v4662, %v4665
        %vm4667 = vweird.f32 %v4661
        %vm4668 = vweird.f32 %v4662
        %vm4669 = vmor %vm4667, %vm4668
        %v4670 = vsel %vm4669, %v4662, %v4666
        %v4671 = vand.u32 2147483647, %v4661
        %vm4672 = vcmp.eq.f32.partialorder %v4671, 8.507059e+37
        %v4673 = vand.u32 %v4661, 2147483648
        %v4674 = vor.u32 1.1754944e-38, %v4673
        %v4675 = vsel %vm4672, %v4674, %v4670
        %v4676 = vmul.f32 %v4651, %v4675
        %v4677 = vmin.f32 %v4676, 1.0
        %v4678 = vmax.f32 %v4677, -1.0
        %v4679 = vmul.f32 %v1626, %v1626
        %v4680 = vmin.f32 16.0, %v4679
        %v4681 = vmul.f32 %v4680, 2.1237322e-06
        %v4682 = vadd.f32 %v4681, 0.00028619796
        %v4683 = vmul.f32 %v4680, %v4682
        %v4684 = vadd.f32 %v4683, 0.0036580483
        %v4685 = vmul.f32 %v4680, %v4684
        %v4686 = vadd.f32 %v4685, 0.05243302
        %v4687 = vmul.f32 %v4680, %v4686
        %v4688 = vadd.f32 %v4687, 0.18741608
        %v4689 = vmul.f32 %v4680, %v4688
        %v4690 = vadd.f32 %v4689, 1.1283791
        %v4691 = vmul.f32 %v1626, %v4690
        %v4692 = vmul.f32 %v4680, 3.8918573e-05
        %v4693 = vadd.f32 %v4692, 0.001143296
        %v4694 = vmul.f32 %v4680, %v4693
        %v4695 = vadd.f32 %v4694, 0.014752088
        %v4696 = vmul.f32 %v4680, %v4695
        %v4697 = vadd.f32 %v4696, 0.112945676
        %v4698 = vmul.f32 %v4680, %v4697
        %v4699 = vadd.f32 %v4698, 0.4994258
        %v4700 = vmul.f32 %v4680, %v4699
        %v4701 = vadd.f32 %v4700, 1.0
        %v4702 = vrcp.pop %v4701
        %v4703 = vmul.f32 %v4701, %v4702
        %v4704 = vsub.f32 1.0, %v4703
        %v4705 = vmul.f32 %v4702, %v4704
        %v4706 = vadd.f32 %v4702, %v4705
        %vm4707 = vweird.f32 %v4701
        %vm4708 = vweird.f32 %v4702
        %vm4709 = vmor %vm4707, %vm4708
        %v4710 = vsel %vm4709, %v4702, %v4706
        %v4711 = vand.u32 2147483647, %v4701
        %vm4712 = vcmp.eq.f32.partialorder %v4711, 8.507059e+37
        %v4713 = vand.u32 %v4701, 2147483648
        %v4714 = vor.u32 1.1754944e-38, %v4713
        %v4715 = vsel %vm4712, %v4714, %v4710
        %v4716 = vmul.f32 %v4691, %v4715
        %v4717 = vmin.f32 %v4716, 1.0
        %v4718 = vmax.f32 %v4717, -1.0
        %v4719 = vmul.f32 %v1627, %v1627
        %v4720 = vmin.f32 16.0, %v4719
        %v4721 = vmul.f32 %v4720, 2.1237322e-06
        %v4722 = vadd.f32 %v4721, 0.00028619796
        %v4723 = vmul.f32 %v4720, %v4722
        %v4724 = vadd.f32 %v4723, 0.0036580483
        %v4725 = vmul.f32 %v4720, %v4724
        %v4726 = vadd.f32 %v4725, 0.05243302
        %v4727 = vmul.f32 %v4720, %v4726
        %v4728 = vadd.f32 %v4727, 0.18741608
        %v4729 = vmul.f32 %v4720, %v4728
        %v4730 = vadd.f32 %v4729, 1.1283791
        %v4731 = vmul.f32 %v1627, %v4730
        %v4732 = vmul.f32 %v4720, 3.8918573e-05
        %v4733 = vadd.f32 %v4732, 0.001143296
        %v4734 = vmul.f32 %v4720, %v4733
        %v4735 = vadd.f32 %v4734, 0.014752088
        %v4736 = vmul.f32 %v4720, %v4735
        %v4737 = vadd.f32 %v4736, 0.112945676
        %v4738 = vmul.f32 %v4720, %v4737
        %v4739 = vadd.f32 %v4738, 0.4994258
        %v4740 = vmul.f32 %v4720, %v4739
        %v4741 = vadd.f32 %v4740, 1.0
        %v4742 = vrcp.pop %v4741
        %v4743 = vmul.f32 %v4741, %v4742
        %v4744 = vsub.f32 1.0, %v4743
        %v4745 = vmul.f32 %v4742, %v4744
        %v4746 = vadd.f32 %v4742, %v4745
        %vm4747 = vweird.f32 %v4741
        %vm4748 = vweird.f32 %v4742
        %vm4749 = vmor %vm4747, %vm4748
        %v4750 = vsel %vm4749, %v4742, %v4746
        %v4751 = vand.u32 2147483647, %v4741
        %vm4752 = vcmp.eq.f32.partialorder %v4751, 8.507059e+37
        %v4753 = vand.u32 %v4741, 2147483648
        %v4754 = vor.u32 1.1754944e-38, %v4753
        %v4755 = vsel %vm4752, %v4754, %v4750
        %v4756 = vmul.f32 %v4731, %v4755
        %v4757 = vmin.f32 %v4756, 1.0
        %v4758 = vmax.f32 %v4757, -1.0
        %v4759 = vmul.f32 %v1628, %v1628
        %v4760 = vmin.f32 16.0, %v4759
        %v4761 = vmul.f32 %v4760, 2.1237322e-06
        %v4762 = vadd.f32 %v4761, 0.00028619796
        %v4763 = vmul.f32 %v4760, %v4762
        %v4764 = vadd.f32 %v4763, 0.0036580483
        %v4765 = vmul.f32 %v4760, %v4764
        %v4766 = vadd.f32 %v4765, 0.05243302
        %v4767 = vmul.f32 %v4760, %v4766
        %v4768 = vadd.f32 %v4767, 0.18741608
        %v4769 = vmul.f32 %v4760, %v4768
        %v4770 = vadd.f32 %v4769, 1.1283791
        %v4771 = vmul.f32 %v1628, %v4770
        %v4772 = vmul.f32 %v4760, 3.8918573e-05
        %v4773 = vadd.f32 %v4772, 0.001143296
        %v4774 = vmul.f32 %v4760, %v4773
        %v4775 = vadd.f32 %v4774, 0.014752088
        %v4776 = vmul.f32 %v4760, %v4775
        %v4777 = vadd.f32 %v4776, 0.112945676
        %v4778 = vmul.f32 %v4760, %v4777
        %v4779 = vadd.f32 %v4778, 0.4994258
        %v4780 = vmul.f32 %v4760, %v4779
        %v4781 = vadd.f32 %v4780, 1.0
        %v4782 = vrcp.pop %v4781
        %v4783 = vmul.f32 %v4781, %v4782
        %v4784 = vsub.f32 1.0, %v4783
        %v4785 = vmul.f32 %v4782, %v4784
        %v4786 = vadd.f32 %v4782, %v4785
        %vm4787 = vweird.f32 %v4781
        %vm4788 = vweird.f32 %v4782
        %vm4789 = vmor %vm4787, %vm4788
        %v4790 = vsel %vm4789, %v4782, %v4786
        %v4791 = vand.u32 2147483647, %v4781
        %vm4792 = vcmp.eq.f32.partialorder %v4791, 8.507059e+37
        %v4793 = vand.u32 %v4781, 2147483648
        %v4794 = vor.u32 1.1754944e-38, %v4793
        %v4795 = vsel %vm4792, %v4794, %v4790
        %v4796 = vmul.f32 %v4771, %v4795
        %v4797 = vmin.f32 %v4796, 1.0
        %v4798 = vmax.f32 %v4797, -1.0
        %v4799 = vmul.f32 %v1629, %v1629
        %v4800 = vmin.f32 16.0, %v4799
        %v4801 = vmul.f32 %v4800, 2.1237322e-06
        %v4802 = vadd.f32 %v4801, 0.00028619796
        %v4803 = vmul.f32 %v4800, %v4802
        %v4804 = vadd.f32 %v4803, 0.0036580483
        %v4805 = vmul.f32 %v4800, %v4804
        %v4806 = vadd.f32 %v4805, 0.05243302
        %v4807 = vmul.f32 %v4800, %v4806
        %v4808 = vadd.f32 %v4807, 0.18741608
        %v4809 = vmul.f32 %v4800, %v4808
        %v4810 = vadd.f32 %v4809, 1.1283791
        %v4811 = vmul.f32 %v1629, %v4810
        %v4812 = vmul.f32 %v4800, 3.8918573e-05
        %v4813 = vadd.f32 %v4812, 0.001143296
        %v4814 = vmul.f32 %v4800, %v4813
        %v4815 = vadd.f32 %v4814, 0.014752088
        %v4816 = vmul.f32 %v4800, %v4815
        %v4817 = vadd.f32 %v4816, 0.112945676
        %v4818 = vmul.f32 %v4800, %v4817
        %v4819 = vadd.f32 %v4818, 0.4994258
        %v4820 = vmul.f32 %v4800, %v4819
        %v4821 = vadd.f32 %v4820, 1.0
        %v4822 = vrcp.pop %v4821
        %v4823 = vmul.f32 %v4821, %v4822
        %v4824 = vsub.f32 1.0, %v4823
        %v4825 = vmul.f32 %v4822, %v4824
        %v4826 = vadd.f32 %v4822, %v4825
        %vm4827 = vweird.f32 %v4821
        %vm4828 = vweird.f32 %v4822
        %vm4829 = vmor %vm4827, %vm4828
        %v4830 = vsel %vm4829, %v4822, %v4826
        %v4831 = vand.u32 2147483647, %v4821
        %vm4832 = vcmp.eq.f32.partialorder %v4831, 8.507059e+37
        %v4833 = vand.u32 %v4821, 2147483648
        %v4834 = vor.u32 1.1754944e-38, %v4833
        %v4835 = vsel %vm4832, %v4834, %v4830
        %v4836 = vmul.f32 %v4811, %v4835
        %v4837 = vmin.f32 %v4836, 1.0
        %v4838 = vmax.f32 %v4837, -1.0
        %v4839 = vmul.f32 %v1630, %v1630
        %v4840 = vmin.f32 16.0, %v4839
        %v4841 = vmul.f32 %v4840, 2.1237322e-06
        %v4842 = vadd.f32 %v4841, 0.00028619796
        %v4843 = vmul.f32 %v4840, %v4842
        %v4844 = vadd.f32 %v4843, 0.0036580483
        %v4845 = vmul.f32 %v4840, %v4844
        %v4846 = vadd.f32 %v4845, 0.05243302
        %v4847 = vmul.f32 %v4840, %v4846
        %v4848 = vadd.f32 %v4847, 0.18741608
        %v4849 = vmul.f32 %v4840, %v4848
        %v4850 = vadd.f32 %v4849, 1.1283791
        %v4851 = vmul.f32 %v1630, %v4850
        %v4852 = vmul.f32 %v4840, 3.8918573e-05
        %v4853 = vadd.f32 %v4852, 0.001143296
        %v4854 = vmul.f32 %v4840, %v4853
        %v4855 = vadd.f32 %v4854, 0.014752088
        %v4856 = vmul.f32 %v4840, %v4855
        %v4857 = vadd.f32 %v4856, 0.112945676
        %v4858 = vmul.f32 %v4840, %v4857
        %v4859 = vadd.f32 %v4858, 0.4994258
        %v4860 = vmul.f32 %v4840, %v4859
        %v4861 = vadd.f32 %v4860, 1.0
        %v4862 = vrcp.pop %v4861
        %v4863 = vmul.f32 %v4861, %v4862
        %v4864 = vsub.f32 1.0, %v4863
        %v4865 = vmul.f32 %v4862, %v4864
        %v4866 = vadd.f32 %v4862, %v4865
        %vm4867 = vweird.f32 %v4861
        %vm4868 = vweird.f32 %v4862
        %vm4869 = vmor %vm4867, %vm4868
        %v4870 = vsel %vm4869, %v4862, %v4866
        %v4871 = vand.u32 2147483647, %v4861
        %vm4872 = vcmp.eq.f32.partialorder %v4871, 8.507059e+37
        %v4873 = vand.u32 %v4861, 2147483648
        %v4874 = vor.u32 1.1754944e-38, %v4873
        %v4875 = vsel %vm4872, %v4874, %v4870
        %v4876 = vmul.f32 %v4851, %v4875
        %v4877 = vmin.f32 %v4876, 1.0
        %v4878 = vmax.f32 %v4877, -1.0
        %v4879 = vmul.f32 %v1631, %v1631
        %v4880 = vmin.f32 16.0, %v4879
        %v4881 = vmul.f32 %v4880, 2.1237322e-06
        %v4882 = vadd.f32 %v4881, 0.00028619796
        %v4883 = vmul.f32 %v4880, %v4882
        %v4884 = vadd.f32 %v4883, 0.0036580483
        %v4885 = vmul.f32 %v4880, %v4884
        %v4886 = vadd.f32 %v4885, 0.05243302
        %v4887 = vmul.f32 %v4880, %v4886
        %v4888 = vadd.f32 %v4887, 0.18741608
        %v4889 = vmul.f32 %v4880, %v4888
        %v4890 = vadd.f32 %v4889, 1.1283791
        %v4891 = vmul.f32 %v1631, %v4890
        %v4892 = vmul.f32 %v4880, 3.8918573e-05
        %v4893 = vadd.f32 %v4892, 0.001143296
        %v4894 = vmul.f32 %v4880, %v4893
        %v4895 = vadd.f32 %v4894, 0.014752088
        %v4896 = vmul.f32 %v4880, %v4895
        %v4897 = vadd.f32 %v4896, 0.112945676
        %v4898 = vmul.f32 %v4880, %v4897
        %v4899 = vadd.f32 %v4898, 0.4994258
        %v4900 = vmul.f32 %v4880, %v4899
        %v4901 = vadd.f32 %v4900, 1.0
        %v4902 = vrcp.pop %v4901
        %v4903 = vmul.f32 %v4901, %v4902
        %v4904 = vsub.f32 1.0, %v4903
        %v4905 = vmul.f32 %v4902, %v4904
        %v4906 = vadd.f32 %v4902, %v4905
        %vm4907 = vweird.f32 %v4901
        %vm4908 = vweird.f32 %v4902
        %vm4909 = vmor %vm4907, %vm4908
        %v4910 = vsel %vm4909, %v4902, %v4906
        %v4911 = vand.u32 2147483647, %v4901
        %vm4912 = vcmp.eq.f32.partialorder %v4911, 8.507059e+37
        %v4913 = vand.u32 %v4901, 2147483648
        %v4914 = vor.u32 1.1754944e-38, %v4913
        %v4915 = vsel %vm4912, %v4914, %v4910
        %v4916 = vmul.f32 %v4891, %v4915
        %v4917 = vmin.f32 %v4916, 1.0
        %v4918 = vmax.f32 %v4917, -1.0
        %v4919 = vmul.f32 %v1632, %v1632
        %v4920 = vmin.f32 16.0, %v4919
        %v4921 = vmul.f32 %v4920, 2.1237322e-06
        %v4922 = vadd.f32 %v4921, 0.00028619796
        %v4923 = vmul.f32 %v4920, %v4922
        %v4924 = vadd.f32 %v4923, 0.0036580483
        %v4925 = vmul.f32 %v4920, %v4924
        %v4926 = vadd.f32 %v4925, 0.05243302
        %v4927 = vmul.f32 %v4920, %v4926
        %v4928 = vadd.f32 %v4927, 0.18741608
        %v4929 = vmul.f32 %v4920, %v4928
        %v4930 = vadd.f32 %v4929, 1.1283791
        %v4931 = vmul.f32 %v1632, %v4930
        %v4932 = vmul.f32 %v4920, 3.8918573e-05
        %v4933 = vadd.f32 %v4932, 0.001143296
        %v4934 = vmul.f32 %v4920, %v4933
        %v4935 = vadd.f32 %v4934, 0.014752088
        %v4936 = vmul.f32 %v4920, %v4935
        %v4937 = vadd.f32 %v4936, 0.112945676
        %v4938 = vmul.f32 %v4920, %v4937
        %v4939 = vadd.f32 %v4938, 0.4994258
        %v4940 = vmul.f32 %v4920, %v4939
        %v4941 = vadd.f32 %v4940, 1.0
        %v4942 = vrcp.pop %v4941
        %v4943 = vmul.f32 %v4941, %v4942
        %v4944 = vsub.f32 1.0, %v4943
        %v4945 = vmul.f32 %v4942, %v4944
        %v4946 = vadd.f32 %v4942, %v4945
        %vm4947 = vweird.f32 %v4941
        %vm4948 = vweird.f32 %v4942
        %vm4949 = vmor %vm4947, %vm4948
        %v4950 = vsel %vm4949, %v4942, %v4946
        %v4951 = vand.u32 2147483647, %v4941
        %vm4952 = vcmp.eq.f32.partialorder %v4951, 8.507059e+37
        %v4953 = vand.u32 %v4941, 2147483648
        %v4954 = vor.u32 1.1754944e-38, %v4953
        %v4955 = vsel %vm4952, %v4954, %v4950
        %v4956 = vmul.f32 %v4931, %v4955
        %v4957 = vmin.f32 %v4956, 1.0
        %v4958 = vmax.f32 %v4957, -1.0
        %v4959 = vmul.f32 %v1633, %v1633
        %v4960 = vmin.f32 16.0, %v4959
        %v4961 = vmul.f32 %v4960, 2.1237322e-06
        %v4962 = vadd.f32 %v4961, 0.00028619796
        %v4963 = vmul.f32 %v4960, %v4962
        %v4964 = vadd.f32 %v4963, 0.0036580483
        %v4965 = vmul.f32 %v4960, %v4964
        %v4966 = vadd.f32 %v4965, 0.05243302
        %v4967 = vmul.f32 %v4960, %v4966
        %v4968 = vadd.f32 %v4967, 0.18741608
        %v4969 = vmul.f32 %v4960, %v4968
        %v4970 = vadd.f32 %v4969, 1.1283791
        %v4971 = vmul.f32 %v1633, %v4970
        %v4972 = vmul.f32 %v4960, 3.8918573e-05
        %v4973 = vadd.f32 %v4972, 0.001143296
        %v4974 = vmul.f32 %v4960, %v4973
        %v4975 = vadd.f32 %v4974, 0.014752088
        %v4976 = vmul.f32 %v4960, %v4975
        %v4977 = vadd.f32 %v4976, 0.112945676
        %v4978 = vmul.f32 %v4960, %v4977
        %v4979 = vadd.f32 %v4978, 0.4994258
        %v4980 = vmul.f32 %v4960, %v4979
        %v4981 = vadd.f32 %v4980, 1.0
        %v4982 = vrcp.pop %v4981
        %v4983 = vmul.f32 %v4981, %v4982
        %v4984 = vsub.f32 1.0, %v4983
        %v4985 = vmul.f32 %v4982, %v4984
        %v4986 = vadd.f32 %v4982, %v4985
        %vm4987 = vweird.f32 %v4981
        %vm4988 = vweird.f32 %v4982
        %vm4989 = vmor %vm4987, %vm4988
        %v4990 = vsel %vm4989, %v4982, %v4986
        %v4991 = vand.u32 2147483647, %v4981
        %vm4992 = vcmp.eq.f32.partialorder %v4991, 8.507059e+37
        %v4993 = vand.u32 %v4981, 2147483648
        %v4994 = vor.u32 1.1754944e-38, %v4993
        %v4995 = vsel %vm4992, %v4994, %v4990
        %v4996 = vmul.f32 %v4971, %v4995
        %v4997 = vmin.f32 %v4996, 1.0
        %v4998 = vmax.f32 %v4997, -1.0
        %v4999 = vmul.f32 %v1634, %v1634
        %v5000 = vmin.f32 16.0, %v4999
        %v5001 = vmul.f32 %v5000, 2.1237322e-06
        %v5002 = vadd.f32 %v5001, 0.00028619796
        %v5003 = vmul.f32 %v5000, %v5002
        %v5004 = vadd.f32 %v5003, 0.0036580483
        %v5005 = vmul.f32 %v5000, %v5004
        %v5006 = vadd.f32 %v5005, 0.05243302
        %v5007 = vmul.f32 %v5000, %v5006
        %v5008 = vadd.f32 %v5007, 0.18741608
        %v5009 = vmul.f32 %v5000, %v5008
        %v5010 = vadd.f32 %v5009, 1.1283791
        %v5011 = vmul.f32 %v1634, %v5010
        %v5012 = vmul.f32 %v5000, 3.8918573e-05
        %v5013 = vadd.f32 %v5012, 0.001143296
        %v5014 = vmul.f32 %v5000, %v5013
        %v5015 = vadd.f32 %v5014, 0.014752088
        %v5016 = vmul.f32 %v5000, %v5015
        %v5017 = vadd.f32 %v5016, 0.112945676
        %v5018 = vmul.f32 %v5000, %v5017
        %v5019 = vadd.f32 %v5018, 0.4994258
        %v5020 = vmul.f32 %v5000, %v5019
        %v5021 = vadd.f32 %v5020, 1.0
        %v5022 = vrcp.pop %v5021
        %v5023 = vmul.f32 %v5021, %v5022
        %v5024 = vsub.f32 1.0, %v5023
        %v5025 = vmul.f32 %v5022, %v5024
        %v5026 = vadd.f32 %v5022, %v5025
        %vm5027 = vweird.f32 %v5021
        %vm5028 = vweird.f32 %v5022
        %vm5029 = vmor %vm5027, %vm5028
        %v5030 = vsel %vm5029, %v5022, %v5026
        %v5031 = vand.u32 2147483647, %v5021
        %vm5032 = vcmp.eq.f32.partialorder %v5031, 8.507059e+37
        %v5033 = vand.u32 %v5021, 2147483648
        %v5034 = vor.u32 1.1754944e-38, %v5033
        %v5035 = vsel %vm5032, %v5034, %v5030
        %v5036 = vmul.f32 %v5011, %v5035
        %v5037 = vmin.f32 %v5036, 1.0
        %v5038 = vmax.f32 %v5037, -1.0
        %v5039 = vmul.f32 %v1635, %v1635
        %v5040 = vmin.f32 16.0, %v5039
        %v5041 = vmul.f32 %v5040, 2.1237322e-06
        %v5042 = vadd.f32 %v5041, 0.00028619796
        %v5043 = vmul.f32 %v5040, %v5042
        %v5044 = vadd.f32 %v5043, 0.0036580483
        %v5045 = vmul.f32 %v5040, %v5044
        %v5046 = vadd.f32 %v5045, 0.05243302
        %v5047 = vmul.f32 %v5040, %v5046
        %v5048 = vadd.f32 %v5047, 0.18741608
        %v5049 = vmul.f32 %v5040, %v5048
        %v5050 = vadd.f32 %v5049, 1.1283791
        %v5051 = vmul.f32 %v1635, %v5050
        %v5052 = vmul.f32 %v5040, 3.8918573e-05
        %v5053 = vadd.f32 %v5052, 0.001143296
        %v5054 = vmul.f32 %v5040, %v5053
        %v5055 = vadd.f32 %v5054, 0.014752088
        %v5056 = vmul.f32 %v5040, %v5055
        %v5057 = vadd.f32 %v5056, 0.112945676
        %v5058 = vmul.f32 %v5040, %v5057
        %v5059 = vadd.f32 %v5058, 0.4994258
        %v5060 = vmul.f32 %v5040, %v5059
        %v5061 = vadd.f32 %v5060, 1.0
        %v5062 = vrcp.pop %v5061
        %v5063 = vmul.f32 %v5061, %v5062
        %v5064 = vsub.f32 1.0, %v5063
        %v5065 = vmul.f32 %v5062, %v5064
        %v5066 = vadd.f32 %v5062, %v5065
        %vm5067 = vweird.f32 %v5061
        %vm5068 = vweird.f32 %v5062
        %vm5069 = vmor %vm5067, %vm5068
        %v5070 = vsel %vm5069, %v5062, %v5066
        %v5071 = vand.u32 2147483647, %v5061
        %vm5072 = vcmp.eq.f32.partialorder %v5071, 8.507059e+37
        %v5073 = vand.u32 %v5061, 2147483648
        %v5074 = vor.u32 1.1754944e-38, %v5073
        %v5075 = vsel %vm5072, %v5074, %v5070
        %v5076 = vmul.f32 %v5051, %v5075
        %v5077 = vmin.f32 %v5076, 1.0
        %v5078 = vmax.f32 %v5077, -1.0
        %v5079 = vmul.f32 %v1636, %v1636
        %v5080 = vmin.f32 16.0, %v5079
        %v5081 = vmul.f32 %v5080, 2.1237322e-06
        %v5082 = vadd.f32 %v5081, 0.00028619796
        %v5083 = vmul.f32 %v5080, %v5082
        %v5084 = vadd.f32 %v5083, 0.0036580483
        %v5085 = vmul.f32 %v5080, %v5084
        %v5086 = vadd.f32 %v5085, 0.05243302
        %v5087 = vmul.f32 %v5080, %v5086
        %v5088 = vadd.f32 %v5087, 0.18741608
        %v5089 = vmul.f32 %v5080, %v5088
        %v5090 = vadd.f32 %v5089, 1.1283791
        %v5091 = vmul.f32 %v1636, %v5090
        %v5092 = vmul.f32 %v5080, 3.8918573e-05
        %v5093 = vadd.f32 %v5092, 0.001143296
        %v5094 = vmul.f32 %v5080, %v5093
        %v5095 = vadd.f32 %v5094, 0.014752088
        %v5096 = vmul.f32 %v5080, %v5095
        %v5097 = vadd.f32 %v5096, 0.112945676
        %v5098 = vmul.f32 %v5080, %v5097
        %v5099 = vadd.f32 %v5098, 0.4994258
        %v5100 = vmul.f32 %v5080, %v5099
        %v5101 = vadd.f32 %v5100, 1.0
        %v5102 = vrcp.pop %v5101
        %v5103 = vmul.f32 %v5101, %v5102
        %v5104 = vsub.f32 1.0, %v5103
        %v5105 = vmul.f32 %v5102, %v5104
        %v5106 = vadd.f32 %v5102, %v5105
        %vm5107 = vweird.f32 %v5101
        %vm5108 = vweird.f32 %v5102
        %vm5109 = vmor %vm5107, %vm5108
        %v5110 = vsel %vm5109, %v5102, %v5106
        %v5111 = vand.u32 2147483647, %v5101
        %vm5112 = vcmp.eq.f32.partialorder %v5111, 8.507059e+37
        %v5113 = vand.u32 %v5101, 2147483648
        %v5114 = vor.u32 1.1754944e-38, %v5113
        %v5115 = vsel %vm5112, %v5114, %v5110
        %v5116 = vmul.f32 %v5091, %v5115
        %v5117 = vmin.f32 %v5116, 1.0
        %v5118 = vmax.f32 %v5117, -1.0
        %v5119 = vmul.f32 %v1637, %v1637
        %v5120 = vmin.f32 16.0, %v5119
        %v5121 = vmul.f32 %v5120, 2.1237322e-06
        %v5122 = vadd.f32 %v5121, 0.00028619796
        %v5123 = vmul.f32 %v5120, %v5122
        %v5124 = vadd.f32 %v5123, 0.0036580483
        %v5125 = vmul.f32 %v5120, %v5124
        %v5126 = vadd.f32 %v5125, 0.05243302
        %v5127 = vmul.f32 %v5120, %v5126
        %v5128 = vadd.f32 %v5127, 0.18741608
        %v5129 = vmul.f32 %v5120, %v5128
        %v5130 = vadd.f32 %v5129, 1.1283791
        %v5131 = vmul.f32 %v1637, %v5130
        %v5132 = vmul.f32 %v5120, 3.8918573e-05
        %v5133 = vadd.f32 %v5132, 0.001143296
        %v5134 = vmul.f32 %v5120, %v5133
        %v5135 = vadd.f32 %v5134, 0.014752088
        %v5136 = vmul.f32 %v5120, %v5135
        %v5137 = vadd.f32 %v5136, 0.112945676
        %v5138 = vmul.f32 %v5120, %v5137
        %v5139 = vadd.f32 %v5138, 0.4994258
        %v5140 = vmul.f32 %v5120, %v5139
        %v5141 = vadd.f32 %v5140, 1.0
        %v5142 = vrcp.pop %v5141
        %v5143 = vmul.f32 %v5141, %v5142
        %v5144 = vsub.f32 1.0, %v5143
        %v5145 = vmul.f32 %v5142, %v5144
        %v5146 = vadd.f32 %v5142, %v5145
        %vm5147 = vweird.f32 %v5141
        %vm5148 = vweird.f32 %v5142
        %vm5149 = vmor %vm5147, %vm5148
        %v5150 = vsel %vm5149, %v5142, %v5146
        %v5151 = vand.u32 2147483647, %v5141
        %vm5152 = vcmp.eq.f32.partialorder %v5151, 8.507059e+37
        %v5153 = vand.u32 %v5141, 2147483648
        %v5154 = vor.u32 1.1754944e-38, %v5153
        %v5155 = vsel %vm5152, %v5154, %v5150
        %v5156 = vmul.f32 %v5131, %v5155
        %v5157 = vmin.f32 %v5156, 1.0
        %v5158 = vmax.f32 %v5157, -1.0
        %v5159 = vmul.f32 %v1638, %v1638
        %v5160 = vmin.f32 16.0, %v5159
        %v5161 = vmul.f32 %v5160, 2.1237322e-06
        %v5162 = vadd.f32 %v5161, 0.00028619796
        %v5163 = vmul.f32 %v5160, %v5162
        %v5164 = vadd.f32 %v5163, 0.0036580483
        %v5165 = vmul.f32 %v5160, %v5164
        %v5166 = vadd.f32 %v5165, 0.05243302
        %v5167 = vmul.f32 %v5160, %v5166
        %v5168 = vadd.f32 %v5167, 0.18741608
        %v5169 = vmul.f32 %v5160, %v5168
        %v5170 = vadd.f32 %v5169, 1.1283791
        %v5171 = vmul.f32 %v1638, %v5170
        %v5172 = vmul.f32 %v5160, 3.8918573e-05
        %v5173 = vadd.f32 %v5172, 0.001143296
        %v5174 = vmul.f32 %v5160, %v5173
        %v5175 = vadd.f32 %v5174, 0.014752088
        %v5176 = vmul.f32 %v5160, %v5175
        %v5177 = vadd.f32 %v5176, 0.112945676
        %v5178 = vmul.f32 %v5160, %v5177
        %v5179 = vadd.f32 %v5178, 0.4994258
        %v5180 = vmul.f32 %v5160, %v5179
        %v5181 = vadd.f32 %v5180, 1.0
        %v5182 = vrcp.pop %v5181
        %v5183 = vmul.f32 %v5181, %v5182
        %v5184 = vsub.f32 1.0, %v5183
        %v5185 = vmul.f32 %v5182, %v5184
        %v5186 = vadd.f32 %v5182, %v5185
        %vm5187 = vweird.f32 %v5181
        %vm5188 = vweird.f32 %v5182
        %vm5189 = vmor %vm5187, %vm5188
        %v5190 = vsel %vm5189, %v5182, %v5186
        %v5191 = vand.u32 2147483647, %v5181
        %vm5192 = vcmp.eq.f32.partialorder %v5191, 8.507059e+37
        %v5193 = vand.u32 %v5181, 2147483648
        %v5194 = vor.u32 1.1754944e-38, %v5193
        %v5195 = vsel %vm5192, %v5194, %v5190
        %v5196 = vmul.f32 %v5171, %v5195
        %v5197 = vmin.f32 %v5196, 1.0
        %v5198 = vmax.f32 %v5197, -1.0
        %v5199 = vmul.f32 %v1639, %v1639
        %v5200 = vmin.f32 16.0, %v5199
        %v5201 = vmul.f32 %v5200, 2.1237322e-06
        %v5202 = vadd.f32 %v5201, 0.00028619796
        %v5203 = vmul.f32 %v5200, %v5202
        %v5204 = vadd.f32 %v5203, 0.0036580483
        %v5205 = vmul.f32 %v5200, %v5204
        %v5206 = vadd.f32 %v5205, 0.05243302
        %v5207 = vmul.f32 %v5200, %v5206
        %v5208 = vadd.f32 %v5207, 0.18741608
        %v5209 = vmul.f32 %v5200, %v5208
        %v5210 = vadd.f32 %v5209, 1.1283791
        %v5211 = vmul.f32 %v1639, %v5210
        %v5212 = vmul.f32 %v5200, 3.8918573e-05
        %v5213 = vadd.f32 %v5212, 0.001143296
        %v5214 = vmul.f32 %v5200, %v5213
        %v5215 = vadd.f32 %v5214, 0.014752088
        %v5216 = vmul.f32 %v5200, %v5215
        %v5217 = vadd.f32 %v5216, 0.112945676
        %v5218 = vmul.f32 %v5200, %v5217
        %v5219 = vadd.f32 %v5218, 0.4994258
        %v5220 = vmul.f32 %v5200, %v5219
        %v5221 = vadd.f32 %v5220, 1.0
        %v5222 = vrcp.pop %v5221
        %v5223 = vmul.f32 %v5221, %v5222
        %v5224 = vsub.f32 1.0, %v5223
        %v5225 = vmul.f32 %v5222, %v5224
        %v5226 = vadd.f32 %v5222, %v5225
        %vm5227 = vweird.f32 %v5221
        %vm5228 = vweird.f32 %v5222
        %vm5229 = vmor %vm5227, %vm5228
        %v5230 = vsel %vm5229, %v5222, %v5226
        %v5231 = vand.u32 2147483647, %v5221
        %vm5232 = vcmp.eq.f32.partialorder %v5231, 8.507059e+37
        %v5233 = vand.u32 %v5221, 2147483648
        %v5234 = vor.u32 1.1754944e-38, %v5233
        %v5235 = vsel %vm5232, %v5234, %v5230
        %v5236 = vmul.f32 %v5211, %v5235
        %v5237 = vmin.f32 %v5236, 1.0
        %v5238 = vmax.f32 %v5237, -1.0
        %v5239 = vmul.f32 %v1640, %v1640
        %v5240 = vmin.f32 16.0, %v5239
        %v5241 = vmul.f32 %v5240, 2.1237322e-06
        %v5242 = vadd.f32 %v5241, 0.00028619796
        %v5243 = vmul.f32 %v5240, %v5242
        %v5244 = vadd.f32 %v5243, 0.0036580483
        %v5245 = vmul.f32 %v5240, %v5244
        %v5246 = vadd.f32 %v5245, 0.05243302
        %v5247 = vmul.f32 %v5240, %v5246
        %v5248 = vadd.f32 %v5247, 0.18741608
        %v5249 = vmul.f32 %v5240, %v5248
        %v5250 = vadd.f32 %v5249, 1.1283791
        %v5251 = vmul.f32 %v1640, %v5250
        %v5252 = vmul.f32 %v5240, 3.8918573e-05
        %v5253 = vadd.f32 %v5252, 0.001143296
        %v5254 = vmul.f32 %v5240, %v5253
        %v5255 = vadd.f32 %v5254, 0.014752088
        %v5256 = vmul.f32 %v5240, %v5255
        %v5257 = vadd.f32 %v5256, 0.112945676
        %v5258 = vmul.f32 %v5240, %v5257
        %v5259 = vadd.f32 %v5258, 0.4994258
        %v5260 = vmul.f32 %v5240, %v5259
        %v5261 = vadd.f32 %v5260, 1.0
        %v5262 = vrcp.pop %v5261
        %v5263 = vmul.f32 %v5261, %v5262
        %v5264 = vsub.f32 1.0, %v5263
        %v5265 = vmul.f32 %v5262, %v5264
        %v5266 = vadd.f32 %v5262, %v5265
        %vm5267 = vweird.f32 %v5261
        %vm5268 = vweird.f32 %v5262
        %vm5269 = vmor %vm5267, %vm5268
        %v5270 = vsel %vm5269, %v5262, %v5266
        %v5271 = vand.u32 2147483647, %v5261
        %vm5272 = vcmp.eq.f32.partialorder %v5271, 8.507059e+37
        %v5273 = vand.u32 %v5261, 2147483648
        %v5274 = vor.u32 1.1754944e-38, %v5273
        %v5275 = vsel %vm5272, %v5274, %v5270
        %v5276 = vmul.f32 %v5251, %v5275
        %v5277 = vmin.f32 %v5276, 1.0
        %v5278 = vmax.f32 %v5277, -1.0
        %v5279 = vmul.f32 %v1641, %v1641
        %v5280 = vmin.f32 16.0, %v5279
        %v5281 = vmul.f32 %v5280, 2.1237322e-06
        %v5282 = vadd.f32 %v5281, 0.00028619796
        %v5283 = vmul.f32 %v5280, %v5282
        %v5284 = vadd.f32 %v5283, 0.0036580483
        %v5285 = vmul.f32 %v5280, %v5284
        %v5286 = vadd.f32 %v5285, 0.05243302
        %v5287 = vmul.f32 %v5280, %v5286
        %v5288 = vadd.f32 %v5287, 0.18741608
        %v5289 = vmul.f32 %v5280, %v5288
        %v5290 = vadd.f32 %v5289, 1.1283791
        %v5291 = vmul.f32 %v1641, %v5290
        %v5292 = vmul.f32 %v5280, 3.8918573e-05
        %v5293 = vadd.f32 %v5292, 0.001143296
        %v5294 = vmul.f32 %v5280, %v5293
        %v5295 = vadd.f32 %v5294, 0.014752088
        %v5296 = vmul.f32 %v5280, %v5295
        %v5297 = vadd.f32 %v5296, 0.112945676
        %v5298 = vmul.f32 %v5280, %v5297
        %v5299 = vadd.f32 %v5298, 0.4994258
        %v5300 = vmul.f32 %v5280, %v5299
        %v5301 = vadd.f32 %v5300, 1.0
        %v5302 = vrcp.pop %v5301
        %v5303 = vmul.f32 %v5301, %v5302
        %v5304 = vsub.f32 1.0, %v5303
        %v5305 = vmul.f32 %v5302, %v5304
        %v5306 = vadd.f32 %v5302, %v5305
        %vm5307 = vweird.f32 %v5301
        %vm5308 = vweird.f32 %v5302
        %vm5309 = vmor %vm5307, %vm5308
        %v5310 = vsel %vm5309, %v5302, %v5306
        %v5311 = vand.u32 2147483647, %v5301
        %vm5312 = vcmp.eq.f32.partialorder %v5311, 8.507059e+37
        %v5313 = vand.u32 %v5301, 2147483648
        %v5314 = vor.u32 1.1754944e-38, %v5313
        %v5315 = vsel %vm5312, %v5314, %v5310
        %v5316 = vmul.f32 %v5291, %v5315
        %v5317 = vmin.f32 %v5316, 1.0
        %v5318 = vmax.f32 %v5317, -1.0
        %v5319 = vmul.f32 %v1642, %v1642
        %v5320 = vmin.f32 16.0, %v5319
        %v5321 = vmul.f32 %v5320, 2.1237322e-06
        %v5322 = vadd.f32 %v5321, 0.00028619796
        %v5323 = vmul.f32 %v5320, %v5322
        %v5324 = vadd.f32 %v5323, 0.0036580483
        %v5325 = vmul.f32 %v5320, %v5324
        %v5326 = vadd.f32 %v5325, 0.05243302
        %v5327 = vmul.f32 %v5320, %v5326
        %v5328 = vadd.f32 %v5327, 0.18741608
        %v5329 = vmul.f32 %v5320, %v5328
        %v5330 = vadd.f32 %v5329, 1.1283791
        %v5331 = vmul.f32 %v1642, %v5330
        %v5332 = vmul.f32 %v5320, 3.8918573e-05
        %v5333 = vadd.f32 %v5332, 0.001143296
        %v5334 = vmul.f32 %v5320, %v5333
        %v5335 = vadd.f32 %v5334, 0.014752088
        %v5336 = vmul.f32 %v5320, %v5335
        %v5337 = vadd.f32 %v5336, 0.112945676
        %v5338 = vmul.f32 %v5320, %v5337
        %v5339 = vadd.f32 %v5338, 0.4994258
        %v5340 = vmul.f32 %v5320, %v5339
        %v5341 = vadd.f32 %v5340, 1.0
        %v5342 = vrcp.pop %v5341
        %v5343 = vmul.f32 %v5341, %v5342
        %v5344 = vsub.f32 1.0, %v5343
        %v5345 = vmul.f32 %v5342, %v5344
        %v5346 = vadd.f32 %v5342, %v5345
        %vm5347 = vweird.f32 %v5341
        %vm5348 = vweird.f32 %v5342
        %vm5349 = vmor %vm5347, %vm5348
        %v5350 = vsel %vm5349, %v5342, %v5346
        %v5351 = vand.u32 2147483647, %v5341
        %vm5352 = vcmp.eq.f32.partialorder %v5351, 8.507059e+37
        %v5353 = vand.u32 %v5341, 2147483648
        %v5354 = vor.u32 1.1754944e-38, %v5353
        %v5355 = vsel %vm5352, %v5354, %v5350
        %v5356 = vmul.f32 %v5331, %v5355
        %v5357 = vmin.f32 %v5356, 1.0
        %v5358 = vmax.f32 %v5357, -1.0
        %v5359 = vmul.f32 %v1643, %v1643
        %v5360 = vmin.f32 16.0, %v5359
        %v5361 = vmul.f32 %v5360, 2.1237322e-06
        %v5362 = vadd.f32 %v5361, 0.00028619796
        %v5363 = vmul.f32 %v5360, %v5362
        %v5364 = vadd.f32 %v5363, 0.0036580483
        %v5365 = vmul.f32 %v5360, %v5364
        %v5366 = vadd.f32 %v5365, 0.05243302
        %v5367 = vmul.f32 %v5360, %v5366
        %v5368 = vadd.f32 %v5367, 0.18741608
        %v5369 = vmul.f32 %v5360, %v5368
        %v5370 = vadd.f32 %v5369, 1.1283791
        %v5371 = vmul.f32 %v1643, %v5370
        %v5372 = vmul.f32 %v5360, 3.8918573e-05
        %v5373 = vadd.f32 %v5372, 0.001143296
        %v5374 = vmul.f32 %v5360, %v5373
        %v5375 = vadd.f32 %v5374, 0.014752088
        %v5376 = vmul.f32 %v5360, %v5375
        %v5377 = vadd.f32 %v5376, 0.112945676
        %v5378 = vmul.f32 %v5360, %v5377
        %v5379 = vadd.f32 %v5378, 0.4994258
        %v5380 = vmul.f32 %v5360, %v5379
        %v5381 = vadd.f32 %v5380, 1.0
        %v5382 = vrcp.pop %v5381
        %v5383 = vmul.f32 %v5381, %v5382
        %v5384 = vsub.f32 1.0, %v5383
        %v5385 = vmul.f32 %v5382, %v5384
        %v5386 = vadd.f32 %v5382, %v5385
        %vm5387 = vweird.f32 %v5381
        %vm5388 = vweird.f32 %v5382
        %vm5389 = vmor %vm5387, %vm5388
        %v5390 = vsel %vm5389, %v5382, %v5386
        %v5391 = vand.u32 2147483647, %v5381
        %vm5392 = vcmp.eq.f32.partialorder %v5391, 8.507059e+37
        %v5393 = vand.u32 %v5381, 2147483648
        %v5394 = vor.u32 1.1754944e-38, %v5393
        %v5395 = vsel %vm5392, %v5394, %v5390
        %v5396 = vmul.f32 %v5371, %v5395
        %v5397 = vmin.f32 %v5396, 1.0
        %v5398 = vmax.f32 %v5397, -1.0
        %v5399 = vmul.f32 %v1644, %v1644
        %v5400 = vmin.f32 16.0, %v5399
        %v5401 = vmul.f32 %v5400, 2.1237322e-06
        %v5402 = vadd.f32 %v5401, 0.00028619796
        %v5403 = vmul.f32 %v5400, %v5402
        %v5404 = vadd.f32 %v5403, 0.0036580483
        %v5405 = vmul.f32 %v5400, %v5404
        %v5406 = vadd.f32 %v5405, 0.05243302
        %v5407 = vmul.f32 %v5400, %v5406
        %v5408 = vadd.f32 %v5407, 0.18741608
        %v5409 = vmul.f32 %v5400, %v5408
        %v5410 = vadd.f32 %v5409, 1.1283791
        %v5411 = vmul.f32 %v1644, %v5410
        %v5412 = vmul.f32 %v5400, 3.8918573e-05
        %v5413 = vadd.f32 %v5412, 0.001143296
        %v5414 = vmul.f32 %v5400, %v5413
        %v5415 = vadd.f32 %v5414, 0.014752088
        %v5416 = vmul.f32 %v5400, %v5415
        %v5417 = vadd.f32 %v5416, 0.112945676
        %v5418 = vmul.f32 %v5400, %v5417
        %v5419 = vadd.f32 %v5418, 0.4994258
        %v5420 = vmul.f32 %v5400, %v5419
        %v5421 = vadd.f32 %v5420, 1.0
        %v5422 = vrcp.pop %v5421
        %v5423 = vmul.f32 %v5421, %v5422
        %v5424 = vsub.f32 1.0, %v5423
        %v5425 = vmul.f32 %v5422, %v5424
        %v5426 = vadd.f32 %v5422, %v5425
        %vm5427 = vweird.f32 %v5421
        %vm5428 = vweird.f32 %v5422
        %vm5429 = vmor %vm5427, %vm5428
        %v5430 = vsel %vm5429, %v5422, %v5426
        %v5431 = vand.u32 2147483647, %v5421
        %vm5432 = vcmp.eq.f32.partialorder %v5431, 8.507059e+37
        %v5433 = vand.u32 %v5421, 2147483648
        %v5434 = vor.u32 1.1754944e-38, %v5433
        %v5435 = vsel %vm5432, %v5434, %v5430
        %v5436 = vmul.f32 %v5411, %v5435
        %v5437 = vmin.f32 %v5436, 1.0
        %v5438 = vmax.f32 %v5437, -1.0
        %v5439 = vmul.f32 %v1645, %v1645
        %v5440 = vmin.f32 16.0, %v5439
        %v5441 = vmul.f32 %v5440, 2.1237322e-06
        %v5442 = vadd.f32 %v5441, 0.00028619796
        %v5443 = vmul.f32 %v5440, %v5442
        %v5444 = vadd.f32 %v5443, 0.0036580483
        %v5445 = vmul.f32 %v5440, %v5444
        %v5446 = vadd.f32 %v5445, 0.05243302
        %v5447 = vmul.f32 %v5440, %v5446
        %v5448 = vadd.f32 %v5447, 0.18741608
        %v5449 = vmul.f32 %v5440, %v5448
        %v5450 = vadd.f32 %v5449, 1.1283791
        %v5451 = vmul.f32 %v1645, %v5450
        %v5452 = vmul.f32 %v5440, 3.8918573e-05
        %v5453 = vadd.f32 %v5452, 0.001143296
        %v5454 = vmul.f32 %v5440, %v5453
        %v5455 = vadd.f32 %v5454, 0.014752088
        %v5456 = vmul.f32 %v5440, %v5455
        %v5457 = vadd.f32 %v5456, 0.112945676
        %v5458 = vmul.f32 %v5440, %v5457
        %v5459 = vadd.f32 %v5458, 0.4994258
        %v5460 = vmul.f32 %v5440, %v5459
        %v5461 = vadd.f32 %v5460, 1.0
        %v5462 = vrcp.pop %v5461
        %v5463 = vmul.f32 %v5461, %v5462
        %v5464 = vsub.f32 1.0, %v5463
        %v5465 = vmul.f32 %v5462, %v5464
        %v5466 = vadd.f32 %v5462, %v5465
        %vm5467 = vweird.f32 %v5461
        %vm5468 = vweird.f32 %v5462
        %vm5469 = vmor %vm5467, %vm5468
        %v5470 = vsel %vm5469, %v5462, %v5466
        %v5471 = vand.u32 2147483647, %v5461
        %vm5472 = vcmp.eq.f32.partialorder %v5471, 8.507059e+37
        %v5473 = vand.u32 %v5461, 2147483648
        %v5474 = vor.u32 1.1754944e-38, %v5473
        %v5475 = vsel %vm5472, %v5474, %v5470
        %v5476 = vmul.f32 %v5451, %v5475
        %v5477 = vmin.f32 %v5476, 1.0
        %v5478 = vmax.f32 %v5477, -1.0
        %v5479 = vmul.f32 %v1646, %v1646
        %v5480 = vmin.f32 16.0, %v5479
        %v5481 = vmul.f32 %v5480, 2.1237322e-06
        %v5482 = vadd.f32 %v5481, 0.00028619796
        %v5483 = vmul.f32 %v5480, %v5482
        %v5484 = vadd.f32 %v5483, 0.0036580483
        %v5485 = vmul.f32 %v5480, %v5484
        %v5486 = vadd.f32 %v5485, 0.05243302
        %v5487 = vmul.f32 %v5480, %v5486
        %v5488 = vadd.f32 %v5487, 0.18741608
        %v5489 = vmul.f32 %v5480, %v5488
        %v5490 = vadd.f32 %v5489, 1.1283791
        %v5491 = vmul.f32 %v1646, %v5490
        %v5492 = vmul.f32 %v5480, 3.8918573e-05
        %v5493 = vadd.f32 %v5492, 0.001143296
        %v5494 = vmul.f32 %v5480, %v5493
        %v5495 = vadd.f32 %v5494, 0.014752088
        %v5496 = vmul.f32 %v5480, %v5495
        %v5497 = vadd.f32 %v5496, 0.112945676
        %v5498 = vmul.f32 %v5480, %v5497
        %v5499 = vadd.f32 %v5498, 0.4994258
        %v5500 = vmul.f32 %v5480, %v5499
        %v5501 = vadd.f32 %v5500, 1.0
        %v5502 = vrcp.pop %v5501
        %v5503 = vmul.f32 %v5501, %v5502
        %v5504 = vsub.f32 1.0, %v5503
        %v5505 = vmul.f32 %v5502, %v5504
        %v5506 = vadd.f32 %v5502, %v5505
        %vm5507 = vweird.f32 %v5501
        %vm5508 = vweird.f32 %v5502
        %vm5509 = vmor %vm5507, %vm5508
        %v5510 = vsel %vm5509, %v5502, %v5506
        %v5511 = vand.u32 2147483647, %v5501
        %vm5512 = vcmp.eq.f32.partialorder %v5511, 8.507059e+37
        %v5513 = vand.u32 %v5501, 2147483648
        %v5514 = vor.u32 1.1754944e-38, %v5513
        %v5515 = vsel %vm5512, %v5514, %v5510
        %v5516 = vmul.f32 %v5491, %v5515
        %v5517 = vmin.f32 %v5516, 1.0
        %v5518 = vmax.f32 %v5517, -1.0
        %v5519 = vmul.f32 %v1647, %v1647
        %v5520 = vmin.f32 16.0, %v5519
        %v5521 = vmul.f32 %v5520, 2.1237322e-06
        %v5522 = vadd.f32 %v5521, 0.00028619796
        %v5523 = vmul.f32 %v5520, %v5522
        %v5524 = vadd.f32 %v5523, 0.0036580483
        %v5525 = vmul.f32 %v5520, %v5524
        %v5526 = vadd.f32 %v5525, 0.05243302
        %v5527 = vmul.f32 %v5520, %v5526
        %v5528 = vadd.f32 %v5527, 0.18741608
        %v5529 = vmul.f32 %v5520, %v5528
        %v5530 = vadd.f32 %v5529, 1.1283791
        %v5531 = vmul.f32 %v1647, %v5530
        %v5532 = vmul.f32 %v5520, 3.8918573e-05
        %v5533 = vadd.f32 %v5532, 0.001143296
        %v5534 = vmul.f32 %v5520, %v5533
        %v5535 = vadd.f32 %v5534, 0.014752088
        %v5536 = vmul.f32 %v5520, %v5535
        %v5537 = vadd.f32 %v5536, 0.112945676
        %v5538 = vmul.f32 %v5520, %v5537
        %v5539 = vadd.f32 %v5538, 0.4994258
        %v5540 = vmul.f32 %v5520, %v5539
        %v5541 = vadd.f32 %v5540, 1.0
        %v5542 = vrcp.pop %v5541
        %v5543 = vmul.f32 %v5541, %v5542
        %v5544 = vsub.f32 1.0, %v5543
        %v5545 = vmul.f32 %v5542, %v5544
        %v5546 = vadd.f32 %v5542, %v5545
        %vm5547 = vweird.f32 %v5541
        %vm5548 = vweird.f32 %v5542
        %vm5549 = vmor %vm5547, %vm5548
        %v5550 = vsel %vm5549, %v5542, %v5546
        %v5551 = vand.u32 2147483647, %v5541
        %vm5552 = vcmp.eq.f32.partialorder %v5551, 8.507059e+37
        %v5553 = vand.u32 %v5541, 2147483648
        %v5554 = vor.u32 1.1754944e-38, %v5553
        %v5555 = vsel %vm5552, %v5554, %v5550
        %v5556 = vmul.f32 %v5531, %v5555
        %v5557 = vmin.f32 %v5556, 1.0
        %v5558 = vmax.f32 %v5557, -1.0
        %v5559 = vmul.f32 %v1648, %v1648
        %v5560 = vmin.f32 16.0, %v5559
        %v5561 = vmul.f32 %v5560, 2.1237322e-06
        %v5562 = vadd.f32 %v5561, 0.00028619796
        %v5563 = vmul.f32 %v5560, %v5562
        %v5564 = vadd.f32 %v5563, 0.0036580483
        %v5565 = vmul.f32 %v5560, %v5564
        %v5566 = vadd.f32 %v5565, 0.05243302
        %v5567 = vmul.f32 %v5560, %v5566
        %v5568 = vadd.f32 %v5567, 0.18741608
        %v5569 = vmul.f32 %v5560, %v5568
        %v5570 = vadd.f32 %v5569, 1.1283791
        %v5571 = vmul.f32 %v1648, %v5570
        %v5572 = vmul.f32 %v5560, 3.8918573e-05
        %v5573 = vadd.f32 %v5572, 0.001143296
        %v5574 = vmul.f32 %v5560, %v5573
        %v5575 = vadd.f32 %v5574, 0.014752088
        %v5576 = vmul.f32 %v5560, %v5575
        %v5577 = vadd.f32 %v5576, 0.112945676
        %v5578 = vmul.f32 %v5560, %v5577
        %v5579 = vadd.f32 %v5578, 0.4994258
        %v5580 = vmul.f32 %v5560, %v5579
        %v5581 = vadd.f32 %v5580, 1.0
        %v5582 = vrcp.pop %v5581
        %v5583 = vmul.f32 %v5581, %v5582
        %v5584 = vsub.f32 1.0, %v5583
        %v5585 = vmul.f32 %v5582, %v5584
        %v5586 = vadd.f32 %v5582, %v5585
        %vm5587 = vweird.f32 %v5581
        %vm5588 = vweird.f32 %v5582
        %vm5589 = vmor %vm5587, %vm5588
        %v5590 = vsel %vm5589, %v5582, %v5586
        %v5591 = vand.u32 2147483647, %v5581
        %vm5592 = vcmp.eq.f32.partialorder %v5591, 8.507059e+37
        %v5593 = vand.u32 %v5581, 2147483648
        %v5594 = vor.u32 1.1754944e-38, %v5593
        %v5595 = vsel %vm5592, %v5594, %v5590
        %v5596 = vmul.f32 %v5571, %v5595
        %v5597 = vmin.f32 %v5596, 1.0
        %v5598 = vmax.f32 %v5597, -1.0
        %v5599 = vmul.f32 %v1649, %v1649
        %v5600 = vmin.f32 16.0, %v5599
        %v5601 = vmul.f32 %v5600, 2.1237322e-06
        %v5602 = vadd.f32 %v5601, 0.00028619796
        %v5603 = vmul.f32 %v5600, %v5602
        %v5604 = vadd.f32 %v5603, 0.0036580483
        %v5605 = vmul.f32 %v5600, %v5604
        %v5606 = vadd.f32 %v5605, 0.05243302
        %v5607 = vmul.f32 %v5600, %v5606
        %v5608 = vadd.f32 %v5607, 0.18741608
        %v5609 = vmul.f32 %v5600, %v5608
        %v5610 = vadd.f32 %v5609, 1.1283791
        %v5611 = vmul.f32 %v1649, %v5610
        %v5612 = vmul.f32 %v5600, 3.8918573e-05
        %v5613 = vadd.f32 %v5612, 0.001143296
        %v5614 = vmul.f32 %v5600, %v5613
        %v5615 = vadd.f32 %v5614, 0.014752088
        %v5616 = vmul.f32 %v5600, %v5615
        %v5617 = vadd.f32 %v5616, 0.112945676
        %v5618 = vmul.f32 %v5600, %v5617
        %v5619 = vadd.f32 %v5618, 0.4994258
        %v5620 = vmul.f32 %v5600, %v5619
        %v5621 = vadd.f32 %v5620, 1.0
        %v5622 = vrcp.pop %v5621
        %v5623 = vmul.f32 %v5621, %v5622
        %v5624 = vsub.f32 1.0, %v5623
        %v5625 = vmul.f32 %v5622, %v5624
        %v5626 = vadd.f32 %v5622, %v5625
        %vm5627 = vweird.f32 %v5621
        %vm5628 = vweird.f32 %v5622
        %vm5629 = vmor %vm5627, %vm5628
        %v5630 = vsel %vm5629, %v5622, %v5626
        %v5631 = vand.u32 2147483647, %v5621
        %vm5632 = vcmp.eq.f32.partialorder %v5631, 8.507059e+37
        %v5633 = vand.u32 %v5621, 2147483648
        %v5634 = vor.u32 1.1754944e-38, %v5633
        %v5635 = vsel %vm5632, %v5634, %v5630
        %v5636 = vmul.f32 %v5611, %v5635
        %v5637 = vmin.f32 %v5636, 1.0
        %v5638 = vmax.f32 %v5637, -1.0
        %v5639 = vmul.f32 %v1650, %v1650
        %v5640 = vmin.f32 16.0, %v5639
        %v5641 = vmul.f32 %v5640, 2.1237322e-06
        %v5642 = vadd.f32 %v5641, 0.00028619796
        %v5643 = vmul.f32 %v5640, %v5642
        %v5644 = vadd.f32 %v5643, 0.0036580483
        %v5645 = vmul.f32 %v5640, %v5644
        %v5646 = vadd.f32 %v5645, 0.05243302
        %v5647 = vmul.f32 %v5640, %v5646
        %v5648 = vadd.f32 %v5647, 0.18741608
        %v5649 = vmul.f32 %v5640, %v5648
        %v5650 = vadd.f32 %v5649, 1.1283791
        %v5651 = vmul.f32 %v1650, %v5650
        %v5652 = vmul.f32 %v5640, 3.8918573e-05
        %v5653 = vadd.f32 %v5652, 0.001143296
        %v5654 = vmul.f32 %v5640, %v5653
        %v5655 = vadd.f32 %v5654, 0.014752088
        %v5656 = vmul.f32 %v5640, %v5655
        %v5657 = vadd.f32 %v5656, 0.112945676
        %v5658 = vmul.f32 %v5640, %v5657
        %v5659 = vadd.f32 %v5658, 0.4994258
        %v5660 = vmul.f32 %v5640, %v5659
        %v5661 = vadd.f32 %v5660, 1.0
        %v5662 = vrcp.pop %v5661
        %v5663 = vmul.f32 %v5661, %v5662
        %v5664 = vsub.f32 1.0, %v5663
        %v5665 = vmul.f32 %v5662, %v5664
        %v5666 = vadd.f32 %v5662, %v5665
        %vm5667 = vweird.f32 %v5661
        %vm5668 = vweird.f32 %v5662
        %vm5669 = vmor %vm5667, %vm5668
        %v5670 = vsel %vm5669, %v5662, %v5666
        %v5671 = vand.u32 2147483647, %v5661
        %vm5672 = vcmp.eq.f32.partialorder %v5671, 8.507059e+37
        %v5673 = vand.u32 %v5661, 2147483648
        %v5674 = vor.u32 1.1754944e-38, %v5673
        %v5675 = vsel %vm5672, %v5674, %v5670
        %v5676 = vmul.f32 %v5651, %v5675
        %v5677 = vmin.f32 %v5676, 1.0
        %v5678 = vmax.f32 %v5677, -1.0
        %v5679 = vmul.f32 %v1651, %v1651
        %v5680 = vmin.f32 16.0, %v5679
        %v5681 = vmul.f32 %v5680, 2.1237322e-06
        %v5682 = vadd.f32 %v5681, 0.00028619796
        %v5683 = vmul.f32 %v5680, %v5682
        %v5684 = vadd.f32 %v5683, 0.0036580483
        %v5685 = vmul.f32 %v5680, %v5684
        %v5686 = vadd.f32 %v5685, 0.05243302
        %v5687 = vmul.f32 %v5680, %v5686
        %v5688 = vadd.f32 %v5687, 0.18741608
        %v5689 = vmul.f32 %v5680, %v5688
        %v5690 = vadd.f32 %v5689, 1.1283791
        %v5691 = vmul.f32 %v1651, %v5690
        %v5692 = vmul.f32 %v5680, 3.8918573e-05
        %v5693 = vadd.f32 %v5692, 0.001143296
        %v5694 = vmul.f32 %v5680, %v5693
        %v5695 = vadd.f32 %v5694, 0.014752088
        %v5696 = vmul.f32 %v5680, %v5695
        %v5697 = vadd.f32 %v5696, 0.112945676
        %v5698 = vmul.f32 %v5680, %v5697
        %v5699 = vadd.f32 %v5698, 0.4994258
        %v5700 = vmul.f32 %v5680, %v5699
        %v5701 = vadd.f32 %v5700, 1.0
        %v5702 = vrcp.pop %v5701
        %v5703 = vmul.f32 %v5701, %v5702
        %v5704 = vsub.f32 1.0, %v5703
        %v5705 = vmul.f32 %v5702, %v5704
        %v5706 = vadd.f32 %v5702, %v5705
        %vm5707 = vweird.f32 %v5701
        %vm5708 = vweird.f32 %v5702
        %vm5709 = vmor %vm5707, %vm5708
        %v5710 = vsel %vm5709, %v5702, %v5706
        %v5711 = vand.u32 2147483647, %v5701
        %vm5712 = vcmp.eq.f32.partialorder %v5711, 8.507059e+37
        %v5713 = vand.u32 %v5701, 2147483648
        %v5714 = vor.u32 1.1754944e-38, %v5713
        %v5715 = vsel %vm5712, %v5714, %v5710
        %v5716 = vmul.f32 %v5691, %v5715
        %v5717 = vmin.f32 %v5716, 1.0
        %v5718 = vmax.f32 %v5717, -1.0
        %v5719 = vmul.f32 %v1652, %v1652
        %v5720 = vmin.f32 16.0, %v5719
        %v5721 = vmul.f32 %v5720, 2.1237322e-06
        %v5722 = vadd.f32 %v5721, 0.00028619796
        %v5723 = vmul.f32 %v5720, %v5722
        %v5724 = vadd.f32 %v5723, 0.0036580483
        %v5725 = vmul.f32 %v5720, %v5724
        %v5726 = vadd.f32 %v5725, 0.05243302
        %v5727 = vmul.f32 %v5720, %v5726
        %v5728 = vadd.f32 %v5727, 0.18741608
        %v5729 = vmul.f32 %v5720, %v5728
        %v5730 = vadd.f32 %v5729, 1.1283791
        %v5731 = vmul.f32 %v1652, %v5730
        %v5732 = vmul.f32 %v5720, 3.8918573e-05
        %v5733 = vadd.f32 %v5732, 0.001143296
        %v5734 = vmul.f32 %v5720, %v5733
        %v5735 = vadd.f32 %v5734, 0.014752088
        %v5736 = vmul.f32 %v5720, %v5735
        %v5737 = vadd.f32 %v5736, 0.112945676
        %v5738 = vmul.f32 %v5720, %v5737
        %v5739 = vadd.f32 %v5738, 0.4994258
        %v5740 = vmul.f32 %v5720, %v5739
        %v5741 = vadd.f32 %v5740, 1.0
        %v5742 = vrcp.pop %v5741
        %v5743 = vmul.f32 %v5741, %v5742
        %v5744 = vsub.f32 1.0, %v5743
        %v5745 = vmul.f32 %v5742, %v5744
        %v5746 = vadd.f32 %v5742, %v5745
        %vm5747 = vweird.f32 %v5741
        %vm5748 = vweird.f32 %v5742
        %vm5749 = vmor %vm5747, %vm5748
        %v5750 = vsel %vm5749, %v5742, %v5746
        %v5751 = vand.u32 2147483647, %v5741
        %vm5752 = vcmp.eq.f32.partialorder %v5751, 8.507059e+37
        %v5753 = vand.u32 %v5741, 2147483648
        %v5754 = vor.u32 1.1754944e-38, %v5753
        %v5755 = vsel %vm5752, %v5754, %v5750
        %v5756 = vmul.f32 %v5731, %v5755
        %v5757 = vmin.f32 %v5756, 1.0
        %v5758 = vmax.f32 %v5757, -1.0
        %v5759 = vmul.f32 %v1653, %v1653
        %v5760 = vmin.f32 16.0, %v5759
        %v5761 = vmul.f32 %v5760, 2.1237322e-06
        %v5762 = vadd.f32 %v5761, 0.00028619796
        %v5763 = vmul.f32 %v5760, %v5762
        %v5764 = vadd.f32 %v5763, 0.0036580483
        %v5765 = vmul.f32 %v5760, %v5764
        %v5766 = vadd.f32 %v5765, 0.05243302
        %v5767 = vmul.f32 %v5760, %v5766
        %v5768 = vadd.f32 %v5767, 0.18741608
        %v5769 = vmul.f32 %v5760, %v5768
        %v5770 = vadd.f32 %v5769, 1.1283791
        %v5771 = vmul.f32 %v1653, %v5770
        %v5772 = vmul.f32 %v5760, 3.8918573e-05
        %v5773 = vadd.f32 %v5772, 0.001143296
        %v5774 = vmul.f32 %v5760, %v5773
        %v5775 = vadd.f32 %v5774, 0.014752088
        %v5776 = vmul.f32 %v5760, %v5775
        %v5777 = vadd.f32 %v5776, 0.112945676
        %v5778 = vmul.f32 %v5760, %v5777
        %v5779 = vadd.f32 %v5778, 0.4994258
        %v5780 = vmul.f32 %v5760, %v5779
        %v5781 = vadd.f32 %v5780, 1.0
        %v5782 = vrcp.pop %v5781
        %v5783 = vmul.f32 %v5781, %v5782
        %v5784 = vsub.f32 1.0, %v5783
        %v5785 = vmul.f32 %v5782, %v5784
        %v5786 = vadd.f32 %v5782, %v5785
        %vm5787 = vweird.f32 %v5781
        %vm5788 = vweird.f32 %v5782
        %vm5789 = vmor %vm5787, %vm5788
        %v5790 = vsel %vm5789, %v5782, %v5786
        %v5791 = vand.u32 2147483647, %v5781
        %vm5792 = vcmp.eq.f32.partialorder %v5791, 8.507059e+37
        %v5793 = vand.u32 %v5781, 2147483648
        %v5794 = vor.u32 1.1754944e-38, %v5793
        %v5795 = vsel %vm5792, %v5794, %v5790
        %v5796 = vmul.f32 %v5771, %v5795
        %v5797 = vmin.f32 %v5796, 1.0
        %v5798 = vmax.f32 %v5797, -1.0
        %v5799 = vmul.f32 %v1654, %v1654
        %v5800 = vmin.f32 16.0, %v5799
        %v5801 = vmul.f32 %v5800, 2.1237322e-06
        %v5802 = vadd.f32 %v5801, 0.00028619796
        %v5803 = vmul.f32 %v5800, %v5802
        %v5804 = vadd.f32 %v5803, 0.0036580483
        %v5805 = vmul.f32 %v5800, %v5804
        %v5806 = vadd.f32 %v5805, 0.05243302
        %v5807 = vmul.f32 %v5800, %v5806
        %v5808 = vadd.f32 %v5807, 0.18741608
        %v5809 = vmul.f32 %v5800, %v5808
        %v5810 = vadd.f32 %v5809, 1.1283791
        %v5811 = vmul.f32 %v1654, %v5810
        %v5812 = vmul.f32 %v5800, 3.8918573e-05
        %v5813 = vadd.f32 %v5812, 0.001143296
        %v5814 = vmul.f32 %v5800, %v5813
        %v5815 = vadd.f32 %v5814, 0.014752088
        %v5816 = vmul.f32 %v5800, %v5815
        %v5817 = vadd.f32 %v5816, 0.112945676
        %v5818 = vmul.f32 %v5800, %v5817
        %v5819 = vadd.f32 %v5818, 0.4994258
        %v5820 = vmul.f32 %v5800, %v5819
        %v5821 = vadd.f32 %v5820, 1.0
        %v5822 = vrcp.pop %v5821
        %v5823 = vmul.f32 %v5821, %v5822
        %v5824 = vsub.f32 1.0, %v5823
        %v5825 = vmul.f32 %v5822, %v5824
        %v5826 = vadd.f32 %v5822, %v5825
        %vm5827 = vweird.f32 %v5821
        %vm5828 = vweird.f32 %v5822
        %vm5829 = vmor %vm5827, %vm5828
        %v5830 = vsel %vm5829, %v5822, %v5826
        %v5831 = vand.u32 2147483647, %v5821
        %vm5832 = vcmp.eq.f32.partialorder %v5831, 8.507059e+37
        %v5833 = vand.u32 %v5821, 2147483648
        %v5834 = vor.u32 1.1754944e-38, %v5833
        %v5835 = vsel %vm5832, %v5834, %v5830
        %v5836 = vmul.f32 %v5811, %v5835
        %v5837 = vmin.f32 %v5836, 1.0
        %v5838 = vmax.f32 %v5837, -1.0
        %v5839 = vmul.f32 %v1655, %v1655
        %v5840 = vmin.f32 16.0, %v5839
        %v5841 = vmul.f32 %v5840, 2.1237322e-06
        %v5842 = vadd.f32 %v5841, 0.00028619796
        %v5843 = vmul.f32 %v5840, %v5842
        %v5844 = vadd.f32 %v5843, 0.0036580483
        %v5845 = vmul.f32 %v5840, %v5844
        %v5846 = vadd.f32 %v5845, 0.05243302
        %v5847 = vmul.f32 %v5840, %v5846
        %v5848 = vadd.f32 %v5847, 0.18741608
        %v5849 = vmul.f32 %v5840, %v5848
        %v5850 = vadd.f32 %v5849, 1.1283791
        %v5851 = vmul.f32 %v1655, %v5850
        %v5852 = vmul.f32 %v5840, 3.8918573e-05
        %v5853 = vadd.f32 %v5852, 0.001143296
        %v5854 = vmul.f32 %v5840, %v5853
        %v5855 = vadd.f32 %v5854, 0.014752088
        %v5856 = vmul.f32 %v5840, %v5855
        %v5857 = vadd.f32 %v5856, 0.112945676
        %v5858 = vmul.f32 %v5840, %v5857
        %v5859 = vadd.f32 %v5858, 0.4994258
        %v5860 = vmul.f32 %v5840, %v5859
        %v5861 = vadd.f32 %v5860, 1.0
        %v5862 = vrcp.pop %v5861
        %v5863 = vmul.f32 %v5861, %v5862
        %v5864 = vsub.f32 1.0, %v5863
        %v5865 = vmul.f32 %v5862, %v5864
        %v5866 = vadd.f32 %v5862, %v5865
        %vm5867 = vweird.f32 %v5861
        %vm5868 = vweird.f32 %v5862
        %vm5869 = vmor %vm5867, %vm5868
        %v5870 = vsel %vm5869, %v5862, %v5866
        %v5871 = vand.u32 2147483647, %v5861
        %vm5872 = vcmp.eq.f32.partialorder %v5871, 8.507059e+37
        %v5873 = vand.u32 %v5861, 2147483648
        %v5874 = vor.u32 1.1754944e-38, %v5873
        %v5875 = vsel %vm5872, %v5874, %v5870
        %v5876 = vmul.f32 %v5851, %v5875
        %v5877 = vmin.f32 %v5876, 1.0
        %v5878 = vmax.f32 %v5877, -1.0
        %v5879 = vmul.f32 %v1656, %v1656
        %v5880 = vmin.f32 16.0, %v5879
        %v5881 = vmul.f32 %v5880, 2.1237322e-06
        %v5882 = vadd.f32 %v5881, 0.00028619796
        %v5883 = vmul.f32 %v5880, %v5882
        %v5884 = vadd.f32 %v5883, 0.0036580483
        %v5885 = vmul.f32 %v5880, %v5884
        %v5886 = vadd.f32 %v5885, 0.05243302
        %v5887 = vmul.f32 %v5880, %v5886
        %v5888 = vadd.f32 %v5887, 0.18741608
        %v5889 = vmul.f32 %v5880, %v5888
        %v5890 = vadd.f32 %v5889, 1.1283791
        %v5891 = vmul.f32 %v1656, %v5890
        %v5892 = vmul.f32 %v5880, 3.8918573e-05
        %v5893 = vadd.f32 %v5892, 0.001143296
        %v5894 = vmul.f32 %v5880, %v5893
        %v5895 = vadd.f32 %v5894, 0.014752088
        %v5896 = vmul.f32 %v5880, %v5895
        %v5897 = vadd.f32 %v5896, 0.112945676
        %v5898 = vmul.f32 %v5880, %v5897
        %v5899 = vadd.f32 %v5898, 0.4994258
        %v5900 = vmul.f32 %v5880, %v5899
        %v5901 = vadd.f32 %v5900, 1.0
        %v5902 = vrcp.pop %v5901
        %v5903 = vmul.f32 %v5901, %v5902
        %v5904 = vsub.f32 1.0, %v5903
        %v5905 = vmul.f32 %v5902, %v5904
        %v5906 = vadd.f32 %v5902, %v5905
        %vm5907 = vweird.f32 %v5901
        %vm5908 = vweird.f32 %v5902
        %vm5909 = vmor %vm5907, %vm5908
        %v5910 = vsel %vm5909, %v5902, %v5906
        %v5911 = vand.u32 2147483647, %v5901
        %vm5912 = vcmp.eq.f32.partialorder %v5911, 8.507059e+37
        %v5913 = vand.u32 %v5901, 2147483648
        %v5914 = vor.u32 1.1754944e-38, %v5913
        %v5915 = vsel %vm5912, %v5914, %v5910
        %v5916 = vmul.f32 %v5891, %v5915
        %v5917 = vmin.f32 %v5916, 1.0
        %v5918 = vmax.f32 %v5917, -1.0
        %v5919 = vmul.f32 %v1657, %v1657
        %v5920 = vmin.f32 16.0, %v5919
        %v5921 = vmul.f32 %v5920, 2.1237322e-06
        %v5922 = vadd.f32 %v5921, 0.00028619796
        %v5923 = vmul.f32 %v5920, %v5922
        %v5924 = vadd.f32 %v5923, 0.0036580483
        %v5925 = vmul.f32 %v5920, %v5924
        %v5926 = vadd.f32 %v5925, 0.05243302
        %v5927 = vmul.f32 %v5920, %v5926
        %v5928 = vadd.f32 %v5927, 0.18741608
        %v5929 = vmul.f32 %v5920, %v5928
        %v5930 = vadd.f32 %v5929, 1.1283791
        %v5931 = vmul.f32 %v1657, %v5930
        %v5932 = vmul.f32 %v5920, 3.8918573e-05
        %v5933 = vadd.f32 %v5932, 0.001143296
        %v5934 = vmul.f32 %v5920, %v5933
        %v5935 = vadd.f32 %v5934, 0.014752088
        %v5936 = vmul.f32 %v5920, %v5935
        %v5937 = vadd.f32 %v5936, 0.112945676
        %v5938 = vmul.f32 %v5920, %v5937
        %v5939 = vadd.f32 %v5938, 0.4994258
        %v5940 = vmul.f32 %v5920, %v5939
        %v5941 = vadd.f32 %v5940, 1.0
        %v5942 = vrcp.pop %v5941
        %v5943 = vmul.f32 %v5941, %v5942
        %v5944 = vsub.f32 1.0, %v5943
        %v5945 = vmul.f32 %v5942, %v5944
        %v5946 = vadd.f32 %v5942, %v5945
        %vm5947 = vweird.f32 %v5941
        %vm5948 = vweird.f32 %v5942
        %vm5949 = vmor %vm5947, %vm5948
        %v5950 = vsel %vm5949, %v5942, %v5946
        %v5951 = vand.u32 2147483647, %v5941
        %vm5952 = vcmp.eq.f32.partialorder %v5951, 8.507059e+37
        %v5953 = vand.u32 %v5941, 2147483648
        %v5954 = vor.u32 1.1754944e-38, %v5953
        %v5955 = vsel %vm5952, %v5954, %v5950
        %v5956 = vmul.f32 %v5931, %v5955
        %v5957 = vmin.f32 %v5956, 1.0
        %v5958 = vmax.f32 %v5957, -1.0
        %v5959 = vmul.f32 %v1658, %v1658
        %v5960 = vmin.f32 16.0, %v5959
        %v5961 = vmul.f32 %v5960, 2.1237322e-06
        %v5962 = vadd.f32 %v5961, 0.00028619796
        %v5963 = vmul.f32 %v5960, %v5962
        %v5964 = vadd.f32 %v5963, 0.0036580483
        %v5965 = vmul.f32 %v5960, %v5964
        %v5966 = vadd.f32 %v5965, 0.05243302
        %v5967 = vmul.f32 %v5960, %v5966
        %v5968 = vadd.f32 %v5967, 0.18741608
        %v5969 = vmul.f32 %v5960, %v5968
        %v5970 = vadd.f32 %v5969, 1.1283791
        %v5971 = vmul.f32 %v1658, %v5970
        %v5972 = vmul.f32 %v5960, 3.8918573e-05
        %v5973 = vadd.f32 %v5972, 0.001143296
        %v5974 = vmul.f32 %v5960, %v5973
        %v5975 = vadd.f32 %v5974, 0.014752088
        %v5976 = vmul.f32 %v5960, %v5975
        %v5977 = vadd.f32 %v5976, 0.112945676
        %v5978 = vmul.f32 %v5960, %v5977
        %v5979 = vadd.f32 %v5978, 0.4994258
        %v5980 = vmul.f32 %v5960, %v5979
        %v5981 = vadd.f32 %v5980, 1.0
        %v5982 = vrcp.pop %v5981
        %v5983 = vmul.f32 %v5981, %v5982
        %v5984 = vsub.f32 1.0, %v5983
        %v5985 = vmul.f32 %v5982, %v5984
        %v5986 = vadd.f32 %v5982, %v5985
        %vm5987 = vweird.f32 %v5981
        %vm5988 = vweird.f32 %v5982
        %vm5989 = vmor %vm5987, %vm5988
        %v5990 = vsel %vm5989, %v5982, %v5986
        %v5991 = vand.u32 2147483647, %v5981
        %vm5992 = vcmp.eq.f32.partialorder %v5991, 8.507059e+37
        %v5993 = vand.u32 %v5981, 2147483648
        %v5994 = vor.u32 1.1754944e-38, %v5993
        %v5995 = vsel %vm5992, %v5994, %v5990
        %v5996 = vmul.f32 %v5971, %v5995
        %v5997 = vmin.f32 %v5996, 1.0
        %v5998 = vmax.f32 %v5997, -1.0
        %v5999 = vmul.f32 %v1659, %v1659
        %v6000 = vmin.f32 16.0, %v5999
        %v6001 = vmul.f32 %v6000, 2.1237322e-06
        %v6002 = vadd.f32 %v6001, 0.00028619796
        %v6003 = vmul.f32 %v6000, %v6002
        %v6004 = vadd.f32 %v6003, 0.0036580483
        %v6005 = vmul.f32 %v6000, %v6004
        %v6006 = vadd.f32 %v6005, 0.05243302
        %v6007 = vmul.f32 %v6000, %v6006
        %v6008 = vadd.f32 %v6007, 0.18741608
        %v6009 = vmul.f32 %v6000, %v6008
        %v6010 = vadd.f32 %v6009, 1.1283791
        %v6011 = vmul.f32 %v1659, %v6010
        %v6012 = vmul.f32 %v6000, 3.8918573e-05
        %v6013 = vadd.f32 %v6012, 0.001143296
        %v6014 = vmul.f32 %v6000, %v6013
        %v6015 = vadd.f32 %v6014, 0.014752088
        %v6016 = vmul.f32 %v6000, %v6015
        %v6017 = vadd.f32 %v6016, 0.112945676
        %v6018 = vmul.f32 %v6000, %v6017
        %v6019 = vadd.f32 %v6018, 0.4994258
        %v6020 = vmul.f32 %v6000, %v6019
        %v6021 = vadd.f32 %v6020, 1.0
        %v6022 = vrcp.pop %v6021
        %v6023 = vmul.f32 %v6021, %v6022
        %v6024 = vsub.f32 1.0, %v6023
        %v6025 = vmul.f32 %v6022, %v6024
        %v6026 = vadd.f32 %v6022, %v6025
        %vm6027 = vweird.f32 %v6021
        %vm6028 = vweird.f32 %v6022
        %vm6029 = vmor %vm6027, %vm6028
        %v6030 = vsel %vm6029, %v6022, %v6026
        %v6031 = vand.u32 2147483647, %v6021
        %vm6032 = vcmp.eq.f32.partialorder %v6031, 8.507059e+37
        %v6033 = vand.u32 %v6021, 2147483648
        %v6034 = vor.u32 1.1754944e-38, %v6033
        %v6035 = vsel %vm6032, %v6034, %v6030
        %v6036 = vmul.f32 %v6011, %v6035
        %v6037 = vmin.f32 %v6036, 1.0
        %v6038 = vmax.f32 %v6037, -1.0
        %v6039 = vmul.f32 %v1660, %v1660
        %v6040 = vmin.f32 16.0, %v6039
        %v6041 = vmul.f32 %v6040, 2.1237322e-06
        %v6042 = vadd.f32 %v6041, 0.00028619796
        %v6043 = vmul.f32 %v6040, %v6042
        %v6044 = vadd.f32 %v6043, 0.0036580483
        %v6045 = vmul.f32 %v6040, %v6044
        %v6046 = vadd.f32 %v6045, 0.05243302
        %v6047 = vmul.f32 %v6040, %v6046
        %v6048 = vadd.f32 %v6047, 0.18741608
        %v6049 = vmul.f32 %v6040, %v6048
        %v6050 = vadd.f32 %v6049, 1.1283791
        %v6051 = vmul.f32 %v1660, %v6050
        %v6052 = vmul.f32 %v6040, 3.8918573e-05
        %v6053 = vadd.f32 %v6052, 0.001143296
        %v6054 = vmul.f32 %v6040, %v6053
        %v6055 = vadd.f32 %v6054, 0.014752088
        %v6056 = vmul.f32 %v6040, %v6055
        %v6057 = vadd.f32 %v6056, 0.112945676
        %v6058 = vmul.f32 %v6040, %v6057
        %v6059 = vadd.f32 %v6058, 0.4994258
        %v6060 = vmul.f32 %v6040, %v6059
        %v6061 = vadd.f32 %v6060, 1.0
        %v6062 = vrcp.pop %v6061
        %v6063 = vmul.f32 %v6061, %v6062
        %v6064 = vsub.f32 1.0, %v6063
        %v6065 = vmul.f32 %v6062, %v6064
        %v6066 = vadd.f32 %v6062, %v6065
        %vm6067 = vweird.f32 %v6061
        %vm6068 = vweird.f32 %v6062
        %vm6069 = vmor %vm6067, %vm6068
        %v6070 = vsel %vm6069, %v6062, %v6066
        %v6071 = vand.u32 2147483647, %v6061
        %vm6072 = vcmp.eq.f32.partialorder %v6071, 8.507059e+37
        %v6073 = vand.u32 %v6061, 2147483648
        %v6074 = vor.u32 1.1754944e-38, %v6073
        %v6075 = vsel %vm6072, %v6074, %v6070
        %v6076 = vmul.f32 %v6051, %v6075
        %v6077 = vmin.f32 %v6076, 1.0
        %v6078 = vmax.f32 %v6077, -1.0
        %v6079 = vmul.f32 %v1661, %v1661
        %v6080 = vmin.f32 16.0, %v6079
        %v6081 = vmul.f32 %v6080, 2.1237322e-06
        %v6082 = vadd.f32 %v6081, 0.00028619796
        %v6083 = vmul.f32 %v6080, %v6082
        %v6084 = vadd.f32 %v6083, 0.0036580483
        %v6085 = vmul.f32 %v6080, %v6084
        %v6086 = vadd.f32 %v6085, 0.05243302
        %v6087 = vmul.f32 %v6080, %v6086
        %v6088 = vadd.f32 %v6087, 0.18741608
        %v6089 = vmul.f32 %v6080, %v6088
        %v6090 = vadd.f32 %v6089, 1.1283791
        %v6091 = vmul.f32 %v1661, %v6090
        %v6092 = vmul.f32 %v6080, 3.8918573e-05
        %v6093 = vadd.f32 %v6092, 0.001143296
        %v6094 = vmul.f32 %v6080, %v6093
        %v6095 = vadd.f32 %v6094, 0.014752088
        %v6096 = vmul.f32 %v6080, %v6095
        %v6097 = vadd.f32 %v6096, 0.112945676
        %v6098 = vmul.f32 %v6080, %v6097
        %v6099 = vadd.f32 %v6098, 0.4994258
        %v6100 = vmul.f32 %v6080, %v6099
        %v6101 = vadd.f32 %v6100, 1.0
        %v6102 = vrcp.pop %v6101
        %v6103 = vmul.f32 %v6101, %v6102
        %v6104 = vsub.f32 1.0, %v6103
        %v6105 = vmul.f32 %v6102, %v6104
        %v6106 = vadd.f32 %v6102, %v6105
        %vm6107 = vweird.f32 %v6101
        %vm6108 = vweird.f32 %v6102
        %vm6109 = vmor %vm6107, %vm6108
        %v6110 = vsel %vm6109, %v6102, %v6106
        %v6111 = vand.u32 2147483647, %v6101
        %vm6112 = vcmp.eq.f32.partialorder %v6111, 8.507059e+37
        %v6113 = vand.u32 %v6101, 2147483648
        %v6114 = vor.u32 1.1754944e-38, %v6113
        %v6115 = vsel %vm6112, %v6114, %v6110
        %v6116 = vmul.f32 %v6091, %v6115
        %v6117 = vmin.f32 %v6116, 1.0
        %v6118 = vmax.f32 %v6117, -1.0
        %v6119 = vmul.f32 %v1662, %v1662
        %v6120 = vmin.f32 16.0, %v6119
        %v6121 = vmul.f32 %v6120, 2.1237322e-06
        %v6122 = vadd.f32 %v6121, 0.00028619796
        %v6123 = vmul.f32 %v6120, %v6122
        %v6124 = vadd.f32 %v6123, 0.0036580483
        %v6125 = vmul.f32 %v6120, %v6124
        %v6126 = vadd.f32 %v6125, 0.05243302
        %v6127 = vmul.f32 %v6120, %v6126
        %v6128 = vadd.f32 %v6127, 0.18741608
        %v6129 = vmul.f32 %v6120, %v6128
        %v6130 = vadd.f32 %v6129, 1.1283791
        %v6131 = vmul.f32 %v1662, %v6130
        %v6132 = vmul.f32 %v6120, 3.8918573e-05
        %v6133 = vadd.f32 %v6132, 0.001143296
        %v6134 = vmul.f32 %v6120, %v6133
        %v6135 = vadd.f32 %v6134, 0.014752088
        %v6136 = vmul.f32 %v6120, %v6135
        %v6137 = vadd.f32 %v6136, 0.112945676
        %v6138 = vmul.f32 %v6120, %v6137
        %v6139 = vadd.f32 %v6138, 0.4994258
        %v6140 = vmul.f32 %v6120, %v6139
        %v6141 = vadd.f32 %v6140, 1.0
        %v6142 = vrcp.pop %v6141
        %v6143 = vmul.f32 %v6141, %v6142
        %v6144 = vsub.f32 1.0, %v6143
        %v6145 = vmul.f32 %v6142, %v6144
        %v6146 = vadd.f32 %v6142, %v6145
        %vm6147 = vweird.f32 %v6141
        %vm6148 = vweird.f32 %v6142
        %vm6149 = vmor %vm6147, %vm6148
        %v6150 = vsel %vm6149, %v6142, %v6146
        %v6151 = vand.u32 2147483647, %v6141
        %vm6152 = vcmp.eq.f32.partialorder %v6151, 8.507059e+37
        %v6153 = vand.u32 %v6141, 2147483648
        %v6154 = vor.u32 1.1754944e-38, %v6153
        %v6155 = vsel %vm6152, %v6154, %v6150
        %v6156 = vmul.f32 %v6131, %v6155
        %v6157 = vmin.f32 %v6156, 1.0
        %v6158 = vmax.f32 %v6157, -1.0
        %v6159 = vmul.f32 %v1663, %v1663
        %v6160 = vmin.f32 16.0, %v6159
        %v6161 = vmul.f32 %v6160, 2.1237322e-06
        %v6162 = vadd.f32 %v6161, 0.00028619796
        %v6163 = vmul.f32 %v6160, %v6162
        %v6164 = vadd.f32 %v6163, 0.0036580483
        %v6165 = vmul.f32 %v6160, %v6164
        %v6166 = vadd.f32 %v6165, 0.05243302
        %v6167 = vmul.f32 %v6160, %v6166
        %v6168 = vadd.f32 %v6167, 0.18741608
        %v6169 = vmul.f32 %v6160, %v6168
        %v6170 = vadd.f32 %v6169, 1.1283791
        %v6171 = vmul.f32 %v1663, %v6170
        %v6172 = vmul.f32 %v6160, 3.8918573e-05
        %v6173 = vadd.f32 %v6172, 0.001143296
        %v6174 = vmul.f32 %v6160, %v6173
        %v6175 = vadd.f32 %v6174, 0.014752088
        %v6176 = vmul.f32 %v6160, %v6175
        %v6177 = vadd.f32 %v6176, 0.112945676
        %v6178 = vmul.f32 %v6160, %v6177
        %v6179 = vadd.f32 %v6178, 0.4994258
        %v6180 = vmul.f32 %v6160, %v6179
        %v6181 = vadd.f32 %v6180, 1.0
        %v6182 = vrcp.pop %v6181
        %v6183 = vmul.f32 %v6181, %v6182
        %v6184 = vsub.f32 1.0, %v6183
        %v6185 = vmul.f32 %v6182, %v6184
        %v6186 = vadd.f32 %v6182, %v6185
        %vm6187 = vweird.f32 %v6181
        %vm6188 = vweird.f32 %v6182
        %vm6189 = vmor %vm6187, %vm6188
        %v6190 = vsel %vm6189, %v6182, %v6186
        %v6191 = vand.u32 2147483647, %v6181
        %vm6192 = vcmp.eq.f32.partialorder %v6191, 8.507059e+37
        %v6193 = vand.u32 %v6181, 2147483648
        %v6194 = vor.u32 1.1754944e-38, %v6193
        %v6195 = vsel %vm6192, %v6194, %v6190
        %v6196 = vmul.f32 %v6171, %v6195
        %v6197 = vmin.f32 %v6196, 1.0
        %v6198 = vmax.f32 %v6197, -1.0
        %v6199 = vmul.f32 %v1664, %v1664
        %v6200 = vmin.f32 16.0, %v6199
        %v6201 = vmul.f32 %v6200, 2.1237322e-06
        %v6202 = vadd.f32 %v6201, 0.00028619796
        %v6203 = vmul.f32 %v6200, %v6202
        %v6204 = vadd.f32 %v6203, 0.0036580483
        %v6205 = vmul.f32 %v6200, %v6204
        %v6206 = vadd.f32 %v6205, 0.05243302
        %v6207 = vmul.f32 %v6200, %v6206
        %v6208 = vadd.f32 %v6207, 0.18741608
        %v6209 = vmul.f32 %v6200, %v6208
        %v6210 = vadd.f32 %v6209, 1.1283791
        %v6211 = vmul.f32 %v1664, %v6210
        %v6212 = vmul.f32 %v6200, 3.8918573e-05
        %v6213 = vadd.f32 %v6212, 0.001143296
        %v6214 = vmul.f32 %v6200, %v6213
        %v6215 = vadd.f32 %v6214, 0.014752088
        %v6216 = vmul.f32 %v6200, %v6215
        %v6217 = vadd.f32 %v6216, 0.112945676
        %v6218 = vmul.f32 %v6200, %v6217
        %v6219 = vadd.f32 %v6218, 0.4994258
        %v6220 = vmul.f32 %v6200, %v6219
        %v6221 = vadd.f32 %v6220, 1.0
        %v6222 = vrcp.pop %v6221
        %v6223 = vmul.f32 %v6221, %v6222
        %v6224 = vsub.f32 1.0, %v6223
        %v6225 = vmul.f32 %v6222, %v6224
        %v6226 = vadd.f32 %v6222, %v6225
        %vm6227 = vweird.f32 %v6221
        %vm6228 = vweird.f32 %v6222
        %vm6229 = vmor %vm6227, %vm6228
        %v6230 = vsel %vm6229, %v6222, %v6226
        %v6231 = vand.u32 2147483647, %v6221
        %vm6232 = vcmp.eq.f32.partialorder %v6231, 8.507059e+37
        %v6233 = vand.u32 %v6221, 2147483648
        %v6234 = vor.u32 1.1754944e-38, %v6233
        %v6235 = vsel %vm6232, %v6234, %v6230
        %v6236 = vmul.f32 %v6211, %v6235
        %v6237 = vmin.f32 %v6236, 1.0
        %v6238 = vmax.f32 %v6237, -1.0
        %v6239 = vmul.f32 %v1665, %v1665
        %v6240 = vmin.f32 16.0, %v6239
        %v6241 = vmul.f32 %v6240, 2.1237322e-06
        %v6242 = vadd.f32 %v6241, 0.00028619796
        %v6243 = vmul.f32 %v6240, %v6242
        %v6244 = vadd.f32 %v6243, 0.0036580483
        %v6245 = vmul.f32 %v6240, %v6244
        %v6246 = vadd.f32 %v6245, 0.05243302
        %v6247 = vmul.f32 %v6240, %v6246
        %v6248 = vadd.f32 %v6247, 0.18741608
        %v6249 = vmul.f32 %v6240, %v6248
        %v6250 = vadd.f32 %v6249, 1.1283791
        %v6251 = vmul.f32 %v1665, %v6250
        %v6252 = vmul.f32 %v6240, 3.8918573e-05
        %v6253 = vadd.f32 %v6252, 0.001143296
        %v6254 = vmul.f32 %v6240, %v6253
        %v6255 = vadd.f32 %v6254, 0.014752088
        %v6256 = vmul.f32 %v6240, %v6255
        %v6257 = vadd.f32 %v6256, 0.112945676
        %v6258 = vmul.f32 %v6240, %v6257
        %v6259 = vadd.f32 %v6258, 0.4994258
        %v6260 = vmul.f32 %v6240, %v6259
        %v6261 = vadd.f32 %v6260, 1.0
        %v6262 = vrcp.pop %v6261
        %v6263 = vmul.f32 %v6261, %v6262
        %v6264 = vsub.f32 1.0, %v6263
        %v6265 = vmul.f32 %v6262, %v6264
        %v6266 = vadd.f32 %v6262, %v6265
        %vm6267 = vweird.f32 %v6261
        %vm6268 = vweird.f32 %v6262
        %vm6269 = vmor %vm6267, %vm6268
        %v6270 = vsel %vm6269, %v6262, %v6266
        %v6271 = vand.u32 2147483647, %v6261
        %vm6272 = vcmp.eq.f32.partialorder %v6271, 8.507059e+37
        %v6273 = vand.u32 %v6261, 2147483648
        %v6274 = vor.u32 1.1754944e-38, %v6273
        %v6275 = vsel %vm6272, %v6274, %v6270
        %v6276 = vmul.f32 %v6251, %v6275
        %v6277 = vmin.f32 %v6276, 1.0
        %v6278 = vmax.f32 %v6277, -1.0
        %v6279 = vmul.f32 %v1666, %v1666
        %v6280 = vmin.f32 16.0, %v6279
        %v6281 = vmul.f32 %v6280, 2.1237322e-06
        %v6282 = vadd.f32 %v6281, 0.00028619796
        %v6283 = vmul.f32 %v6280, %v6282
        %v6284 = vadd.f32 %v6283, 0.0036580483
        %v6285 = vmul.f32 %v6280, %v6284
        %v6286 = vadd.f32 %v6285, 0.05243302
        %v6287 = vmul.f32 %v6280, %v6286
        %v6288 = vadd.f32 %v6287, 0.18741608
        %v6289 = vmul.f32 %v6280, %v6288
        %v6290 = vadd.f32 %v6289, 1.1283791
        %v6291 = vmul.f32 %v1666, %v6290
        %v6292 = vmul.f32 %v6280, 3.8918573e-05
        %v6293 = vadd.f32 %v6292, 0.001143296
        %v6294 = vmul.f32 %v6280, %v6293
        %v6295 = vadd.f32 %v6294, 0.014752088
        %v6296 = vmul.f32 %v6280, %v6295
        %v6297 = vadd.f32 %v6296, 0.112945676
        %v6298 = vmul.f32 %v6280, %v6297
        %v6299 = vadd.f32 %v6298, 0.4994258
        %v6300 = vmul.f32 %v6280, %v6299
        %v6301 = vadd.f32 %v6300, 1.0
        %v6302 = vrcp.pop %v6301
        %v6303 = vmul.f32 %v6301, %v6302
        %v6304 = vsub.f32 1.0, %v6303
        %v6305 = vmul.f32 %v6302, %v6304
        %v6306 = vadd.f32 %v6302, %v6305
        %vm6307 = vweird.f32 %v6301
        %vm6308 = vweird.f32 %v6302
        %vm6309 = vmor %vm6307, %vm6308
        %v6310 = vsel %vm6309, %v6302, %v6306
        %v6311 = vand.u32 2147483647, %v6301
        %vm6312 = vcmp.eq.f32.partialorder %v6311, 8.507059e+37
        %v6313 = vand.u32 %v6301, 2147483648
        %v6314 = vor.u32 1.1754944e-38, %v6313
        %v6315 = vsel %vm6312, %v6314, %v6310
        %v6316 = vmul.f32 %v6291, %v6315
        %v6317 = vmin.f32 %v6316, 1.0
        %v6318 = vmax.f32 %v6317, -1.0
        %v6319 = vmul.f32 %v1667, %v1667
        %v6320 = vmin.f32 16.0, %v6319
        %v6321 = vmul.f32 %v6320, 2.1237322e-06
        %v6322 = vadd.f32 %v6321, 0.00028619796
        %v6323 = vmul.f32 %v6320, %v6322
        %v6324 = vadd.f32 %v6323, 0.0036580483
        %v6325 = vmul.f32 %v6320, %v6324
        %v6326 = vadd.f32 %v6325, 0.05243302
        %v6327 = vmul.f32 %v6320, %v6326
        %v6328 = vadd.f32 %v6327, 0.18741608
        %v6329 = vmul.f32 %v6320, %v6328
        %v6330 = vadd.f32 %v6329, 1.1283791
        %v6331 = vmul.f32 %v1667, %v6330
        %v6332 = vmul.f32 %v6320, 3.8918573e-05
        %v6333 = vadd.f32 %v6332, 0.001143296
        %v6334 = vmul.f32 %v6320, %v6333
        %v6335 = vadd.f32 %v6334, 0.014752088
        %v6336 = vmul.f32 %v6320, %v6335
        %v6337 = vadd.f32 %v6336, 0.112945676
        %v6338 = vmul.f32 %v6320, %v6337
        %v6339 = vadd.f32 %v6338, 0.4994258
        %v6340 = vmul.f32 %v6320, %v6339
        %v6341 = vadd.f32 %v6340, 1.0
        %v6342 = vrcp.pop %v6341
        %v6343 = vmul.f32 %v6341, %v6342
        %v6344 = vsub.f32 1.0, %v6343
        %v6345 = vmul.f32 %v6342, %v6344
        %v6346 = vadd.f32 %v6342, %v6345
        %vm6347 = vweird.f32 %v6341
        %vm6348 = vweird.f32 %v6342
        %vm6349 = vmor %vm6347, %vm6348
        %v6350 = vsel %vm6349, %v6342, %v6346
        %v6351 = vand.u32 2147483647, %v6341
        %vm6352 = vcmp.eq.f32.partialorder %v6351, 8.507059e+37
        %v6353 = vand.u32 %v6341, 2147483648
        %v6354 = vor.u32 1.1754944e-38, %v6353
        %v6355 = vsel %vm6352, %v6354, %v6350
        %v6356 = vmul.f32 %v6331, %v6355
        %v6357 = vmin.f32 %v6356, 1.0
        %v6358 = vmax.f32 %v6357, -1.0
        %v6359 = vmul.f32 %v1668, %v1668
        %v6360 = vmin.f32 16.0, %v6359
        %v6361 = vmul.f32 %v6360, 2.1237322e-06
        %v6362 = vadd.f32 %v6361, 0.00028619796
        %v6363 = vmul.f32 %v6360, %v6362
        %v6364 = vadd.f32 %v6363, 0.0036580483
        %v6365 = vmul.f32 %v6360, %v6364
        %v6366 = vadd.f32 %v6365, 0.05243302
        %v6367 = vmul.f32 %v6360, %v6366
        %v6368 = vadd.f32 %v6367, 0.18741608
        %v6369 = vmul.f32 %v6360, %v6368
        %v6370 = vadd.f32 %v6369, 1.1283791
        %v6371 = vmul.f32 %v1668, %v6370
        %v6372 = vmul.f32 %v6360, 3.8918573e-05
        %v6373 = vadd.f32 %v6372, 0.001143296
        %v6374 = vmul.f32 %v6360, %v6373
        %v6375 = vadd.f32 %v6374, 0.014752088
        %v6376 = vmul.f32 %v6360, %v6375
        %v6377 = vadd.f32 %v6376, 0.112945676
        %v6378 = vmul.f32 %v6360, %v6377
        %v6379 = vadd.f32 %v6378, 0.4994258
        %v6380 = vmul.f32 %v6360, %v6379
        %v6381 = vadd.f32 %v6380, 1.0
        %v6382 = vrcp.pop %v6381
        %v6383 = vmul.f32 %v6381, %v6382
        %v6384 = vsub.f32 1.0, %v6383
        %v6385 = vmul.f32 %v6382, %v6384
        %v6386 = vadd.f32 %v6382, %v6385
        %vm6387 = vweird.f32 %v6381
        %vm6388 = vweird.f32 %v6382
        %vm6389 = vmor %vm6387, %vm6388
        %v6390 = vsel %vm6389, %v6382, %v6386
        %v6391 = vand.u32 2147483647, %v6381
        %vm6392 = vcmp.eq.f32.partialorder %v6391, 8.507059e+37
        %v6393 = vand.u32 %v6381, 2147483648
        %v6394 = vor.u32 1.1754944e-38, %v6393
        %v6395 = vsel %vm6392, %v6394, %v6390
        %v6396 = vmul.f32 %v6371, %v6395
        %v6397 = vmin.f32 %v6396, 1.0
        %v6398 = vmax.f32 %v6397, -1.0
        %v6399 = vmul.f32 %v1669, %v1669
        %v6400 = vmin.f32 16.0, %v6399
        %v6401 = vmul.f32 %v6400, 2.1237322e-06
        %v6402 = vadd.f32 %v6401, 0.00028619796
        %v6403 = vmul.f32 %v6400, %v6402
        %v6404 = vadd.f32 %v6403, 0.0036580483
        %v6405 = vmul.f32 %v6400, %v6404
        %v6406 = vadd.f32 %v6405, 0.05243302
        %v6407 = vmul.f32 %v6400, %v6406
        %v6408 = vadd.f32 %v6407, 0.18741608
        %v6409 = vmul.f32 %v6400, %v6408
        %v6410 = vadd.f32 %v6409, 1.1283791
        %v6411 = vmul.f32 %v1669, %v6410
        %v6412 = vmul.f32 %v6400, 3.8918573e-05
        %v6413 = vadd.f32 %v6412, 0.001143296
        %v6414 = vmul.f32 %v6400, %v6413
        %v6415 = vadd.f32 %v6414, 0.014752088
        %v6416 = vmul.f32 %v6400, %v6415
        %v6417 = vadd.f32 %v6416, 0.112945676
        %v6418 = vmul.f32 %v6400, %v6417
        %v6419 = vadd.f32 %v6418, 0.4994258
        %v6420 = vmul.f32 %v6400, %v6419
        %v6421 = vadd.f32 %v6420, 1.0
        %v6422 = vrcp.pop %v6421
        %v6423 = vmul.f32 %v6421, %v6422
        %v6424 = vsub.f32 1.0, %v6423
        %v6425 = vmul.f32 %v6422, %v6424
        %v6426 = vadd.f32 %v6422, %v6425
        %vm6427 = vweird.f32 %v6421
        %vm6428 = vweird.f32 %v6422
        %vm6429 = vmor %vm6427, %vm6428
        %v6430 = vsel %vm6429, %v6422, %v6426
        %v6431 = vand.u32 2147483647, %v6421
        %vm6432 = vcmp.eq.f32.partialorder %v6431, 8.507059e+37
        %v6433 = vand.u32 %v6421, 2147483648
        %v6434 = vor.u32 1.1754944e-38, %v6433
        %v6435 = vsel %vm6432, %v6434, %v6430
        %v6436 = vmul.f32 %v6411, %v6435
        %v6437 = vmin.f32 %v6436, 1.0
        %v6438 = vmax.f32 %v6437, -1.0
        %v6439 = vmul.f32 %v1670, %v1670
        %v6440 = vmin.f32 16.0, %v6439
        %v6441 = vmul.f32 %v6440, 2.1237322e-06
        %v6442 = vadd.f32 %v6441, 0.00028619796
        %v6443 = vmul.f32 %v6440, %v6442
        %v6444 = vadd.f32 %v6443, 0.0036580483
        %v6445 = vmul.f32 %v6440, %v6444
        %v6446 = vadd.f32 %v6445, 0.05243302
        %v6447 = vmul.f32 %v6440, %v6446
        %v6448 = vadd.f32 %v6447, 0.18741608
        %v6449 = vmul.f32 %v6440, %v6448
        %v6450 = vadd.f32 %v6449, 1.1283791
        %v6451 = vmul.f32 %v1670, %v6450
        %v6452 = vmul.f32 %v6440, 3.8918573e-05
        %v6453 = vadd.f32 %v6452, 0.001143296
        %v6454 = vmul.f32 %v6440, %v6453
        %v6455 = vadd.f32 %v6454, 0.014752088
        %v6456 = vmul.f32 %v6440, %v6455
        %v6457 = vadd.f32 %v6456, 0.112945676
        %v6458 = vmul.f32 %v6440, %v6457
        %v6459 = vadd.f32 %v6458, 0.4994258
        %v6460 = vmul.f32 %v6440, %v6459
        %v6461 = vadd.f32 %v6460, 1.0
        %v6462 = vrcp.pop %v6461
        %v6463 = vmul.f32 %v6461, %v6462
        %v6464 = vsub.f32 1.0, %v6463
        %v6465 = vmul.f32 %v6462, %v6464
        %v6466 = vadd.f32 %v6462, %v6465
        %vm6467 = vweird.f32 %v6461
        %vm6468 = vweird.f32 %v6462
        %vm6469 = vmor %vm6467, %vm6468
        %v6470 = vsel %vm6469, %v6462, %v6466
        %v6471 = vand.u32 2147483647, %v6461
        %vm6472 = vcmp.eq.f32.partialorder %v6471, 8.507059e+37
        %v6473 = vand.u32 %v6461, 2147483648
        %v6474 = vor.u32 1.1754944e-38, %v6473
        %v6475 = vsel %vm6472, %v6474, %v6470
        %v6476 = vmul.f32 %v6451, %v6475
        %v6477 = vmin.f32 %v6476, 1.0
        %v6478 = vmax.f32 %v6477, -1.0
        %v6479 = vmul.f32 %v1671, %v1671
        %v6480 = vmin.f32 16.0, %v6479
        %v6481 = vmul.f32 %v6480, 2.1237322e-06
        %v6482 = vadd.f32 %v6481, 0.00028619796
        %v6483 = vmul.f32 %v6480, %v6482
        %v6484 = vadd.f32 %v6483, 0.0036580483
        %v6485 = vmul.f32 %v6480, %v6484
        %v6486 = vadd.f32 %v6485, 0.05243302
        %v6487 = vmul.f32 %v6480, %v6486
        %v6488 = vadd.f32 %v6487, 0.18741608
        %v6489 = vmul.f32 %v6480, %v6488
        %v6490 = vadd.f32 %v6489, 1.1283791
        %v6491 = vmul.f32 %v1671, %v6490
        %v6492 = vmul.f32 %v6480, 3.8918573e-05
        %v6493 = vadd.f32 %v6492, 0.001143296
        %v6494 = vmul.f32 %v6480, %v6493
        %v6495 = vadd.f32 %v6494, 0.014752088
        %v6496 = vmul.f32 %v6480, %v6495
        %v6497 = vadd.f32 %v6496, 0.112945676
        %v6498 = vmul.f32 %v6480, %v6497
        %v6499 = vadd.f32 %v6498, 0.4994258
        %v6500 = vmul.f32 %v6480, %v6499
        %v6501 = vadd.f32 %v6500, 1.0
        %v6502 = vrcp.pop %v6501
        %v6503 = vmul.f32 %v6501, %v6502
        %v6504 = vsub.f32 1.0, %v6503
        %v6505 = vmul.f32 %v6502, %v6504
        %v6506 = vadd.f32 %v6502, %v6505
        %vm6507 = vweird.f32 %v6501
        %vm6508 = vweird.f32 %v6502
        %vm6509 = vmor %vm6507, %vm6508
        %v6510 = vsel %vm6509, %v6502, %v6506
        %v6511 = vand.u32 2147483647, %v6501
        %vm6512 = vcmp.eq.f32.partialorder %v6511, 8.507059e+37
        %v6513 = vand.u32 %v6501, 2147483648
        %v6514 = vor.u32 1.1754944e-38, %v6513
        %v6515 = vsel %vm6512, %v6514, %v6510
        %v6516 = vmul.f32 %v6491, %v6515
        %v6517 = vmin.f32 %v6516, 1.0
        %v6518 = vmax.f32 %v6517, -1.0
        %v6519 = vmul.f32 %v1672, %v1672
        %v6520 = vmin.f32 16.0, %v6519
        %v6521 = vmul.f32 %v6520, 2.1237322e-06
        %v6522 = vadd.f32 %v6521, 0.00028619796
        %v6523 = vmul.f32 %v6520, %v6522
        %v6524 = vadd.f32 %v6523, 0.0036580483
        %v6525 = vmul.f32 %v6520, %v6524
        %v6526 = vadd.f32 %v6525, 0.05243302
        %v6527 = vmul.f32 %v6520, %v6526
        %v6528 = vadd.f32 %v6527, 0.18741608
        %v6529 = vmul.f32 %v6520, %v6528
        %v6530 = vadd.f32 %v6529, 1.1283791
        %v6531 = vmul.f32 %v1672, %v6530
        %v6532 = vmul.f32 %v6520, 3.8918573e-05
        %v6533 = vadd.f32 %v6532, 0.001143296
        %v6534 = vmul.f32 %v6520, %v6533
        %v6535 = vadd.f32 %v6534, 0.014752088
        %v6536 = vmul.f32 %v6520, %v6535
        %v6537 = vadd.f32 %v6536, 0.112945676
        %v6538 = vmul.f32 %v6520, %v6537
        %v6539 = vadd.f32 %v6538, 0.4994258
        %v6540 = vmul.f32 %v6520, %v6539
        %v6541 = vadd.f32 %v6540, 1.0
        %v6542 = vrcp.pop %v6541
        %v6543 = vmul.f32 %v6541, %v6542
        %v6544 = vsub.f32 1.0, %v6543
        %v6545 = vmul.f32 %v6542, %v6544
        %v6546 = vadd.f32 %v6542, %v6545
        %vm6547 = vweird.f32 %v6541
        %vm6548 = vweird.f32 %v6542
        %vm6549 = vmor %vm6547, %vm6548
        %v6550 = vsel %vm6549, %v6542, %v6546
        %v6551 = vand.u32 2147483647, %v6541
        %vm6552 = vcmp.eq.f32.partialorder %v6551, 8.507059e+37
        %v6553 = vand.u32 %v6541, 2147483648
        %v6554 = vor.u32 1.1754944e-38, %v6553
        %v6555 = vsel %vm6552, %v6554, %v6550
        %v6556 = vmul.f32 %v6531, %v6555
        %v6557 = vmin.f32 %v6556, 1.0
        %v6558 = vmax.f32 %v6557, -1.0
        %v6559 = vmul.f32 %v1673, %v1673
        %v6560 = vmin.f32 16.0, %v6559
        %v6561 = vmul.f32 %v6560, 2.1237322e-06
        %v6562 = vadd.f32 %v6561, 0.00028619796
        %v6563 = vmul.f32 %v6560, %v6562
        %v6564 = vadd.f32 %v6563, 0.0036580483
        %v6565 = vmul.f32 %v6560, %v6564
        %v6566 = vadd.f32 %v6565, 0.05243302
        %v6567 = vmul.f32 %v6560, %v6566
        %v6568 = vadd.f32 %v6567, 0.18741608
        %v6569 = vmul.f32 %v6560, %v6568
        %v6570 = vadd.f32 %v6569, 1.1283791
        %v6571 = vmul.f32 %v1673, %v6570
        %v6572 = vmul.f32 %v6560, 3.8918573e-05
        %v6573 = vadd.f32 %v6572, 0.001143296
        %v6574 = vmul.f32 %v6560, %v6573
        %v6575 = vadd.f32 %v6574, 0.014752088
        %v6576 = vmul.f32 %v6560, %v6575
        %v6577 = vadd.f32 %v6576, 0.112945676
        %v6578 = vmul.f32 %v6560, %v6577
        %v6579 = vadd.f32 %v6578, 0.4994258
        %v6580 = vmul.f32 %v6560, %v6579
        %v6581 = vadd.f32 %v6580, 1.0
        %v6582 = vrcp.pop %v6581
        %v6583 = vmul.f32 %v6581, %v6582
        %v6584 = vsub.f32 1.0, %v6583
        %v6585 = vmul.f32 %v6582, %v6584
        %v6586 = vadd.f32 %v6582, %v6585
        %vm6587 = vweird.f32 %v6581
        %vm6588 = vweird.f32 %v6582
        %vm6589 = vmor %vm6587, %vm6588
        %v6590 = vsel %vm6589, %v6582, %v6586
        %v6591 = vand.u32 2147483647, %v6581
        %vm6592 = vcmp.eq.f32.partialorder %v6591, 8.507059e+37
        %v6593 = vand.u32 %v6581, 2147483648
        %v6594 = vor.u32 1.1754944e-38, %v6593
        %v6595 = vsel %vm6592, %v6594, %v6590
        %v6596 = vmul.f32 %v6571, %v6595
        %v6597 = vmin.f32 %v6596, 1.0
        %v6598 = vmax.f32 %v6597, -1.0
        %v6599 = vmul.f32 %v1674, %v1674
        %v6600 = vmin.f32 16.0, %v6599
        %v6601 = vmul.f32 %v6600, 2.1237322e-06
        %v6602 = vadd.f32 %v6601, 0.00028619796
        %v6603 = vmul.f32 %v6600, %v6602
        %v6604 = vadd.f32 %v6603, 0.0036580483
        %v6605 = vmul.f32 %v6600, %v6604
        %v6606 = vadd.f32 %v6605, 0.05243302
        %v6607 = vmul.f32 %v6600, %v6606
        %v6608 = vadd.f32 %v6607, 0.18741608
        %v6609 = vmul.f32 %v6600, %v6608
        %v6610 = vadd.f32 %v6609, 1.1283791
        %v6611 = vmul.f32 %v1674, %v6610
        %v6612 = vmul.f32 %v6600, 3.8918573e-05
        %v6613 = vadd.f32 %v6612, 0.001143296
        %v6614 = vmul.f32 %v6600, %v6613
        %v6615 = vadd.f32 %v6614, 0.014752088
        %v6616 = vmul.f32 %v6600, %v6615
        %v6617 = vadd.f32 %v6616, 0.112945676
        %v6618 = vmul.f32 %v6600, %v6617
        %v6619 = vadd.f32 %v6618, 0.4994258
        %v6620 = vmul.f32 %v6600, %v6619
        %v6621 = vadd.f32 %v6620, 1.0
        %v6622 = vrcp.pop %v6621
        %v6623 = vmul.f32 %v6621, %v6622
        %v6624 = vsub.f32 1.0, %v6623
        %v6625 = vmul.f32 %v6622, %v6624
        %v6626 = vadd.f32 %v6622, %v6625
        %vm6627 = vweird.f32 %v6621
        %vm6628 = vweird.f32 %v6622
        %vm6629 = vmor %vm6627, %vm6628
        %v6630 = vsel %vm6629, %v6622, %v6626
        %v6631 = vand.u32 2147483647, %v6621
        %vm6632 = vcmp.eq.f32.partialorder %v6631, 8.507059e+37
        %v6633 = vand.u32 %v6621, 2147483648
        %v6634 = vor.u32 1.1754944e-38, %v6633
        %v6635 = vsel %vm6632, %v6634, %v6630
        %v6636 = vmul.f32 %v6611, %v6635
        %v6637 = vmin.f32 %v6636, 1.0
        %v6638 = vmax.f32 %v6637, -1.0
        %v6639 = vmul.f32 %v1675, %v1675
        %v6640 = vmin.f32 16.0, %v6639
        %v6641 = vmul.f32 %v6640, 2.1237322e-06
        %v6642 = vadd.f32 %v6641, 0.00028619796
        %v6643 = vmul.f32 %v6640, %v6642
        %v6644 = vadd.f32 %v6643, 0.0036580483
        %v6645 = vmul.f32 %v6640, %v6644
        %v6646 = vadd.f32 %v6645, 0.05243302
        %v6647 = vmul.f32 %v6640, %v6646
        %v6648 = vadd.f32 %v6647, 0.18741608
        %v6649 = vmul.f32 %v6640, %v6648
        %v6650 = vadd.f32 %v6649, 1.1283791
        %v6651 = vmul.f32 %v1675, %v6650
        %v6652 = vmul.f32 %v6640, 3.8918573e-05
        %v6653 = vadd.f32 %v6652, 0.001143296
        %v6654 = vmul.f32 %v6640, %v6653
        %v6655 = vadd.f32 %v6654, 0.014752088
        %v6656 = vmul.f32 %v6640, %v6655
        %v6657 = vadd.f32 %v6656, 0.112945676
        %v6658 = vmul.f32 %v6640, %v6657
        %v6659 = vadd.f32 %v6658, 0.4994258
        %v6660 = vmul.f32 %v6640, %v6659
        %v6661 = vadd.f32 %v6660, 1.0
        %v6662 = vrcp.pop %v6661
        %v6663 = vmul.f32 %v6661, %v6662
        %v6664 = vsub.f32 1.0, %v6663
        %v6665 = vmul.f32 %v6662, %v6664
        %v6666 = vadd.f32 %v6662, %v6665
        %vm6667 = vweird.f32 %v6661
        %vm6668 = vweird.f32 %v6662
        %vm6669 = vmor %vm6667, %vm6668
        %v6670 = vsel %vm6669, %v6662, %v6666
        %v6671 = vand.u32 2147483647, %v6661
        %vm6672 = vcmp.eq.f32.partialorder %v6671, 8.507059e+37
        %v6673 = vand.u32 %v6661, 2147483648
        %v6674 = vor.u32 1.1754944e-38, %v6673
        %v6675 = vsel %vm6672, %v6674, %v6670
        %v6676 = vmul.f32 %v6651, %v6675
        %v6677 = vmin.f32 %v6676, 1.0
        %v6678 = vmax.f32 %v6677, -1.0
        %v6679 = vmul.f32 %v1676, %v1676
        %v6680 = vmin.f32 16.0, %v6679
        %v6681 = vmul.f32 %v6680, 2.1237322e-06
        %v6682 = vadd.f32 %v6681, 0.00028619796
        %v6683 = vmul.f32 %v6680, %v6682
        %v6684 = vadd.f32 %v6683, 0.0036580483
        %v6685 = vmul.f32 %v6680, %v6684
        %v6686 = vadd.f32 %v6685, 0.05243302
        %v6687 = vmul.f32 %v6680, %v6686
        %v6688 = vadd.f32 %v6687, 0.18741608
        %v6689 = vmul.f32 %v6680, %v6688
        %v6690 = vadd.f32 %v6689, 1.1283791
        %v6691 = vmul.f32 %v1676, %v6690
        %v6692 = vmul.f32 %v6680, 3.8918573e-05
        %v6693 = vadd.f32 %v6692, 0.001143296
        %v6694 = vmul.f32 %v6680, %v6693
        %v6695 = vadd.f32 %v6694, 0.014752088
        %v6696 = vmul.f32 %v6680, %v6695
        %v6697 = vadd.f32 %v6696, 0.112945676
        %v6698 = vmul.f32 %v6680, %v6697
        %v6699 = vadd.f32 %v6698, 0.4994258
        %v6700 = vmul.f32 %v6680, %v6699
        %v6701 = vadd.f32 %v6700, 1.0
        %v6702 = vrcp.pop %v6701
        %v6703 = vmul.f32 %v6701, %v6702
        %v6704 = vsub.f32 1.0, %v6703
        %v6705 = vmul.f32 %v6702, %v6704
        %v6706 = vadd.f32 %v6702, %v6705
        %vm6707 = vweird.f32 %v6701
        %vm6708 = vweird.f32 %v6702
        %vm6709 = vmor %vm6707, %vm6708
        %v6710 = vsel %vm6709, %v6702, %v6706
        %v6711 = vand.u32 2147483647, %v6701
        %vm6712 = vcmp.eq.f32.partialorder %v6711, 8.507059e+37
        %v6713 = vand.u32 %v6701, 2147483648
        %v6714 = vor.u32 1.1754944e-38, %v6713
        %v6715 = vsel %vm6712, %v6714, %v6710
        %v6716 = vmul.f32 %v6691, %v6715
        %v6717 = vmin.f32 %v6716, 1.0
        %v6718 = vmax.f32 %v6717, -1.0
        %v6719 = vmul.f32 %v1677, %v1677
        %v6720 = vmin.f32 16.0, %v6719
        %v6721 = vmul.f32 %v6720, 2.1237322e-06
        %v6722 = vadd.f32 %v6721, 0.00028619796
        %v6723 = vmul.f32 %v6720, %v6722
        %v6724 = vadd.f32 %v6723, 0.0036580483
        %v6725 = vmul.f32 %v6720, %v6724
        %v6726 = vadd.f32 %v6725, 0.05243302
        %v6727 = vmul.f32 %v6720, %v6726
        %v6728 = vadd.f32 %v6727, 0.18741608
        %v6729 = vmul.f32 %v6720, %v6728
        %v6730 = vadd.f32 %v6729, 1.1283791
        %v6731 = vmul.f32 %v1677, %v6730
        %v6732 = vmul.f32 %v6720, 3.8918573e-05
        %v6733 = vadd.f32 %v6732, 0.001143296
        %v6734 = vmul.f32 %v6720, %v6733
        %v6735 = vadd.f32 %v6734, 0.014752088
        %v6736 = vmul.f32 %v6720, %v6735
        %v6737 = vadd.f32 %v6736, 0.112945676
        %v6738 = vmul.f32 %v6720, %v6737
        %v6739 = vadd.f32 %v6738, 0.4994258
        %v6740 = vmul.f32 %v6720, %v6739
        %v6741 = vadd.f32 %v6740, 1.0
        %v6742 = vrcp.pop %v6741
        %v6743 = vmul.f32 %v6741, %v6742
        %v6744 = vsub.f32 1.0, %v6743
        %v6745 = vmul.f32 %v6742, %v6744
        %v6746 = vadd.f32 %v6742, %v6745
        %vm6747 = vweird.f32 %v6741
        %vm6748 = vweird.f32 %v6742
        %vm6749 = vmor %vm6747, %vm6748
        %v6750 = vsel %vm6749, %v6742, %v6746
        %v6751 = vand.u32 2147483647, %v6741
        %vm6752 = vcmp.eq.f32.partialorder %v6751, 8.507059e+37
        %v6753 = vand.u32 %v6741, 2147483648
        %v6754 = vor.u32 1.1754944e-38, %v6753
        %v6755 = vsel %vm6752, %v6754, %v6750
        %v6756 = vmul.f32 %v6731, %v6755
        %v6757 = vmin.f32 %v6756, 1.0
        %v6758 = vmax.f32 %v6757, -1.0
        %v6759 = vmul.f32 %v1678, %v1678
        %v6760 = vmin.f32 16.0, %v6759
        %v6761 = vmul.f32 %v6760, 2.1237322e-06
        %v6762 = vadd.f32 %v6761, 0.00028619796
        %v6763 = vmul.f32 %v6760, %v6762
        %v6764 = vadd.f32 %v6763, 0.0036580483
        %v6765 = vmul.f32 %v6760, %v6764
        %v6766 = vadd.f32 %v6765, 0.05243302
        %v6767 = vmul.f32 %v6760, %v6766
        %v6768 = vadd.f32 %v6767, 0.18741608
        %v6769 = vmul.f32 %v6760, %v6768
        %v6770 = vadd.f32 %v6769, 1.1283791
        %v6771 = vmul.f32 %v1678, %v6770
        %v6772 = vmul.f32 %v6760, 3.8918573e-05
        %v6773 = vadd.f32 %v6772, 0.001143296
        %v6774 = vmul.f32 %v6760, %v6773
        %v6775 = vadd.f32 %v6774, 0.014752088
        %v6776 = vmul.f32 %v6760, %v6775
        %v6777 = vadd.f32 %v6776, 0.112945676
        %v6778 = vmul.f32 %v6760, %v6777
        %v6779 = vadd.f32 %v6778, 0.4994258
        %v6780 = vmul.f32 %v6760, %v6779
        %v6781 = vadd.f32 %v6780, 1.0
        %v6782 = vrcp.pop %v6781
        %v6783 = vmul.f32 %v6781, %v6782
        %v6784 = vsub.f32 1.0, %v6783
        %v6785 = vmul.f32 %v6782, %v6784
        %v6786 = vadd.f32 %v6782, %v6785
        %vm6787 = vweird.f32 %v6781
        %vm6788 = vweird.f32 %v6782
        %vm6789 = vmor %vm6787, %vm6788
        %v6790 = vsel %vm6789, %v6782, %v6786
        %v6791 = vand.u32 2147483647, %v6781
        %vm6792 = vcmp.eq.f32.partialorder %v6791, 8.507059e+37
        %v6793 = vand.u32 %v6781, 2147483648
        %v6794 = vor.u32 1.1754944e-38, %v6793
        %v6795 = vsel %vm6792, %v6794, %v6790
        %v6796 = vmul.f32 %v6771, %v6795
        %v6797 = vmin.f32 %v6796, 1.0
        %v6798 = vmax.f32 %v6797, -1.0
        %v6799 = vpack.c.bf16 %v1758, %v1718
        %v6800 = vpack.c.bf16 %v1838, %v1798
        %v6801 = vpack.c.bf16 %v1918, %v1878
        %v6802 = vpack.c.bf16 %v1998, %v1958
        %v6803 = vpack.c.bf16 %v2078, %v2038
        %v6804 = vpack.c.bf16 %v2158, %v2118
        %v6805 = vpack.c.bf16 %v2238, %v2198
        %v6806 = vpack.c.bf16 %v2318, %v2278
        %v6807 = vpack.c.bf16 %v2398, %v2358
        %v6808 = vpack.c.bf16 %v2478, %v2438
        %v6809 = vpack.c.bf16 %v2558, %v2518
        %v6810 = vpack.c.bf16 %v2638, %v2598
        %v6811 = vpack.c.bf16 %v2718, %v2678
        %v6812 = vpack.c.bf16 %v2798, %v2758
        %v6813 = vpack.c.bf16 %v2878, %v2838
        %v6814 = vpack.c.bf16 %v2958, %v2918
        %v6815 = vpack.c.bf16 %v3038, %v2998
        %v6816 = vpack.c.bf16 %v3118, %v3078
        %v6817 = vpack.c.bf16 %v3198, %v3158
        %v6818 = vpack.c.bf16 %v3278, %v3238
        %v6819 = vpack.c.bf16 %v3358, %v3318
        %v6820 = vpack.c.bf16 %v3438, %v3398
        %v6821 = vpack.c.bf16 %v3518, %v3478
        %v6822 = vpack.c.bf16 %v3598, %v3558
        %v6823 = vpack.c.bf16 %v3678, %v3638
        %v6824 = vpack.c.bf16 %v3758, %v3718
        %v6825 = vpack.c.bf16 %v3838, %v3798
        %v6826 = vpack.c.bf16 %v3918, %v3878
        %v6827 = vpack.c.bf16 %v3998, %v3958
        %v6828 = vpack.c.bf16 %v4078, %v4038
        %v6829 = vpack.c.bf16 %v4158, %v4118
        %v6830 = vpack.c.bf16 %v4238, %v4198
        %v6831 = vpack.c.bf16 %v4318, %v4278
        %v6832 = vpack.c.bf16 %v4398, %v4358
        %v6833 = vpack.c.bf16 %v4478, %v4438
        %v6834 = vpack.c.bf16 %v4558, %v4518
        %v6835 = vpack.c.bf16 %v4638, %v4598
        %v6836 = vpack.c.bf16 %v4718, %v4678
        %v6837 = vpack.c.bf16 %v4798, %v4758
        %v6838 = vpack.c.bf16 %v4878, %v4838
        %v6839 = vpack.c.bf16 %v4958, %v4918
        %v6840 = vpack.c.bf16 %v5038, %v4998
        %v6841 = vpack.c.bf16 %v5118, %v5078
        %v6842 = vpack.c.bf16 %v5198, %v5158
        %v6843 = vpack.c.bf16 %v5278, %v5238
        %v6844 = vpack.c.bf16 %v5358, %v5318
        %v6845 = vpack.c.bf16 %v5438, %v5398
        %v6846 = vpack.c.bf16 %v5518, %v5478
        %v6847 = vpack.c.bf16 %v5598, %v5558
        %v6848 = vpack.c.bf16 %v5678, %v5638
        %v6849 = vpack.c.bf16 %v5758, %v5718
        %v6850 = vpack.c.bf16 %v5838, %v5798
        %v6851 = vpack.c.bf16 %v5918, %v5878
        %v6852 = vpack.c.bf16 %v5998, %v5958
        %v6853 = vpack.c.bf16 %v6078, %v6038
        %v6854 = vpack.c.bf16 %v6158, %v6118
        %v6855 = vpack.c.bf16 %v6238, %v6198
        %v6856 = vpack.c.bf16 %v6318, %v6278
        %v6857 = vpack.c.bf16 %v6398, %v6358
        %v6858 = vpack.c.bf16 %v6478, %v6438
        %v6859 = vpack.c.bf16 %v6558, %v6518
        %v6860 = vpack.c.bf16 %v6638, %v6598
        %v6861 = vpack.c.bf16 %v6718, %v6678
        %v6862 = vpack.c.bf16 %v6798, %v6758
        %v6863 = vunpack.c.l.bf16 %v6799
        %v6864 = vunpack.c.h.bf16 %v6799
        %v6865 = vunpack.c.l.bf16 %v6800
        %v6866 = vunpack.c.h.bf16 %v6800
        %v6867 = vunpack.c.l.bf16 %v6801
        %v6868 = vunpack.c.h.bf16 %v6801
        %v6869 = vunpack.c.l.bf16 %v6802
        %v6870 = vunpack.c.h.bf16 %v6802
        %v6871 = vunpack.c.l.bf16 %v6803
        %v6872 = vunpack.c.h.bf16 %v6803
        %v6873 = vunpack.c.l.bf16 %v6804
        %v6874 = vunpack.c.h.bf16 %v6804
        %v6875 = vunpack.c.l.bf16 %v6805
        %v6876 = vunpack.c.h.bf16 %v6805
        %v6877 = vunpack.c.l.bf16 %v6806
        %v6878 = vunpack.c.h.bf16 %v6806
        %v6879 = vunpack.c.l.bf16 %v6807
        %v6880 = vunpack.c.h.bf16 %v6807
        %v6881 = vunpack.c.l.bf16 %v6808
        %v6882 = vunpack.c.h.bf16 %v6808
        %v6883 = vunpack.c.l.bf16 %v6809
        %v6884 = vunpack.c.h.bf16 %v6809
        %v6885 = vunpack.c.l.bf16 %v6810
        %v6886 = vunpack.c.h.bf16 %v6810
        %v6887 = vunpack.c.l.bf16 %v6811
        %v6888 = vunpack.c.h.bf16 %v6811
        %v6889 = vunpack.c.l.bf16 %v6812
        %v6890 = vunpack.c.h.bf16 %v6812
        %v6891 = vunpack.c.l.bf16 %v6813
        %v6892 = vunpack.c.h.bf16 %v6813
        %v6893 = vunpack.c.l.bf16 %v6814
        %v6894 = vunpack.c.h.bf16 %v6814
        %v6895 = vunpack.c.l.bf16 %v6815
        %v6896 = vunpack.c.h.bf16 %v6815
        %v6897 = vunpack.c.l.bf16 %v6816
        %v6898 = vunpack.c.h.bf16 %v6816
        %v6899 = vunpack.c.l.bf16 %v6817
        %v6900 = vunpack.c.h.bf16 %v6817
        %v6901 = vunpack.c.l.bf16 %v6818
        %v6902 = vunpack.c.h.bf16 %v6818
        %v6903 = vunpack.c.l.bf16 %v6819
        %v6904 = vunpack.c.h.bf16 %v6819
        %v6905 = vunpack.c.l.bf16 %v6820
        %v6906 = vunpack.c.h.bf16 %v6820
        %v6907 = vunpack.c.l.bf16 %v6821
        %v6908 = vunpack.c.h.bf16 %v6821
        %v6909 = vunpack.c.l.bf16 %v6822
        %v6910 = vunpack.c.h.bf16 %v6822
        %v6911 = vunpack.c.l.bf16 %v6823
        %v6912 = vunpack.c.h.bf16 %v6823
        %v6913 = vunpack.c.l.bf16 %v6824
        %v6914 = vunpack.c.h.bf16 %v6824
        %v6915 = vunpack.c.l.bf16 %v6825
        %v6916 = vunpack.c.h.bf16 %v6825
        %v6917 = vunpack.c.l.bf16 %v6826
        %v6918 = vunpack.c.h.bf16 %v6826
        %v6919 = vunpack.c.l.bf16 %v6827
        %v6920 = vunpack.c.h.bf16 %v6827
        %v6921 = vunpack.c.l.bf16 %v6828
        %v6922 = vunpack.c.h.bf16 %v6828
        %v6923 = vunpack.c.l.bf16 %v6829
        %v6924 = vunpack.c.h.bf16 %v6829
        %v6925 = vunpack.c.l.bf16 %v6830
        %v6926 = vunpack.c.h.bf16 %v6830
        %v6927 = vunpack.c.l.bf16 %v6831
        %v6928 = vunpack.c.h.bf16 %v6831
        %v6929 = vunpack.c.l.bf16 %v6832
        %v6930 = vunpack.c.h.bf16 %v6832
        %v6931 = vunpack.c.l.bf16 %v6833
        %v6932 = vunpack.c.h.bf16 %v6833
        %v6933 = vunpack.c.l.bf16 %v6834
        %v6934 = vunpack.c.h.bf16 %v6834
        %v6935 = vunpack.c.l.bf16 %v6835
        %v6936 = vunpack.c.h.bf16 %v6835
        %v6937 = vunpack.c.l.bf16 %v6836
        %v6938 = vunpack.c.h.bf16 %v6836
        %v6939 = vunpack.c.l.bf16 %v6837
        %v6940 = vunpack.c.h.bf16 %v6837
        %v6941 = vunpack.c.l.bf16 %v6838
        %v6942 = vunpack.c.h.bf16 %v6838
        %v6943 = vunpack.c.l.bf16 %v6839
        %v6944 = vunpack.c.h.bf16 %v6839
        %v6945 = vunpack.c.l.bf16 %v6840
        %v6946 = vunpack.c.h.bf16 %v6840
        %v6947 = vunpack.c.l.bf16 %v6841
        %v6948 = vunpack.c.h.bf16 %v6841
        %v6949 = vunpack.c.l.bf16 %v6842
        %v6950 = vunpack.c.h.bf16 %v6842
        %v6951 = vunpack.c.l.bf16 %v6843
        %v6952 = vunpack.c.h.bf16 %v6843
        %v6953 = vunpack.c.l.bf16 %v6844
        %v6954 = vunpack.c.h.bf16 %v6844
        %v6955 = vunpack.c.l.bf16 %v6845
        %v6956 = vunpack.c.h.bf16 %v6845
        %v6957 = vunpack.c.l.bf16 %v6846
        %v6958 = vunpack.c.h.bf16 %v6846
        %v6959 = vunpack.c.l.bf16 %v6847
        %v6960 = vunpack.c.h.bf16 %v6847
        %v6961 = vunpack.c.l.bf16 %v6848
        %v6962 = vunpack.c.h.bf16 %v6848
        %v6963 = vunpack.c.l.bf16 %v6849
        %v6964 = vunpack.c.h.bf16 %v6849
        %v6965 = vunpack.c.l.bf16 %v6850
        %v6966 = vunpack.c.h.bf16 %v6850
        %v6967 = vunpack.c.l.bf16 %v6851
        %v6968 = vunpack.c.h.bf16 %v6851
        %v6969 = vunpack.c.l.bf16 %v6852
        %v6970 = vunpack.c.h.bf16 %v6852
        %v6971 = vunpack.c.l.bf16 %v6853
        %v6972 = vunpack.c.h.bf16 %v6853
        %v6973 = vunpack.c.l.bf16 %v6854
        %v6974 = vunpack.c.h.bf16 %v6854
        %v6975 = vunpack.c.l.bf16 %v6855
        %v6976 = vunpack.c.h.bf16 %v6855
        %v6977 = vunpack.c.l.bf16 %v6856
        %v6978 = vunpack.c.h.bf16 %v6856
        %v6979 = vunpack.c.l.bf16 %v6857
        %v6980 = vunpack.c.h.bf16 %v6857
        %v6981 = vunpack.c.l.bf16 %v6858
        %v6982 = vunpack.c.h.bf16 %v6858
        %v6983 = vunpack.c.l.bf16 %v6859
        %v6984 = vunpack.c.h.bf16 %v6859
        %v6985 = vunpack.c.l.bf16 %v6860
        %v6986 = vunpack.c.h.bf16 %v6860
        %v6987 = vunpack.c.l.bf16 %v6861
        %v6988 = vunpack.c.h.bf16 %v6861
        %v6989 = vunpack.c.l.bf16 %v6862
        %v6990 = vunpack.c.h.bf16 %v6862
        %v6991 = vadd.f32 %v6863, 1.0
        %v6992 = vadd.f32 %v6864, 1.0
        %v6993 = vadd.f32 %v6865, 1.0
        %v6994 = vadd.f32 %v6866, 1.0
        %v6995 = vadd.f32 %v6867, 1.0
        %v6996 = vadd.f32 %v6868, 1.0
        %v6997 = vadd.f32 %v6869, 1.0
        %v6998 = vadd.f32 %v6870, 1.0
        %v6999 = vadd.f32 %v6871, 1.0
        %v7000 = vadd.f32 %v6872, 1.0
        %v7001 = vadd.f32 %v6873, 1.0
        %v7002 = vadd.f32 %v6874, 1.0
        %v7003 = vadd.f32 %v6875, 1.0
        %v7004 = vadd.f32 %v6876, 1.0
        %v7005 = vadd.f32 %v6877, 1.0
        %v7006 = vadd.f32 %v6878, 1.0
        %v7007 = vadd.f32 %v6879, 1.0
        %v7008 = vadd.f32 %v6880, 1.0
        %v7009 = vadd.f32 %v6881, 1.0
        %v7010 = vadd.f32 %v6882, 1.0
        %v7011 = vadd.f32 %v6883, 1.0
        %v7012 = vadd.f32 %v6884, 1.0
        %v7013 = vadd.f32 %v6885, 1.0
        %v7014 = vadd.f32 %v6886, 1.0
        %v7015 = vadd.f32 %v6887, 1.0
        %v7016 = vadd.f32 %v6888, 1.0
        %v7017 = vadd.f32 %v6889, 1.0
        %v7018 = vadd.f32 %v6890, 1.0
        %v7019 = vadd.f32 %v6891, 1.0
        %v7020 = vadd.f32 %v6892, 1.0
        %v7021 = vadd.f32 %v6893, 1.0
        %v7022 = vadd.f32 %v6894, 1.0
        %v7023 = vadd.f32 %v6895, 1.0
        %v7024 = vadd.f32 %v6896, 1.0
        %v7025 = vadd.f32 %v6897, 1.0
        %v7026 = vadd.f32 %v6898, 1.0
        %v7027 = vadd.f32 %v6899, 1.0
        %v7028 = vadd.f32 %v6900, 1.0
        %v7029 = vadd.f32 %v6901, 1.0
        %v7030 = vadd.f32 %v6902, 1.0
        %v7031 = vadd.f32 %v6903, 1.0
        %v7032 = vadd.f32 %v6904, 1.0
        %v7033 = vadd.f32 %v6905, 1.0
        %v7034 = vadd.f32 %v6906, 1.0
        %v7035 = vadd.f32 %v6907, 1.0
        %v7036 = vadd.f32 %v6908, 1.0
        %v7037 = vadd.f32 %v6909, 1.0
        %v7038 = vadd.f32 %v6910, 1.0
        %v7039 = vadd.f32 %v6911, 1.0
        %v7040 = vadd.f32 %v6912, 1.0
        %v7041 = vadd.f32 %v6913, 1.0
        %v7042 = vadd.f32 %v6914, 1.0
        %v7043 = vadd.f32 %v6915, 1.0
        %v7044 = vadd.f32 %v6916, 1.0
        %v7045 = vadd.f32 %v6917, 1.0
        %v7046 = vadd.f32 %v6918, 1.0
        %v7047 = vadd.f32 %v6919, 1.0
        %v7048 = vadd.f32 %v6920, 1.0
        %v7049 = vadd.f32 %v6921, 1.0
        %v7050 = vadd.f32 %v6922, 1.0
        %v7051 = vadd.f32 %v6923, 1.0
        %v7052 = vadd.f32 %v6924, 1.0
        %v7053 = vadd.f32 %v6925, 1.0
        %v7054 = vadd.f32 %v6926, 1.0
        %v7055 = vadd.f32 %v6927, 1.0
        %v7056 = vadd.f32 %v6928, 1.0
        %v7057 = vadd.f32 %v6929, 1.0
        %v7058 = vadd.f32 %v6930, 1.0
        %v7059 = vadd.f32 %v6931, 1.0
        %v7060 = vadd.f32 %v6932, 1.0
        %v7061 = vadd.f32 %v6933, 1.0
        %v7062 = vadd.f32 %v6934, 1.0
        %v7063 = vadd.f32 %v6935, 1.0
        %v7064 = vadd.f32 %v6936, 1.0
        %v7065 = vadd.f32 %v6937, 1.0
        %v7066 = vadd.f32 %v6938, 1.0
        %v7067 = vadd.f32 %v6939, 1.0
        %v7068 = vadd.f32 %v6940, 1.0
        %v7069 = vadd.f32 %v6941, 1.0
        %v7070 = vadd.f32 %v6942, 1.0
        %v7071 = vadd.f32 %v6943, 1.0
        %v7072 = vadd.f32 %v6944, 1.0
        %v7073 = vadd.f32 %v6945, 1.0
        %v7074 = vadd.f32 %v6946, 1.0
        %v7075 = vadd.f32 %v6947, 1.0
        %v7076 = vadd.f32 %v6948, 1.0
        %v7077 = vadd.f32 %v6949, 1.0
        %v7078 = vadd.f32 %v6950, 1.0
        %v7079 = vadd.f32 %v6951, 1.0
        %v7080 = vadd.f32 %v6952, 1.0
        %v7081 = vadd.f32 %v6953, 1.0
        %v7082 = vadd.f32 %v6954, 1.0
        %v7083 = vadd.f32 %v6955, 1.0
        %v7084 = vadd.f32 %v6956, 1.0
        %v7085 = vadd.f32 %v6957, 1.0
        %v7086 = vadd.f32 %v6958, 1.0
        %v7087 = vadd.f32 %v6959, 1.0
        %v7088 = vadd.f32 %v6960, 1.0
        %v7089 = vadd.f32 %v6961, 1.0
        %v7090 = vadd.f32 %v6962, 1.0
        %v7091 = vadd.f32 %v6963, 1.0
        %v7092 = vadd.f32 %v6964, 1.0
        %v7093 = vadd.f32 %v6965, 1.0
        %v7094 = vadd.f32 %v6966, 1.0
        %v7095 = vadd.f32 %v6967, 1.0
        %v7096 = vadd.f32 %v6968, 1.0
        %v7097 = vadd.f32 %v6969, 1.0
        %v7098 = vadd.f32 %v6970, 1.0
        %v7099 = vadd.f32 %v6971, 1.0
        %v7100 = vadd.f32 %v6972, 1.0
        %v7101 = vadd.f32 %v6973, 1.0
        %v7102 = vadd.f32 %v6974, 1.0
        %v7103 = vadd.f32 %v6975, 1.0
        %v7104 = vadd.f32 %v6976, 1.0
        %v7105 = vadd.f32 %v6977, 1.0
        %v7106 = vadd.f32 %v6978, 1.0
        %v7107 = vadd.f32 %v6979, 1.0
        %v7108 = vadd.f32 %v6980, 1.0
        %v7109 = vadd.f32 %v6981, 1.0
        %v7110 = vadd.f32 %v6982, 1.0
        %v7111 = vadd.f32 %v6983, 1.0
        %v7112 = vadd.f32 %v6984, 1.0
        %v7113 = vadd.f32 %v6985, 1.0
        %v7114 = vadd.f32 %v6986, 1.0
        %v7115 = vadd.f32 %v6987, 1.0
        %v7116 = vadd.f32 %v6988, 1.0
        %v7117 = vadd.f32 %v6989, 1.0
        %v7118 = vadd.f32 %v6990, 1.0
        %v7119 = vpack.c.bf16 %v6992, %v6991
        %v7120 = vpack.c.bf16 %v6994, %v6993
        %v7121 = vpack.c.bf16 %v6996, %v6995
        %v7122 = vpack.c.bf16 %v6998, %v6997
        %v7123 = vpack.c.bf16 %v7000, %v6999
        %v7124 = vpack.c.bf16 %v7002, %v7001
        %v7125 = vpack.c.bf16 %v7004, %v7003
        %v7126 = vpack.c.bf16 %v7006, %v7005
        %v7127 = vpack.c.bf16 %v7008, %v7007
        %v7128 = vpack.c.bf16 %v7010, %v7009
        %v7129 = vpack.c.bf16 %v7012, %v7011
        %v7130 = vpack.c.bf16 %v7014, %v7013
        %v7131 = vpack.c.bf16 %v7016, %v7015
        %v7132 = vpack.c.bf16 %v7018, %v7017
        %v7133 = vpack.c.bf16 %v7020, %v7019
        %v7134 = vpack.c.bf16 %v7022, %v7021
        %v7135 = vpack.c.bf16 %v7024, %v7023
        %v7136 = vpack.c.bf16 %v7026, %v7025
        %v7137 = vpack.c.bf16 %v7028, %v7027
        %v7138 = vpack.c.bf16 %v7030, %v7029
        %v7139 = vpack.c.bf16 %v7032, %v7031
        %v7140 = vpack.c.bf16 %v7034, %v7033
        %v7141 = vpack.c.bf16 %v7036, %v7035
        %v7142 = vpack.c.bf16 %v7038, %v7037
        %v7143 = vpack.c.bf16 %v7040, %v7039
        %v7144 = vpack.c.bf16 %v7042, %v7041
        %v7145 = vpack.c.bf16 %v7044, %v7043
        %v7146 = vpack.c.bf16 %v7046, %v7045
        %v7147 = vpack.c.bf16 %v7048, %v7047
        %v7148 = vpack.c.bf16 %v7050, %v7049
        %v7149 = vpack.c.bf16 %v7052, %v7051
        %v7150 = vpack.c.bf16 %v7054, %v7053
        %v7151 = vpack.c.bf16 %v7056, %v7055
        %v7152 = vpack.c.bf16 %v7058, %v7057
        %v7153 = vpack.c.bf16 %v7060, %v7059
        %v7154 = vpack.c.bf16 %v7062, %v7061
        %v7155 = vpack.c.bf16 %v7064, %v7063
        %v7156 = vpack.c.bf16 %v7066, %v7065
        %v7157 = vpack.c.bf16 %v7068, %v7067
        %v7158 = vpack.c.bf16 %v7070, %v7069
        %v7159 = vpack.c.bf16 %v7072, %v7071
        %v7160 = vpack.c.bf16 %v7074, %v7073
        %v7161 = vpack.c.bf16 %v7076, %v7075
        %v7162 = vpack.c.bf16 %v7078, %v7077
        %v7163 = vpack.c.bf16 %v7080, %v7079
        %v7164 = vpack.c.bf16 %v7082, %v7081
        %v7165 = vpack.c.bf16 %v7084, %v7083
        %v7166 = vpack.c.bf16 %v7086, %v7085
        %v7167 = vpack.c.bf16 %v7088, %v7087
        %v7168 = vpack.c.bf16 %v7090, %v7089
        %v7169 = vpack.c.bf16 %v7092, %v7091
        %v7170 = vpack.c.bf16 %v7094, %v7093
        %v7171 = vpack.c.bf16 %v7096, %v7095
        %v7172 = vpack.c.bf16 %v7098, %v7097
        %v7173 = vpack.c.bf16 %v7100, %v7099
        %v7174 = vpack.c.bf16 %v7102, %v7101
        %v7175 = vpack.c.bf16 %v7104, %v7103
        %v7176 = vpack.c.bf16 %v7106, %v7105
        %v7177 = vpack.c.bf16 %v7108, %v7107
        %v7178 = vpack.c.bf16 %v7110, %v7109
        %v7179 = vpack.c.bf16 %v7112, %v7111
        %v7180 = vpack.c.bf16 %v7114, %v7113
        %v7181 = vpack.c.bf16 %v7116, %v7115
        %v7182 = vpack.c.bf16 %v7118, %v7117
        %v7183 = vunpack.c.l.bf16 %v1295
        %v7184 = vunpack.c.h.bf16 %v1295
        %v7185 = vunpack.c.l.bf16 %v1296
        %v7186 = vunpack.c.h.bf16 %v1296
        %v7187 = vunpack.c.l.bf16 %v1297
        %v7188 = vunpack.c.h.bf16 %v1297
        %v7189 = vunpack.c.l.bf16 %v1298
        %v7190 = vunpack.c.h.bf16 %v1298
        %v7191 = vunpack.c.l.bf16 %v1299
        %v7192 = vunpack.c.h.bf16 %v1299
        %v7193 = vunpack.c.l.bf16 %v1300
        %v7194 = vunpack.c.h.bf16 %v1300
        %v7195 = vunpack.c.l.bf16 %v1301
        %v7196 = vunpack.c.h.bf16 %v1301
        %v7197 = vunpack.c.l.bf16 %v1302
        %v7198 = vunpack.c.h.bf16 %v1302
        %v7199 = vunpack.c.l.bf16 %v1303
        %v7200 = vunpack.c.h.bf16 %v1303
        %v7201 = vunpack.c.l.bf16 %v1304
        %v7202 = vunpack.c.h.bf16 %v1304
        %v7203 = vunpack.c.l.bf16 %v1305
        %v7204 = vunpack.c.h.bf16 %v1305
        %v7205 = vunpack.c.l.bf16 %v1306
        %v7206 = vunpack.c.h.bf16 %v1306
        %v7207 = vunpack.c.l.bf16 %v1307
        %v7208 = vunpack.c.h.bf16 %v1307
        %v7209 = vunpack.c.l.bf16 %v1308
        %v7210 = vunpack.c.h.bf16 %v1308
        %v7211 = vunpack.c.l.bf16 %v1309
        %v7212 = vunpack.c.h.bf16 %v1309
        %v7213 = vunpack.c.l.bf16 %v1310
        %v7214 = vunpack.c.h.bf16 %v1310
        %v7215 = vunpack.c.l.bf16 %v1311
        %v7216 = vunpack.c.h.bf16 %v1311
        %v7217 = vunpack.c.l.bf16 %v1312
        %v7218 = vunpack.c.h.bf16 %v1312
        %v7219 = vunpack.c.l.bf16 %v1313
        %v7220 = vunpack.c.h.bf16 %v1313
        %v7221 = vunpack.c.l.bf16 %v1314
        %v7222 = vunpack.c.h.bf16 %v1314
        %v7223 = vunpack.c.l.bf16 %v1315
        %v7224 = vunpack.c.h.bf16 %v1315
        %v7225 = vunpack.c.l.bf16 %v1316
        %v7226 = vunpack.c.h.bf16 %v1316
        %v7227 = vunpack.c.l.bf16 %v1317
        %v7228 = vunpack.c.h.bf16 %v1317
        %v7229 = vunpack.c.l.bf16 %v1318
        %v7230 = vunpack.c.h.bf16 %v1318
        %v7231 = vunpack.c.l.bf16 %v1319
        %v7232 = vunpack.c.h.bf16 %v1319
        %v7233 = vunpack.c.l.bf16 %v1320
        %v7234 = vunpack.c.h.bf16 %v1320
        %v7235 = vunpack.c.l.bf16 %v1321
        %v7236 = vunpack.c.h.bf16 %v1321
        %v7237 = vunpack.c.l.bf16 %v1322
        %v7238 = vunpack.c.h.bf16 %v1322
        %v7239 = vunpack.c.l.bf16 %v1323
        %v7240 = vunpack.c.h.bf16 %v1323
        %v7241 = vunpack.c.l.bf16 %v1324
        %v7242 = vunpack.c.h.bf16 %v1324
        %v7243 = vunpack.c.l.bf16 %v1325
        %v7244 = vunpack.c.h.bf16 %v1325
        %v7245 = vunpack.c.l.bf16 %v1326
        %v7246 = vunpack.c.h.bf16 %v1326
        %v7247 = vunpack.c.l.bf16 %v1327
        %v7248 = vunpack.c.h.bf16 %v1327
        %v7249 = vunpack.c.l.bf16 %v1328
        %v7250 = vunpack.c.h.bf16 %v1328
        %v7251 = vunpack.c.l.bf16 %v1329
        %v7252 = vunpack.c.h.bf16 %v1329
        %v7253 = vunpack.c.l.bf16 %v1330
        %v7254 = vunpack.c.h.bf16 %v1330
        %v7255 = vunpack.c.l.bf16 %v1331
        %v7256 = vunpack.c.h.bf16 %v1331
        %v7257 = vunpack.c.l.bf16 %v1332
        %v7258 = vunpack.c.h.bf16 %v1332
        %v7259 = vunpack.c.l.bf16 %v1333
        %v7260 = vunpack.c.h.bf16 %v1333
        %v7261 = vunpack.c.l.bf16 %v1334
        %v7262 = vunpack.c.h.bf16 %v1334
        %v7263 = vunpack.c.l.bf16 %v1335
        %v7264 = vunpack.c.h.bf16 %v1335
        %v7265 = vunpack.c.l.bf16 %v1336
        %v7266 = vunpack.c.h.bf16 %v1336
        %v7267 = vunpack.c.l.bf16 %v1337
        %v7268 = vunpack.c.h.bf16 %v1337
        %v7269 = vunpack.c.l.bf16 %v1338
        %v7270 = vunpack.c.h.bf16 %v1338
        %v7271 = vunpack.c.l.bf16 %v1339
        %v7272 = vunpack.c.h.bf16 %v1339
        %v7273 = vunpack.c.l.bf16 %v1340
        %v7274 = vunpack.c.h.bf16 %v1340
        %v7275 = vunpack.c.l.bf16 %v1341
        %v7276 = vunpack.c.h.bf16 %v1341
        %v7277 = vunpack.c.l.bf16 %v1342
        %v7278 = vunpack.c.h.bf16 %v1342
        %v7279 = vunpack.c.l.bf16 %v1343
        %v7280 = vunpack.c.h.bf16 %v1343
        %v7281 = vunpack.c.l.bf16 %v1344
        %v7282 = vunpack.c.h.bf16 %v1344
        %v7283 = vunpack.c.l.bf16 %v1345
        %v7284 = vunpack.c.h.bf16 %v1345
        %v7285 = vunpack.c.l.bf16 %v1346
        %v7286 = vunpack.c.h.bf16 %v1346
        %v7287 = vunpack.c.l.bf16 %v1347
        %v7288 = vunpack.c.h.bf16 %v1347
        %v7289 = vunpack.c.l.bf16 %v1348
        %v7290 = vunpack.c.h.bf16 %v1348
        %v7291 = vunpack.c.l.bf16 %v1349
        %v7292 = vunpack.c.h.bf16 %v1349
        %v7293 = vunpack.c.l.bf16 %v1350
        %v7294 = vunpack.c.h.bf16 %v1350
        %v7295 = vunpack.c.l.bf16 %v1351
        %v7296 = vunpack.c.h.bf16 %v1351
        %v7297 = vunpack.c.l.bf16 %v1352
        %v7298 = vunpack.c.h.bf16 %v1352
        %v7299 = vunpack.c.l.bf16 %v1353
        %v7300 = vunpack.c.h.bf16 %v1353
        %v7301 = vunpack.c.l.bf16 %v1354
        %v7302 = vunpack.c.h.bf16 %v1354
        %v7303 = vunpack.c.l.bf16 %v1355
        %v7304 = vunpack.c.h.bf16 %v1355
        %v7305 = vunpack.c.l.bf16 %v1356
        %v7306 = vunpack.c.h.bf16 %v1356
        %v7307 = vunpack.c.l.bf16 %v1357
        %v7308 = vunpack.c.h.bf16 %v1357
        %v7309 = vunpack.c.l.bf16 %v1358
        %v7310 = vunpack.c.h.bf16 %v1358
        %v7311 = vunpack.c.l.bf16 %v7119
        %v7312 = vunpack.c.h.bf16 %v7119
        %v7313 = vunpack.c.l.bf16 %v7120
        %v7314 = vunpack.c.h.bf16 %v7120
        %v7315 = vunpack.c.l.bf16 %v7121
        %v7316 = vunpack.c.h.bf16 %v7121
        %v7317 = vunpack.c.l.bf16 %v7122
        %v7318 = vunpack.c.h.bf16 %v7122
        %v7319 = vunpack.c.l.bf16 %v7123
        %v7320 = vunpack.c.h.bf16 %v7123
        %v7321 = vunpack.c.l.bf16 %v7124
        %v7322 = vunpack.c.h.bf16 %v7124
        %v7323 = vunpack.c.l.bf16 %v7125
        %v7324 = vunpack.c.h.bf16 %v7125
        %v7325 = vunpack.c.l.bf16 %v7126
        %v7326 = vunpack.c.h.bf16 %v7126
        %v7327 = vunpack.c.l.bf16 %v7127
        %v7328 = vunpack.c.h.bf16 %v7127
        %v7329 = vunpack.c.l.bf16 %v7128
        %v7330 = vunpack.c.h.bf16 %v7128
        %v7331 = vunpack.c.l.bf16 %v7129
        %v7332 = vunpack.c.h.bf16 %v7129
        %v7333 = vunpack.c.l.bf16 %v7130
        %v7334 = vunpack.c.h.bf16 %v7130
        %v7335 = vunpack.c.l.bf16 %v7131
        %v7336 = vunpack.c.h.bf16 %v7131
        %v7337 = vunpack.c.l.bf16 %v7132
        %v7338 = vunpack.c.h.bf16 %v7132
        %v7339 = vunpack.c.l.bf16 %v7133
        %v7340 = vunpack.c.h.bf16 %v7133
        %v7341 = vunpack.c.l.bf16 %v7134
        %v7342 = vunpack.c.h.bf16 %v7134
        %v7343 = vunpack.c.l.bf16 %v7135
        %v7344 = vunpack.c.h.bf16 %v7135
        %v7345 = vunpack.c.l.bf16 %v7136
        %v7346 = vunpack.c.h.bf16 %v7136
        %v7347 = vunpack.c.l.bf16 %v7137
        %v7348 = vunpack.c.h.bf16 %v7137
        %v7349 = vunpack.c.l.bf16 %v7138
        %v7350 = vunpack.c.h.bf16 %v7138
        %v7351 = vunpack.c.l.bf16 %v7139
        %v7352 = vunpack.c.h.bf16 %v7139
        %v7353 = vunpack.c.l.bf16 %v7140
        %v7354 = vunpack.c.h.bf16 %v7140
        %v7355 = vunpack.c.l.bf16 %v7141
        %v7356 = vunpack.c.h.bf16 %v7141
        %v7357 = vunpack.c.l.bf16 %v7142
        %v7358 = vunpack.c.h.bf16 %v7142
        %v7359 = vunpack.c.l.bf16 %v7143
        %v7360 = vunpack.c.h.bf16 %v7143
        %v7361 = vunpack.c.l.bf16 %v7144
        %v7362 = vunpack.c.h.bf16 %v7144
        %v7363 = vunpack.c.l.bf16 %v7145
        %v7364 = vunpack.c.h.bf16 %v7145
        %v7365 = vunpack.c.l.bf16 %v7146
        %v7366 = vunpack.c.h.bf16 %v7146
        %v7367 = vunpack.c.l.bf16 %v7147
        %v7368 = vunpack.c.h.bf16 %v7147
        %v7369 = vunpack.c.l.bf16 %v7148
        %v7370 = vunpack.c.h.bf16 %v7148
        %v7371 = vunpack.c.l.bf16 %v7149
        %v7372 = vunpack.c.h.bf16 %v7149
        %v7373 = vunpack.c.l.bf16 %v7150
        %v7374 = vunpack.c.h.bf16 %v7150
        %v7375 = vunpack.c.l.bf16 %v7151
        %v7376 = vunpack.c.h.bf16 %v7151
        %v7377 = vunpack.c.l.bf16 %v7152
        %v7378 = vunpack.c.h.bf16 %v7152
        %v7379 = vunpack.c.l.bf16 %v7153
        %v7380 = vunpack.c.h.bf16 %v7153
        %v7381 = vunpack.c.l.bf16 %v7154
        %v7382 = vunpack.c.h.bf16 %v7154
        %v7383 = vunpack.c.l.bf16 %v7155
        %v7384 = vunpack.c.h.bf16 %v7155
        %v7385 = vunpack.c.l.bf16 %v7156
        %v7386 = vunpack.c.h.bf16 %v7156
        %v7387 = vunpack.c.l.bf16 %v7157
        %v7388 = vunpack.c.h.bf16 %v7157
        %v7389 = vunpack.c.l.bf16 %v7158
        %v7390 = vunpack.c.h.bf16 %v7158
        %v7391 = vunpack.c.l.bf16 %v7159
        %v7392 = vunpack.c.h.bf16 %v7159
        %v7393 = vunpack.c.l.bf16 %v7160
        %v7394 = vunpack.c.h.bf16 %v7160
        %v7395 = vunpack.c.l.bf16 %v7161
        %v7396 = vunpack.c.h.bf16 %v7161
        %v7397 = vunpack.c.l.bf16 %v7162
        %v7398 = vunpack.c.h.bf16 %v7162
        %v7399 = vunpack.c.l.bf16 %v7163
        %v7400 = vunpack.c.h.bf16 %v7163
        %v7401 = vunpack.c.l.bf16 %v7164
        %v7402 = vunpack.c.h.bf16 %v7164
        %v7403 = vunpack.c.l.bf16 %v7165
        %v7404 = vunpack.c.h.bf16 %v7165
        %v7405 = vunpack.c.l.bf16 %v7166
        %v7406 = vunpack.c.h.bf16 %v7166
        %v7407 = vunpack.c.l.bf16 %v7167
        %v7408 = vunpack.c.h.bf16 %v7167
        %v7409 = vunpack.c.l.bf16 %v7168
        %v7410 = vunpack.c.h.bf16 %v7168
        %v7411 = vunpack.c.l.bf16 %v7169
        %v7412 = vunpack.c.h.bf16 %v7169
        %v7413 = vunpack.c.l.bf16 %v7170
        %v7414 = vunpack.c.h.bf16 %v7170
        %v7415 = vunpack.c.l.bf16 %v7171
        %v7416 = vunpack.c.h.bf16 %v7171
        %v7417 = vunpack.c.l.bf16 %v7172
        %v7418 = vunpack.c.h.bf16 %v7172
        %v7419 = vunpack.c.l.bf16 %v7173
        %v7420 = vunpack.c.h.bf16 %v7173
        %v7421 = vunpack.c.l.bf16 %v7174
        %v7422 = vunpack.c.h.bf16 %v7174
        %v7423 = vunpack.c.l.bf16 %v7175
        %v7424 = vunpack.c.h.bf16 %v7175
        %v7425 = vunpack.c.l.bf16 %v7176
        %v7426 = vunpack.c.h.bf16 %v7176
        %v7427 = vunpack.c.l.bf16 %v7177
        %v7428 = vunpack.c.h.bf16 %v7177
        %v7429 = vunpack.c.l.bf16 %v7178
        %v7430 = vunpack.c.h.bf16 %v7178
        %v7431 = vunpack.c.l.bf16 %v7179
        %v7432 = vunpack.c.h.bf16 %v7179
        %v7433 = vunpack.c.l.bf16 %v7180
        %v7434 = vunpack.c.h.bf16 %v7180
        %v7435 = vunpack.c.l.bf16 %v7181
        %v7436 = vunpack.c.h.bf16 %v7181
        %v7437 = vunpack.c.l.bf16 %v7182
        %v7438 = vunpack.c.h.bf16 %v7182
        %v7439 = vmul.f32 %v7183, %v7311
        %v7440 = vmul.f32 %v7184, %v7312
        %v7441 = vmul.f32 %v7185, %v7313
        %v7442 = vmul.f32 %v7186, %v7314
        %v7443 = vmul.f32 %v7187, %v7315
        %v7444 = vmul.f32 %v7188, %v7316
        %v7445 = vmul.f32 %v7189, %v7317
        %v7446 = vmul.f32 %v7190, %v7318
        %v7447 = vmul.f32 %v7191, %v7319
        %v7448 = vmul.f32 %v7192, %v7320
        %v7449 = vmul.f32 %v7193, %v7321
        %v7450 = vmul.f32 %v7194, %v7322
        %v7451 = vmul.f32 %v7195, %v7323
        %v7452 = vmul.f32 %v7196, %v7324
        %v7453 = vmul.f32 %v7197, %v7325
        %v7454 = vmul.f32 %v7198, %v7326
        %v7455 = vmul.f32 %v7199, %v7327
        %v7456 = vmul.f32 %v7200, %v7328
        %v7457 = vmul.f32 %v7201, %v7329
        %v7458 = vmul.f32 %v7202, %v7330
        %v7459 = vmul.f32 %v7203, %v7331
        %v7460 = vmul.f32 %v7204, %v7332
        %v7461 = vmul.f32 %v7205, %v7333
        %v7462 = vmul.f32 %v7206, %v7334
        %v7463 = vmul.f32 %v7207, %v7335
        %v7464 = vmul.f32 %v7208, %v7336
        %v7465 = vmul.f32 %v7209, %v7337
        %v7466 = vmul.f32 %v7210, %v7338
        %v7467 = vmul.f32 %v7211, %v7339
        %v7468 = vmul.f32 %v7212, %v7340
        %v7469 = vmul.f32 %v7213, %v7341
        %v7470 = vmul.f32 %v7214, %v7342
        %v7471 = vmul.f32 %v7215, %v7343
        %v7472 = vmul.f32 %v7216, %v7344
        %v7473 = vmul.f32 %v7217, %v7345
        %v7474 = vmul.f32 %v7218, %v7346
        %v7475 = vmul.f32 %v7219, %v7347
        %v7476 = vmul.f32 %v7220, %v7348
        %v7477 = vmul.f32 %v7221, %v7349
        %v7478 = vmul.f32 %v7222, %v7350
        %v7479 = vmul.f32 %v7223, %v7351
        %v7480 = vmul.f32 %v7224, %v7352
        %v7481 = vmul.f32 %v7225, %v7353
        %v7482 = vmul.f32 %v7226, %v7354
        %v7483 = vmul.f32 %v7227, %v7355
        %v7484 = vmul.f32 %v7228, %v7356
        %v7485 = vmul.f32 %v7229, %v7357
        %v7486 = vmul.f32 %v7230, %v7358
        %v7487 = vmul.f32 %v7231, %v7359
        %v7488 = vmul.f32 %v7232, %v7360
        %v7489 = vmul.f32 %v7233, %v7361
        %v7490 = vmul.f32 %v7234, %v7362
        %v7491 = vmul.f32 %v7235, %v7363
        %v7492 = vmul.f32 %v7236, %v7364
        %v7493 = vmul.f32 %v7237, %v7365
        %v7494 = vmul.f32 %v7238, %v7366
        %v7495 = vmul.f32 %v7239, %v7367
        %v7496 = vmul.f32 %v7240, %v7368
        %v7497 = vmul.f32 %v7241, %v7369
        %v7498 = vmul.f32 %v7242, %v7370
        %v7499 = vmul.f32 %v7243, %v7371
        %v7500 = vmul.f32 %v7244, %v7372
        %v7501 = vmul.f32 %v7245, %v7373
        %v7502 = vmul.f32 %v7246, %v7374
        %v7503 = vmul.f32 %v7247, %v7375
        %v7504 = vmul.f32 %v7248, %v7376
        %v7505 = vmul.f32 %v7249, %v7377
        %v7506 = vmul.f32 %v7250, %v7378
        %v7507 = vmul.f32 %v7251, %v7379
        %v7508 = vmul.f32 %v7252, %v7380
        %v7509 = vmul.f32 %v7253, %v7381
        %v7510 = vmul.f32 %v7254, %v7382
        %v7511 = vmul.f32 %v7255, %v7383
        %v7512 = vmul.f32 %v7256, %v7384
        %v7513 = vmul.f32 %v7257, %v7385
        %v7514 = vmul.f32 %v7258, %v7386
        %v7515 = vmul.f32 %v7259, %v7387
        %v7516 = vmul.f32 %v7260, %v7388
        %v7517 = vmul.f32 %v7261, %v7389
        %v7518 = vmul.f32 %v7262, %v7390
        %v7519 = vmul.f32 %v7263, %v7391
        %v7520 = vmul.f32 %v7264, %v7392
        %v7521 = vmul.f32 %v7265, %v7393
        %v7522 = vmul.f32 %v7266, %v7394
        %v7523 = vmul.f32 %v7267, %v7395
        %v7524 = vmul.f32 %v7268, %v7396
        %v7525 = vmul.f32 %v7269, %v7397
        %v7526 = vmul.f32 %v7270, %v7398
        %v7527 = vmul.f32 %v7271, %v7399
        %v7528 = vmul.f32 %v7272, %v7400
        %v7529 = vmul.f32 %v7273, %v7401
        %v7530 = vmul.f32 %v7274, %v7402
        %v7531 = vmul.f32 %v7275, %v7403
        %v7532 = vmul.f32 %v7276, %v7404
        %v7533 = vmul.f32 %v7277, %v7405
        %v7534 = vmul.f32 %v7278, %v7406
        %v7535 = vmul.f32 %v7279, %v7407
        %v7536 = vmul.f32 %v7280, %v7408
        %v7537 = vmul.f32 %v7281, %v7409
        %v7538 = vmul.f32 %v7282, %v7410
        %v7539 = vmul.f32 %v7283, %v7411
        %v7540 = vmul.f32 %v7284, %v7412
        %v7541 = vmul.f32 %v7285, %v7413
        %v7542 = vmul.f32 %v7286, %v7414
        %v7543 = vmul.f32 %v7287, %v7415
        %v7544 = vmul.f32 %v7288, %v7416
        %v7545 = vmul.f32 %v7289, %v7417
        %v7546 = vmul.f32 %v7290, %v7418
        %v7547 = vmul.f32 %v7291, %v7419
        %v7548 = vmul.f32 %v7292, %v7420
        %v7549 = vmul.f32 %v7293, %v7421
        %v7550 = vmul.f32 %v7294, %v7422
        %v7551 = vmul.f32 %v7295, %v7423
        %v7552 = vmul.f32 %v7296, %v7424
        %v7553 = vmul.f32 %v7297, %v7425
        %v7554 = vmul.f32 %v7298, %v7426
        %v7555 = vmul.f32 %v7299, %v7427
        %v7556 = vmul.f32 %v7300, %v7428
        %v7557 = vmul.f32 %v7301, %v7429
        %v7558 = vmul.f32 %v7302, %v7430
        %v7559 = vmul.f32 %v7303, %v7431
        %v7560 = vmul.f32 %v7304, %v7432
        %v7561 = vmul.f32 %v7305, %v7433
        %v7562 = vmul.f32 %v7306, %v7434
        %v7563 = vmul.f32 %v7307, %v7435
        %v7564 = vmul.f32 %v7308, %v7436
        %v7565 = vmul.f32 %v7309, %v7437
        %v7566 = vmul.f32 %v7310, %v7438
        %v7567 = vpack.c.bf16 %v7443, %v7439
        %v7568 = vpack.c.bf16 %v7444, %v7440
        %v7569 = vpack.c.bf16 %v7445, %v7441
        %v7570 = vpack.c.bf16 %v7446, %v7442
        %v7571 = vpack.c.bf16 %v7451, %v7447
        %v7572 = vpack.c.bf16 %v7452, %v7448
        %v7573 = vpack.c.bf16 %v7453, %v7449
        %v7574 = vpack.c.bf16 %v7454, %v7450
        %v7575 = vpack.c.bf16 %v7459, %v7455
        %v7576 = vpack.c.bf16 %v7460, %v7456
        %v7577 = vpack.c.bf16 %v7461, %v7457
        %v7578 = vpack.c.bf16 %v7462, %v7458
        %v7579 = vpack.c.bf16 %v7467, %v7463
        %v7580 = vpack.c.bf16 %v7468, %v7464
        %v7581 = vpack.c.bf16 %v7469, %v7465
        %v7582 = vpack.c.bf16 %v7470, %v7466
        %v7583 = vpack.c.bf16 %v7475, %v7471
        %v7584 = vpack.c.bf16 %v7476, %v7472
        %v7585 = vpack.c.bf16 %v7477, %v7473
        %v7586 = vpack.c.bf16 %v7478, %v7474
        %v7587 = vpack.c.bf16 %v7483, %v7479
        %v7588 = vpack.c.bf16 %v7484, %v7480
        %v7589 = vpack.c.bf16 %v7485, %v7481
        %v7590 = vpack.c.bf16 %v7486, %v7482
        %v7591 = vpack.c.bf16 %v7491, %v7487
        %v7592 = vpack.c.bf16 %v7492, %v7488
        %v7593 = vpack.c.bf16 %v7493, %v7489
        %v7594 = vpack.c.bf16 %v7494, %v7490
        %v7595 = vpack.c.bf16 %v7499, %v7495
        %v7596 = vpack.c.bf16 %v7500, %v7496
        %v7597 = vpack.c.bf16 %v7501, %v7497
        %v7598 = vpack.c.bf16 %v7502, %v7498
        %v7599 = vpack.c.bf16 %v7507, %v7503
        %v7600 = vpack.c.bf16 %v7508, %v7504
        %v7601 = vpack.c.bf16 %v7509, %v7505
        %v7602 = vpack.c.bf16 %v7510, %v7506
        %v7603 = vpack.c.bf16 %v7515, %v7511
        %v7604 = vpack.c.bf16 %v7516, %v7512
        %v7605 = vpack.c.bf16 %v7517, %v7513
        %v7606 = vpack.c.bf16 %v7518, %v7514
        %v7607 = vpack.c.bf16 %v7523, %v7519
        %v7608 = vpack.c.bf16 %v7524, %v7520
        %v7609 = vpack.c.bf16 %v7525, %v7521
        %v7610 = vpack.c.bf16 %v7526, %v7522
        %v7611 = vpack.c.bf16 %v7531, %v7527
        %v7612 = vpack.c.bf16 %v7532, %v7528
        %v7613 = vpack.c.bf16 %v7533, %v7529
        %v7614 = vpack.c.bf16 %v7534, %v7530
        %v7615 = vpack.c.bf16 %v7539, %v7535
        %v7616 = vpack.c.bf16 %v7540, %v7536
        %v7617 = vpack.c.bf16 %v7541, %v7537
        %v7618 = vpack.c.bf16 %v7542, %v7538
        %v7619 = vpack.c.bf16 %v7547, %v7543
        %v7620 = vpack.c.bf16 %v7548, %v7544
        %v7621 = vpack.c.bf16 %v7549, %v7545
        %v7622 = vpack.c.bf16 %v7550, %v7546
        %v7623 = vpack.c.bf16 %v7555, %v7551
        %v7624 = vpack.c.bf16 %v7556, %v7552
        %v7625 = vpack.c.bf16 %v7557, %v7553
        %v7626 = vpack.c.bf16 %v7558, %v7554
        %v7627 = vpack.c.bf16 %v7563, %v7559
        %v7628 = vpack.c.bf16 %v7564, %v7560
        %v7629 = vpack.c.bf16 %v7565, %v7561
        %v7630 = vpack.c.bf16 %v7566, %v7562
        %v7631 = vld [vmem:[#allocation2] sm:$0xff]
        %v7632 = vld [vmem:[#allocation2 + $0x8] sm:$0xff]
        %v7633 = vld [vmem:[#allocation2 + $0x10] sm:$0xff]
        %v7634 = vld [vmem:[#allocation2 + $0x18] sm:$0xff]
        %v7635 = vld [vmem:[#allocation2 + $0x20] sm:$0xff]
        %v7636 = vld [vmem:[#allocation2 + $0x28] sm:$0xff]
        %v7637 = vld [vmem:[#allocation2 + $0x30] sm:$0xff]
        %v7638 = vld [vmem:[#allocation2 + $0x38] sm:$0xff]
        %v7639 = vld [vmem:[#allocation2 + $0x40] sm:$0xff]
        %v7640 = vld [vmem:[#allocation2 + $0x48] sm:$0xff]
        %v7641 = vld [vmem:[#allocation2 + $0x50] sm:$0xff]
        %v7642 = vld [vmem:[#allocation2 + $0x58] sm:$0xff]
        %v7643 = vld [vmem:[#allocation2 + $0x60] sm:$0xff]
        %v7644 = vld [vmem:[#allocation2 + $0x68] sm:$0xff]
        %v7645 = vld [vmem:[#allocation2 + $0x70] sm:$0xff]
        %v7646 = vld [vmem:[#allocation2 + $0x78] sm:$0xff]
        %v7647 = vld [vmem:[#allocation2 + $0x80] sm:$0xff]
        %v7648 = vld [vmem:[#allocation2 + $0x88] sm:$0xff]
        %v7649 = vld [vmem:[#allocation2 + $0x90] sm:$0xff]
        %v7650 = vld [vmem:[#allocation2 + $0x98] sm:$0xff]
        %v7651 = vld [vmem:[#allocation2 + $0xa0] sm:$0xff]
        %v7652 = vld [vmem:[#allocation2 + $0xa8] sm:$0xff]
        %v7653 = vld [vmem:[#allocation2 + $0xb0] sm:$0xff]
        %v7654 = vld [vmem:[#allocation2 + $0xb8] sm:$0xff]
        %v7655 = vld [vmem:[#allocation2 + $0xc0] sm:$0xff]
        %v7656 = vld [vmem:[#allocation2 + $0xc8] sm:$0xff]
        %v7657 = vld [vmem:[#allocation2 + $0xd0] sm:$0xff]
        %v7658 = vld [vmem:[#allocation2 + $0xd8] sm:$0xff]
        %v7659 = vld [vmem:[#allocation2 + $0xe0] sm:$0xff]
        %v7660 = vld [vmem:[#allocation2 + $0xe8] sm:$0xff]
        %v7661 = vld [vmem:[#allocation2 + $0xf0] sm:$0xff]
        %v7662 = vld [vmem:[#allocation2 + $0xf8] sm:$0xff]
        %v7663 = vld [vmem:[#allocation9] sm:$0xf]
        %v7664 = vld [vmem:[#allocation9 + $0x4] sm:$0xf]
        %v7665 = vld [vmem:[#allocation9 + $0x8] sm:$0xf]
        %v7666 = vld [vmem:[#allocation9 + $0xc] sm:$0xf]
        %v7667 = vld [vmem:[#allocation9 + $0x10] sm:$0xf]
        %v7668 = vld [vmem:[#allocation9 + $0x14] sm:$0xf]
        %v7669 = vld [vmem:[#allocation9 + $0x18] sm:$0xf]
        %v7670 = vld [vmem:[#allocation9 + $0x1c] sm:$0xf]
        %v7671 = vld [vmem:[#allocation9 + $0x20] sm:$0xf]
        %v7672 = vld [vmem:[#allocation9 + $0x24] sm:$0xf]
        %v7673 = vld [vmem:[#allocation9 + $0x28] sm:$0xf]
        %v7674 = vld [vmem:[#allocation9 + $0x2c] sm:$0xf]
        %v7675 = vld [vmem:[#allocation9 + $0x30] sm:$0xf]
        %v7676 = vld [vmem:[#allocation9 + $0x34] sm:$0xf]
        %v7677 = vld [vmem:[#allocation9 + $0x38] sm:$0xf]
        %v7678 = vld [vmem:[#allocation9 + $0x3c] sm:$0xf]
        %v7679 = vld [vmem:[#allocation9 + $0x40] sm:$0xf]
        %v7680 = vld [vmem:[#allocation9 + $0x44] sm:$0xf]
        %v7681 = vld [vmem:[#allocation9 + $0x48] sm:$0xf]
        %v7682 = vld [vmem:[#allocation9 + $0x4c] sm:$0xf]
        %v7683 = vld [vmem:[#allocation9 + $0x50] sm:$0xf]
        %v7684 = vld [vmem:[#allocation9 + $0x54] sm:$0xf]
        %v7685 = vld [vmem:[#allocation9 + $0x58] sm:$0xf]
        %v7686 = vld [vmem:[#allocation9 + $0x5c] sm:$0xf]
        %v7687 = vld [vmem:[#allocation9 + $0x60] sm:$0xf]
        %v7688 = vld [vmem:[#allocation9 + $0x64] sm:$0xf]
        %v7689 = vld [vmem:[#allocation9 + $0x68] sm:$0xf]
        %v7690 = vld [vmem:[#allocation9 + $0x6c] sm:$0xf]
        %v7691 = vld [vmem:[#allocation9 + $0x70] sm:$0xf]
        %v7692 = vld [vmem:[#allocation9 + $0x74] sm:$0xf]
        %v7693 = vld [vmem:[#allocation9 + $0x78] sm:$0xf]
        %v7694 = vld [vmem:[#allocation9 + $0x7c] sm:$0xf]
        %v7695 = vld [vmem:[#allocation9 + $0x80] sm:$0xf]
        %v7696 = vld [vmem:[#allocation9 + $0x84] sm:$0xf]
        %v7697 = vld [vmem:[#allocation9 + $0x88] sm:$0xf]
        %v7698 = vld [vmem:[#allocation9 + $0x8c] sm:$0xf]
        %v7699 = vld [vmem:[#allocation9 + $0x90] sm:$0xf]
        %v7700 = vld [vmem:[#allocation9 + $0x94] sm:$0xf]
        %v7701 = vld [vmem:[#allocation9 + $0x98] sm:$0xf]
        %v7702 = vld [vmem:[#allocation9 + $0x9c] sm:$0xf]
        %v7703 = vld [vmem:[#allocation9 + $0xa0] sm:$0xf]
        %v7704 = vld [vmem:[#allocation9 + $0xa4] sm:$0xf]
        %v7705 = vld [vmem:[#allocation9 + $0xa8] sm:$0xf]
        %v7706 = vld [vmem:[#allocation9 + $0xac] sm:$0xf]
        %v7707 = vld [vmem:[#allocation9 + $0xb0] sm:$0xf]
        %v7708 = vld [vmem:[#allocation9 + $0xb4] sm:$0xf]
        %v7709 = vld [vmem:[#allocation9 + $0xb8] sm:$0xf]
        %v7710 = vld [vmem:[#allocation9 + $0xbc] sm:$0xf]
        %v7711 = vld [vmem:[#allocation9 + $0xc0] sm:$0xf]
        %v7712 = vld [vmem:[#allocation9 + $0xc4] sm:$0xf]
        %v7713 = vld [vmem:[#allocation9 + $0xc8] sm:$0xf]
        %v7714 = vld [vmem:[#allocation9 + $0xcc] sm:$0xf]
        %v7715 = vld [vmem:[#allocation9 + $0xd0] sm:$0xf]
        %v7716 = vld [vmem:[#allocation9 + $0xd4] sm:$0xf]
        %v7717 = vld [vmem:[#allocation9 + $0xd8] sm:$0xf]
        %v7718 = vld [vmem:[#allocation9 + $0xdc] sm:$0xf]
        %v7719 = vld [vmem:[#allocation9 + $0xe0] sm:$0xf]
        %v7720 = vld [vmem:[#allocation9 + $0xe4] sm:$0xf]
        %v7721 = vld [vmem:[#allocation9 + $0xe8] sm:$0xf]
        %v7722 = vld [vmem:[#allocation9 + $0xec] sm:$0xf]
        %v7723 = vld [vmem:[#allocation9 + $0xf0] sm:$0xf]
        %v7724 = vld [vmem:[#allocation9 + $0xf4] sm:$0xf]
        %v7725 = vld [vmem:[#allocation9 + $0xf8] sm:$0xf]
        %v7726 = vld [vmem:[#allocation9 + $0xfc] sm:$0xf]
        %v7791 = vunpack.c.l.b16 %v7663
        %v7792 = vunpack.c.l.b16 %v7664
        %v7793 = vunpack.c.l.b16 %v7665
        %v7794 = vunpack.c.l.b16 %v7666
        %v7795 = vunpack.c.l.b16 %v7667
        %v7796 = vunpack.c.l.b16 %v7668
        %v7797 = vunpack.c.l.b16 %v7669
        %v7798 = vunpack.c.l.b16 %v7670
        %v7799 = vunpack.c.l.b16 %v7671
        %v7800 = vunpack.c.l.b16 %v7672
        %v7801 = vunpack.c.l.b16 %v7673
        %v7802 = vunpack.c.l.b16 %v7674
        %v7803 = vunpack.c.l.b16 %v7675
        %v7804 = vunpack.c.l.b16 %v7676
        %v7805 = vunpack.c.l.b16 %v7677
        %v7806 = vunpack.c.l.b16 %v7678
        %v7807 = vunpack.c.l.b16 %v7679
        %v7808 = vunpack.c.l.b16 %v7680
        %v7809 = vunpack.c.l.b16 %v7681
        %v7810 = vunpack.c.l.b16 %v7682
        %v7811 = vunpack.c.l.b16 %v7683
        %v7812 = vunpack.c.l.b16 %v7684
        %v7813 = vunpack.c.l.b16 %v7685
        %v7814 = vunpack.c.l.b16 %v7686
        %v7815 = vunpack.c.l.b16 %v7687
        %v7816 = vunpack.c.l.b16 %v7688
        %v7817 = vunpack.c.l.b16 %v7689
        %v7818 = vunpack.c.l.b16 %v7690
        %v7819 = vunpack.c.l.b16 %v7691
        %v7820 = vunpack.c.l.b16 %v7692
        %v7821 = vunpack.c.l.b16 %v7693
        %v7822 = vunpack.c.l.b16 %v7694
        %v7823 = vunpack.c.l.b16 %v7695
        %v7824 = vunpack.c.l.b16 %v7696
        %v7825 = vunpack.c.l.b16 %v7697
        %v7826 = vunpack.c.l.b16 %v7698
        %v7827 = vunpack.c.l.b16 %v7699
        %v7828 = vunpack.c.l.b16 %v7700
        %v7829 = vunpack.c.l.b16 %v7701
        %v7830 = vunpack.c.l.b16 %v7702
        %v7831 = vunpack.c.l.b16 %v7703
        %v7832 = vunpack.c.l.b16 %v7704
        %v7833 = vunpack.c.l.b16 %v7705
        %v7834 = vunpack.c.l.b16 %v7706
        %v7835 = vunpack.c.l.b16 %v7707
        %v7836 = vunpack.c.l.b16 %v7708
        %v7837 = vunpack.c.l.b16 %v7709
        %v7838 = vunpack.c.l.b16 %v7710
        %v7839 = vunpack.c.l.b16 %v7711
        %v7840 = vunpack.c.l.b16 %v7712
        %v7841 = vunpack.c.l.b16 %v7713
        %v7842 = vunpack.c.l.b16 %v7714
        %v7843 = vunpack.c.l.b16 %v7715
        %v7844 = vunpack.c.l.b16 %v7716
        %v7845 = vunpack.c.l.b16 %v7717
        %v7846 = vunpack.c.l.b16 %v7718
        %v7847 = vunpack.c.l.b16 %v7719
        %v7848 = vunpack.c.l.b16 %v7720
        %v7849 = vunpack.c.l.b16 %v7721
        %v7850 = vunpack.c.l.b16 %v7722
        %v7851 = vunpack.c.l.b16 %v7723
        %v7852 = vunpack.c.l.b16 %v7724
        %v7853 = vunpack.c.l.b16 %v7725
        %v7854 = vunpack.c.l.b16 %v7726
        %v7855 = vpack.c.b16 %v7792, %v7791
        %v7856 = vpack.c.b16 %v7794, %v7793
        %v7857 = vpack.c.b16 %v7796, %v7795
        %v7858 = vpack.c.b16 %v7798, %v7797
        %v7859 = vpack.c.b16 %v7800, %v7799
        %v7860 = vpack.c.b16 %v7802, %v7801
        %v7861 = vpack.c.b16 %v7804, %v7803
        %v7862 = vpack.c.b16 %v7806, %v7805
        %v7863 = vpack.c.b16 %v7808, %v7807
        %v7864 = vpack.c.b16 %v7810, %v7809
        %v7865 = vpack.c.b16 %v7812, %v7811
        %v7866 = vpack.c.b16 %v7814, %v7813
        %v7867 = vpack.c.b16 %v7816, %v7815
        %v7868 = vpack.c.b16 %v7818, %v7817
        %v7869 = vpack.c.b16 %v7820, %v7819
        %v7870 = vpack.c.b16 %v7822, %v7821
        %v7871 = vpack.c.b16 %v7824, %v7823
        %v7872 = vpack.c.b16 %v7826, %v7825
        %v7873 = vpack.c.b16 %v7828, %v7827
        %v7874 = vpack.c.b16 %v7830, %v7829
        %v7875 = vpack.c.b16 %v7832, %v7831
        %v7876 = vpack.c.b16 %v7834, %v7833
        %v7877 = vpack.c.b16 %v7836, %v7835
        %v7878 = vpack.c.b16 %v7838, %v7837
        %v7879 = vpack.c.b16 %v7840, %v7839
        %v7880 = vpack.c.b16 %v7842, %v7841
        %v7881 = vpack.c.b16 %v7844, %v7843
        %v7882 = vpack.c.b16 %v7846, %v7845
        %v7883 = vpack.c.b16 %v7848, %v7847
        %v7884 = vpack.c.b16 %v7850, %v7849
        %v7885 = vpack.c.b16 %v7852, %v7851
        %v7886 = vpack.c.b16 %v7854, %v7853
        %7919 = vmatpush.bf16.msra.mxu0 %v7862
        %7920 = vmatpush.bf16.msra.mxu0 %v7861
        %7921 = vmatpush.bf16.msra.mxu0 %v7860
        %7922 = vmatpush.bf16.msra.mxu0 %v7859
        %7923 = vmatpush.bf16.msra.mxu0 %v7858
        %7924 = vmatpush.bf16.msra.mxu0 %v7857
        %7925 = vmatpush.bf16.msra.mxu0 %v7856
        %7926 = vmatpush.bf16.msra.mxu0 %v7855
        %7927 = vmatmul.bf16.gmra.mxu0 %v7567
        %v7928 = vpop.f32.mrf.mxu0
        %v7929 = vadd.f32 0.0, %v7928
        %v7930 = vpop.f32.mrf.mxu0
        %v7931 = vadd.f32 0.0, %v7930
        %7932 = vmatmul.bf16.gmra.mxu0 %v7571
        %v7933 = vpop.f32.mrf.mxu0
        %v7934 = vadd.f32 0.0, %v7933
        %v7935 = vpop.f32.mrf.mxu0
        %v7936 = vadd.f32 0.0, %v7935
        %7937 = vmatmul.bf16.gmra.mxu0 %v7575
        %v7938 = vpop.f32.mrf.mxu0
        %v7939 = vadd.f32 0.0, %v7938
        %v7940 = vpop.f32.mrf.mxu0
        %v7941 = vadd.f32 0.0, %v7940
        %7942 = vmatmul.bf16.gmra.mxu0 %v7579
        %v7943 = vpop.f32.mrf.mxu0
        %v7944 = vadd.f32 0.0, %v7943
        %v7945 = vpop.f32.mrf.mxu0
        %v7946 = vadd.f32 0.0, %v7945
        %7947 = vmatmul.bf16.gmra.mxu0 %v7583
        %v7948 = vpop.f32.mrf.mxu0
        %v7949 = vadd.f32 0.0, %v7948
        %v7950 = vpop.f32.mrf.mxu0
        %v7951 = vadd.f32 0.0, %v7950
        %7952 = vmatmul.bf16.gmra.mxu0 %v7587
        %v7953 = vpop.f32.mrf.mxu0
        %v7954 = vadd.f32 0.0, %v7953
        %v7955 = vpop.f32.mrf.mxu0
        %v7956 = vadd.f32 0.0, %v7955
        %7957 = vmatmul.bf16.gmra.mxu0 %v7591
        %v7958 = vpop.f32.mrf.mxu0
        %v7959 = vadd.f32 0.0, %v7958
        %v7960 = vpop.f32.mrf.mxu0
        %v7961 = vadd.f32 0.0, %v7960
        %7962 = vmatmul.bf16.gmra.mxu0 %v7595
        %v7963 = vpop.f32.mrf.mxu0
        %v7964 = vadd.f32 0.0, %v7963
        %v7965 = vpop.f32.mrf.mxu0
        %v7966 = vadd.f32 0.0, %v7965
        %7967 = vmatmul.bf16.gmra.mxu0 %v7599
        %v7968 = vpop.f32.mrf.mxu0
        %v7969 = vadd.f32 0.0, %v7968
        %v7970 = vpop.f32.mrf.mxu0
        %v7971 = vadd.f32 0.0, %v7970
        %7972 = vmatmul.bf16.gmra.mxu0 %v7603
        %v7973 = vpop.f32.mrf.mxu0
        %v7974 = vadd.f32 0.0, %v7973
        %v7975 = vpop.f32.mrf.mxu0
        %v7976 = vadd.f32 0.0, %v7975
        %7977 = vmatmul.bf16.gmra.mxu0 %v7607
        %v7978 = vpop.f32.mrf.mxu0
        %v7979 = vadd.f32 0.0, %v7978
        %v7980 = vpop.f32.mrf.mxu0
        %v7981 = vadd.f32 0.0, %v7980
        %7982 = vmatmul.bf16.gmra.mxu0 %v7611
        %v7983 = vpop.f32.mrf.mxu0
        %v7984 = vadd.f32 0.0, %v7983
        %v7985 = vpop.f32.mrf.mxu0
        %v7986 = vadd.f32 0.0, %v7985
        %7987 = vmatmul.bf16.gmra.mxu0 %v7615
        %v7988 = vpop.f32.mrf.mxu0
        %v7989 = vadd.f32 0.0, %v7988
        %v7990 = vpop.f32.mrf.mxu0
        %v7991 = vadd.f32 0.0, %v7990
        %7992 = vmatmul.bf16.gmra.mxu0 %v7619
        %v7993 = vpop.f32.mrf.mxu0
        %v7994 = vadd.f32 0.0, %v7993
        %v7995 = vpop.f32.mrf.mxu0
        %v7996 = vadd.f32 0.0, %v7995
        %7997 = vmatmul.bf16.gmra.mxu0 %v7623
        %v7998 = vpop.f32.mrf.mxu0
        %v7999 = vadd.f32 0.0, %v7998
        %v8000 = vpop.f32.mrf.mxu0
        %v8001 = vadd.f32 0.0, %v8000
        %8002 = vmatmul.bf16.gmra.mxu0 %v7627
        %v8003 = vpop.f32.mrf.mxu0
        %v8004 = vadd.f32 0.0, %v8003
        %v8005 = vpop.f32.mrf.mxu0
        %v8006 = vadd.f32 0.0, %v8005
        %8007 = vdwg.mxu0
        %8008 = vmatpush.bf16.msra.mxu0 %v7870
        %8009 = vmatpush.bf16.msra.mxu0 %v7869
        %8010 = vmatpush.bf16.msra.mxu0 %v7868
        %8011 = vmatpush.bf16.msra.mxu0 %v7867
        %8012 = vmatpush.bf16.msra.mxu0 %v7866
        %8013 = vmatpush.bf16.msra.mxu0 %v7865
        %8014 = vmatpush.bf16.msra.mxu0 %v7864
        %8015 = vmatpush.bf16.msra.mxu0 %v7863
        %8016 = vmatmul.bf16.gmra.mxu0 %v7568
        %v8017 = vpop.f32.mrf.mxu0
        %v8018 = vadd.f32 %v7929, %v8017
        %v8019 = vpop.f32.mrf.mxu0
        %v8020 = vadd.f32 %v7931, %v8019
        %8021 = vmatmul.bf16.gmra.mxu0 %v7572
        %v8022 = vpop.f32.mrf.mxu0
        %v8023 = vadd.f32 %v7934, %v8022
        %v8024 = vpop.f32.mrf.mxu0
        %v8025 = vadd.f32 %v7936, %v8024
        %8026 = vmatmul.bf16.gmra.mxu0 %v7576
        %v8027 = vpop.f32.mrf.mxu0
        %v8028 = vadd.f32 %v7939, %v8027
        %v8029 = vpop.f32.mrf.mxu0
        %v8030 = vadd.f32 %v7941, %v8029
        %8031 = vmatmul.bf16.gmra.mxu0 %v7580
        %v8032 = vpop.f32.mrf.mxu0
        %v8033 = vadd.f32 %v7944, %v8032
        %v8034 = vpop.f32.mrf.mxu0
        %v8035 = vadd.f32 %v7946, %v8034
        %8036 = vmatmul.bf16.gmra.mxu0 %v7584
        %v8037 = vpop.f32.mrf.mxu0
        %v8038 = vadd.f32 %v7949, %v8037
        %v8039 = vpop.f32.mrf.mxu0
        %v8040 = vadd.f32 %v7951, %v8039
        %8041 = vmatmul.bf16.gmra.mxu0 %v7588
        %v8042 = vpop.f32.mrf.mxu0
        %v8043 = vadd.f32 %v7954, %v8042
        %v8044 = vpop.f32.mrf.mxu0
        %v8045 = vadd.f32 %v7956, %v8044
        %8046 = vmatmul.bf16.gmra.mxu0 %v7592
        %v8047 = vpop.f32.mrf.mxu0
        %v8048 = vadd.f32 %v7959, %v8047
        %v8049 = vpop.f32.mrf.mxu0
        %v8050 = vadd.f32 %v7961, %v8049
        %8051 = vmatmul.bf16.gmra.mxu0 %v7596
        %v8052 = vpop.f32.mrf.mxu0
        %v8053 = vadd.f32 %v7964, %v8052
        %v8054 = vpop.f32.mrf.mxu0
        %v8055 = vadd.f32 %v7966, %v8054
        %8056 = vmatmul.bf16.gmra.mxu0 %v7600
        %v8057 = vpop.f32.mrf.mxu0
        %v8058 = vadd.f32 %v7969, %v8057
        %v8059 = vpop.f32.mrf.mxu0
        %v8060 = vadd.f32 %v7971, %v8059
        %8061 = vmatmul.bf16.gmra.mxu0 %v7604
        %v8062 = vpop.f32.mrf.mxu0
        %v8063 = vadd.f32 %v7974, %v8062
        %v8064 = vpop.f32.mrf.mxu0
        %v8065 = vadd.f32 %v7976, %v8064
        %8066 = vmatmul.bf16.gmra.mxu0 %v7608
        %v8067 = vpop.f32.mrf.mxu0
        %v8068 = vadd.f32 %v7979, %v8067
        %v8069 = vpop.f32.mrf.mxu0
        %v8070 = vadd.f32 %v7981, %v8069
        %8071 = vmatmul.bf16.gmra.mxu0 %v7612
        %v8072 = vpop.f32.mrf.mxu0
        %v8073 = vadd.f32 %v7984, %v8072
        %v8074 = vpop.f32.mrf.mxu0
        %v8075 = vadd.f32 %v7986, %v8074
        %8076 = vmatmul.bf16.gmra.mxu0 %v7616
        %v8077 = vpop.f32.mrf.mxu0
        %v8078 = vadd.f32 %v7989, %v8077
        %v8079 = vpop.f32.mrf.mxu0
        %v8080 = vadd.f32 %v7991, %v8079
        %8081 = vmatmul.bf16.gmra.mxu0 %v7620
        %v8082 = vpop.f32.mrf.mxu0
        %v8083 = vadd.f32 %v7994, %v8082
        %v8084 = vpop.f32.mrf.mxu0
        %v8085 = vadd.f32 %v7996, %v8084
        %8086 = vmatmul.bf16.gmra.mxu0 %v7624
        %v8087 = vpop.f32.mrf.mxu0
        %v8088 = vadd.f32 %v7999, %v8087
        %v8089 = vpop.f32.mrf.mxu0
        %v8090 = vadd.f32 %v8001, %v8089
        %8091 = vmatmul.bf16.gmra.mxu0 %v7628
        %v8092 = vpop.f32.mrf.mxu0
        %v8093 = vadd.f32 %v8004, %v8092
        %v8094 = vpop.f32.mrf.mxu0
        %v8095 = vadd.f32 %v8006, %v8094
        %8096 = vdwg.mxu0
        %8097 = vmatpush.bf16.msra.mxu0 %v7878
        %8098 = vmatpush.bf16.msra.mxu0 %v7877
        %8099 = vmatpush.bf16.msra.mxu0 %v7876
        %8100 = vmatpush.bf16.msra.mxu0 %v7875
        %8101 = vmatpush.bf16.msra.mxu0 %v7874
        %8102 = vmatpush.bf16.msra.mxu0 %v7873
        %8103 = vmatpush.bf16.msra.mxu0 %v7872
        %8104 = vmatpush.bf16.msra.mxu0 %v7871
        %8105 = vmatmul.bf16.gmra.mxu0 %v7569
        %v8106 = vpop.f32.mrf.mxu0
        %v8107 = vadd.f32 %v8018, %v8106
        %v8108 = vpop.f32.mrf.mxu0
        %v8109 = vadd.f32 %v8020, %v8108
        %8110 = vmatmul.bf16.gmra.mxu0 %v7573
        %v8111 = vpop.f32.mrf.mxu0
        %v8112 = vadd.f32 %v8023, %v8111
        %v8113 = vpop.f32.mrf.mxu0
        %v8114 = vadd.f32 %v8025, %v8113
        %8115 = vmatmul.bf16.gmra.mxu0 %v7577
        %v8116 = vpop.f32.mrf.mxu0
        %v8117 = vadd.f32 %v8028, %v8116
        %v8118 = vpop.f32.mrf.mxu0
        %v8119 = vadd.f32 %v8030, %v8118
        %8120 = vmatmul.bf16.gmra.mxu0 %v7581
        %v8121 = vpop.f32.mrf.mxu0
        %v8122 = vadd.f32 %v8033, %v8121
        %v8123 = vpop.f32.mrf.mxu0
        %v8124 = vadd.f32 %v8035, %v8123
        %8125 = vmatmul.bf16.gmra.mxu0 %v7585
        %v8126 = vpop.f32.mrf.mxu0
        %v8127 = vadd.f32 %v8038, %v8126
        %v8128 = vpop.f32.mrf.mxu0
        %v8129 = vadd.f32 %v8040, %v8128
        %8130 = vmatmul.bf16.gmra.mxu0 %v7589
        %v8131 = vpop.f32.mrf.mxu0
        %v8132 = vadd.f32 %v8043, %v8131
        %v8133 = vpop.f32.mrf.mxu0
        %v8134 = vadd.f32 %v8045, %v8133
        %8135 = vmatmul.bf16.gmra.mxu0 %v7593
        %v8136 = vpop.f32.mrf.mxu0
        %v8137 = vadd.f32 %v8048, %v8136
        %v8138 = vpop.f32.mrf.mxu0
        %v8139 = vadd.f32 %v8050, %v8138
        %8140 = vmatmul.bf16.gmra.mxu0 %v7597
        %v8141 = vpop.f32.mrf.mxu0
        %v8142 = vadd.f32 %v8053, %v8141
        %v8143 = vpop.f32.mrf.mxu0
        %v8144 = vadd.f32 %v8055, %v8143
        %8145 = vmatmul.bf16.gmra.mxu0 %v7601
        %v8146 = vpop.f32.mrf.mxu0
        %v8147 = vadd.f32 %v8058, %v8146
        %v8148 = vpop.f32.mrf.mxu0
        %v8149 = vadd.f32 %v8060, %v8148
        %8150 = vmatmul.bf16.gmra.mxu0 %v7605
        %v8151 = vpop.f32.mrf.mxu0
        %v8152 = vadd.f32 %v8063, %v8151
        %v8153 = vpop.f32.mrf.mxu0
        %v8154 = vadd.f32 %v8065, %v8153
        %8155 = vmatmul.bf16.gmra.mxu0 %v7609
        %v8156 = vpop.f32.mrf.mxu0
        %v8157 = vadd.f32 %v8068, %v8156
        %v8158 = vpop.f32.mrf.mxu0
        %v8159 = vadd.f32 %v8070, %v8158
        %8160 = vmatmul.bf16.gmra.mxu0 %v7613
        %v8161 = vpop.f32.mrf.mxu0
        %v8162 = vadd.f32 %v8073, %v8161
        %v8163 = vpop.f32.mrf.mxu0
        %v8164 = vadd.f32 %v8075, %v8163
        %8165 = vmatmul.bf16.gmra.mxu0 %v7617
        %v8166 = vpop.f32.mrf.mxu0
        %v8167 = vadd.f32 %v8078, %v8166
        %v8168 = vpop.f32.mrf.mxu0
        %v8169 = vadd.f32 %v8080, %v8168
        %8170 = vmatmul.bf16.gmra.mxu0 %v7621
        %v8171 = vpop.f32.mrf.mxu0
        %v8172 = vadd.f32 %v8083, %v8171
        %v8173 = vpop.f32.mrf.mxu0
        %v8174 = vadd.f32 %v8085, %v8173
        %8175 = vmatmul.bf16.gmra.mxu0 %v7625
        %v8176 = vpop.f32.mrf.mxu0
        %v8177 = vadd.f32 %v8088, %v8176
        %v8178 = vpop.f32.mrf.mxu0
        %v8179 = vadd.f32 %v8090, %v8178
        %8180 = vmatmul.bf16.gmra.mxu0 %v7629
        %v8181 = vpop.f32.mrf.mxu0
        %v8182 = vadd.f32 %v8093, %v8181
        %v8183 = vpop.f32.mrf.mxu0
        %v8184 = vadd.f32 %v8095, %v8183
        %8185 = vdwg.mxu0
        %8186 = vmatpush.bf16.msra.mxu0 %v7886
        %8187 = vmatpush.bf16.msra.mxu0 %v7885
        %8188 = vmatpush.bf16.msra.mxu0 %v7884
        %8189 = vmatpush.bf16.msra.mxu0 %v7883
        %8190 = vmatpush.bf16.msra.mxu0 %v7882
        %8191 = vmatpush.bf16.msra.mxu0 %v7881
        %8192 = vmatpush.bf16.msra.mxu0 %v7880
        %8193 = vmatpush.bf16.msra.mxu0 %v7879
        %8194 = vmatmul.bf16.gmra.mxu0 %v7570
        %v8195 = vpop.f32.mrf.mxu0
        %v8196 = vadd.f32 %v8107, %v8195
        %v8197 = vpop.f32.mrf.mxu0
        %v8198 = vadd.f32 %v8109, %v8197
        %8199 = vmatmul.bf16.gmra.mxu0 %v7574
        %v8200 = vpop.f32.mrf.mxu0
        %v8201 = vadd.f32 %v8112, %v8200
        %v8202 = vpop.f32.mrf.mxu0
        %v8203 = vadd.f32 %v8114, %v8202
        %8204 = vmatmul.bf16.gmra.mxu0 %v7578
        %v8205 = vpop.f32.mrf.mxu0
        %v8206 = vadd.f32 %v8117, %v8205
        %v8207 = vpop.f32.mrf.mxu0
        %v8208 = vadd.f32 %v8119, %v8207
        %8209 = vmatmul.bf16.gmra.mxu0 %v7582
        %v8210 = vpop.f32.mrf.mxu0
        %v8211 = vadd.f32 %v8122, %v8210
        %v8212 = vpop.f32.mrf.mxu0
        %v8213 = vadd.f32 %v8124, %v8212
        %8214 = vmatmul.bf16.gmra.mxu0 %v7586
        %v8215 = vpop.f32.mrf.mxu0
        %v8216 = vadd.f32 %v8127, %v8215
        %v8217 = vpop.f32.mrf.mxu0
        %v8218 = vadd.f32 %v8129, %v8217
        %8219 = vmatmul.bf16.gmra.mxu0 %v7590
        %v8220 = vpop.f32.mrf.mxu0
        %v8221 = vadd.f32 %v8132, %v8220
        %v8222 = vpop.f32.mrf.mxu0
        %v8223 = vadd.f32 %v8134, %v8222
        %8224 = vmatmul.bf16.gmra.mxu0 %v7594
        %v8225 = vpop.f32.mrf.mxu0
        %v8226 = vadd.f32 %v8137, %v8225
        %v8227 = vpop.f32.mrf.mxu0
        %v8228 = vadd.f32 %v8139, %v8227
        %8229 = vmatmul.bf16.gmra.mxu0 %v7598
        %v8230 = vpop.f32.mrf.mxu0
        %v8231 = vadd.f32 %v8142, %v8230
        %v8232 = vpop.f32.mrf.mxu0
        %v8233 = vadd.f32 %v8144, %v8232
        %8234 = vmatmul.bf16.gmra.mxu0 %v7602
        %v8235 = vpop.f32.mrf.mxu0
        %v8236 = vadd.f32 %v8147, %v8235
        %v8237 = vpop.f32.mrf.mxu0
        %v8238 = vadd.f32 %v8149, %v8237
        %8239 = vmatmul.bf16.gmra.mxu0 %v7606
        %v8240 = vpop.f32.mrf.mxu0
        %v8241 = vadd.f32 %v8152, %v8240
        %v8242 = vpop.f32.mrf.mxu0
        %v8243 = vadd.f32 %v8154, %v8242
        %8244 = vmatmul.bf16.gmra.mxu0 %v7610
        %v8245 = vpop.f32.mrf.mxu0
        %v8246 = vadd.f32 %v8157, %v8245
        %v8247 = vpop.f32.mrf.mxu0
        %v8248 = vadd.f32 %v8159, %v8247
        %8249 = vmatmul.bf16.gmra.mxu0 %v7614
        %v8250 = vpop.f32.mrf.mxu0
        %v8251 = vadd.f32 %v8162, %v8250
        %v8252 = vpop.f32.mrf.mxu0
        %v8253 = vadd.f32 %v8164, %v8252
        %8254 = vmatmul.bf16.gmra.mxu0 %v7618
        %v8255 = vpop.f32.mrf.mxu0
        %v8256 = vadd.f32 %v8167, %v8255
        %v8257 = vpop.f32.mrf.mxu0
        %v8258 = vadd.f32 %v8169, %v8257
        %8259 = vmatmul.bf16.gmra.mxu0 %v7622
        %v8260 = vpop.f32.mrf.mxu0
        %v8261 = vadd.f32 %v8172, %v8260
        %v8262 = vpop.f32.mrf.mxu0
        %v8263 = vadd.f32 %v8174, %v8262
        %8264 = vmatmul.bf16.gmra.mxu0 %v7626
        %v8265 = vpop.f32.mrf.mxu0
        %v8266 = vadd.f32 %v8177, %v8265
        %v8267 = vpop.f32.mrf.mxu0
        %v8268 = vadd.f32 %v8179, %v8267
        %8269 = vmatmul.bf16.gmra.mxu0 %v7630
        %v8270 = vpop.f32.mrf.mxu0
        %v8271 = vadd.f32 %v8182, %v8270
        %v8272 = vpop.f32.mrf.mxu0
        %v8273 = vadd.f32 %v8184, %v8272
        %8274 = vdwg.mxu0
        %v8275 = vadd.f32 %v7631, %v8196
        %v8276 = vadd.f32 %v7632, %v8198
        %v8277 = vadd.f32 %v7633, %v8201
        %v8278 = vadd.f32 %v7634, %v8203
        %v8279 = vadd.f32 %v7635, %v8206
        %v8280 = vadd.f32 %v7636, %v8208
        %v8281 = vadd.f32 %v7637, %v8211
        %v8282 = vadd.f32 %v7638, %v8213
        %v8283 = vadd.f32 %v7639, %v8216
        %v8284 = vadd.f32 %v7640, %v8218
        %v8285 = vadd.f32 %v7641, %v8221
        %v8286 = vadd.f32 %v7642, %v8223
        %v8287 = vadd.f32 %v7643, %v8226
        %v8288 = vadd.f32 %v7644, %v8228
        %v8289 = vadd.f32 %v7645, %v8231
        %v8290 = vadd.f32 %v7646, %v8233
        %v8291 = vadd.f32 %v7647, %v8236
        %v8292 = vadd.f32 %v7648, %v8238
        %v8293 = vadd.f32 %v7649, %v8241
        %v8294 = vadd.f32 %v7650, %v8243
        %v8295 = vadd.f32 %v7651, %v8246
        %v8296 = vadd.f32 %v7652, %v8248
        %v8297 = vadd.f32 %v7653, %v8251
        %v8298 = vadd.f32 %v7654, %v8253
        %v8299 = vadd.f32 %v7655, %v8256
        %v8300 = vadd.f32 %v7656, %v8258
        %v8301 = vadd.f32 %v7657, %v8261
        %v8302 = vadd.f32 %v7658, %v8263
        %v8303 = vadd.f32 %v7659, %v8266
        %v8304 = vadd.f32 %v7660, %v8268
        %v8305 = vadd.f32 %v7661, %v8271
        %v8306 = vadd.f32 %v7662, %v8273
        %8307 = vst [vmem:[#allocation2] sm:$0xff] %v8275
        %8308 = vst [vmem:[#allocation2 + $0x8] sm:$0xff] %v8276
        %8309 = vst [vmem:[#allocation2 + $0x10] sm:$0xff] %v8277
        %8310 = vst [vmem:[#allocation2 + $0x18] sm:$0xff] %v8278
        %8311 = vst [vmem:[#allocation2 + $0x20] sm:$0xff] %v8279
        %8312 = vst [vmem:[#allocation2 + $0x28] sm:$0xff] %v8280
        %8313 = vst [vmem:[#allocation2 + $0x30] sm:$0xff] %v8281
        %8314 = vst [vmem:[#allocation2 + $0x38] sm:$0xff] %v8282
        %8315 = vst [vmem:[#allocation2 + $0x40] sm:$0xff] %v8283
        %8316 = vst [vmem:[#allocation2 + $0x48] sm:$0xff] %v8284
        %8317 = vst [vmem:[#allocation2 + $0x50] sm:$0xff] %v8285
        %8318 = vst [vmem:[#allocation2 + $0x58] sm:$0xff] %v8286
        %8319 = vst [vmem:[#allocation2 + $0x60] sm:$0xff] %v8287
        %8320 = vst [vmem:[#allocation2 + $0x68] sm:$0xff] %v8288
        %8321 = vst [vmem:[#allocation2 + $0x70] sm:$0xff] %v8289
        %8322 = vst [vmem:[#allocation2 + $0x78] sm:$0xff] %v8290
        %8323 = vst [vmem:[#allocation2 + $0x80] sm:$0xff] %v8291
        %8324 = vst [vmem:[#allocation2 + $0x88] sm:$0xff] %v8292
        %8325 = vst [vmem:[#allocation2 + $0x90] sm:$0xff] %v8293
        %8326 = vst [vmem:[#allocation2 + $0x98] sm:$0xff] %v8294
        %8327 = vst [vmem:[#allocation2 + $0xa0] sm:$0xff] %v8295
        %8328 = vst [vmem:[#allocation2 + $0xa8] sm:$0xff] %v8296
        %8329 = vst [vmem:[#allocation2 + $0xb0] sm:$0xff] %v8297
        %8330 = vst [vmem:[#allocation2 + $0xb8] sm:$0xff] %v8298
        %8331 = vst [vmem:[#allocation2 + $0xc0] sm:$0xff] %v8299
        %8332 = vst [vmem:[#allocation2 + $0xc8] sm:$0xff] %v8300
        %8333 = vst [vmem:[#allocation2 + $0xd0] sm:$0xff] %v8301
        %8334 = vst [vmem:[#allocation2 + $0xd8] sm:$0xff] %v8302
        %8335 = vst [vmem:[#allocation2 + $0xe0] sm:$0xff] %v8303
        %8336 = vst [vmem:[#allocation2 + $0xe8] sm:$0xff] %v8304
        %8337 = vst [vmem:[#allocation2 + $0xf0] sm:$0xff] %v8305
        %8338 = vst [vmem:[#allocation2 + $0xf8] sm:$0xff] %v8306
        // Predicated region
        $region61: #{tpu_custom_call.1} parent=39 // pred_check
          %p8339 = pneg %p333
        $region62: #{tpu_custom_call.1} parent=39 // pred_check_branch
          %8341 = sbr.rel (%p8339) target = $region64
        $region63: #{tpu_custom_call.1} parent=39 // pred_region
          %v8342 = vld [vmem:[#allocation2] sm:$0xff]
          %v8343 = vld [vmem:[#allocation2 + $0x8] sm:$0xff]
          %v8344 = vld [vmem:[#allocation2 + $0x10] sm:$0xff]
          %v8345 = vld [vmem:[#allocation2 + $0x18] sm:$0xff]
          %v8346 = vld [vmem:[#allocation2 + $0x20] sm:$0xff]
          %v8347 = vld [vmem:[#allocation2 + $0x28] sm:$0xff]
          %v8348 = vld [vmem:[#allocation2 + $0x30] sm:$0xff]
          %v8349 = vld [vmem:[#allocation2 + $0x38] sm:$0xff]
          %v8350 = vld [vmem:[#allocation2 + $0x40] sm:$0xff]
          %v8351 = vld [vmem:[#allocation2 + $0x48] sm:$0xff]
          %v8352 = vld [vmem:[#allocation2 + $0x50] sm:$0xff]
          %v8353 = vld [vmem:[#allocation2 + $0x58] sm:$0xff]
          %v8354 = vld [vmem:[#allocation2 + $0x60] sm:$0xff]
          %v8355 = vld [vmem:[#allocation2 + $0x68] sm:$0xff]
          %v8356 = vld [vmem:[#allocation2 + $0x70] sm:$0xff]
          %v8357 = vld [vmem:[#allocation2 + $0x78] sm:$0xff]
          %v8358 = vld [vmem:[#allocation2 + $0x80] sm:$0xff]
          %v8359 = vld [vmem:[#allocation2 + $0x88] sm:$0xff]
          %v8360 = vld [vmem:[#allocation2 + $0x90] sm:$0xff]
          %v8361 = vld [vmem:[#allocation2 + $0x98] sm:$0xff]
          %v8362 = vld [vmem:[#allocation2 + $0xa0] sm:$0xff]
          %v8363 = vld [vmem:[#allocation2 + $0xa8] sm:$0xff]
          %v8364 = vld [vmem:[#allocation2 + $0xb0] sm:$0xff]
          %v8365 = vld [vmem:[#allocation2 + $0xb8] sm:$0xff]
          %v8366 = vld [vmem:[#allocation2 + $0xc0] sm:$0xff]
          %v8367 = vld [vmem:[#allocation2 + $0xc8] sm:$0xff]
          %v8368 = vld [vmem:[#allocation2 + $0xd0] sm:$0xff]
          %v8369 = vld [vmem:[#allocation2 + $0xd8] sm:$0xff]
          %v8370 = vld [vmem:[#allocation2 + $0xe0] sm:$0xff]
          %v8371 = vld [vmem:[#allocation2 + $0xe8] sm:$0xff]
          %v8372 = vld [vmem:[#allocation2 + $0xf0] sm:$0xff]
          %v8373 = vld [vmem:[#allocation2 + $0xf8] sm:$0xff]
          %v8374 = vld [vmem:[%s4] sm:$0x1]
          %v8376 = vperm.slane %v8374, 0
          %v8378 = vadd.f32 %v8342, %v8376
          %v8379 = vadd.f32 %v8343, %v8376
          %v8380 = vadd.f32 %v8344, %v8376
          %v8381 = vadd.f32 %v8345, %v8376
          %v8382 = vadd.f32 %v8346, %v8376
          %v8383 = vadd.f32 %v8347, %v8376
          %v8384 = vadd.f32 %v8348, %v8376
          %v8385 = vadd.f32 %v8349, %v8376
          %v8386 = vadd.f32 %v8350, %v8376
          %v8387 = vadd.f32 %v8351, %v8376
          %v8388 = vadd.f32 %v8352, %v8376
          %v8389 = vadd.f32 %v8353, %v8376
          %v8390 = vadd.f32 %v8354, %v8376
          %v8391 = vadd.f32 %v8355, %v8376
          %v8392 = vadd.f32 %v8356, %v8376
          %v8393 = vadd.f32 %v8357, %v8376
          %v8394 = vadd.f32 %v8358, %v8376
          %v8395 = vadd.f32 %v8359, %v8376
          %v8396 = vadd.f32 %v8360, %v8376
          %v8397 = vadd.f32 %v8361, %v8376
          %v8398 = vadd.f32 %v8362, %v8376
          %v8399 = vadd.f32 %v8363, %v8376
          %v8400 = vadd.f32 %v8364, %v8376
          %v8401 = vadd.f32 %v8365, %v8376
          %v8402 = vadd.f32 %v8366, %v8376
          %v8403 = vadd.f32 %v8367, %v8376
          %v8404 = vadd.f32 %v8368, %v8376
          %v8405 = vadd.f32 %v8369, %v8376
          %v8406 = vadd.f32 %v8370, %v8376
          %v8407 = vadd.f32 %v8371, %v8376
          %v8408 = vadd.f32 %v8372, %v8376
          %v8409 = vadd.f32 %v8373, %v8376
          %8410 = vst [vmem:[%s327] sm:$0xff] %v8378
          %8411 = vst [vmem:[%s327 + $0x8] sm:$0xff] %v8379
          %8412 = vst [vmem:[%s327 + $0x10] sm:$0xff] %v8380
          %8413 = vst [vmem:[%s327 + $0x18] sm:$0xff] %v8381
          %8414 = vst [vmem:[%s327 + $0x20] sm:$0xff] %v8382
          %8415 = vst [vmem:[%s327 + $0x28] sm:$0xff] %v8383
          %8416 = vst [vmem:[%s327 + $0x30] sm:$0xff] %v8384
          %8417 = vst [vmem:[%s327 + $0x38] sm:$0xff] %v8385
          %8418 = vst [vmem:[%s327 + $0x40] sm:$0xff] %v8386
          %8419 = vst [vmem:[%s327 + $0x48] sm:$0xff] %v8387
          %8420 = vst [vmem:[%s327 + $0x50] sm:$0xff] %v8388
          %8421 = vst [vmem:[%s327 + $0x58] sm:$0xff] %v8389
          %8422 = vst [vmem:[%s327 + $0x60] sm:$0xff] %v8390
          %8423 = vst [vmem:[%s327 + $0x68] sm:$0xff] %v8391
          %8424 = vst [vmem:[%s327 + $0x70] sm:$0xff] %v8392
          %8425 = vst [vmem:[%s327 + $0x78] sm:$0xff] %v8393
          %8426 = vst [vmem:[%s327 + $0x80] sm:$0xff] %v8394
          %8427 = vst [vmem:[%s327 + $0x88] sm:$0xff] %v8395
          %8428 = vst [vmem:[%s327 + $0x90] sm:$0xff] %v8396
          %8429 = vst [vmem:[%s327 + $0x98] sm:$0xff] %v8397
          %8430 = vst [vmem:[%s327 + $0xa0] sm:$0xff] %v8398
          %8431 = vst [vmem:[%s327 + $0xa8] sm:$0xff] %v8399
          %8432 = vst [vmem:[%s327 + $0xb0] sm:$0xff] %v8400
          %8433 = vst [vmem:[%s327 + $0xb8] sm:$0xff] %v8401
          %8434 = vst [vmem:[%s327 + $0xc0] sm:$0xff] %v8402
          %8435 = vst [vmem:[%s327 + $0xc8] sm:$0xff] %v8403
          %8436 = vst [vmem:[%s327 + $0xd0] sm:$0xff] %v8404
          %8437 = vst [vmem:[%s327 + $0xd8] sm:$0xff] %v8405
          %8438 = vst [vmem:[%s327 + $0xe0] sm:$0xff] %v8406
          %8439 = vst [vmem:[%s327 + $0xe8] sm:$0xff] %v8407
          %8440 = vst [vmem:[%s327 + $0xf0] sm:$0xff] %v8408
          %8441 = vst [vmem:[%s327 + $0xf8] sm:$0xff] %v8409
        $region64: #{tpu_custom_call.1} parent=39 // pred_fallthru
          _
        %s8442 = sand.u32 %s169, 1
        %s8443 = scalar_lea.sflag [#allocation5], %s8442
        %s8444 = sand.u32 %s169, 1
        %s8445 = smul.addr %s8444, 256
        %s8446 = scalar_lea.vmem [#allocation11], %s8445
        // Predicated region
        $region65: #{tpu_custom_call.1} parent=39 // pred_check
          %p8447 = pneg %p179
        $region66: #{tpu_custom_call.1} parent=39 // pred_check_branch
          %8449 = sbr.rel (%p8447) target = $region68
        $region67: #{tpu_custom_call.1} parent=39 // pred_region
          %s8450 = smul.u32 32, %s28
          %8452 = vsyncadd %s8443, 0
          %s8453 = smul.addr %s8450, 8
          %s8454 = scalar_lea.hbm %s5, %s8453
          %s8455 = sshll.u32 %s8446, 4
          %s8456 = int_to_ptr.vmem [resolvable:$true] %s8455
          %s8457 = sshll.u32 %s8454, 4
          %s8458 = int_to_ptr.hbm [resolvable:$true] %s8457
          %8463 = dma.vmem_to_hbm [thread:$0]  %s8456, 4096, %s8458, %s8443, 128, 128, 8
        $region68: #{tpu_custom_call.1} parent=39 // pred_fallthru
          _
      $region40: #{tpu_custom_call.1} parent=5 // pred_fallthru
        _
      %p8464 = scmp.le.s32.totalorder 2, %s19
      // Predicated region
      $region69: #{tpu_custom_call.1} parent=5 // pred_check
        %p8465 = pneg %p8464
      $region70: #{tpu_custom_call.1} parent=5 // pred_check_branch
        %8467 = sbr.rel (%p8465) target = $region72
      $region71: #{tpu_custom_call.1} parent=5 // pred_region
        %s8468 = ssub.s32 %s19, 2
        // Predicated region
        $region73: #{tpu_custom_call.1} parent=71 // pred_check
          %p8469 = pneg %p185
        $region74: #{tpu_custom_call.1} parent=71 // pred_check_branch
          %8471 = sbr.rel (%p8469) target = $region76
        $region75: #{tpu_custom_call.1} parent=71 // pred_region
          %s8472 = sand.u32 %s170, 1
          %s8473 = scalar_lea.sflag [#allocation5], %s8472
          %s8474 = sand.u32 %s170, 1
          %s8475 = smul.addr %s8474, 256
          %s8476 = scalar_lea.vmem [#allocation11], %s8475
          %8478 = dma.done %s8473, 4096
        $region76: #{tpu_custom_call.1} parent=71 // pred_fallthru
          _
      $region72: #{tpu_custom_call.1} parent=5 // pred_fallthru
        _
    $region6: #{tpu_custom_call.1} parent=1 // loop_footer
      %s23 = sadd.s32 1, %s19
    $region7: #{tpu_custom_call.1} parent=1 // loop_footer_branch
      %18 = sbr.rel target = $region3
    $region8: #{tpu_custom_call.1} parent=1 // loop_exit
      _
    %8479 = vsyncpa [#allocation4], 1
    %s8480 = scalar_lea.sflag [#allocation4], 1
    %8481 = vsyncpa %s8480, 1
    %8482 = vsyncpa [#allocation7], 1
    %8483 = vsyncpa [#allocation10], 1
    %8484 = vsyncpa [#allocation5], 1
    %s8485 = scalar_lea.sflag [#allocation5], 1
    %8486 = vsyncpa %s8485, 1

</llo_original>
